<compile_context>
chip_gen: v6e
topology: v6e:2x2x1
jax: 0.10.0
libtpu: 0.0.40
codegen_flags: <defaults>
</compile_context>

<pallas_src>
import functools

import jax
import jax.numpy as jnp
from jax.experimental import pallas as pl
from jax.experimental.pallas import tpu as pltpu

LANE = 128
CPAD = 128            # inter-block channel padding (lane-dense activations)
KSUP = 4 * CPAD       # super-pixel channel count after space-to-depth (2*2*128)
NEG_SLOPE = 0.2       # nn.LeakyReLU(0.2)
BN_EPS = 0.8          # nn.BatchNorm2d(out_feat, 0.8) -> eps = 0.8


# --------------------------------------------------------------------------- #
# Pallas kernel: fused conv(3x3, stride 2, pad 1) + bias + LeakyReLU + BN affine
# (expressed as a stride-1 2x2 conv over the space-to-depth input: 4 shifted,
#  contiguous views of the VMEM-resident tile -> 4 accumulated MXU dots)
# --------------------------------------------------------------------------- #
def _conv_block_kernel(x_ref, w_ref, p_ref, o_ref, *, ho, wo):
    # x_ref: (1, ho+1, wo+1, 512) bf16   one space-to-depth image
    # w_ref: (4, 512, 128)        bf16   packed weights, tap t = dh*2 + dw
    # p_ref: (3, 128)             f32    rows: conv bias, BN scale, BN shift
    # o_ref: (1, ho, wo, 128)     bf16
    kc = w_ref.shape[1]
    acc = jnp.zeros((ho * wo, CPAD), jnp.float32)
    for t, (dh, dw) in enumerate(((0, 0), (0, 1), (1, 0), (1, 1))):
        slab = x_ref[:, pl.ds(dh, ho), pl.ds(dw, wo), :]       # (1, ho, wo, kc)
        acc = acc + jnp.dot(slab.reshape(ho * wo, kc), w_ref[t],
                            preferred_element_type=jnp.float32)
    p = p_ref[...]
    y = acc + p[0:1, :]                                        # conv bias
    y = jnp.where(y >= 0.0, y, NEG_SLOPE * y)                  # LeakyReLU(0.2)
    y = y * p[1:2, :] + p[2:3, :]                              # eval-mode BN affine
    o_ref[...] = y.reshape(1, ho, wo, CPAD).astype(o_ref.dtype)


# --------------------------------------------------------------------------- #
# XLA glue: pad-1 border + 2x2 pixel pack ("space-to-depth"), ~1x HBM traffic
# --------------------------------------------------------------------------- #
def _space_to_depth_pad(x):
    """(N, H, W, C) -> (N, H//2 + 1, W//2 + 1, 4*C)."""
    n, h, w, c = x.shape
    hq, wq = h // 2 + 1, w // 2 + 1
    xp = jnp.pad(x, ((0, 0), (1, 1), (1, 1), (0, 0)))
    xq = xp.reshape(n, hq, 2, wq, 2, c).transpose(0, 1, 3, 2, 4, 5)
    return xq.reshape(n, hq, wq, 4 * c)


def conv_block(x, w_packed, p):
    """One discriminator block on lane-padded NHWC activations.

    x: (N, H, W, 128) bf16  ->  (N, H//2, W//2, 128) bf16 (padded lanes exactly 0).
    """
    n, h, w, c = x.shape
    assert c == CPAD and h % 2 == 0 and w % 2 == 0
    ho, wo = h // 2, w // 2
    xq = _space_to_depth_pad(x)                                # (N, ho+1, wo+1, 512)

    kernel = functools.partial(_conv_block_kernel, ho=ho, wo=wo)
    cost = pl.CostEstimate(
        flops=2 * n * ho * wo * KSUP * CPAD * 4,
        transcendentals=0,
        bytes_accessed=(xq.size * 2 + w_packed.size * 2 + p.size * 4
                        + n * ho * wo * CPAD * 2))
    return pl.pallas_call(
        kernel,
        out_shape=jax.ShapeDtypeStruct((n, ho, wo, CPAD), jnp.bfloat16),
        grid_spec=pltpu.PrefetchScalarGridSpec(
            num_scalar_prefetch=0,
            grid=(n,),                                         # one image per step
            in_specs=[
                pl.BlockSpec((1, ho + 1, wo + 1, KSUP), lambda i: (i, 0, 0, 0)),
                pl.BlockSpec((4, KSUP, CPAD), lambda i: (0, 0, 0)),
                pl.BlockSpec((3, CPAD), lambda i: (0, 0)),
            ],
            out_specs=pl.BlockSpec((1, ho, wo, CPAD), lambda i: (i, 0, 0, 0)),
        ),
        compiler_params=pltpu.CompilerParams(
            dimension_semantics=("parallel",),                 # batch -> 2 TCs on v7x
            vmem_limit_bytes=32 * 1024 * 1024),
        cost_estimate=cost,
    )(xq, w_packed, p)


# --------------------------------------------------------------------------- #
# Deterministic synthetic parameters (shapes match the PyTorch module)
# --------------------------------------------------------------------------- #
def init_params(key, img_shape):
    c_in, h, w = img_shape
    assert h % 16 == 0 and w % 16 == 0
    chans = [c_in, 16, 32, 64, 128]
    # kernel tap kh (or kw) -> (2x2-block shift d, sub-position r):
    # padded input row 2*ho + kh = 2*(ho + d) + r.
    tap = ((0, 0), (0, 1), (1, 0))
    blocks = []
    for i in range(4):
        cin, cout = chans[i], chans[i + 1]
        key, k1, k2, k3, k4 = jax.random.split(key, 5)
        w_hwio = (jax.random.normal(k1, (3, 3, cin, cout), jnp.float32) * 0.1
                  ).astype(jnp.bfloat16)
        b = jax.random.normal(k2, (cout,), jnp.float32) * 0.1
        if i == 0:                                   # first block: bn=False
            scale = jnp.ones((cout,), jnp.float32)
            shift = jnp.zeros((cout,), jnp.float32)
        else:                                        # eval-mode BatchNorm2d(cout, 0.8)
            gamma = 1.0 + 0.1 * jax.random.normal(k3, (cout,), jnp.float32)
            beta = 0.1 * jax.random.normal(k4, (cout,), jnp.float32)
            running_mean = jnp.zeros((cout,), jnp.float32)
            running_var = jnp.ones((cout,), jnp.float32)
            scale = gamma / jnp.sqrt(running_var + BN_EPS)
            shift = beta - running_mean * scale
        # Pack (3,3,cin,cout) as a stride-1 2x2 conv over space-to-depth channels:
        # w_packed[dh*2+dw, rh*256 + rw*128 + ci, co].  Rows for padded input
        # channels and for the unused (d,r)=(1,1) sub-positions stay zero.
        wp = jnp.zeros((2, 2, 2, 2, CPAD, CPAD), jnp.float32)
        for kh in range(3):
            dh, rh = tap[kh]
            for kw in range(3):
                dw, rw = tap[kw]
                wp = wp.at[dh, dw, rh, rw, :cin, :cout].set(
                    w_hwio[kh, kw].astype(jnp.float32))
        w_packed = wp.reshape(4, KSUP, CPAD).astype(jnp.bfloat16)
        # Epilogue params; zero bias/scale/shift on padded lanes keep them exactly 0.
        p = jnp.zeros((3, CPAD), jnp.float32)
        p = p.at[0, :cout].set(b).at[1, :cout].set(scale).at[2, :cout].set(shift)
        blocks.append(dict(w_packed=w_packed, p=p,                       # kernel side
                           w_hwio=w_hwio, b=b, scale=scale, shift=shift))  # reference
    hs, ws = h // 16, w // 16
    feat_dim = 128 * hs * ws
    key, k5, k6 = jax.random.split(key, 3)
    lin_w = jax.random.normal(k5, (feat_dim, 1), jnp.float32) * 0.05
    lin_b = jax.random.normal(k6, (1,), jnp.float32) * 0.05
    # Fold torch's NCHW flatten order (c, h, w) into NHWC (h, w, c) row order so the
    # runtime flatten is a plain reshape of the NHWC activation (no transpose).
    lin_w_nhwc = lin_w.reshape(128, hs, ws, 1).transpose(1, 2, 0, 3).reshape(feat_dim, 1)
    return dict(blocks=blocks, lin_w=lin_w_nhwc, lin_b=lin_b)


# --------------------------------------------------------------------------- #
# Forward pass (Pallas conv blocks + XLA final linear)
# --------------------------------------------------------------------------- #
def discriminator_forward(img_nchw, params):
    # nn.Dropout2d(0.25) is identity in eval mode (deterministic forward).
    x = jnp.transpose(img_nchw, (0, 2, 3, 1)).astype(jnp.bfloat16)   # NCHW -> NHWC
    assert x.shape[-1] <= CPAD
    x = jnp.pad(x, ((0, 0), (0, 0), (0, 0), (0, CPAD - x.shape[-1])))
    for blk in params["blocks"]:
        x = conv_block(x, blk["w_packed"], blk["p"])
    n = x.shape[0]
    feat = x.reshape(n, -1).astype(jnp.float32)   # NHWC flatten; perm folded into lin_w
    # Final Linear as a plain XLA dot (per perf review: a (1,1,1)-grid Pallas call
    # at K=128*Hs*Ws, N=1 is pure launch/DMA overhead).
    return feat @ params["lin_w"] + params["lin_b"][None, :]


# Pure-XLA reference (lax.conv), mirroring the kernel's bf16 storage points.
def reference_forward(img_nchw, params):
    x = jnp.transpose(img_nchw, (0, 2, 3, 1)).astype(jnp.bfloat16).astype(jnp.float32)
    for blk in params["blocks"]:
        y = jax.lax.conv_general_dilated(
            x, blk["w_hwio"].astype(jnp.float32), window_strides=(2, 2),
            padding=((1, 1), (1, 1)), dimension_numbers=("NHWC", "HWIO", "NHWC"))
        y = y + blk["b"][None, None, None, :]
        y = jnp.where(y >= 0.0, y, NEG_SLOPE * y)
        y = y * blk["scale"][None, None, None, :] + blk["shift"][None, None, None, :]
        x = y.astype(jnp.bfloat16).astype(jnp.float32)
    feat = x.reshape(x.shape[0], -1)
    return feat @ params["lin_w"] + params["lin_b"][None, :]


# --------------------------------------------------------------------------- #
if __name__ == "__main__":
    key = jax.random.PRNGKey(0)
    img_shape = (4, 16, 16)            # (C, H, W); H, W divisible by 2**4
    batch = 2

    key, k_img, k_par = jax.random.split(key, 3)
    img = jax.random.normal(k_img, (batch,) + img_shape, jnp.float32)
    params = init_params(k_par, img_shape)

    fwd = jax.jit(discriminator_forward)
    out = jax.block_until_ready(fwd(img, params))
    assert out.shape == (batch, 1)
    assert out.dtype == jnp.float32

    # Loose-tolerance check vs the XLA reference (only bf16 accumulation-order drift).
    ref = jax.block_until_ready(reference_forward(img, params))
    assert bool(jnp.allclose(out, ref, rtol=5e-2, atol=2e-2)), (out, ref)

    print("KERNEL_OK")
</pallas_src>

<mosaic_0001>
module attributes {stable_mosaic.version = 11 : i64} {
  func.func @_conv_block_kernel(%arg0: i32, %arg1: memref<1x9x9x512xbf16, #tpu.memory_space<vmem>>, %arg2: memref<4x512x128xbf16, #tpu.memory_space<vmem>>, %arg3: memref<3x128xf32, #tpu.memory_space<vmem>>, %arg4: memref<1x8x8x128xbf16, #tpu.memory_space<vmem>>) attributes {dimension_semantics = [#tpu.dimension_semantics<parallel>], iteration_bounds = array<i64: 2>, scalar_prefetch = 0 : i64, scratch_operands = 0 : i64, tpu.core_type = #tpu.core_type<tc>, window_params = [{transform_indices = @transform_0, window_bounds = array<i64: 1, 9, 9, 512>}, {pipeline_mode = #tpu.pipeline_mode<synchronous>, transform_indices = @transform_1, window_bounds = array<i64: 4, 512, 128>}, {pipeline_mode = #tpu.pipeline_mode<synchronous>, transform_indices = @transform_2, window_bounds = array<i64: 3, 128>}, {transform_indices = @transform_3, window_bounds = array<i64: 1, 8, 8, 128>}]} {
    %cst = arith.constant 0.000000e+00 : f32
    %0 = vector.broadcast %cst : f32 to vector<64x128xf32>
    %c0 = arith.constant 0 : index
    %c0_0 = arith.constant 0 : index
    %c0_1 = arith.constant 0 : index
    %c0_2 = arith.constant 0 : index
    %1 = vector.load %arg1[%c0, %c0_0, %c0_1, %c0_2] : memref<1x9x9x512xbf16, #tpu.memory_space<vmem>>, vector<1x8x8x512xbf16>
    %2 = vector.shape_cast %1 : vector<1x8x8x512xbf16> to vector<64x512xbf16>
    %c0_3 = arith.constant 0 : index
    %c0_4 = arith.constant 0 : index
    %c0_5 = arith.constant 0 : index
    %3 = vector.load %arg2[%c0_3, %c0_4, %c0_5] : memref<4x512x128xbf16, #tpu.memory_space<vmem>>, vector<1x512x128xbf16>
    %4 = vector.shape_cast %3 : vector<1x512x128xbf16> to vector<512x128xbf16>
    %cst_6 = arith.constant dense<0.000000e+00> : vector<64x128xf32>
    %5 = tpu.matmul %2, %4, %cst_6 {dimension_numbers = #tpu.dot_dimension_numbers<[1], [0], [0], [1], [0, 0, 1, 1], [], []>} : vector<64x512xbf16>, vector<512x128xbf16>, vector<64x128xf32> -> vector<64x128xf32>
    %6 = arith.addf %0, %5 : vector<64x128xf32>
    %c0_7 = arith.constant 0 : index
    %c0_8 = arith.constant 0 : index
    %c1 = arith.constant 1 : index
    %c0_9 = arith.constant 0 : index
    %7 = vector.load %arg1[%c0_7, %c0_8, %c1, %c0_9] : memref<1x9x9x512xbf16, #tpu.memory_space<vmem>>, vector<1x8x8x512xbf16>
    %8 = vector.shape_cast %7 : vector<1x8x8x512xbf16> to vector<64x512xbf16>
    %c1_10 = arith.constant 1 : index
    %c0_11 = arith.constant 0 : index
    %c0_12 = arith.constant 0 : index
    %9 = vector.load %arg2[%c1_10, %c0_11, %c0_12] : memref<4x512x128xbf16, #tpu.memory_space<vmem>>, vector<1x512x128xbf16>
    %10 = vector.shape_cast %9 : vector<1x512x128xbf16> to vector<512x128xbf16>
    %cst_13 = arith.constant dense<0.000000e+00> : vector<64x128xf32>
    %11 = tpu.matmul %8, %10, %cst_13 {dimension_numbers = #tpu.dot_dimension_numbers<[1], [0], [0], [1], [0, 0, 1, 1], [], []>} : vector<64x512xbf16>, vector<512x128xbf16>, vector<64x128xf32> -> vector<64x128xf32>
    %12 = arith.addf %6, %11 : vector<64x128xf32>
    %c0_14 = arith.constant 0 : index
    %c1_15 = arith.constant 1 : index
    %c0_16 = arith.constant 0 : index
    %c0_17 = arith.constant 0 : index
    %13 = vector.load %arg1[%c0_14, %c1_15, %c0_16, %c0_17] : memref<1x9x9x512xbf16, #tpu.memory_space<vmem>>, vector<1x8x8x512xbf16>
    %14 = vector.shape_cast %13 : vector<1x8x8x512xbf16> to vector<64x512xbf16>
    %c2 = arith.constant 2 : index
    %c0_18 = arith.constant 0 : index
    %c0_19 = arith.constant 0 : index
    %15 = vector.load %arg2[%c2, %c0_18, %c0_19] : memref<4x512x128xbf16, #tpu.memory_space<vmem>>, vector<1x512x128xbf16>
    %16 = vector.shape_cast %15 : vector<1x512x128xbf16> to vector<512x128xbf16>
    %cst_20 = arith.constant dense<0.000000e+00> : vector<64x128xf32>
    %17 = tpu.matmul %14, %16, %cst_20 {dimension_numbers = #tpu.dot_dimension_numbers<[1], [0], [0], [1], [0, 0, 1, 1], [], []>} : vector<64x512xbf16>, vector<512x128xbf16>, vector<64x128xf32> -> vector<64x128xf32>
    %18 = arith.addf %12, %17 : vector<64x128xf32>
    %c0_21 = arith.constant 0 : index
    %c1_22 = arith.constant 1 : index
    %c1_23 = arith.constant 1 : index
    %c0_24 = arith.constant 0 : index
    %19 = vector.load %arg1[%c0_21, %c1_22, %c1_23, %c0_24] : memref<1x9x9x512xbf16, #tpu.memory_space<vmem>>, vector<1x8x8x512xbf16>
    %20 = vector.shape_cast %19 : vector<1x8x8x512xbf16> to vector<64x512xbf16>
    %c3 = arith.constant 3 : index
    %c0_25 = arith.constant 0 : index
    %c0_26 = arith.constant 0 : index
    %21 = vector.load %arg2[%c3, %c0_25, %c0_26] : memref<4x512x128xbf16, #tpu.memory_space<vmem>>, vector<1x512x128xbf16>
    %22 = vector.shape_cast %21 : vector<1x512x128xbf16> to vector<512x128xbf16>
    %cst_27 = arith.constant dense<0.000000e+00> : vector<64x128xf32>
    %23 = tpu.matmul %20, %22, %cst_27 {dimension_numbers = #tpu.dot_dimension_numbers<[1], [0], [0], [1], [0, 0, 1, 1], [], []>} : vector<64x512xbf16>, vector<512x128xbf16>, vector<64x128xf32> -> vector<64x128xf32>
    %24 = arith.addf %18, %23 : vector<64x128xf32>
    %c0_28 = arith.constant 0 : index
    %c0_29 = arith.constant 0 : index
    %25 = vector.load %arg3[%c0_28, %c0_29] : memref<3x128xf32, #tpu.memory_space<vmem>>, vector<3x128xf32>
    %26 = vector.extract_strided_slice %25 {offsets = [0, 0], sizes = [1, 128], strides = [1, 1]} : vector<3x128xf32> to vector<1x128xf32>
    %27 = vector.broadcast %26 : vector<1x128xf32> to vector<64x128xf32>
    %28 = arith.addf %24, %27 : vector<64x128xf32>
    %cst_30 = arith.constant 0.000000e+00 : f32
    %29 = vector.broadcast %cst_30 : f32 to vector<64x128xf32>
    %30 = arith.cmpf oge, %28, %29 : vector<64x128xf32>
    %cst_31 = arith.constant 2.000000e-01 : f32
    %31 = vector.broadcast %cst_31 : f32 to vector<64x128xf32>
    %32 = arith.mulf %31, %28 : vector<64x128xf32>
    %33 = arith.select %30, %28, %32 : vector<64x128xi1>, vector<64x128xf32>
    %34 = vector.extract_strided_slice %25 {offsets = [1, 0], sizes = [1, 128], strides = [1, 1]} : vector<3x128xf32> to vector<1x128xf32>
    %35 = vector.broadcast %34 : vector<1x128xf32> to vector<64x128xf32>
    %36 = arith.mulf %33, %35 : vector<64x128xf32>
    %37 = vector.extract_strided_slice %25 {offsets = [2, 0], sizes = [1, 128], strides = [1, 1]} : vector<3x128xf32> to vector<1x128xf32>
    %38 = vector.broadcast %37 : vector<1x128xf32> to vector<64x128xf32>
    %39 = arith.addf %36, %38 : vector<64x128xf32>
    %40 = vector.shape_cast %39 : vector<64x128xf32> to vector<1x8x8x128xf32>
    %41 = arith.truncf %40 : vector<1x8x8x128xf32> to vector<1x8x8x128xbf16>
    %c0_32 = arith.constant 0 : index
    %c0_33 = arith.constant 0 : index
    %c0_34 = arith.constant 0 : index
    %c0_35 = arith.constant 0 : index
    %42 = vector.load %arg4[%c0_32, %c0_33, %c0_34, %c0_35] : memref<1x8x8x128xbf16, #tpu.memory_space<vmem>>, vector<1x8x8x128xbf16>
    tpu.vector_store %arg4[%c0_32, %c0_33, %c0_34, %c0_35], %41 {strides = array<i32>} : memref<1x8x8x128xbf16, #tpu.memory_space<vmem>>, vector<1x8x8x128xbf16>,
    return
  }
  func.func @transform_0(%arg0: i32) -> (i32, i32, i32, i32) {
    %c0_i32 = arith.constant 0 : i32
    %c0_i32_0 = arith.constant 0 : i32
    %c0_i32_1 = arith.constant 0 : i32
    %c0_i32_2 = arith.constant 0 : i32
    return %arg0, %c0_i32, %c0_i32_0, %c0_i32_1 : i32, i32, i32, i32
  }
  func.func @transform_1(%arg0: i32) -> (i32, i32, i32) {
    %c0_i32 = arith.constant 0 : i32
    %c0_i32_0 = arith.constant 0 : i32
    %c0_i32_1 = arith.constant 0 : i32
    %c0_i32_2 = arith.constant 0 : i32
    return %c0_i32, %c0_i32_0, %c0_i32_1 : i32, i32, i32
  }
  func.func @transform_2(%arg0: i32) -> (i32, i32) {
    %c0_i32 = arith.constant 0 : i32
    %c0_i32_0 = arith.constant 0 : i32
    %c0_i32_1 = arith.constant 0 : i32
    return %c0_i32, %c0_i32_0 : i32, i32
  }
  func.func @transform_3(%arg0: i32) -> (i32, i32, i32, i32) {
    %c0_i32 = arith.constant 0 : i32
    %c0_i32_0 = arith.constant 0 : i32
    %c0_i32_1 = arith.constant 0 : i32
    %c0_i32_2 = arith.constant 0 : i32
    return %arg0, %c0_i32, %c0_i32_0, %c0_i32_1 : i32, i32, i32, i32
  }
}

module attributes {stable_mosaic.version = 11 : i64} {
  func.func @_conv_block_kernel(%arg0: i32, %arg1: memref<1x5x5x512xbf16, #tpu.memory_space<vmem>>, %arg2: memref<4x512x128xbf16, #tpu.memory_space<vmem>>, %arg3: memref<3x128xf32, #tpu.memory_space<vmem>>, %arg4: memref<1x4x4x128xbf16, #tpu.memory_space<vmem>>) attributes {dimension_semantics = [#tpu.dimension_semantics<parallel>], iteration_bounds = array<i64: 2>, scalar_prefetch = 0 : i64, scratch_operands = 0 : i64, tpu.core_type = #tpu.core_type<tc>, window_params = [{transform_indices = @transform_0, window_bounds = array<i64: 1, 5, 5, 512>}, {pipeline_mode = #tpu.pipeline_mode<synchronous>, transform_indices = @transform_1, window_bounds = array<i64: 4, 512, 128>}, {pipeline_mode = #tpu.pipeline_mode<synchronous>, transform_indices = @transform_2, window_bounds = array<i64: 3, 128>}, {transform_indices = @transform_3, window_bounds = array<i64: 1, 4, 4, 128>}]} {
    %cst = arith.constant 0.000000e+00 : f32
    %0 = vector.broadcast %cst : f32 to vector<16x128xf32>
    %c0 = arith.constant 0 : index
    %c0_0 = arith.constant 0 : index
    %c0_1 = arith.constant 0 : index
    %c0_2 = arith.constant 0 : index
    %1 = vector.load %arg1[%c0, %c0_0, %c0_1, %c0_2] : memref<1x5x5x512xbf16, #tpu.memory_space<vmem>>, vector<1x4x4x512xbf16>
    %2 = vector.shape_cast %1 : vector<1x4x4x512xbf16> to vector<16x512xbf16>
    %c0_3 = arith.constant 0 : index
    %c0_4 = arith.constant 0 : index
    %c0_5 = arith.constant 0 : index
    %3 = vector.load %arg2[%c0_3, %c0_4, %c0_5] : memref<4x512x128xbf16, #tpu.memory_space<vmem>>, vector<1x512x128xbf16>
    %4 = vector.shape_cast %3 : vector<1x512x128xbf16> to vector<512x128xbf16>
    %cst_6 = arith.constant dense<0.000000e+00> : vector<16x128xf32>
    %5 = tpu.matmul %2, %4, %cst_6 {dimension_numbers = #tpu.dot_dimension_numbers<[1], [0], [0], [1], [0, 0, 1, 1], [], []>} : vector<16x512xbf16>, vector<512x128xbf16>, vector<16x128xf32> -> vector<16x128xf32>
    %6 = arith.addf %0, %5 : vector<16x128xf32>
    %c0_7 = arith.constant 0 : index
    %c0_8 = arith.constant 0 : index
    %c1 = arith.constant 1 : index
    %c0_9 = arith.constant 0 : index
    %7 = vector.load %arg1[%c0_7, %c0_8, %c1, %c0_9] : memref<1x5x5x512xbf16, #tpu.memory_space<vmem>>, vector<1x4x4x512xbf16>
    %8 = vector.shape_cast %7 : vector<1x4x4x512xbf16> to vector<16x512xbf16>
    %c1_10 = arith.constant 1 : index
    %c0_11 = arith.constant 0 : index
    %c0_12 = arith.constant 0 : index
    %9 = vector.load %arg2[%c1_10, %c0_11, %c0_12] : memref<4x512x128xbf16, #tpu.memory_space<vmem>>, vector<1x512x128xbf16>
    %10 = vector.shape_cast %9 : vector<1x512x128xbf16> to vector<512x128xbf16>
    %cst_13 = arith.constant dense<0.000000e+00> : vector<16x128xf32>
    %11 = tpu.matmul %8, %10, %cst_13 {dimension_numbers = #tpu.dot_dimension_numbers<[1], [0], [0], [1], [0, 0, 1, 1], [], []>} : vector<16x512xbf16>, vector<512x128xbf16>, vector<16x128xf32> -> vector<16x128xf32>
    %12 = arith.addf %6, %11 : vector<16x128xf32>
    %c0_14 = arith.constant 0 : index
    %c1_15 = arith.constant 1 : index
    %c0_16 = arith.constant 0 : index
    %c0_17 = arith.constant 0 : index
    %13 = vector.load %arg1[%c0_14, %c1_15, %c0_16, %c0_17] : memref<1x5x5x512xbf16, #tpu.memory_space<vmem>>, vector<1x4x4x512xbf16>
    %14 = vector.shape_cast %13 : vector<1x4x4x512xbf16> to vector<16x512xbf16>
    %c2 = arith.constant 2 : index
    %c0_18 = arith.constant 0 : index
    %c0_19 = arith.constant 0 : index
    %15 = vector.load %arg2[%c2, %c0_18, %c0_19] : memref<4x512x128xbf16, #tpu.memory_space<vmem>>, vector<1x512x128xbf16>
    %16 = vector.shape_cast %15 : vector<1x512x128xbf16> to vector<512x128xbf16>
    %cst_20 = arith.constant dense<0.000000e+00> : vector<16x128xf32>
    %17 = tpu.matmul %14, %16, %cst_20 {dimension_numbers = #tpu.dot_dimension_numbers<[1], [0], [0], [1], [0, 0, 1, 1], [], []>} : vector<16x512xbf16>, vector<512x128xbf16>, vector<16x128xf32> -> vector<16x128xf32>
    %18 = arith.addf %12, %17 : vector<16x128xf32>
    %c0_21 = arith.constant 0 : index
    %c1_22 = arith.constant 1 : index
    %c1_23 = arith.constant 1 : index
    %c0_24 = arith.constant 0 : index
    %19 = vector.load %arg1[%c0_21, %c1_22, %c1_23, %c0_24] : memref<1x5x5x512xbf16, #tpu.memory_space<vmem>>, vector<1x4x4x512xbf16>
    %20 = vector.shape_cast %19 : vector<1x4x4x512xbf16> to vector<16x512xbf16>
    %c3 = arith.constant 3 : index
    %c0_25 = arith.constant 0 : index
    %c0_26 = arith.constant 0 : index
    %21 = vector.load %arg2[%c3, %c0_25, %c0_26] : memref<4x512x128xbf16, #tpu.memory_space<vmem>>, vector<1x512x128xbf16>
    %22 = vector.shape_cast %21 : vector<1x512x128xbf16> to vector<512x128xbf16>
    %cst_27 = arith.constant dense<0.000000e+00> : vector<16x128xf32>
    %23 = tpu.matmul %20, %22, %cst_27 {dimension_numbers = #tpu.dot_dimension_numbers<[1], [0], [0], [1], [0, 0, 1, 1], [], []>} : vector<16x512xbf16>, vector<512x128xbf16>, vector<16x128xf32> -> vector<16x128xf32>
    %24 = arith.addf %18, %23 : vector<16x128xf32>
    %c0_28 = arith.constant 0 : index
    %c0_29 = arith.constant 0 : index
    %25 = vector.load %arg3[%c0_28, %c0_29] : memref<3x128xf32, #tpu.memory_space<vmem>>, vector<3x128xf32>
    %26 = vector.extract_strided_slice %25 {offsets = [0, 0], sizes = [1, 128], strides = [1, 1]} : vector<3x128xf32> to vector<1x128xf32>
    %27 = vector.broadcast %26 : vector<1x128xf32> to vector<16x128xf32>
    %28 = arith.addf %24, %27 : vector<16x128xf32>
    %cst_30 = arith.constant 0.000000e+00 : f32
    %29 = vector.broadcast %cst_30 : f32 to vector<16x128xf32>
    %30 = arith.cmpf oge, %28, %29 : vector<16x128xf32>
    %cst_31 = arith.constant 2.000000e-01 : f32
    %31 = vector.broadcast %cst_31 : f32 to vector<16x128xf32>
    %32 = arith.mulf %31, %28 : vector<16x128xf32>
    %33 = arith.select %30, %28, %32 : vector<16x128xi1>, vector<16x128xf32>
    %34 = vector.extract_strided_slice %25 {offsets = [1, 0], sizes = [1, 128], strides = [1, 1]} : vector<3x128xf32> to vector<1x128xf32>
    %35 = vector.broadcast %34 : vector<1x128xf32> to vector<16x128xf32>
    %36 = arith.mulf %33, %35 : vector<16x128xf32>
    %37 = vector.extract_strided_slice %25 {offsets = [2, 0], sizes = [1, 128], strides = [1, 1]} : vector<3x128xf32> to vector<1x128xf32>
    %38 = vector.broadcast %37 : vector<1x128xf32> to vector<16x128xf32>
    %39 = arith.addf %36, %38 : vector<16x128xf32>
    %40 = vector.shape_cast %39 : vector<16x128xf32> to vector<1x4x4x128xf32>
    %41 = arith.truncf %40 : vector<1x4x4x128xf32> to vector<1x4x4x128xbf16>
    %c0_32 = arith.constant 0 : index
    %c0_33 = arith.constant 0 : index
    %c0_34 = arith.constant 0 : index
    %c0_35 = arith.constant 0 : index
    %42 = vector.load %arg4[%c0_32, %c0_33, %c0_34, %c0_35] : memref<1x4x4x128xbf16, #tpu.memory_space<vmem>>, vector<1x4x4x128xbf16>
    tpu.vector_store %arg4[%c0_32, %c0_33, %c0_34, %c0_35], %41 {strides = array<i32>} : memref<1x4x4x128xbf16, #tpu.memory_space<vmem>>, vector<1x4x4x128xbf16>,
    return
  }
  func.func @transform_0(%arg0: i32) -> (i32, i32, i32, i32) {
    %c0_i32 = arith.constant 0 : i32
    %c0_i32_0 = arith.constant 0 : i32
    %c0_i32_1 = arith.constant 0 : i32
    %c0_i32_2 = arith.constant 0 : i32
    return %arg0, %c0_i32, %c0_i32_0, %c0_i32_1 : i32, i32, i32, i32
  }
  func.func @transform_1(%arg0: i32) -> (i32, i32, i32) {
    %c0_i32 = arith.constant 0 : i32
    %c0_i32_0 = arith.constant 0 : i32
    %c0_i32_1 = arith.constant 0 : i32
    %c0_i32_2 = arith.constant 0 : i32
    return %c0_i32, %c0_i32_0, %c0_i32_1 : i32, i32, i32
  }
  func.func @transform_2(%arg0: i32) -> (i32, i32) {
    %c0_i32 = arith.constant 0 : i32
    %c0_i32_0 = arith.constant 0 : i32
    %c0_i32_1 = arith.constant 0 : i32
    return %c0_i32, %c0_i32_0 : i32, i32
  }
  func.func @transform_3(%arg0: i32) -> (i32, i32, i32, i32) {
    %c0_i32 = arith.constant 0 : i32
    %c0_i32_0 = arith.constant 0 : i32
    %c0_i32_1 = arith.constant 0 : i32
    %c0_i32_2 = arith.constant 0 : i32
    return %arg0, %c0_i32, %c0_i32_0, %c0_i32_1 : i32, i32, i32, i32
  }
}

module attributes {stable_mosaic.version = 11 : i64} {
  func.func @_conv_block_kernel(%arg0: i32, %arg1: memref<1x3x3x512xbf16, #tpu.memory_space<vmem>>, %arg2: memref<4x512x128xbf16, #tpu.memory_space<vmem>>, %arg3: memref<3x128xf32, #tpu.memory_space<vmem>>, %arg4: memref<1x2x2x128xbf16, #tpu.memory_space<vmem>>) attributes {dimension_semantics = [#tpu.dimension_semantics<parallel>], iteration_bounds = array<i64: 2>, scalar_prefetch = 0 : i64, scratch_operands = 0 : i64, tpu.core_type = #tpu.core_type<tc>, window_params = [{transform_indices = @transform_0, window_bounds = array<i64: 1, 3, 3, 512>}, {pipeline_mode = #tpu.pipeline_mode<synchronous>, transform_indices = @transform_1, window_bounds = array<i64: 4, 512, 128>}, {pipeline_mode = #tpu.pipeline_mode<synchronous>, transform_indices = @transform_2, window_bounds = array<i64: 3, 128>}, {transform_indices = @transform_3, window_bounds = array<i64: 1, 2, 2, 128>}]} {
    %cst = arith.constant 0.000000e+00 : f32
    %0 = vector.broadcast %cst : f32 to vector<4x128xf32>
    %c0 = arith.constant 0 : index
    %c0_0 = arith.constant 0 : index
    %c0_1 = arith.constant 0 : index
    %c0_2 = arith.constant 0 : index
    %1 = vector.load %arg1[%c0, %c0_0, %c0_1, %c0_2] : memref<1x3x3x512xbf16, #tpu.memory_space<vmem>>, vector<1x2x2x512xbf16>
    %2 = vector.shape_cast %1 : vector<1x2x2x512xbf16> to vector<4x512xbf16>
    %c0_3 = arith.constant 0 : index
    %c0_4 = arith.constant 0 : index
    %c0_5 = arith.constant 0 : index
    %3 = vector.load %arg2[%c0_3, %c0_4, %c0_5] : memref<4x512x128xbf16, #tpu.memory_space<vmem>>, vector<1x512x128xbf16>
    %4 = vector.shape_cast %3 : vector<1x512x128xbf16> to vector<512x128xbf16>
    %cst_6 = arith.constant dense<0.000000e+00> : vector<4x128xf32>
    %5 = tpu.matmul %2, %4, %cst_6 {dimension_numbers = #tpu.dot_dimension_numbers<[1], [0], [0], [1], [0, 0, 1, 1], [], []>} : vector<4x512xbf16>, vector<512x128xbf16>, vector<4x128xf32> -> vector<4x128xf32>
    %6 = arith.addf %0, %5 : vector<4x128xf32>
    %c0_7 = arith.constant 0 : index
    %c0_8 = arith.constant 0 : index
    %c1 = arith.constant 1 : index
    %c0_9 = arith.constant 0 : index
    %7 = vector.load %arg1[%c0_7, %c0_8, %c1, %c0_9] : memref<1x3x3x512xbf16, #tpu.memory_space<vmem>>, vector<1x2x2x512xbf16>
    %8 = vector.shape_cast %7 : vector<1x2x2x512xbf16> to vector<4x512xbf16>
    %c1_10 = arith.constant 1 : index
    %c0_11 = arith.constant 0 : index
    %c0_12 = arith.constant 0 : index
    %9 = vector.load %arg2[%c1_10, %c0_11, %c0_12] : memref<4x512x128xbf16, #tpu.memory_space<vmem>>, vector<1x512x128xbf16>
    %10 = vector.shape_cast %9 : vector<1x512x128xbf16> to vector<512x128xbf16>
    %cst_13 = arith.constant dense<0.000000e+00> : vector<4x128xf32>
    %11 = tpu.matmul %8, %10, %cst_13 {dimension_numbers = #tpu.dot_dimension_numbers<[1], [0], [0], [1], [0, 0, 1, 1], [], []>} : vector<4x512xbf16>, vector<512x128xbf16>, vector<4x128xf32> -> vector<4x128xf32>
    %12 = arith.addf %6, %11 : vector<4x128xf32>
    %c0_14 = arith.constant 0 : index
    %c1_15 = arith.constant 1 : index
    %c0_16 = arith.constant 0 : index
    %c0_17 = arith.constant 0 : index
    %13 = vector.load %arg1[%c0_14, %c1_15, %c0_16, %c0_17] : memref<1x3x3x512xbf16, #tpu.memory_space<vmem>>, vector<1x2x2x512xbf16>
    %14 = vector.shape_cast %13 : vector<1x2x2x512xbf16> to vector<4x512xbf16>
    %c2 = arith.constant 2 : index
    %c0_18 = arith.constant 0 : index
    %c0_19 = arith.constant 0 : index
    %15 = vector.load %arg2[%c2, %c0_18, %c0_19] : memref<4x512x128xbf16, #tpu.memory_space<vmem>>, vector<1x512x128xbf16>
    %16 = vector.shape_cast %15 : vector<1x512x128xbf16> to vector<512x128xbf16>
    %cst_20 = arith.constant dense<0.000000e+00> : vector<4x128xf32>
    %17 = tpu.matmul %14, %16, %cst_20 {dimension_numbers = #tpu.dot_dimension_numbers<[1], [0], [0], [1], [0, 0, 1, 1], [], []>} : vector<4x512xbf16>, vector<512x128xbf16>, vector<4x128xf32> -> vector<4x128xf32>
    %18 = arith.addf %12, %17 : vector<4x128xf32>
    %c0_21 = arith.constant 0 : index
    %c1_22 = arith.constant 1 : index
    %c1_23 = arith.constant 1 : index
    %c0_24 = arith.constant 0 : index
    %19 = vector.load %arg1[%c0_21, %c1_22, %c1_23, %c0_24] : memref<1x3x3x512xbf16, #tpu.memory_space<vmem>>, vector<1x2x2x512xbf16>
    %20 = vector.shape_cast %19 : vector<1x2x2x512xbf16> to vector<4x512xbf16>
    %c3 = arith.constant 3 : index
    %c0_25 = arith.constant 0 : index
    %c0_26 = arith.constant 0 : index
    %21 = vector.load %arg2[%c3, %c0_25, %c0_26] : memref<4x512x128xbf16, #tpu.memory_space<vmem>>, vector<1x512x128xbf16>
    %22 = vector.shape_cast %21 : vector<1x512x128xbf16> to vector<512x128xbf16>
    %cst_27 = arith.constant dense<0.000000e+00> : vector<4x128xf32>
    %23 = tpu.matmul %20, %22, %cst_27 {dimension_numbers = #tpu.dot_dimension_numbers<[1], [0], [0], [1], [0, 0, 1, 1], [], []>} : vector<4x512xbf16>, vector<512x128xbf16>, vector<4x128xf32> -> vector<4x128xf32>
    %24 = arith.addf %18, %23 : vector<4x128xf32>
    %c0_28 = arith.constant 0 : index
    %c0_29 = arith.constant 0 : index
    %25 = vector.load %arg3[%c0_28, %c0_29] : memref<3x128xf32, #tpu.memory_space<vmem>>, vector<3x128xf32>
    %26 = vector.extract_strided_slice %25 {offsets = [0, 0], sizes = [1, 128], strides = [1, 1]} : vector<3x128xf32> to vector<1x128xf32>
    %27 = vector.broadcast %26 : vector<1x128xf32> to vector<4x128xf32>
    %28 = arith.addf %24, %27 : vector<4x128xf32>
    %cst_30 = arith.constant 0.000000e+00 : f32
    %29 = vector.broadcast %cst_30 : f32 to vector<4x128xf32>
    %30 = arith.cmpf oge, %28, %29 : vector<4x128xf32>
    %cst_31 = arith.constant 2.000000e-01 : f32
    %31 = vector.broadcast %cst_31 : f32 to vector<4x128xf32>
    %32 = arith.mulf %31, %28 : vector<4x128xf32>
    %33 = arith.select %30, %28, %32 : vector<4x128xi1>, vector<4x128xf32>
    %34 = vector.extract_strided_slice %25 {offsets = [1, 0], sizes = [1, 128], strides = [1, 1]} : vector<3x128xf32> to vector<1x128xf32>
    %35 = vector.broadcast %34 : vector<1x128xf32> to vector<4x128xf32>
    %36 = arith.mulf %33, %35 : vector<4x128xf32>
    %37 = vector.extract_strided_slice %25 {offsets = [2, 0], sizes = [1, 128], strides = [1, 1]} : vector<3x128xf32> to vector<1x128xf32>
    %38 = vector.broadcast %37 : vector<1x128xf32> to vector<4x128xf32>
    %39 = arith.addf %36, %38 : vector<4x128xf32>
    %40 = vector.shape_cast %39 : vector<4x128xf32> to vector<1x2x2x128xf32>
    %41 = arith.truncf %40 : vector<1x2x2x128xf32> to vector<1x2x2x128xbf16>
    %c0_32 = arith.constant 0 : index
    %c0_33 = arith.constant 0 : index
    %c0_34 = arith.constant 0 : index
    %c0_35 = arith.constant 0 : index
    %42 = vector.load %arg4[%c0_32, %c0_33, %c0_34, %c0_35] : memref<1x2x2x128xbf16, #tpu.memory_space<vmem>>, vector<1x2x2x128xbf16>
    tpu.vector_store %arg4[%c0_32, %c0_33, %c0_34, %c0_35], %41 {strides = array<i32>} : memref<1x2x2x128xbf16, #tpu.memory_space<vmem>>, vector<1x2x2x128xbf16>,
    return
  }
  func.func @transform_0(%arg0: i32) -> (i32, i32, i32, i32) {
    %c0_i32 = arith.constant 0 : i32
    %c0_i32_0 = arith.constant 0 : i32
    %c0_i32_1 = arith.constant 0 : i32
    %c0_i32_2 = arith.constant 0 : i32
    return %arg0, %c0_i32, %c0_i32_0, %c0_i32_1 : i32, i32, i32, i32
  }
  func.func @transform_1(%arg0: i32) -> (i32, i32, i32) {
    %c0_i32 = arith.constant 0 : i32
    %c0_i32_0 = arith.constant 0 : i32
    %c0_i32_1 = arith.constant 0 : i32
    %c0_i32_2 = arith.constant 0 : i32
    return %c0_i32, %c0_i32_0, %c0_i32_1 : i32, i32, i32
  }
  func.func @transform_2(%arg0: i32) -> (i32, i32) {
    %c0_i32 = arith.constant 0 : i32
    %c0_i32_0 = arith.constant 0 : i32
    %c0_i32_1 = arith.constant 0 : i32
    return %c0_i32, %c0_i32_0 : i32, i32
  }
  func.func @transform_3(%arg0: i32) -> (i32, i32, i32, i32) {
    %c0_i32 = arith.constant 0 : i32
    %c0_i32_0 = arith.constant 0 : i32
    %c0_i32_1 = arith.constant 0 : i32
    %c0_i32_2 = arith.constant 0 : i32
    return %arg0, %c0_i32, %c0_i32_0, %c0_i32_1 : i32, i32, i32, i32
  }
}

module attributes {stable_mosaic.version = 11 : i64} {
  func.func @_conv_block_kernel(%arg0: i32, %arg1: memref<1x2x2x512xbf16, #tpu.memory_space<vmem>>, %arg2: memref<4x512x128xbf16, #tpu.memory_space<vmem>>, %arg3: memref<3x128xf32, #tpu.memory_space<vmem>>, %arg4: memref<1x1x1x128xbf16, #tpu.memory_space<vmem>>) attributes {dimension_semantics = [#tpu.dimension_semantics<parallel>], iteration_bounds = array<i64: 2>, scalar_prefetch = 0 : i64, scratch_operands = 0 : i64, tpu.core_type = #tpu.core_type<tc>, window_params = [{transform_indices = @transform_0, window_bounds = array<i64: 1, 2, 2, 512>}, {pipeline_mode = #tpu.pipeline_mode<synchronous>, transform_indices = @transform_1, window_bounds = array<i64: 4, 512, 128>}, {pipeline_mode = #tpu.pipeline_mode<synchronous>, transform_indices = @transform_2, window_bounds = array<i64: 3, 128>}, {transform_indices = @transform_3, window_bounds = array<i64: 1, 1, 1, 128>}]} {
    %cst = arith.constant 0.000000e+00 : f32
    %0 = vector.broadcast %cst : f32 to vector<1x128xf32>
    %c0 = arith.constant 0 : index
    %c0_0 = arith.constant 0 : index
    %c0_1 = arith.constant 0 : index
    %c0_2 = arith.constant 0 : index
    %1 = vector.load %arg1[%c0, %c0_0, %c0_1, %c0_2] : memref<1x2x2x512xbf16, #tpu.memory_space<vmem>>, vector<1x1x1x512xbf16>
    %2 = vector.shape_cast %1 : vector<1x1x1x512xbf16> to vector<1x512xbf16>
    %c0_3 = arith.constant 0 : index
    %c0_4 = arith.constant 0 : index
    %c0_5 = arith.constant 0 : index
    %3 = vector.load %arg2[%c0_3, %c0_4, %c0_5] : memref<4x512x128xbf16, #tpu.memory_space<vmem>>, vector<1x512x128xbf16>
    %4 = vector.shape_cast %3 : vector<1x512x128xbf16> to vector<512x128xbf16>
    %cst_6 = arith.constant dense<0.000000e+00> : vector<1x128xf32>
    %5 = tpu.matmul %2, %4, %cst_6 {dimension_numbers = #tpu.dot_dimension_numbers<[1], [0], [0], [1], [0, 0, 1, 1], [], []>} : vector<1x512xbf16>, vector<512x128xbf16>, vector<1x128xf32> -> vector<1x128xf32>
    %6 = arith.addf %0, %5 : vector<1x128xf32>
    %c0_7 = arith.constant 0 : index
    %c0_8 = arith.constant 0 : index
    %c1 = arith.constant 1 : index
    %c0_9 = arith.constant 0 : index
    %7 = vector.load %arg1[%c0_7, %c0_8, %c1, %c0_9] : memref<1x2x2x512xbf16, #tpu.memory_space<vmem>>, vector<1x1x1x512xbf16>
    %8 = vector.shape_cast %7 : vector<1x1x1x512xbf16> to vector<1x512xbf16>
    %c1_10 = arith.constant 1 : index
    %c0_11 = arith.constant 0 : index
    %c0_12 = arith.constant 0 : index
    %9 = vector.load %arg2[%c1_10, %c0_11, %c0_12] : memref<4x512x128xbf16, #tpu.memory_space<vmem>>, vector<1x512x128xbf16>
    %10 = vector.shape_cast %9 : vector<1x512x128xbf16> to vector<512x128xbf16>
    %cst_13 = arith.constant dense<0.000000e+00> : vector<1x128xf32>
    %11 = tpu.matmul %8, %10, %cst_13 {dimension_numbers = #tpu.dot_dimension_numbers<[1], [0], [0], [1], [0, 0, 1, 1], [], []>} : vector<1x512xbf16>, vector<512x128xbf16>, vector<1x128xf32> -> vector<1x128xf32>
    %12 = arith.addf %6, %11 : vector<1x128xf32>
    %c0_14 = arith.constant 0 : index
    %c1_15 = arith.constant 1 : index
    %c0_16 = arith.constant 0 : index
    %c0_17 = arith.constant 0 : index
    %13 = vector.load %arg1[%c0_14, %c1_15, %c0_16, %c0_17] : memref<1x2x2x512xbf16, #tpu.memory_space<vmem>>, vector<1x1x1x512xbf16>
    %14 = vector.shape_cast %13 : vector<1x1x1x512xbf16> to vector<1x512xbf16>
    %c2 = arith.constant 2 : index
    %c0_18 = arith.constant 0 : index
    %c0_19 = arith.constant 0 : index
    %15 = vector.load %arg2[%c2, %c0_18, %c0_19] : memref<4x512x128xbf16, #tpu.memory_space<vmem>>, vector<1x512x128xbf16>
    %16 = vector.shape_cast %15 : vector<1x512x128xbf16> to vector<512x128xbf16>
    %cst_20 = arith.constant dense<0.000000e+00> : vector<1x128xf32>
    %17 = tpu.matmul %14, %16, %cst_20 {dimension_numbers = #tpu.dot_dimension_numbers<[1], [0], [0], [1], [0, 0, 1, 1], [], []>} : vector<1x512xbf16>, vector<512x128xbf16>, vector<1x128xf32> -> vector<1x128xf32>
    %18 = arith.addf %12, %17 : vector<1x128xf32>
    %c0_21 = arith.constant 0 : index
    %c1_22 = arith.constant 1 : index
    %c1_23 = arith.constant 1 : index
    %c0_24 = arith.constant 0 : index
    %19 = vector.load %arg1[%c0_21, %c1_22, %c1_23, %c0_24] : memref<1x2x2x512xbf16, #tpu.memory_space<vmem>>, vector<1x1x1x512xbf16>
    %20 = vector.shape_cast %19 : vector<1x1x1x512xbf16> to vector<1x512xbf16>
    %c3 = arith.constant 3 : index
    %c0_25 = arith.constant 0 : index
    %c0_26 = arith.constant 0 : index
    %21 = vector.load %arg2[%c3, %c0_25, %c0_26] : memref<4x512x128xbf16, #tpu.memory_space<vmem>>, vector<1x512x128xbf16>
    %22 = vector.shape_cast %21 : vector<1x512x128xbf16> to vector<512x128xbf16>
    %cst_27 = arith.constant dense<0.000000e+00> : vector<1x128xf32>
    %23 = tpu.matmul %20, %22, %cst_27 {dimension_numbers = #tpu.dot_dimension_numbers<[1], [0], [0], [1], [0, 0, 1, 1], [], []>} : vector<1x512xbf16>, vector<512x128xbf16>, vector<1x128xf32> -> vector<1x128xf32>
    %24 = arith.addf %18, %23 : vector<1x128xf32>
    %c0_28 = arith.constant 0 : index
    %c0_29 = arith.constant 0 : index
    %25 = vector.load %arg3[%c0_28, %c0_29] : memref<3x128xf32, #tpu.memory_space<vmem>>, vector<3x128xf32>
    %26 = vector.extract_strided_slice %25 {offsets = [0, 0], sizes = [1, 128], strides = [1, 1]} : vector<3x128xf32> to vector<1x128xf32>
    %27 = arith.addf %24, %26 : vector<1x128xf32>
    %cst_30 = arith.constant 0.000000e+00 : f32
    %28 = vector.broadcast %cst_30 : f32 to vector<1x128xf32>
    %29 = arith.cmpf oge, %27, %28 : vector<1x128xf32>
    %cst_31 = arith.constant 2.000000e-01 : f32
    %30 = vector.broadcast %cst_31 : f32 to vector<1x128xf32>
    %31 = arith.mulf %30, %27 : vector<1x128xf32>
    %32 = arith.select %29, %27, %31 : vector<1x128xi1>, vector<1x128xf32>
    %33 = vector.extract_strided_slice %25 {offsets = [1, 0], sizes = [1, 128], strides = [1, 1]} : vector<3x128xf32> to vector<1x128xf32>
    %34 = arith.mulf %32, %33 : vector<1x128xf32>
    %35 = vector.extract_strided_slice %25 {offsets = [2, 0], sizes = [1, 128], strides = [1, 1]} : vector<3x128xf32> to vector<1x128xf32>
    %36 = arith.addf %34, %35 : vector<1x128xf32>
    %37 = vector.shape_cast %36 : vector<1x128xf32> to vector<1x1x1x128xf32>
    %38 = arith.truncf %37 : vector<1x1x1x128xf32> to vector<1x1x1x128xbf16>
    %c0_32 = arith.constant 0 : index
    %c0_33 = arith.constant 0 : index
    %c0_34 = arith.constant 0 : index
    %c0_35 = arith.constant 0 : index
    %39 = vector.load %arg4[%c0_32, %c0_33, %c0_34, %c0_35] : memref<1x1x1x128xbf16, #tpu.memory_space<vmem>>, vector<1x1x1x128xbf16>
    tpu.vector_store %arg4[%c0_32, %c0_33, %c0_34, %c0_35], %38 {strides = array<i32>} : memref<1x1x1x128xbf16, #tpu.memory_space<vmem>>, vector<1x1x1x128xbf16>,
    return
  }
  func.func @transform_0(%arg0: i32) -> (i32, i32, i32, i32) {
    %c0_i32 = arith.constant 0 : i32
    %c0_i32_0 = arith.constant 0 : i32
    %c0_i32_1 = arith.constant 0 : i32
    %c0_i32_2 = arith.constant 0 : i32
    return %arg0, %c0_i32, %c0_i32_0, %c0_i32_1 : i32, i32, i32, i32
  }
  func.func @transform_1(%arg0: i32) -> (i32, i32, i32) {
    %c0_i32 = arith.constant 0 : i32
    %c0_i32_0 = arith.constant 0 : i32
    %c0_i32_1 = arith.constant 0 : i32
    %c0_i32_2 = arith.constant 0 : i32
    return %c0_i32, %c0_i32_0, %c0_i32_1 : i32, i32, i32
  }
  func.func @transform_2(%arg0: i32) -> (i32, i32) {
    %c0_i32 = arith.constant 0 : i32
    %c0_i32_0 = arith.constant 0 : i32
    %c0_i32_1 = arith.constant 0 : i32
    return %c0_i32, %c0_i32_0 : i32, i32
  }
  func.func @transform_3(%arg0: i32) -> (i32, i32, i32, i32) {
    %c0_i32 = arith.constant 0 : i32
    %c0_i32_0 = arith.constant 0 : i32
    %c0_i32_1 = arith.constant 0 : i32
    %c0_i32_2 = arith.constant 0 : i32
    return %arg0, %c0_i32, %c0_i32_0, %c0_i32_1 : i32, i32, i32, i32
  }
}

</mosaic_0001>

<llo_original>
// kernel: discriminator_forward.4
$region0: #{discriminator_forward.4}
  #allocation0 [shape = 'u32[]', space=smem, size = 0x4, offset = 0x4, fixed_abs, tag = 'smem constant byte address 0x4 - core index']
  #allocation1 [shape = 'u32[144,128]{1,0:T(1,128)}', space=vmem, size = 0x12000, scoped, tag = 'internal scratch']
  %s0 = inlined_call_operand.vmem [shape: bf16[2,9,9,512], index: 0, kind: input, shape index: {}]
  %s1 = inlined_call_operand.vmem [shape: bf16[4,512,128], index: 1, kind: input, shape index: {}]
  %s2 = inlined_call_operand.vmem [shape: f32[3,128], index: 2, kind: input, shape index: {}]
  %s3 = inlined_call_operand.vmem [shape: bf16[2,8,8,128], index: 3, kind: output, shape index: {}]
  %s4 = sld [smem:[#allocation0]]
  $region45: #{discriminator_forward.4} parent=0
    _
  %s6 = ssub.s32 1, %s4
  %s7 = scalar_select 0, %s6, %s4
  loop: start=0, step=1, limit=4
  $region2: #{discriminator_forward.4} parent=0 // loop_pre_header
    _
  $region3: #{discriminator_forward.4} parent=0 // loop_header
    %s9 = sphi 0, %s13
    %p10 = scmp.ge.s32.totalorder %s9, 4
    %s19 = sphi 0, %s21
    %s22 = sphi 0, %s19
    %s23 = sphi 0, %s22
    %s39 = sphi 0, %s23
    %s43 = sphi 0, %s43
    %s45 = sphi 0, %s43
    %s46 = sphi 0, %s45
    %s60 = sphi 0, %s46
    %s64 = sphi 0, %s64
    %s66 = sphi 0, %s64
    %s67 = sphi 0, %s66
    %s81 = sphi 0, %s67
    %s87 = sphi 0, %s89
    %s90 = sphi 0, %s87
    %s91 = sphi 0, %s90
    %s107 = sphi 0, %s91
  $region4: #{discriminator_forward.4} parent=0 // loop_header_branch
    %12 = sbr.rel (%p10) target = $region8
  $region5: #{discriminator_forward.4} parent=0 // loop_body
    %s14 = ssub.s32 %s9, 1
    %s15 = ssub.s32 %s9, 2
    %s16 = sadd.s32 %s9, 1
    %s17 = ssub.s32 %s9, %s16
    %p18 = scmp.eq.s32.totalorder %s17, 0
    %s20 = sadd.s32 %s19, 1
    %s21 = scalar_select %p18, %s19, %s20
    %p24 = pneg %p18
    %p25 = scmp.eq.s32.totalorder %s9, 1
    %p26 = por %p24, %p25
    %p27 = scmp.ne.s32.totalorder %s19, %s22
    %p28 = scmp.eq.s32.totalorder %s9, 0
    %p29 = por %p27, %p28
    %p30 = scmp.ne.s32.totalorder %s19, %s22
    %p31 = scmp.eq.s32.totalorder %s14, 1
    %p32 = por %p30, %p31
    %p33 = scmp.ne.s32.totalorder %s22, %s23
    %p34 = scmp.eq.s32.totalorder %s14, 0
    %p35 = por %p33, %p34
    %p36 = scmp.ne.s32.totalorder %s22, %s23
    %p37 = scmp.eq.s32.totalorder %s15, 1
    %p38 = por %p36, %p37
    %p40 = scmp.ne.s32.totalorder %s23, %s39
    %p41 = scmp.eq.s32.totalorder %s15, 0
    %p42 = por %p40, %p41
    %s44 = sadd.s32 %s43, 1
    %p47 = scmp.eq.s32.totalorder %s9, 1
    %p48 = scmp.ne.s32.totalorder %s43, %s45
    %p49 = scmp.eq.s32.totalorder %s9, 0
    %p50 = por %p48, %p49
    %p51 = scmp.ne.s32.totalorder %s43, %s45
    %p52 = scmp.eq.s32.totalorder %s14, 1
    %p53 = por %p51, %p52
    %p54 = scmp.ne.s32.totalorder %s45, %s46
    %p55 = scmp.eq.s32.totalorder %s14, 0
    %p56 = por %p54, %p55
    %p57 = scmp.ne.s32.totalorder %s45, %s46
    %p58 = scmp.eq.s32.totalorder %s15, 1
    %p59 = por %p57, %p58
    %p61 = scmp.ne.s32.totalorder %s46, %s60
    %p62 = scmp.eq.s32.totalorder %s15, 0
    %p63 = por %p61, %p62
    %s65 = sadd.s32 %s64, 1
    %p68 = scmp.eq.s32.totalorder %s9, 1
    %p69 = scmp.ne.s32.totalorder %s64, %s66
    %p70 = scmp.eq.s32.totalorder %s9, 0
    %p71 = por %p69, %p70
    %p72 = scmp.ne.s32.totalorder %s64, %s66
    %p73 = scmp.eq.s32.totalorder %s14, 1
    %p74 = por %p72, %p73
    %p75 = scmp.ne.s32.totalorder %s66, %s67
    %p76 = scmp.eq.s32.totalorder %s14, 0
    %p77 = por %p75, %p76
    %p78 = scmp.ne.s32.totalorder %s66, %s67
    %p79 = scmp.eq.s32.totalorder %s15, 1
    %p80 = por %p78, %p79
    %p82 = scmp.ne.s32.totalorder %s67, %s81
    %p83 = scmp.eq.s32.totalorder %s15, 0
    %p84 = por %p82, %p83
    %s85 = ssub.s32 %s9, %s16
    %p86 = scmp.eq.s32.totalorder %s85, 0
    %s88 = sadd.s32 %s87, 1
    %s89 = scalar_select %p86, %s87, %s88
    %p92 = pneg %p86
    %p93 = scmp.eq.s32.totalorder %s9, 1
    %p94 = por %p92, %p93
    %p95 = scmp.ne.s32.totalorder %s87, %s90
    %p96 = scmp.eq.s32.totalorder %s9, 0
    %p97 = por %p95, %p96
    %p98 = scmp.ne.s32.totalorder %s87, %s90
    %p99 = scmp.eq.s32.totalorder %s14, 1
    %p100 = por %p98, %p99
    %p101 = scmp.ne.s32.totalorder %s90, %s91
    %p102 = scmp.eq.s32.totalorder %s14, 0
    %p103 = por %p101, %p102
    %p104 = scmp.ne.s32.totalorder %s90, %s91
    %p105 = scmp.eq.s32.totalorder %s15, 1
    %p106 = por %p104, %p105
    %p108 = scmp.ne.s32.totalorder %s91, %s107
    %p109 = scmp.eq.s32.totalorder %s15, 0
    %p110 = por %p108, %p109
    %p111 = scmp.le.s32.totalorder 1, %s9
    %p112 = scmp.lt.s32.totalorder %s9, 3
    %p113 = pnand %p111, %p112
    %p114 = pneg %p113
    // Predicated region
    $region9: #{discriminator_forward.4} parent=5 // pred_check
      _
    $region10: #{discriminator_forward.4} parent=5 // pred_check_branch
      %116 = sbr.rel (%p113) target = $region12
    $region11: #{discriminator_forward.4} parent=5 // pred_region
      %s117 = ssub.s32 %s9, 1
      // Predicated region
      $region13: #{discriminator_forward.4} parent=11 // pred_check
        %p118 = pneg %p56
      $region14: #{discriminator_forward.4} parent=11 // pred_check_branch
        %120 = sbr.rel (%p118) target = $region16
      $region15: #{discriminator_forward.4} parent=11 // pred_region
        _
      $region16: #{discriminator_forward.4} parent=11 // pred_fallthru
        _
      // Predicated region
      $region17: #{discriminator_forward.4} parent=11 // pred_check
        %p121 = pneg %p77
      $region18: #{discriminator_forward.4} parent=11 // pred_check_branch
        %123 = sbr.rel (%p121) target = $region20
      $region19: #{discriminator_forward.4} parent=11 // pred_region
        _
      $region20: #{discriminator_forward.4} parent=11 // pred_fallthru
        _
    $region12: #{discriminator_forward.4} parent=5 // pred_fallthru
      _
    %p124 = scmp.lt.s32.totalorder %s9, 2
    // Predicated region
    $region21: #{discriminator_forward.4} parent=5 // pred_check
      %p125 = pneg %p124
    $region22: #{discriminator_forward.4} parent=5 // pred_check_branch
      %127 = sbr.rel (%p125) target = $region24
    $region23: #{discriminator_forward.4} parent=5 // pred_region
      // Predicated region
      $region25: #{discriminator_forward.4} parent=23 // pred_check
        %p128 = pneg %p29
      $region26: #{discriminator_forward.4} parent=23 // pred_check_branch
        %130 = sbr.rel (%p128) target = $region28
      $region27: #{discriminator_forward.4} parent=23 // pred_region
        %p131 = scmp.lt.s32.totalorder %s9, 1
        %s132 = scalar_select %p131, %s9, 1
        %s133 = smul.addr %s132, 72
        %s134 = smul.addr %s133, 4
        %s135 = scalar_lea.vmem %s0, %s134
      $region28: #{discriminator_forward.4} parent=23 // pred_fallthru
        _
    $region24: #{discriminator_forward.4} parent=5 // pred_fallthru
      _
    %p136 = scmp.le.s32.totalorder 1, %s9
    %p137 = scmp.lt.s32.totalorder %s9, 3
    %p138 = pnand %p136, %p137
    %p139 = pneg %p138
    // Predicated region
    $region29: #{discriminator_forward.4} parent=5 // pred_check
      _
    $region30: #{discriminator_forward.4} parent=5 // pred_check_branch
      %141 = sbr.rel (%p138) target = $region32
    $region31: #{discriminator_forward.4} parent=5 // pred_region
      %s142 = ssub.s32 %s9, 1
      %p143 = scmp.lt.s32.totalorder %s14, 1
      %s144 = scalar_select %p143, %s14, 1
      %s145 = smul.addr %s144, 72
      %s146 = smul.addr %s145, 4
      %s147 = scalar_lea.vmem %s0, %s146
      %p148 = pneg %p35
      %p149 = pneg %p32
      %p150 = pneg %p56
      %p151 = pneg %p53
      %p152 = pneg %p77
      %p153 = pneg %p74
      %p154 = pneg %p103
      %p155 = pneg %p100
      %p156 = scmp.lt.s32.totalorder %s14, 1
      %s157 = scalar_select %p156, %s14, 1
      %s158 = smul.addr %s157, 8
      %s159 = smul.addr %s158, 4
      %s160 = scalar_lea.vmem %s3, %s159
      %p161 = scmp.lt.s32.totalorder %s14, 1
      %s162 = scalar_select %p161, %s14, 1
      %s163 = smul.addr %s162, 72
      %s164 = smul.addr %s163, 4
      %s165 = scalar_lea.vmem %s0, %s164
      %p166 = scmp.lt.s32.totalorder %s14, 1
      %s167 = scalar_select %p166, %s14, 1
      %s168 = smul.addr %s167, 8
      %s169 = smul.addr %s168, 4
      %s170 = scalar_lea.vmem %s3, %s169
      %v172 = vld [vmem:[%s165] sm:$0xff]
      %v173 = vld [vmem:[%s165 + $0x8] sm:$0xff]
      %v174 = vld [vmem:[%s165 + $0x20] sm:$0xff]
      %v175 = vld [vmem:[%s165 + $0x28] sm:$0xff]
      %v176 = vld [vmem:[%s165 + $0x40] sm:$0xff]
      %v177 = vld [vmem:[%s165 + $0x48] sm:$0xff]
      %v178 = vld [vmem:[%s165 + $0x60] sm:$0xff]
      %v179 = vld [vmem:[%s165 + $0x68] sm:$0xff]
      %v180 = vld [vmem:[%s165 + $0x80] sm:$0xff]
      %v181 = vld [vmem:[%s165 + $0x88] sm:$0xff]
      %v182 = vld [vmem:[%s165 + $0xa0] sm:$0xff]
      %v183 = vld [vmem:[%s165 + $0xa8] sm:$0xff]
      %v184 = vld [vmem:[%s165 + $0xc0] sm:$0xff]
      %v185 = vld [vmem:[%s165 + $0xc8] sm:$0xff]
      %v186 = vld [vmem:[%s165 + $0xe0] sm:$0xff]
      %v187 = vld [vmem:[%s165 + $0xe8] sm:$0xff]
      %v188 = vld [vmem:[%s1] sm:$0xf]
      %v189 = vld [vmem:[%s1 + $0x4] sm:$0xf]
      %v190 = vld [vmem:[%s1 + $0x8] sm:$0xf]
      %v191 = vld [vmem:[%s1 + $0xc] sm:$0xf]
      %v192 = vld [vmem:[%s1 + $0x10] sm:$0xf]
      %v193 = vld [vmem:[%s1 + $0x14] sm:$0xf]
      %v194 = vld [vmem:[%s1 + $0x18] sm:$0xf]
      %v195 = vld [vmem:[%s1 + $0x1c] sm:$0xf]
      %v196 = vld [vmem:[%s1 + $0x20] sm:$0xf]
      %v197 = vld [vmem:[%s1 + $0x24] sm:$0xf]
      %v198 = vld [vmem:[%s1 + $0x28] sm:$0xf]
      %v199 = vld [vmem:[%s1 + $0x2c] sm:$0xf]
      %v200 = vld [vmem:[%s1 + $0x30] sm:$0xf]
      %v201 = vld [vmem:[%s1 + $0x34] sm:$0xf]
      %v202 = vld [vmem:[%s1 + $0x38] sm:$0xf]
      %v203 = vld [vmem:[%s1 + $0x3c] sm:$0xf]
      %v204 = vld [vmem:[%s1 + $0x40] sm:$0xf]
      %v205 = vld [vmem:[%s1 + $0x44] sm:$0xf]
      %v206 = vld [vmem:[%s1 + $0x48] sm:$0xf]
      %v207 = vld [vmem:[%s1 + $0x4c] sm:$0xf]
      %v208 = vld [vmem:[%s1 + $0x50] sm:$0xf]
      %v209 = vld [vmem:[%s1 + $0x54] sm:$0xf]
      %v210 = vld [vmem:[%s1 + $0x58] sm:$0xf]
      %v211 = vld [vmem:[%s1 + $0x5c] sm:$0xf]
      %v212 = vld [vmem:[%s1 + $0x60] sm:$0xf]
      %v213 = vld [vmem:[%s1 + $0x64] sm:$0xf]
      %v214 = vld [vmem:[%s1 + $0x68] sm:$0xf]
      %v215 = vld [vmem:[%s1 + $0x6c] sm:$0xf]
      %v216 = vld [vmem:[%s1 + $0x70] sm:$0xf]
      %v217 = vld [vmem:[%s1 + $0x74] sm:$0xf]
      %v218 = vld [vmem:[%s1 + $0x78] sm:$0xf]
      %v219 = vld [vmem:[%s1 + $0x7c] sm:$0xf]
      %v220 = vld [vmem:[%s1 + $0x80] sm:$0xf]
      %v221 = vld [vmem:[%s1 + $0x84] sm:$0xf]
      %v222 = vld [vmem:[%s1 + $0x88] sm:$0xf]
      %v223 = vld [vmem:[%s1 + $0x8c] sm:$0xf]
      %v224 = vld [vmem:[%s1 + $0x90] sm:$0xf]
      %v225 = vld [vmem:[%s1 + $0x94] sm:$0xf]
      %v226 = vld [vmem:[%s1 + $0x98] sm:$0xf]
      %v227 = vld [vmem:[%s1 + $0x9c] sm:$0xf]
      %v228 = vld [vmem:[%s1 + $0xa0] sm:$0xf]
      %v229 = vld [vmem:[%s1 + $0xa4] sm:$0xf]
      %v230 = vld [vmem:[%s1 + $0xa8] sm:$0xf]
      %v231 = vld [vmem:[%s1 + $0xac] sm:$0xf]
      %v232 = vld [vmem:[%s1 + $0xb0] sm:$0xf]
      %v233 = vld [vmem:[%s1 + $0xb4] sm:$0xf]
      %v234 = vld [vmem:[%s1 + $0xb8] sm:$0xf]
      %v235 = vld [vmem:[%s1 + $0xbc] sm:$0xf]
      %v236 = vld [vmem:[%s1 + $0xc0] sm:$0xf]
      %v237 = vld [vmem:[%s1 + $0xc4] sm:$0xf]
      %v238 = vld [vmem:[%s1 + $0xc8] sm:$0xf]
      %v239 = vld [vmem:[%s1 + $0xcc] sm:$0xf]
      %v240 = vld [vmem:[%s1 + $0xd0] sm:$0xf]
      %v241 = vld [vmem:[%s1 + $0xd4] sm:$0xf]
      %v242 = vld [vmem:[%s1 + $0xd8] sm:$0xf]
      %v243 = vld [vmem:[%s1 + $0xdc] sm:$0xf]
      %v244 = vld [vmem:[%s1 + $0xe0] sm:$0xf]
      %v245 = vld [vmem:[%s1 + $0xe4] sm:$0xf]
      %v246 = vld [vmem:[%s1 + $0xe8] sm:$0xf]
      %v247 = vld [vmem:[%s1 + $0xec] sm:$0xf]
      %v248 = vld [vmem:[%s1 + $0xf0] sm:$0xf]
      %v249 = vld [vmem:[%s1 + $0xf4] sm:$0xf]
      %v250 = vld [vmem:[%s1 + $0xf8] sm:$0xf]
      %v251 = vld [vmem:[%s1 + $0xfc] sm:$0xf]
      %v252 = vld [vmem:[%s165 + $0x10] sm:$0x11]
      %v253 = vld [vmem:[%s165 + $0x18] sm:$0x11]
      %v254 = vld [vmem:[%s165 + $0x30] sm:$0x11]
      %v255 = vld [vmem:[%s165 + $0x38] sm:$0x11]
      %v256 = vld [vmem:[%s165 + $0x50] sm:$0x11]
      %v257 = vld [vmem:[%s165 + $0x58] sm:$0x11]
      %v258 = vld [vmem:[%s165 + $0x70] sm:$0x11]
      %v259 = vld [vmem:[%s165 + $0x78] sm:$0x11]
      %v260 = vld [vmem:[%s165 + $0x90] sm:$0x11]
      %v261 = vld [vmem:[%s165 + $0x98] sm:$0x11]
      %v262 = vld [vmem:[%s165 + $0xb0] sm:$0x11]
      %v263 = vld [vmem:[%s165 + $0xb8] sm:$0x11]
      %v264 = vld [vmem:[%s165 + $0xd0] sm:$0x11]
      %v265 = vld [vmem:[%s165 + $0xd8] sm:$0x11]
      %v266 = vld [vmem:[%s165 + $0xf0] sm:$0x11]
      %v267 = vld [vmem:[%s165 + $0xf8] sm:$0x11]
      %vm268 = vsmask.f32 3328
      %vm269 = vsmask.f32 7440
      %vm270 = vmor %vm268, %vm269
      %v272 = vshrl.u32 %v172, 16
      %v274 = vrot.slane %v272, 4
      %v275 = vshll.u32 %v172, 16
      %v277 = vrot.slane %v275, 5
      %v278 = vor.u32 %v274, %v277
      %v279 = vrot.slane %v278, 4
      %v281 = vshll.u32 %v252, 16
      %v283 = vrot.slane %v281, 5
      %v284 = vsel %vm270, %v279, %v283
      %v286 = vshrl.u32 %v173, 16
      %v288 = vrot.slane %v286, 4
      %v289 = vshll.u32 %v173, 16
      %v291 = vrot.slane %v289, 5
      %v292 = vor.u32 %v288, %v291
      %v293 = vrot.slane %v292, 4
      %v295 = vshll.u32 %v253, 16
      %v297 = vrot.slane %v295, 5
      %v298 = vsel %vm270, %v293, %v297
      %v300 = vshrl.u32 %v174, 16
      %v302 = vrot.slane %v300, 4
      %v303 = vshll.u32 %v174, 16
      %v305 = vrot.slane %v303, 5
      %v306 = vor.u32 %v302, %v305
      %v307 = vrot.slane %v306, 4
      %v309 = vshll.u32 %v254, 16
      %v311 = vrot.slane %v309, 5
      %v312 = vsel %vm270, %v307, %v311
      %v314 = vshrl.u32 %v175, 16
      %v316 = vrot.slane %v314, 4
      %v317 = vshll.u32 %v175, 16
      %v319 = vrot.slane %v317, 5
      %v320 = vor.u32 %v316, %v319
      %v321 = vrot.slane %v320, 4
      %v323 = vshll.u32 %v255, 16
      %v325 = vrot.slane %v323, 5
      %v326 = vsel %vm270, %v321, %v325
      %v328 = vshrl.u32 %v176, 16
      %v330 = vrot.slane %v328, 4
      %v331 = vshll.u32 %v176, 16
      %v333 = vrot.slane %v331, 5
      %v334 = vor.u32 %v330, %v333
      %v335 = vrot.slane %v334, 4
      %v337 = vshll.u32 %v256, 16
      %v339 = vrot.slane %v337, 5
      %v340 = vsel %vm270, %v335, %v339
      %v342 = vshrl.u32 %v177, 16
      %v344 = vrot.slane %v342, 4
      %v345 = vshll.u32 %v177, 16
      %v347 = vrot.slane %v345, 5
      %v348 = vor.u32 %v344, %v347
      %v349 = vrot.slane %v348, 4
      %v351 = vshll.u32 %v257, 16
      %v353 = vrot.slane %v351, 5
      %v354 = vsel %vm270, %v349, %v353
      %v356 = vshrl.u32 %v178, 16
      %v358 = vrot.slane %v356, 4
      %v359 = vshll.u32 %v178, 16
      %v361 = vrot.slane %v359, 5
      %v362 = vor.u32 %v358, %v361
      %v363 = vrot.slane %v362, 4
      %v365 = vshll.u32 %v258, 16
      %v367 = vrot.slane %v365, 5
      %v368 = vsel %vm270, %v363, %v367
      %v370 = vshrl.u32 %v179, 16
      %v372 = vrot.slane %v370, 4
      %v373 = vshll.u32 %v179, 16
      %v375 = vrot.slane %v373, 5
      %v376 = vor.u32 %v372, %v375
      %v377 = vrot.slane %v376, 4
      %v379 = vshll.u32 %v259, 16
      %v381 = vrot.slane %v379, 5
      %v382 = vsel %vm270, %v377, %v381
      %v384 = vshrl.u32 %v180, 16
      %v386 = vrot.slane %v384, 4
      %v387 = vshll.u32 %v180, 16
      %v389 = vrot.slane %v387, 5
      %v390 = vor.u32 %v386, %v389
      %v391 = vrot.slane %v390, 4
      %v393 = vshll.u32 %v260, 16
      %v395 = vrot.slane %v393, 5
      %v396 = vsel %vm270, %v391, %v395
      %v398 = vshrl.u32 %v181, 16
      %v400 = vrot.slane %v398, 4
      %v401 = vshll.u32 %v181, 16
      %v403 = vrot.slane %v401, 5
      %v404 = vor.u32 %v400, %v403
      %v405 = vrot.slane %v404, 4
      %v407 = vshll.u32 %v261, 16
      %v409 = vrot.slane %v407, 5
      %v410 = vsel %vm270, %v405, %v409
      %v412 = vshrl.u32 %v182, 16
      %v414 = vrot.slane %v412, 4
      %v415 = vshll.u32 %v182, 16
      %v417 = vrot.slane %v415, 5
      %v418 = vor.u32 %v414, %v417
      %v419 = vrot.slane %v418, 4
      %v421 = vshll.u32 %v262, 16
      %v423 = vrot.slane %v421, 5
      %v424 = vsel %vm270, %v419, %v423
      %v426 = vshrl.u32 %v183, 16
      %v428 = vrot.slane %v426, 4
      %v429 = vshll.u32 %v183, 16
      %v431 = vrot.slane %v429, 5
      %v432 = vor.u32 %v428, %v431
      %v433 = vrot.slane %v432, 4
      %v435 = vshll.u32 %v263, 16
      %v437 = vrot.slane %v435, 5
      %v438 = vsel %vm270, %v433, %v437
      %v440 = vshrl.u32 %v184, 16
      %v442 = vrot.slane %v440, 4
      %v443 = vshll.u32 %v184, 16
      %v445 = vrot.slane %v443, 5
      %v446 = vor.u32 %v442, %v445
      %v447 = vrot.slane %v446, 4
      %v449 = vshll.u32 %v264, 16
      %v451 = vrot.slane %v449, 5
      %v452 = vsel %vm270, %v447, %v451
      %v454 = vshrl.u32 %v185, 16
      %v456 = vrot.slane %v454, 4
      %v457 = vshll.u32 %v185, 16
      %v459 = vrot.slane %v457, 5
      %v460 = vor.u32 %v456, %v459
      %v461 = vrot.slane %v460, 4
      %v463 = vshll.u32 %v265, 16
      %v465 = vrot.slane %v463, 5
      %v466 = vsel %vm270, %v461, %v465
      %v468 = vshrl.u32 %v186, 16
      %v470 = vrot.slane %v468, 4
      %v471 = vshll.u32 %v186, 16
      %v473 = vrot.slane %v471, 5
      %v474 = vor.u32 %v470, %v473
      %v475 = vrot.slane %v474, 4
      %v477 = vshll.u32 %v266, 16
      %v479 = vrot.slane %v477, 5
      %v480 = vsel %vm270, %v475, %v479
      %v482 = vshrl.u32 %v187, 16
      %v484 = vrot.slane %v482, 4
      %v485 = vshll.u32 %v187, 16
      %v487 = vrot.slane %v485, 5
      %v488 = vor.u32 %v484, %v487
      %v489 = vrot.slane %v488, 4
      %v491 = vshll.u32 %v267, 16
      %v493 = vrot.slane %v491, 5
      %v494 = vsel %vm270, %v489, %v493
      %s495 = scalar_lea.vmem %s1, 256
      %v496 = vld [vmem:[%s495] sm:$0xf]
      %v497 = vld [vmem:[%s495 + $0x4] sm:$0xf]
      %v498 = vld [vmem:[%s495 + $0x8] sm:$0xf]
      %v499 = vld [vmem:[%s495 + $0xc] sm:$0xf]
      %v500 = vld [vmem:[%s495 + $0x10] sm:$0xf]
      %v501 = vld [vmem:[%s495 + $0x14] sm:$0xf]
      %v502 = vld [vmem:[%s495 + $0x18] sm:$0xf]
      %v503 = vld [vmem:[%s495 + $0x1c] sm:$0xf]
      %v504 = vld [vmem:[%s495 + $0x20] sm:$0xf]
      %v505 = vld [vmem:[%s495 + $0x24] sm:$0xf]
      %v506 = vld [vmem:[%s495 + $0x28] sm:$0xf]
      %v507 = vld [vmem:[%s495 + $0x2c] sm:$0xf]
      %v508 = vld [vmem:[%s495 + $0x30] sm:$0xf]
      %v509 = vld [vmem:[%s495 + $0x34] sm:$0xf]
      %v510 = vld [vmem:[%s495 + $0x38] sm:$0xf]
      %v511 = vld [vmem:[%s495 + $0x3c] sm:$0xf]
      %v512 = vld [vmem:[%s495 + $0x40] sm:$0xf]
      %v513 = vld [vmem:[%s495 + $0x44] sm:$0xf]
      %v514 = vld [vmem:[%s495 + $0x48] sm:$0xf]
      %v515 = vld [vmem:[%s495 + $0x4c] sm:$0xf]
      %v516 = vld [vmem:[%s495 + $0x50] sm:$0xf]
      %v517 = vld [vmem:[%s495 + $0x54] sm:$0xf]
      %v518 = vld [vmem:[%s495 + $0x58] sm:$0xf]
      %v519 = vld [vmem:[%s495 + $0x5c] sm:$0xf]
      %v520 = vld [vmem:[%s495 + $0x60] sm:$0xf]
      %v521 = vld [vmem:[%s495 + $0x64] sm:$0xf]
      %v522 = vld [vmem:[%s495 + $0x68] sm:$0xf]
      %v523 = vld [vmem:[%s495 + $0x6c] sm:$0xf]
      %v524 = vld [vmem:[%s495 + $0x70] sm:$0xf]
      %v525 = vld [vmem:[%s495 + $0x74] sm:$0xf]
      %v526 = vld [vmem:[%s495 + $0x78] sm:$0xf]
      %v527 = vld [vmem:[%s495 + $0x7c] sm:$0xf]
      %v528 = vld [vmem:[%s495 + $0x80] sm:$0xf]
      %v529 = vld [vmem:[%s495 + $0x84] sm:$0xf]
      %v530 = vld [vmem:[%s495 + $0x88] sm:$0xf]
      %v531 = vld [vmem:[%s495 + $0x8c] sm:$0xf]
      %v532 = vld [vmem:[%s495 + $0x90] sm:$0xf]
      %v533 = vld [vmem:[%s495 + $0x94] sm:$0xf]
      %v534 = vld [vmem:[%s495 + $0x98] sm:$0xf]
      %v535 = vld [vmem:[%s495 + $0x9c] sm:$0xf]
      %v536 = vld [vmem:[%s495 + $0xa0] sm:$0xf]
      %v537 = vld [vmem:[%s495 + $0xa4] sm:$0xf]
      %v538 = vld [vmem:[%s495 + $0xa8] sm:$0xf]
      %v539 = vld [vmem:[%s495 + $0xac] sm:$0xf]
      %v540 = vld [vmem:[%s495 + $0xb0] sm:$0xf]
      %v541 = vld [vmem:[%s495 + $0xb4] sm:$0xf]
      %v542 = vld [vmem:[%s495 + $0xb8] sm:$0xf]
      %v543 = vld [vmem:[%s495 + $0xbc] sm:$0xf]
      %v544 = vld [vmem:[%s495 + $0xc0] sm:$0xf]
      %v545 = vld [vmem:[%s495 + $0xc4] sm:$0xf]
      %v546 = vld [vmem:[%s495 + $0xc8] sm:$0xf]
      %v547 = vld [vmem:[%s495 + $0xcc] sm:$0xf]
      %v548 = vld [vmem:[%s495 + $0xd0] sm:$0xf]
      %v549 = vld [vmem:[%s495 + $0xd4] sm:$0xf]
      %v550 = vld [vmem:[%s495 + $0xd8] sm:$0xf]
      %v551 = vld [vmem:[%s495 + $0xdc] sm:$0xf]
      %v552 = vld [vmem:[%s495 + $0xe0] sm:$0xf]
      %v553 = vld [vmem:[%s495 + $0xe4] sm:$0xf]
      %v554 = vld [vmem:[%s495 + $0xe8] sm:$0xf]
      %v555 = vld [vmem:[%s495 + $0xec] sm:$0xf]
      %v556 = vld [vmem:[%s495 + $0xf0] sm:$0xf]
      %v557 = vld [vmem:[%s495 + $0xf4] sm:$0xf]
      %v558 = vld [vmem:[%s495 + $0xf8] sm:$0xf]
      %v559 = vld [vmem:[%s495 + $0xfc] sm:$0xf]
      %v560 = vunpack.c.l.b16 %v284
      %v561 = vunpack.c.h.b16 %v284
      %v562 = vunpack.c.l.b16 %v298
      %v563 = vunpack.c.h.b16 %v298
      %v564 = vunpack.c.l.b16 %v312
      %v565 = vunpack.c.h.b16 %v312
      %v566 = vunpack.c.l.b16 %v326
      %v567 = vunpack.c.h.b16 %v326
      %v568 = vunpack.c.l.b16 %v340
      %v569 = vunpack.c.h.b16 %v340
      %v570 = vunpack.c.l.b16 %v354
      %v571 = vunpack.c.h.b16 %v354
      %v572 = vunpack.c.l.b16 %v368
      %v573 = vunpack.c.h.b16 %v368
      %v574 = vunpack.c.l.b16 %v382
      %v575 = vunpack.c.h.b16 %v382
      %v576 = vunpack.c.l.b16 %v396
      %v577 = vunpack.c.h.b16 %v396
      %v578 = vunpack.c.l.b16 %v410
      %v579 = vunpack.c.h.b16 %v410
      %v580 = vunpack.c.l.b16 %v424
      %v581 = vunpack.c.h.b16 %v424
      %v582 = vunpack.c.l.b16 %v438
      %v583 = vunpack.c.h.b16 %v438
      %v584 = vunpack.c.l.b16 %v452
      %v585 = vunpack.c.h.b16 %v452
      %v586 = vunpack.c.l.b16 %v466
      %v587 = vunpack.c.h.b16 %v466
      %v588 = vunpack.c.l.b16 %v480
      %v589 = vunpack.c.h.b16 %v480
      %v590 = vunpack.c.l.b16 %v494
      %v591 = vunpack.c.h.b16 %v494
      %v592 = vpack.c.b16 %v564, %v560
      %v593 = vpack.c.b16 %v565, %v561
      %v594 = vpack.c.b16 %v566, %v562
      %v595 = vpack.c.b16 %v567, %v563
      %v596 = vpack.c.b16 %v572, %v568
      %v597 = vpack.c.b16 %v573, %v569
      %v598 = vpack.c.b16 %v574, %v570
      %v599 = vpack.c.b16 %v575, %v571
      %v600 = vpack.c.b16 %v580, %v576
      %v601 = vpack.c.b16 %v581, %v577
      %v602 = vpack.c.b16 %v582, %v578
      %v603 = vpack.c.b16 %v583, %v579
      %v604 = vpack.c.b16 %v588, %v584
      %v605 = vpack.c.b16 %v589, %v585
      %v606 = vpack.c.b16 %v590, %v586
      %v607 = vpack.c.b16 %v591, %v587
      %v688 = vunpack.c.l.b16 %v496
      %v689 = vunpack.c.l.b16 %v497
      %v690 = vunpack.c.l.b16 %v498
      %v691 = vunpack.c.l.b16 %v499
      %v692 = vunpack.c.l.b16 %v500
      %v693 = vunpack.c.l.b16 %v501
      %v694 = vunpack.c.l.b16 %v502
      %v695 = vunpack.c.l.b16 %v503
      %v696 = vunpack.c.l.b16 %v504
      %v697 = vunpack.c.l.b16 %v505
      %v698 = vunpack.c.l.b16 %v506
      %v699 = vunpack.c.l.b16 %v507
      %v700 = vunpack.c.l.b16 %v508
      %v701 = vunpack.c.l.b16 %v509
      %v702 = vunpack.c.l.b16 %v510
      %v703 = vunpack.c.l.b16 %v511
      %v704 = vunpack.c.l.b16 %v512
      %v705 = vunpack.c.l.b16 %v513
      %v706 = vunpack.c.l.b16 %v514
      %v707 = vunpack.c.l.b16 %v515
      %v708 = vunpack.c.l.b16 %v516
      %v709 = vunpack.c.l.b16 %v517
      %v710 = vunpack.c.l.b16 %v518
      %v711 = vunpack.c.l.b16 %v519
      %v712 = vunpack.c.l.b16 %v520
      %v713 = vunpack.c.l.b16 %v521
      %v714 = vunpack.c.l.b16 %v522
      %v715 = vunpack.c.l.b16 %v523
      %v716 = vunpack.c.l.b16 %v524
      %v717 = vunpack.c.l.b16 %v525
      %v718 = vunpack.c.l.b16 %v526
      %v719 = vunpack.c.l.b16 %v527
      %v720 = vunpack.c.l.b16 %v528
      %v721 = vunpack.c.l.b16 %v529
      %v722 = vunpack.c.l.b16 %v530
      %v723 = vunpack.c.l.b16 %v531
      %v724 = vunpack.c.l.b16 %v532
      %v725 = vunpack.c.l.b16 %v533
      %v726 = vunpack.c.l.b16 %v534
      %v727 = vunpack.c.l.b16 %v535
      %v728 = vunpack.c.l.b16 %v536
      %v729 = vunpack.c.l.b16 %v537
      %v730 = vunpack.c.l.b16 %v538
      %v731 = vunpack.c.l.b16 %v539
      %v732 = vunpack.c.l.b16 %v540
      %v733 = vunpack.c.l.b16 %v541
      %v734 = vunpack.c.l.b16 %v542
      %v735 = vunpack.c.l.b16 %v543
      %v736 = vunpack.c.l.b16 %v544
      %v737 = vunpack.c.l.b16 %v545
      %v738 = vunpack.c.l.b16 %v546
      %v739 = vunpack.c.l.b16 %v547
      %v740 = vunpack.c.l.b16 %v548
      %v741 = vunpack.c.l.b16 %v549
      %v742 = vunpack.c.l.b16 %v550
      %v743 = vunpack.c.l.b16 %v551
      %v744 = vunpack.c.l.b16 %v552
      %v745 = vunpack.c.l.b16 %v553
      %v746 = vunpack.c.l.b16 %v554
      %v747 = vunpack.c.l.b16 %v555
      %v748 = vunpack.c.l.b16 %v556
      %v749 = vunpack.c.l.b16 %v557
      %v750 = vunpack.c.l.b16 %v558
      %v751 = vunpack.c.l.b16 %v559
      %v752 = vpack.c.b16 %v689, %v688
      %v753 = vpack.c.b16 %v691, %v690
      %v754 = vpack.c.b16 %v693, %v692
      %v755 = vpack.c.b16 %v695, %v694
      %v756 = vpack.c.b16 %v697, %v696
      %v757 = vpack.c.b16 %v699, %v698
      %v758 = vpack.c.b16 %v701, %v700
      %v759 = vpack.c.b16 %v703, %v702
      %v760 = vpack.c.b16 %v705, %v704
      %v761 = vpack.c.b16 %v707, %v706
      %v762 = vpack.c.b16 %v709, %v708
      %v763 = vpack.c.b16 %v711, %v710
      %v764 = vpack.c.b16 %v713, %v712
      %v765 = vpack.c.b16 %v715, %v714
      %v766 = vpack.c.b16 %v717, %v716
      %v767 = vpack.c.b16 %v719, %v718
      %v768 = vpack.c.b16 %v721, %v720
      %v769 = vpack.c.b16 %v723, %v722
      %v770 = vpack.c.b16 %v725, %v724
      %v771 = vpack.c.b16 %v727, %v726
      %v772 = vpack.c.b16 %v729, %v728
      %v773 = vpack.c.b16 %v731, %v730
      %v774 = vpack.c.b16 %v733, %v732
      %v775 = vpack.c.b16 %v735, %v734
      %v776 = vpack.c.b16 %v737, %v736
      %v777 = vpack.c.b16 %v739, %v738
      %v778 = vpack.c.b16 %v741, %v740
      %v779 = vpack.c.b16 %v743, %v742
      %v780 = vpack.c.b16 %v745, %v744
      %v781 = vpack.c.b16 %v747, %v746
      %v782 = vpack.c.b16 %v749, %v748
      %v783 = vpack.c.b16 %v751, %v750
      %816 = vmatprep.subr.bf16.mxu0 0
      %817 = vmatpush1.bf16.msra.mxu0 %v759
      %818 = vmatprep.subr.bf16.mxu0 0
      %819 = vmatpush1.bf16.msra.mxu0 %v758
      %820 = vmatprep.subr.bf16.mxu0 0
      %821 = vmatpush1.bf16.msra.mxu0 %v757
      %822 = vmatprep.subr.bf16.mxu0 0
      %823 = vmatpush1.bf16.msra.mxu0 %v756
      %824 = vmatprep.subr.bf16.mxu0 0
      %825 = vmatpush1.bf16.msra.mxu0 %v755
      %826 = vmatprep.subr.bf16.mxu0 0
      %827 = vmatpush1.bf16.msra.mxu0 %v754
      %828 = vmatprep.subr.bf16.mxu0 0
      %829 = vmatpush1.bf16.msra.mxu0 %v753
      %830 = vmatprep.subr.bf16.mxu0 0
      %831 = vmatpush1.bf16.msra.mxu0 %v752
      %832 = vmatprep.subr.bf16.mxu0 0
      %833 = vmatpush2.bf16.msra.mxu0 %v767
      %834 = vmatprep.subr.bf16.mxu0 0
      %835 = vmatpush2.bf16.msra.mxu0 %v766
      %836 = vmatprep.subr.bf16.mxu0 0
      %837 = vmatpush2.bf16.msra.mxu0 %v765
      %838 = vmatprep.subr.bf16.mxu0 0
      %839 = vmatpush2.bf16.msra.mxu0 %v764
      %840 = vmatprep.subr.bf16.mxu0 0
      %841 = vmatpush2.bf16.msra.mxu0 %v763
      %842 = vmatprep.subr.bf16.mxu0 0
      %843 = vmatpush2.bf16.msra.mxu0 %v762
      %844 = vmatprep.subr.bf16.mxu0 0
      %845 = vmatpush2.bf16.msra.mxu0 %v761
      %846 = vmatprep.subr.bf16.mxu0 0
      %847 = vmatpush2.bf16.msra.mxu0 %v760
      %848 = vmatprep.mubr.bf16.mxu0 %v593
      %849 = vmatmul.mubr.bf16.gmra.mxu0 %v592
      %v850 = vpop.f32.mrf.mxu0
      %v851 = vadd.f32 0.0, %v850
      %v852 = vpop.f32.mrf.mxu0
      %v853 = vpop.f32.mrf.mxu0
      %v854 = vadd.f32 0.0, %v853
      %v855 = vpop.f32.mrf.mxu0
      %856 = vmatprep.mubr.bf16.mxu0 %v597
      %857 = vmatmul.mubr.bf16.gmra.mxu0 %v596
      %v858 = vpop.f32.mrf.mxu0
      %v859 = vadd.f32 0.0, %v858
      %v860 = vpop.f32.mrf.mxu0
      %v861 = vpop.f32.mrf.mxu0
      %v862 = vadd.f32 0.0, %v861
      %v863 = vpop.f32.mrf.mxu0
      %864 = vmatprep.mubr.bf16.mxu0 %v601
      %865 = vmatmul.mubr.bf16.gmra.mxu0 %v600
      %v866 = vpop.f32.mrf.mxu0
      %v867 = vadd.f32 0.0, %v866
      %v868 = vpop.f32.mrf.mxu0
      %v869 = vpop.f32.mrf.mxu0
      %v870 = vadd.f32 0.0, %v869
      %v871 = vpop.f32.mrf.mxu0
      %872 = vmatprep.mubr.bf16.mxu0 %v605
      %873 = vmatmul.mubr.bf16.gmra.mxu0 %v604
      %v874 = vpop.f32.mrf.mxu0
      %v875 = vadd.f32 0.0, %v874
      %v876 = vpop.f32.mrf.mxu0
      %v877 = vpop.f32.mrf.mxu0
      %v878 = vadd.f32 0.0, %v877
      %v879 = vpop.f32.mrf.mxu0
      %880 = vdwg.mxu0
      %881 = vmatprep.subr.bf16.mxu0 0
      %882 = vmatpush1.bf16.msra.mxu0 %v775
      %883 = vmatprep.subr.bf16.mxu0 0
      %884 = vmatpush1.bf16.msra.mxu0 %v774
      %885 = vmatprep.subr.bf16.mxu0 0
      %886 = vmatpush1.bf16.msra.mxu0 %v773
      %887 = vmatprep.subr.bf16.mxu0 0
      %888 = vmatpush1.bf16.msra.mxu0 %v772
      %889 = vmatprep.subr.bf16.mxu0 0
      %890 = vmatpush1.bf16.msra.mxu0 %v771
      %891 = vmatprep.subr.bf16.mxu0 0
      %892 = vmatpush1.bf16.msra.mxu0 %v770
      %893 = vmatprep.subr.bf16.mxu0 0
      %894 = vmatpush1.bf16.msra.mxu0 %v769
      %895 = vmatprep.subr.bf16.mxu0 0
      %896 = vmatpush1.bf16.msra.mxu0 %v768
      %897 = vmatprep.subr.bf16.mxu0 0
      %898 = vmatpush2.bf16.msra.mxu0 %v783
      %899 = vmatprep.subr.bf16.mxu0 0
      %900 = vmatpush2.bf16.msra.mxu0 %v782
      %901 = vmatprep.subr.bf16.mxu0 0
      %902 = vmatpush2.bf16.msra.mxu0 %v781
      %903 = vmatprep.subr.bf16.mxu0 0
      %904 = vmatpush2.bf16.msra.mxu0 %v780
      %905 = vmatprep.subr.bf16.mxu0 0
      %906 = vmatpush2.bf16.msra.mxu0 %v779
      %907 = vmatprep.subr.bf16.mxu0 0
      %908 = vmatpush2.bf16.msra.mxu0 %v778
      %909 = vmatprep.subr.bf16.mxu0 0
      %910 = vmatpush2.bf16.msra.mxu0 %v777
      %911 = vmatprep.subr.bf16.mxu0 0
      %912 = vmatpush2.bf16.msra.mxu0 %v776
      %913 = vmatprep.mubr.bf16.mxu0 %v595
      %914 = vmatmul.mubr.bf16.gmra.mxu0 %v594
      %v915 = vpop.f32.mrf.mxu0
      %v916 = vadd.f32 %v851, %v915
      %v917 = vpop.f32.mrf.mxu0
      %v918 = vpop.f32.mrf.mxu0
      %v919 = vadd.f32 %v854, %v918
      %v920 = vpop.f32.mrf.mxu0
      %921 = vmatprep.mubr.bf16.mxu0 %v599
      %922 = vmatmul.mubr.bf16.gmra.mxu0 %v598
      %v923 = vpop.f32.mrf.mxu0
      %v924 = vadd.f32 %v859, %v923
      %v925 = vpop.f32.mrf.mxu0
      %v926 = vpop.f32.mrf.mxu0
      %v927 = vadd.f32 %v862, %v926
      %v928 = vpop.f32.mrf.mxu0
      %929 = vmatprep.mubr.bf16.mxu0 %v603
      %930 = vmatmul.mubr.bf16.gmra.mxu0 %v602
      %v931 = vpop.f32.mrf.mxu0
      %v932 = vadd.f32 %v867, %v931
      %v933 = vpop.f32.mrf.mxu0
      %v934 = vpop.f32.mrf.mxu0
      %v935 = vadd.f32 %v870, %v934
      %v936 = vpop.f32.mrf.mxu0
      %937 = vmatprep.mubr.bf16.mxu0 %v607
      %938 = vmatmul.mubr.bf16.gmra.mxu0 %v606
      %v939 = vpop.f32.mrf.mxu0
      %v940 = vadd.f32 %v875, %v939
      %v941 = vpop.f32.mrf.mxu0
      %v942 = vpop.f32.mrf.mxu0
      %v943 = vadd.f32 %v878, %v942
      %v944 = vpop.f32.mrf.mxu0
      %945 = vdwg.mxu0
      %v962 = vunpack.c.l.b16 %v172
      %v963 = vunpack.c.h.b16 %v172
      %v964 = vunpack.c.l.b16 %v173
      %v965 = vunpack.c.h.b16 %v173
      %v966 = vunpack.c.l.b16 %v174
      %v967 = vunpack.c.h.b16 %v174
      %v968 = vunpack.c.l.b16 %v175
      %v969 = vunpack.c.h.b16 %v175
      %v970 = vunpack.c.l.b16 %v176
      %v971 = vunpack.c.h.b16 %v176
      %v972 = vunpack.c.l.b16 %v177
      %v973 = vunpack.c.h.b16 %v177
      %v974 = vunpack.c.l.b16 %v178
      %v975 = vunpack.c.h.b16 %v178
      %v976 = vunpack.c.l.b16 %v179
      %v977 = vunpack.c.h.b16 %v179
      %v978 = vunpack.c.l.b16 %v180
      %v979 = vunpack.c.h.b16 %v180
      %v980 = vunpack.c.l.b16 %v181
      %v981 = vunpack.c.h.b16 %v181
      %v982 = vunpack.c.l.b16 %v182
      %v983 = vunpack.c.h.b16 %v182
      %v984 = vunpack.c.l.b16 %v183
      %v985 = vunpack.c.h.b16 %v183
      %v986 = vunpack.c.l.b16 %v184
      %v987 = vunpack.c.h.b16 %v184
      %v988 = vunpack.c.l.b16 %v185
      %v989 = vunpack.c.h.b16 %v185
      %v990 = vunpack.c.l.b16 %v186
      %v991 = vunpack.c.h.b16 %v186
      %v992 = vunpack.c.l.b16 %v187
      %v993 = vunpack.c.h.b16 %v187
      %v994 = vpack.c.b16 %v966, %v962
      %v995 = vpack.c.b16 %v967, %v963
      %v996 = vpack.c.b16 %v968, %v964
      %v997 = vpack.c.b16 %v969, %v965
      %v998 = vpack.c.b16 %v974, %v970
      %v999 = vpack.c.b16 %v975, %v971
      %v1000 = vpack.c.b16 %v976, %v972
      %v1001 = vpack.c.b16 %v977, %v973
      %v1002 = vpack.c.b16 %v982, %v978
      %v1003 = vpack.c.b16 %v983, %v979
      %v1004 = vpack.c.b16 %v984, %v980
      %v1005 = vpack.c.b16 %v985, %v981
      %v1006 = vpack.c.b16 %v990, %v986
      %v1007 = vpack.c.b16 %v991, %v987
      %v1008 = vpack.c.b16 %v992, %v988
      %v1009 = vpack.c.b16 %v993, %v989
      %v1090 = vunpack.c.l.b16 %v188
      %v1091 = vunpack.c.l.b16 %v189
      %v1092 = vunpack.c.l.b16 %v190
      %v1093 = vunpack.c.l.b16 %v191
      %v1094 = vunpack.c.l.b16 %v192
      %v1095 = vunpack.c.l.b16 %v193
      %v1096 = vunpack.c.l.b16 %v194
      %v1097 = vunpack.c.l.b16 %v195
      %v1098 = vunpack.c.l.b16 %v196
      %v1099 = vunpack.c.l.b16 %v197
      %v1100 = vunpack.c.l.b16 %v198
      %v1101 = vunpack.c.l.b16 %v199
      %v1102 = vunpack.c.l.b16 %v200
      %v1103 = vunpack.c.l.b16 %v201
      %v1104 = vunpack.c.l.b16 %v202
      %v1105 = vunpack.c.l.b16 %v203
      %v1106 = vunpack.c.l.b16 %v204
      %v1107 = vunpack.c.l.b16 %v205
      %v1108 = vunpack.c.l.b16 %v206
      %v1109 = vunpack.c.l.b16 %v207
      %v1110 = vunpack.c.l.b16 %v208
      %v1111 = vunpack.c.l.b16 %v209
      %v1112 = vunpack.c.l.b16 %v210
      %v1113 = vunpack.c.l.b16 %v211
      %v1114 = vunpack.c.l.b16 %v212
      %v1115 = vunpack.c.l.b16 %v213
      %v1116 = vunpack.c.l.b16 %v214
      %v1117 = vunpack.c.l.b16 %v215
      %v1118 = vunpack.c.l.b16 %v216
      %v1119 = vunpack.c.l.b16 %v217
      %v1120 = vunpack.c.l.b16 %v218
      %v1121 = vunpack.c.l.b16 %v219
      %v1122 = vunpack.c.l.b16 %v220
      %v1123 = vunpack.c.l.b16 %v221
      %v1124 = vunpack.c.l.b16 %v222
      %v1125 = vunpack.c.l.b16 %v223
      %v1126 = vunpack.c.l.b16 %v224
      %v1127 = vunpack.c.l.b16 %v225
      %v1128 = vunpack.c.l.b16 %v226
      %v1129 = vunpack.c.l.b16 %v227
      %v1130 = vunpack.c.l.b16 %v228
      %v1131 = vunpack.c.l.b16 %v229
      %v1132 = vunpack.c.l.b16 %v230
      %v1133 = vunpack.c.l.b16 %v231
      %v1134 = vunpack.c.l.b16 %v232
      %v1135 = vunpack.c.l.b16 %v233
      %v1136 = vunpack.c.l.b16 %v234
      %v1137 = vunpack.c.l.b16 %v235
      %v1138 = vunpack.c.l.b16 %v236
      %v1139 = vunpack.c.l.b16 %v237
      %v1140 = vunpack.c.l.b16 %v238
      %v1141 = vunpack.c.l.b16 %v239
      %v1142 = vunpack.c.l.b16 %v240
      %v1143 = vunpack.c.l.b16 %v241
      %v1144 = vunpack.c.l.b16 %v242
      %v1145 = vunpack.c.l.b16 %v243
      %v1146 = vunpack.c.l.b16 %v244
      %v1147 = vunpack.c.l.b16 %v245
      %v1148 = vunpack.c.l.b16 %v246
      %v1149 = vunpack.c.l.b16 %v247
      %v1150 = vunpack.c.l.b16 %v248
      %v1151 = vunpack.c.l.b16 %v249
      %v1152 = vunpack.c.l.b16 %v250
      %v1153 = vunpack.c.l.b16 %v251
      %v1154 = vpack.c.b16 %v1091, %v1090
      %v1155 = vpack.c.b16 %v1093, %v1092
      %v1156 = vpack.c.b16 %v1095, %v1094
      %v1157 = vpack.c.b16 %v1097, %v1096
      %v1158 = vpack.c.b16 %v1099, %v1098
      %v1159 = vpack.c.b16 %v1101, %v1100
      %v1160 = vpack.c.b16 %v1103, %v1102
      %v1161 = vpack.c.b16 %v1105, %v1104
      %v1162 = vpack.c.b16 %v1107, %v1106
      %v1163 = vpack.c.b16 %v1109, %v1108
      %v1164 = vpack.c.b16 %v1111, %v1110
      %v1165 = vpack.c.b16 %v1113, %v1112
      %v1166 = vpack.c.b16 %v1115, %v1114
      %v1167 = vpack.c.b16 %v1117, %v1116
      %v1168 = vpack.c.b16 %v1119, %v1118
      %v1169 = vpack.c.b16 %v1121, %v1120
      %v1170 = vpack.c.b16 %v1123, %v1122
      %v1171 = vpack.c.b16 %v1125, %v1124
      %v1172 = vpack.c.b16 %v1127, %v1126
      %v1173 = vpack.c.b16 %v1129, %v1128
      %v1174 = vpack.c.b16 %v1131, %v1130
      %v1175 = vpack.c.b16 %v1133, %v1132
      %v1176 = vpack.c.b16 %v1135, %v1134
      %v1177 = vpack.c.b16 %v1137, %v1136
      %v1178 = vpack.c.b16 %v1139, %v1138
      %v1179 = vpack.c.b16 %v1141, %v1140
      %v1180 = vpack.c.b16 %v1143, %v1142
      %v1181 = vpack.c.b16 %v1145, %v1144
      %v1182 = vpack.c.b16 %v1147, %v1146
      %v1183 = vpack.c.b16 %v1149, %v1148
      %v1184 = vpack.c.b16 %v1151, %v1150
      %v1185 = vpack.c.b16 %v1153, %v1152
      %1218 = vmatprep.subr.bf16.mxu0 0
      %1219 = vmatpush1.bf16.msra.mxu0 %v1161
      %1220 = vmatprep.subr.bf16.mxu0 0
      %1221 = vmatpush1.bf16.msra.mxu0 %v1160
      %1222 = vmatprep.subr.bf16.mxu0 0
      %1223 = vmatpush1.bf16.msra.mxu0 %v1159
      %1224 = vmatprep.subr.bf16.mxu0 0
      %1225 = vmatpush1.bf16.msra.mxu0 %v1158
      %1226 = vmatprep.subr.bf16.mxu0 0
      %1227 = vmatpush1.bf16.msra.mxu0 %v1157
      %1228 = vmatprep.subr.bf16.mxu0 0
      %1229 = vmatpush1.bf16.msra.mxu0 %v1156
      %1230 = vmatprep.subr.bf16.mxu0 0
      %1231 = vmatpush1.bf16.msra.mxu0 %v1155
      %1232 = vmatprep.subr.bf16.mxu0 0
      %1233 = vmatpush1.bf16.msra.mxu0 %v1154
      %1234 = vmatprep.subr.bf16.mxu0 0
      %1235 = vmatpush2.bf16.msra.mxu0 %v1169
      %1236 = vmatprep.subr.bf16.mxu0 0
      %1237 = vmatpush2.bf16.msra.mxu0 %v1168
      %1238 = vmatprep.subr.bf16.mxu0 0
      %1239 = vmatpush2.bf16.msra.mxu0 %v1167
      %1240 = vmatprep.subr.bf16.mxu0 0
      %1241 = vmatpush2.bf16.msra.mxu0 %v1166
      %1242 = vmatprep.subr.bf16.mxu0 0
      %1243 = vmatpush2.bf16.msra.mxu0 %v1165
      %1244 = vmatprep.subr.bf16.mxu0 0
      %1245 = vmatpush2.bf16.msra.mxu0 %v1164
      %1246 = vmatprep.subr.bf16.mxu0 0
      %1247 = vmatpush2.bf16.msra.mxu0 %v1163
      %1248 = vmatprep.subr.bf16.mxu0 0
      %1249 = vmatpush2.bf16.msra.mxu0 %v1162
      %1250 = vmatprep.mubr.bf16.mxu0 %v995
      %1251 = vmatmul.mubr.bf16.gmra.mxu0 %v994
      %v1252 = vpop.f32.mrf.mxu0
      %v1253 = vadd.f32 %v916, %v1252
      %v1254 = vpop.f32.mrf.mxu0
      %v1255 = vpop.f32.mrf.mxu0
      %v1256 = vadd.f32 %v919, %v1255
      %v1257 = vpop.f32.mrf.mxu0
      %1258 = vmatprep.mubr.bf16.mxu0 %v999
      %1259 = vmatmul.mubr.bf16.gmra.mxu0 %v998
      %v1260 = vpop.f32.mrf.mxu0
      %v1261 = vadd.f32 %v924, %v1260
      %v1262 = vpop.f32.mrf.mxu0
      %v1263 = vpop.f32.mrf.mxu0
      %v1264 = vadd.f32 %v927, %v1263
      %v1265 = vpop.f32.mrf.mxu0
      %1266 = vmatprep.mubr.bf16.mxu0 %v1003
      %1267 = vmatmul.mubr.bf16.gmra.mxu0 %v1002
      %v1268 = vpop.f32.mrf.mxu0
      %v1269 = vadd.f32 %v932, %v1268
      %v1270 = vpop.f32.mrf.mxu0
      %v1271 = vpop.f32.mrf.mxu0
      %v1272 = vadd.f32 %v935, %v1271
      %v1273 = vpop.f32.mrf.mxu0
      %1274 = vmatprep.mubr.bf16.mxu0 %v1007
      %1275 = vmatmul.mubr.bf16.gmra.mxu0 %v1006
      %v1276 = vpop.f32.mrf.mxu0
      %v1277 = vadd.f32 %v940, %v1276
      %v1278 = vpop.f32.mrf.mxu0
      %v1279 = vpop.f32.mrf.mxu0
      %v1280 = vadd.f32 %v943, %v1279
      %v1281 = vpop.f32.mrf.mxu0
      %1282 = vdwg.mxu0
      %1283 = vmatprep.subr.bf16.mxu0 0
      %1284 = vmatpush1.bf16.msra.mxu0 %v1177
      %1285 = vmatprep.subr.bf16.mxu0 0
      %1286 = vmatpush1.bf16.msra.mxu0 %v1176
      %1287 = vmatprep.subr.bf16.mxu0 0
      %1288 = vmatpush1.bf16.msra.mxu0 %v1175
      %1289 = vmatprep.subr.bf16.mxu0 0
      %1290 = vmatpush1.bf16.msra.mxu0 %v1174
      %1291 = vmatprep.subr.bf16.mxu0 0
      %1292 = vmatpush1.bf16.msra.mxu0 %v1173
      %1293 = vmatprep.subr.bf16.mxu0 0
      %1294 = vmatpush1.bf16.msra.mxu0 %v1172
      %1295 = vmatprep.subr.bf16.mxu0 0
      %1296 = vmatpush1.bf16.msra.mxu0 %v1171
      %1297 = vmatprep.subr.bf16.mxu0 0
      %1298 = vmatpush1.bf16.msra.mxu0 %v1170
      %1299 = vmatprep.subr.bf16.mxu0 0
      %1300 = vmatpush2.bf16.msra.mxu0 %v1185
      %1301 = vmatprep.subr.bf16.mxu0 0
      %1302 = vmatpush2.bf16.msra.mxu0 %v1184
      %1303 = vmatprep.subr.bf16.mxu0 0
      %1304 = vmatpush2.bf16.msra.mxu0 %v1183
      %1305 = vmatprep.subr.bf16.mxu0 0
      %1306 = vmatpush2.bf16.msra.mxu0 %v1182
      %1307 = vmatprep.subr.bf16.mxu0 0
      %1308 = vmatpush2.bf16.msra.mxu0 %v1181
      %1309 = vmatprep.subr.bf16.mxu0 0
      %1310 = vmatpush2.bf16.msra.mxu0 %v1180
      %1311 = vmatprep.subr.bf16.mxu0 0
      %1312 = vmatpush2.bf16.msra.mxu0 %v1179
      %1313 = vmatprep.subr.bf16.mxu0 0
      %1314 = vmatpush2.bf16.msra.mxu0 %v1178
      %1315 = vmatprep.mubr.bf16.mxu0 %v997
      %1316 = vmatmul.mubr.bf16.gmra.mxu0 %v996
      %v1317 = vpop.f32.mrf.mxu0
      %v1318 = vadd.f32 %v1253, %v1317
      %v1319 = vpop.f32.mrf.mxu0
      %v1320 = vpop.f32.mrf.mxu0
      %v1321 = vadd.f32 %v1256, %v1320
      %v1322 = vpop.f32.mrf.mxu0
      %1323 = vmatprep.mubr.bf16.mxu0 %v1001
      %1324 = vmatmul.mubr.bf16.gmra.mxu0 %v1000
      %v1325 = vpop.f32.mrf.mxu0
      %v1326 = vadd.f32 %v1261, %v1325
      %v1327 = vpop.f32.mrf.mxu0
      %v1328 = vpop.f32.mrf.mxu0
      %v1329 = vadd.f32 %v1264, %v1328
      %v1330 = vpop.f32.mrf.mxu0
      %1331 = vmatprep.mubr.bf16.mxu0 %v1005
      %1332 = vmatmul.mubr.bf16.gmra.mxu0 %v1004
      %v1333 = vpop.f32.mrf.mxu0
      %v1334 = vadd.f32 %v1269, %v1333
      %v1335 = vpop.f32.mrf.mxu0
      %v1336 = vpop.f32.mrf.mxu0
      %v1337 = vadd.f32 %v1272, %v1336
      %v1338 = vpop.f32.mrf.mxu0
      %1339 = vmatprep.mubr.bf16.mxu0 %v1009
      %1340 = vmatmul.mubr.bf16.gmra.mxu0 %v1008
      %v1341 = vpop.f32.mrf.mxu0
      %v1342 = vadd.f32 %v1277, %v1341
      %v1343 = vpop.f32.mrf.mxu0
      %v1344 = vpop.f32.mrf.mxu0
      %v1345 = vadd.f32 %v1280, %v1344
      %v1346 = vpop.f32.mrf.mxu0
      %1347 = vdwg.mxu0
      %s1348 = scalar_lea.vmem %s165, 32
      %v1349 = vld [vmem:[%s1348] sm:$0xff]
      %v1350 = vld [vmem:[%s1348 + $0x8] sm:$0xff]
      %v1351 = vld [vmem:[%s1348 + $0x20] sm:$0xff]
      %v1352 = vld [vmem:[%s1348 + $0x28] sm:$0xff]
      %v1353 = vld [vmem:[%s1348 + $0x40] sm:$0xff]
      %v1354 = vld [vmem:[%s1348 + $0x48] sm:$0xff]
      %v1355 = vld [vmem:[%s1348 + $0x60] sm:$0xff]
      %v1356 = vld [vmem:[%s1348 + $0x68] sm:$0xff]
      %v1357 = vld [vmem:[%s1348 + $0x80] sm:$0xff]
      %v1358 = vld [vmem:[%s1348 + $0x88] sm:$0xff]
      %v1359 = vld [vmem:[%s1348 + $0xa0] sm:$0xff]
      %v1360 = vld [vmem:[%s1348 + $0xa8] sm:$0xff]
      %v1361 = vld [vmem:[%s1348 + $0xc0] sm:$0xff]
      %v1362 = vld [vmem:[%s1348 + $0xc8] sm:$0xff]
      %v1363 = vld [vmem:[%s1348 + $0xe0] sm:$0xff]
      %v1364 = vld [vmem:[%s1348 + $0xe8] sm:$0xff]
      %s1365 = scalar_lea.vmem %s1, 512
      %v1366 = vld [vmem:[%s1365] sm:$0xf]
      %v1367 = vld [vmem:[%s1365 + $0x4] sm:$0xf]
      %v1368 = vld [vmem:[%s1365 + $0x8] sm:$0xf]
      %v1369 = vld [vmem:[%s1365 + $0xc] sm:$0xf]
      %v1370 = vld [vmem:[%s1365 + $0x10] sm:$0xf]
      %v1371 = vld [vmem:[%s1365 + $0x14] sm:$0xf]
      %v1372 = vld [vmem:[%s1365 + $0x18] sm:$0xf]
      %v1373 = vld [vmem:[%s1365 + $0x1c] sm:$0xf]
      %v1374 = vld [vmem:[%s1365 + $0x20] sm:$0xf]
      %v1375 = vld [vmem:[%s1365 + $0x24] sm:$0xf]
      %v1376 = vld [vmem:[%s1365 + $0x28] sm:$0xf]
      %v1377 = vld [vmem:[%s1365 + $0x2c] sm:$0xf]
      %v1378 = vld [vmem:[%s1365 + $0x30] sm:$0xf]
      %v1379 = vld [vmem:[%s1365 + $0x34] sm:$0xf]
      %v1380 = vld [vmem:[%s1365 + $0x38] sm:$0xf]
      %v1381 = vld [vmem:[%s1365 + $0x3c] sm:$0xf]
      %v1382 = vld [vmem:[%s1365 + $0x40] sm:$0xf]
      %v1383 = vld [vmem:[%s1365 + $0x44] sm:$0xf]
      %v1384 = vld [vmem:[%s1365 + $0x48] sm:$0xf]
      %v1385 = vld [vmem:[%s1365 + $0x4c] sm:$0xf]
      %v1386 = vld [vmem:[%s1365 + $0x50] sm:$0xf]
      %v1387 = vld [vmem:[%s1365 + $0x54] sm:$0xf]
      %v1388 = vld [vmem:[%s1365 + $0x58] sm:$0xf]
      %v1389 = vld [vmem:[%s1365 + $0x5c] sm:$0xf]
      %v1390 = vld [vmem:[%s1365 + $0x60] sm:$0xf]
      %v1391 = vld [vmem:[%s1365 + $0x64] sm:$0xf]
      %v1392 = vld [vmem:[%s1365 + $0x68] sm:$0xf]
      %v1393 = vld [vmem:[%s1365 + $0x6c] sm:$0xf]
      %v1394 = vld [vmem:[%s1365 + $0x70] sm:$0xf]
      %v1395 = vld [vmem:[%s1365 + $0x74] sm:$0xf]
      %v1396 = vld [vmem:[%s1365 + $0x78] sm:$0xf]
      %v1397 = vld [vmem:[%s1365 + $0x7c] sm:$0xf]
      %v1398 = vld [vmem:[%s1365 + $0x80] sm:$0xf]
      %v1399 = vld [vmem:[%s1365 + $0x84] sm:$0xf]
      %v1400 = vld [vmem:[%s1365 + $0x88] sm:$0xf]
      %v1401 = vld [vmem:[%s1365 + $0x8c] sm:$0xf]
      %v1402 = vld [vmem:[%s1365 + $0x90] sm:$0xf]
      %v1403 = vld [vmem:[%s1365 + $0x94] sm:$0xf]
      %v1404 = vld [vmem:[%s1365 + $0x98] sm:$0xf]
      %v1405 = vld [vmem:[%s1365 + $0x9c] sm:$0xf]
      %v1406 = vld [vmem:[%s1365 + $0xa0] sm:$0xf]
      %v1407 = vld [vmem:[%s1365 + $0xa4] sm:$0xf]
      %v1408 = vld [vmem:[%s1365 + $0xa8] sm:$0xf]
      %v1409 = vld [vmem:[%s1365 + $0xac] sm:$0xf]
      %v1410 = vld [vmem:[%s1365 + $0xb0] sm:$0xf]
      %v1411 = vld [vmem:[%s1365 + $0xb4] sm:$0xf]
      %v1412 = vld [vmem:[%s1365 + $0xb8] sm:$0xf]
      %v1413 = vld [vmem:[%s1365 + $0xbc] sm:$0xf]
      %v1414 = vld [vmem:[%s1365 + $0xc0] sm:$0xf]
      %v1415 = vld [vmem:[%s1365 + $0xc4] sm:$0xf]
      %v1416 = vld [vmem:[%s1365 + $0xc8] sm:$0xf]
      %v1417 = vld [vmem:[%s1365 + $0xcc] sm:$0xf]
      %v1418 = vld [vmem:[%s1365 + $0xd0] sm:$0xf]
      %v1419 = vld [vmem:[%s1365 + $0xd4] sm:$0xf]
      %v1420 = vld [vmem:[%s1365 + $0xd8] sm:$0xf]
      %v1421 = vld [vmem:[%s1365 + $0xdc] sm:$0xf]
      %v1422 = vld [vmem:[%s1365 + $0xe0] sm:$0xf]
      %v1423 = vld [vmem:[%s1365 + $0xe4] sm:$0xf]
      %v1424 = vld [vmem:[%s1365 + $0xe8] sm:$0xf]
      %v1425 = vld [vmem:[%s1365 + $0xec] sm:$0xf]
      %v1426 = vld [vmem:[%s1365 + $0xf0] sm:$0xf]
      %v1427 = vld [vmem:[%s1365 + $0xf4] sm:$0xf]
      %v1428 = vld [vmem:[%s1365 + $0xf8] sm:$0xf]
      %v1429 = vld [vmem:[%s1365 + $0xfc] sm:$0xf]
      %v1446 = vunpack.c.l.b16 %v1349
      %v1447 = vunpack.c.h.b16 %v1349
      %v1448 = vunpack.c.l.b16 %v1350
      %v1449 = vunpack.c.h.b16 %v1350
      %v1450 = vunpack.c.l.b16 %v1351
      %v1451 = vunpack.c.h.b16 %v1351
      %v1452 = vunpack.c.l.b16 %v1352
      %v1453 = vunpack.c.h.b16 %v1352
      %v1454 = vunpack.c.l.b16 %v1353
      %v1455 = vunpack.c.h.b16 %v1353
      %v1456 = vunpack.c.l.b16 %v1354
      %v1457 = vunpack.c.h.b16 %v1354
      %v1458 = vunpack.c.l.b16 %v1355
      %v1459 = vunpack.c.h.b16 %v1355
      %v1460 = vunpack.c.l.b16 %v1356
      %v1461 = vunpack.c.h.b16 %v1356
      %v1462 = vunpack.c.l.b16 %v1357
      %v1463 = vunpack.c.h.b16 %v1357
      %v1464 = vunpack.c.l.b16 %v1358
      %v1465 = vunpack.c.h.b16 %v1358
      %v1466 = vunpack.c.l.b16 %v1359
      %v1467 = vunpack.c.h.b16 %v1359
      %v1468 = vunpack.c.l.b16 %v1360
      %v1469 = vunpack.c.h.b16 %v1360
      %v1470 = vunpack.c.l.b16 %v1361
      %v1471 = vunpack.c.h.b16 %v1361
      %v1472 = vunpack.c.l.b16 %v1362
      %v1473 = vunpack.c.h.b16 %v1362
      %v1474 = vunpack.c.l.b16 %v1363
      %v1475 = vunpack.c.h.b16 %v1363
      %v1476 = vunpack.c.l.b16 %v1364
      %v1477 = vunpack.c.h.b16 %v1364
      %v1478 = vpack.c.b16 %v1450, %v1446
      %v1479 = vpack.c.b16 %v1451, %v1447
      %v1480 = vpack.c.b16 %v1452, %v1448
      %v1481 = vpack.c.b16 %v1453, %v1449
      %v1482 = vpack.c.b16 %v1458, %v1454
      %v1483 = vpack.c.b16 %v1459, %v1455
      %v1484 = vpack.c.b16 %v1460, %v1456
      %v1485 = vpack.c.b16 %v1461, %v1457
      %v1486 = vpack.c.b16 %v1466, %v1462
      %v1487 = vpack.c.b16 %v1467, %v1463
      %v1488 = vpack.c.b16 %v1468, %v1464
      %v1489 = vpack.c.b16 %v1469, %v1465
      %v1490 = vpack.c.b16 %v1474, %v1470
      %v1491 = vpack.c.b16 %v1475, %v1471
      %v1492 = vpack.c.b16 %v1476, %v1472
      %v1493 = vpack.c.b16 %v1477, %v1473
      %v1574 = vunpack.c.l.b16 %v1366
      %v1575 = vunpack.c.l.b16 %v1367
      %v1576 = vunpack.c.l.b16 %v1368
      %v1577 = vunpack.c.l.b16 %v1369
      %v1578 = vunpack.c.l.b16 %v1370
      %v1579 = vunpack.c.l.b16 %v1371
      %v1580 = vunpack.c.l.b16 %v1372
      %v1581 = vunpack.c.l.b16 %v1373
      %v1582 = vunpack.c.l.b16 %v1374
      %v1583 = vunpack.c.l.b16 %v1375
      %v1584 = vunpack.c.l.b16 %v1376
      %v1585 = vunpack.c.l.b16 %v1377
      %v1586 = vunpack.c.l.b16 %v1378
      %v1587 = vunpack.c.l.b16 %v1379
      %v1588 = vunpack.c.l.b16 %v1380
      %v1589 = vunpack.c.l.b16 %v1381
      %v1590 = vunpack.c.l.b16 %v1382
      %v1591 = vunpack.c.l.b16 %v1383
      %v1592 = vunpack.c.l.b16 %v1384
      %v1593 = vunpack.c.l.b16 %v1385
      %v1594 = vunpack.c.l.b16 %v1386
      %v1595 = vunpack.c.l.b16 %v1387
      %v1596 = vunpack.c.l.b16 %v1388
      %v1597 = vunpack.c.l.b16 %v1389
      %v1598 = vunpack.c.l.b16 %v1390
      %v1599 = vunpack.c.l.b16 %v1391
      %v1600 = vunpack.c.l.b16 %v1392
      %v1601 = vunpack.c.l.b16 %v1393
      %v1602 = vunpack.c.l.b16 %v1394
      %v1603 = vunpack.c.l.b16 %v1395
      %v1604 = vunpack.c.l.b16 %v1396
      %v1605 = vunpack.c.l.b16 %v1397
      %v1606 = vunpack.c.l.b16 %v1398
      %v1607 = vunpack.c.l.b16 %v1399
      %v1608 = vunpack.c.l.b16 %v1400
      %v1609 = vunpack.c.l.b16 %v1401
      %v1610 = vunpack.c.l.b16 %v1402
      %v1611 = vunpack.c.l.b16 %v1403
      %v1612 = vunpack.c.l.b16 %v1404
      %v1613 = vunpack.c.l.b16 %v1405
      %v1614 = vunpack.c.l.b16 %v1406
      %v1615 = vunpack.c.l.b16 %v1407
      %v1616 = vunpack.c.l.b16 %v1408
      %v1617 = vunpack.c.l.b16 %v1409
      %v1618 = vunpack.c.l.b16 %v1410
      %v1619 = vunpack.c.l.b16 %v1411
      %v1620 = vunpack.c.l.b16 %v1412
      %v1621 = vunpack.c.l.b16 %v1413
      %v1622 = vunpack.c.l.b16 %v1414
      %v1623 = vunpack.c.l.b16 %v1415
      %v1624 = vunpack.c.l.b16 %v1416
      %v1625 = vunpack.c.l.b16 %v1417
      %v1626 = vunpack.c.l.b16 %v1418
      %v1627 = vunpack.c.l.b16 %v1419
      %v1628 = vunpack.c.l.b16 %v1420
      %v1629 = vunpack.c.l.b16 %v1421
      %v1630 = vunpack.c.l.b16 %v1422
      %v1631 = vunpack.c.l.b16 %v1423
      %v1632 = vunpack.c.l.b16 %v1424
      %v1633 = vunpack.c.l.b16 %v1425
      %v1634 = vunpack.c.l.b16 %v1426
      %v1635 = vunpack.c.l.b16 %v1427
      %v1636 = vunpack.c.l.b16 %v1428
      %v1637 = vunpack.c.l.b16 %v1429
      %v1638 = vpack.c.b16 %v1575, %v1574
      %v1639 = vpack.c.b16 %v1577, %v1576
      %v1640 = vpack.c.b16 %v1579, %v1578
      %v1641 = vpack.c.b16 %v1581, %v1580
      %v1642 = vpack.c.b16 %v1583, %v1582
      %v1643 = vpack.c.b16 %v1585, %v1584
      %v1644 = vpack.c.b16 %v1587, %v1586
      %v1645 = vpack.c.b16 %v1589, %v1588
      %v1646 = vpack.c.b16 %v1591, %v1590
      %v1647 = vpack.c.b16 %v1593, %v1592
      %v1648 = vpack.c.b16 %v1595, %v1594
      %v1649 = vpack.c.b16 %v1597, %v1596
      %v1650 = vpack.c.b16 %v1599, %v1598
      %v1651 = vpack.c.b16 %v1601, %v1600
      %v1652 = vpack.c.b16 %v1603, %v1602
      %v1653 = vpack.c.b16 %v1605, %v1604
      %v1654 = vpack.c.b16 %v1607, %v1606
      %v1655 = vpack.c.b16 %v1609, %v1608
      %v1656 = vpack.c.b16 %v1611, %v1610
      %v1657 = vpack.c.b16 %v1613, %v1612
      %v1658 = vpack.c.b16 %v1615, %v1614
      %v1659 = vpack.c.b16 %v1617, %v1616
      %v1660 = vpack.c.b16 %v1619, %v1618
      %v1661 = vpack.c.b16 %v1621, %v1620
      %v1662 = vpack.c.b16 %v1623, %v1622
      %v1663 = vpack.c.b16 %v1625, %v1624
      %v1664 = vpack.c.b16 %v1627, %v1626
      %v1665 = vpack.c.b16 %v1629, %v1628
      %v1666 = vpack.c.b16 %v1631, %v1630
      %v1667 = vpack.c.b16 %v1633, %v1632
      %v1668 = vpack.c.b16 %v1635, %v1634
      %v1669 = vpack.c.b16 %v1637, %v1636
      %1702 = vmatprep.subr.bf16.mxu0 0
      %1703 = vmatpush1.bf16.msra.mxu0 %v1645
      %1704 = vmatprep.subr.bf16.mxu0 0
      %1705 = vmatpush1.bf16.msra.mxu0 %v1644
      %1706 = vmatprep.subr.bf16.mxu0 0
      %1707 = vmatpush1.bf16.msra.mxu0 %v1643
      %1708 = vmatprep.subr.bf16.mxu0 0
      %1709 = vmatpush1.bf16.msra.mxu0 %v1642
      %1710 = vmatprep.subr.bf16.mxu0 0
      %1711 = vmatpush1.bf16.msra.mxu0 %v1641
      %1712 = vmatprep.subr.bf16.mxu0 0
      %1713 = vmatpush1.bf16.msra.mxu0 %v1640
      %1714 = vmatprep.subr.bf16.mxu0 0
      %1715 = vmatpush1.bf16.msra.mxu0 %v1639
      %1716 = vmatprep.subr.bf16.mxu0 0
      %1717 = vmatpush1.bf16.msra.mxu0 %v1638
      %1718 = vmatprep.subr.bf16.mxu0 0
      %1719 = vmatpush2.bf16.msra.mxu0 %v1653
      %1720 = vmatprep.subr.bf16.mxu0 0
      %1721 = vmatpush2.bf16.msra.mxu0 %v1652
      %1722 = vmatprep.subr.bf16.mxu0 0
      %1723 = vmatpush2.bf16.msra.mxu0 %v1651
      %1724 = vmatprep.subr.bf16.mxu0 0
      %1725 = vmatpush2.bf16.msra.mxu0 %v1650
      %1726 = vmatprep.subr.bf16.mxu0 0
      %1727 = vmatpush2.bf16.msra.mxu0 %v1649
      %1728 = vmatprep.subr.bf16.mxu0 0
      %1729 = vmatpush2.bf16.msra.mxu0 %v1648
      %1730 = vmatprep.subr.bf16.mxu0 0
      %1731 = vmatpush2.bf16.msra.mxu0 %v1647
      %1732 = vmatprep.subr.bf16.mxu0 0
      %1733 = vmatpush2.bf16.msra.mxu0 %v1646
      %1734 = vmatprep.mubr.bf16.mxu0 %v1479
      %1735 = vmatmul.mubr.bf16.gmra.mxu0 %v1478
      %v1736 = vpop.f32.mrf.mxu0
      %v1737 = vadd.f32 0.0, %v1736
      %v1738 = vpop.f32.mrf.mxu0
      %v1739 = vpop.f32.mrf.mxu0
      %v1740 = vadd.f32 0.0, %v1739
      %v1741 = vpop.f32.mrf.mxu0
      %1742 = vmatprep.mubr.bf16.mxu0 %v1483
      %1743 = vmatmul.mubr.bf16.gmra.mxu0 %v1482
      %v1744 = vpop.f32.mrf.mxu0
      %v1745 = vadd.f32 0.0, %v1744
      %v1746 = vpop.f32.mrf.mxu0
      %v1747 = vpop.f32.mrf.mxu0
      %v1748 = vadd.f32 0.0, %v1747
      %v1749 = vpop.f32.mrf.mxu0
      %1750 = vmatprep.mubr.bf16.mxu0 %v1487
      %1751 = vmatmul.mubr.bf16.gmra.mxu0 %v1486
      %v1752 = vpop.f32.mrf.mxu0
      %v1753 = vadd.f32 0.0, %v1752
      %v1754 = vpop.f32.mrf.mxu0
      %v1755 = vpop.f32.mrf.mxu0
      %v1756 = vadd.f32 0.0, %v1755
      %v1757 = vpop.f32.mrf.mxu0
      %1758 = vmatprep.mubr.bf16.mxu0 %v1491
      %1759 = vmatmul.mubr.bf16.gmra.mxu0 %v1490
      %v1760 = vpop.f32.mrf.mxu0
      %v1761 = vadd.f32 0.0, %v1760
      %v1762 = vpop.f32.mrf.mxu0
      %v1763 = vpop.f32.mrf.mxu0
      %v1764 = vadd.f32 0.0, %v1763
      %v1765 = vpop.f32.mrf.mxu0
      %1766 = vdwg.mxu0
      %1767 = vmatprep.subr.bf16.mxu0 0
      %1768 = vmatpush1.bf16.msra.mxu0 %v1661
      %1769 = vmatprep.subr.bf16.mxu0 0
      %1770 = vmatpush1.bf16.msra.mxu0 %v1660
      %1771 = vmatprep.subr.bf16.mxu0 0
      %1772 = vmatpush1.bf16.msra.mxu0 %v1659
      %1773 = vmatprep.subr.bf16.mxu0 0
      %1774 = vmatpush1.bf16.msra.mxu0 %v1658
      %1775 = vmatprep.subr.bf16.mxu0 0
      %1776 = vmatpush1.bf16.msra.mxu0 %v1657
      %1777 = vmatprep.subr.bf16.mxu0 0
      %1778 = vmatpush1.bf16.msra.mxu0 %v1656
      %1779 = vmatprep.subr.bf16.mxu0 0
      %1780 = vmatpush1.bf16.msra.mxu0 %v1655
      %1781 = vmatprep.subr.bf16.mxu0 0
      %1782 = vmatpush1.bf16.msra.mxu0 %v1654
      %1783 = vmatprep.subr.bf16.mxu0 0
      %1784 = vmatpush2.bf16.msra.mxu0 %v1669
      %1785 = vmatprep.subr.bf16.mxu0 0
      %1786 = vmatpush2.bf16.msra.mxu0 %v1668
      %1787 = vmatprep.subr.bf16.mxu0 0
      %1788 = vmatpush2.bf16.msra.mxu0 %v1667
      %1789 = vmatprep.subr.bf16.mxu0 0
      %1790 = vmatpush2.bf16.msra.mxu0 %v1666
      %1791 = vmatprep.subr.bf16.mxu0 0
      %1792 = vmatpush2.bf16.msra.mxu0 %v1665
      %1793 = vmatprep.subr.bf16.mxu0 0
      %1794 = vmatpush2.bf16.msra.mxu0 %v1664
      %1795 = vmatprep.subr.bf16.mxu0 0
      %1796 = vmatpush2.bf16.msra.mxu0 %v1663
      %1797 = vmatprep.subr.bf16.mxu0 0
      %1798 = vmatpush2.bf16.msra.mxu0 %v1662
      %1799 = vmatprep.mubr.bf16.mxu0 %v1481
      %1800 = vmatmul.mubr.bf16.gmra.mxu0 %v1480
      %v1801 = vpop.f32.mrf.mxu0
      %v1802 = vadd.f32 %v1737, %v1801
      %v1803 = vpop.f32.mrf.mxu0
      %v1804 = vpop.f32.mrf.mxu0
      %v1805 = vadd.f32 %v1740, %v1804
      %v1806 = vpop.f32.mrf.mxu0
      %1807 = vmatprep.mubr.bf16.mxu0 %v1485
      %1808 = vmatmul.mubr.bf16.gmra.mxu0 %v1484
      %v1809 = vpop.f32.mrf.mxu0
      %v1810 = vadd.f32 %v1745, %v1809
      %v1811 = vpop.f32.mrf.mxu0
      %v1812 = vpop.f32.mrf.mxu0
      %v1813 = vadd.f32 %v1748, %v1812
      %v1814 = vpop.f32.mrf.mxu0
      %1815 = vmatprep.mubr.bf16.mxu0 %v1489
      %1816 = vmatmul.mubr.bf16.gmra.mxu0 %v1488
      %v1817 = vpop.f32.mrf.mxu0
      %v1818 = vadd.f32 %v1753, %v1817
      %v1819 = vpop.f32.mrf.mxu0
      %v1820 = vpop.f32.mrf.mxu0
      %v1821 = vadd.f32 %v1756, %v1820
      %v1822 = vpop.f32.mrf.mxu0
      %1823 = vmatprep.mubr.bf16.mxu0 %v1493
      %1824 = vmatmul.mubr.bf16.gmra.mxu0 %v1492
      %v1825 = vpop.f32.mrf.mxu0
      %v1826 = vadd.f32 %v1761, %v1825
      %v1827 = vpop.f32.mrf.mxu0
      %v1828 = vpop.f32.mrf.mxu0
      %v1829 = vadd.f32 %v1764, %v1828
      %v1830 = vpop.f32.mrf.mxu0
      %1831 = vdwg.mxu0
      %v1832 = vadd.f32 %v1318, %v1802
      %v1833 = vadd.f32 %v1321, %v1805
      %v1834 = vadd.f32 %v1326, %v1810
      %v1835 = vadd.f32 %v1329, %v1813
      %v1836 = vadd.f32 %v1334, %v1818
      %v1837 = vadd.f32 %v1337, %v1821
      %v1838 = vadd.f32 %v1342, %v1826
      %v1839 = vadd.f32 %v1345, %v1829
      %v1840 = vld [vmem:[%s1348] sm:$0xff]
      %v1841 = vld [vmem:[%s1348 + $0x8] sm:$0xff]
      %v1842 = vld [vmem:[%s1348 + $0x10] sm:$0x11]
      %v1843 = vld [vmem:[%s1348 + $0x18] sm:$0x11]
      %v1844 = vld [vmem:[%s1348 + $0x20] sm:$0xff]
      %v1845 = vld [vmem:[%s1348 + $0x28] sm:$0xff]
      %v1846 = vld [vmem:[%s1348 + $0x30] sm:$0x11]
      %v1847 = vld [vmem:[%s1348 + $0x38] sm:$0x11]
      %v1848 = vld [vmem:[%s1348 + $0x40] sm:$0xff]
      %v1849 = vld [vmem:[%s1348 + $0x48] sm:$0xff]
      %v1850 = vld [vmem:[%s1348 + $0x50] sm:$0x11]
      %v1851 = vld [vmem:[%s1348 + $0x58] sm:$0x11]
      %v1852 = vld [vmem:[%s1348 + $0x60] sm:$0xff]
      %v1853 = vld [vmem:[%s1348 + $0x68] sm:$0xff]
      %v1854 = vld [vmem:[%s1348 + $0x70] sm:$0x11]
      %v1855 = vld [vmem:[%s1348 + $0x78] sm:$0x11]
      %v1856 = vld [vmem:[%s1348 + $0x80] sm:$0xff]
      %v1857 = vld [vmem:[%s1348 + $0x88] sm:$0xff]
      %v1858 = vld [vmem:[%s1348 + $0x90] sm:$0x11]
      %v1859 = vld [vmem:[%s1348 + $0x98] sm:$0x11]
      %v1860 = vld [vmem:[%s1348 + $0xa0] sm:$0xff]
      %v1861 = vld [vmem:[%s1348 + $0xa8] sm:$0xff]
      %v1862 = vld [vmem:[%s1348 + $0xb0] sm:$0x11]
      %v1863 = vld [vmem:[%s1348 + $0xb8] sm:$0x11]
      %v1864 = vld [vmem:[%s1348 + $0xc0] sm:$0xff]
      %v1865 = vld [vmem:[%s1348 + $0xc8] sm:$0xff]
      %v1866 = vld [vmem:[%s1348 + $0xd0] sm:$0x11]
      %v1867 = vld [vmem:[%s1348 + $0xd8] sm:$0x11]
      %v1868 = vld [vmem:[%s1348 + $0xe0] sm:$0xff]
      %v1869 = vld [vmem:[%s1348 + $0xe8] sm:$0xff]
      %v1870 = vld [vmem:[%s1348 + $0xf0] sm:$0x11]
      %v1871 = vld [vmem:[%s1348 + $0xf8] sm:$0x11]
      %v1873 = vshrl.u32 %v1840, 16
      %v1875 = vrot.slane %v1873, 4
      %v1876 = vshll.u32 %v1840, 16
      %v1878 = vrot.slane %v1876, 5
      %v1879 = vor.u32 %v1875, %v1878
      %v1880 = vrot.slane %v1879, 4
      %v1882 = vshll.u32 %v1842, 16
      %v1884 = vrot.slane %v1882, 5
      %v1885 = vsel %vm270, %v1880, %v1884
      %v1887 = vshrl.u32 %v1841, 16
      %v1889 = vrot.slane %v1887, 4
      %v1890 = vshll.u32 %v1841, 16
      %v1892 = vrot.slane %v1890, 5
      %v1893 = vor.u32 %v1889, %v1892
      %v1894 = vrot.slane %v1893, 4
      %v1896 = vshll.u32 %v1843, 16
      %v1898 = vrot.slane %v1896, 5
      %v1899 = vsel %vm270, %v1894, %v1898
      %v1901 = vshrl.u32 %v1844, 16
      %v1903 = vrot.slane %v1901, 4
      %v1904 = vshll.u32 %v1844, 16
      %v1906 = vrot.slane %v1904, 5
      %v1907 = vor.u32 %v1903, %v1906
      %v1908 = vrot.slane %v1907, 4
      %v1910 = vshll.u32 %v1846, 16
      %v1912 = vrot.slane %v1910, 5
      %v1913 = vsel %vm270, %v1908, %v1912
      %v1915 = vshrl.u32 %v1845, 16
      %v1917 = vrot.slane %v1915, 4
      %v1918 = vshll.u32 %v1845, 16
      %v1920 = vrot.slane %v1918, 5
      %v1921 = vor.u32 %v1917, %v1920
      %v1922 = vrot.slane %v1921, 4
      %v1924 = vshll.u32 %v1847, 16
      %v1926 = vrot.slane %v1924, 5
      %v1927 = vsel %vm270, %v1922, %v1926
      %v1929 = vshrl.u32 %v1848, 16
      %v1931 = vrot.slane %v1929, 4
      %v1932 = vshll.u32 %v1848, 16
      %v1934 = vrot.slane %v1932, 5
      %v1935 = vor.u32 %v1931, %v1934
      %v1936 = vrot.slane %v1935, 4
      %v1938 = vshll.u32 %v1850, 16
      %v1940 = vrot.slane %v1938, 5
      %v1941 = vsel %vm270, %v1936, %v1940
      %v1943 = vshrl.u32 %v1849, 16
      %v1945 = vrot.slane %v1943, 4
      %v1946 = vshll.u32 %v1849, 16
      %v1948 = vrot.slane %v1946, 5
      %v1949 = vor.u32 %v1945, %v1948
      %v1950 = vrot.slane %v1949, 4
      %v1952 = vshll.u32 %v1851, 16
      %v1954 = vrot.slane %v1952, 5
      %v1955 = vsel %vm270, %v1950, %v1954
      %v1957 = vshrl.u32 %v1852, 16
      %v1959 = vrot.slane %v1957, 4
      %v1960 = vshll.u32 %v1852, 16
      %v1962 = vrot.slane %v1960, 5
      %v1963 = vor.u32 %v1959, %v1962
      %v1964 = vrot.slane %v1963, 4
      %v1966 = vshll.u32 %v1854, 16
      %v1968 = vrot.slane %v1966, 5
      %v1969 = vsel %vm270, %v1964, %v1968
      %v1971 = vshrl.u32 %v1853, 16
      %v1973 = vrot.slane %v1971, 4
      %v1974 = vshll.u32 %v1853, 16
      %v1976 = vrot.slane %v1974, 5
      %v1977 = vor.u32 %v1973, %v1976
      %v1978 = vrot.slane %v1977, 4
      %v1980 = vshll.u32 %v1855, 16
      %v1982 = vrot.slane %v1980, 5
      %v1983 = vsel %vm270, %v1978, %v1982
      %v1985 = vshrl.u32 %v1856, 16
      %v1987 = vrot.slane %v1985, 4
      %v1988 = vshll.u32 %v1856, 16
      %v1990 = vrot.slane %v1988, 5
      %v1991 = vor.u32 %v1987, %v1990
      %v1992 = vrot.slane %v1991, 4
      %v1994 = vshll.u32 %v1858, 16
      %v1996 = vrot.slane %v1994, 5
      %v1997 = vsel %vm270, %v1992, %v1996
      %v1999 = vshrl.u32 %v1857, 16
      %v2001 = vrot.slane %v1999, 4
      %v2002 = vshll.u32 %v1857, 16
      %v2004 = vrot.slane %v2002, 5
      %v2005 = vor.u32 %v2001, %v2004
      %v2006 = vrot.slane %v2005, 4
      %v2008 = vshll.u32 %v1859, 16
      %v2010 = vrot.slane %v2008, 5
      %v2011 = vsel %vm270, %v2006, %v2010
      %v2013 = vshrl.u32 %v1860, 16
      %v2015 = vrot.slane %v2013, 4
      %v2016 = vshll.u32 %v1860, 16
      %v2018 = vrot.slane %v2016, 5
      %v2019 = vor.u32 %v2015, %v2018
      %v2020 = vrot.slane %v2019, 4
      %v2022 = vshll.u32 %v1862, 16
      %v2024 = vrot.slane %v2022, 5
      %v2025 = vsel %vm270, %v2020, %v2024
      %v2027 = vshrl.u32 %v1861, 16
      %v2029 = vrot.slane %v2027, 4
      %v2030 = vshll.u32 %v1861, 16
      %v2032 = vrot.slane %v2030, 5
      %v2033 = vor.u32 %v2029, %v2032
      %v2034 = vrot.slane %v2033, 4
      %v2036 = vshll.u32 %v1863, 16
      %v2038 = vrot.slane %v2036, 5
      %v2039 = vsel %vm270, %v2034, %v2038
      %v2041 = vshrl.u32 %v1864, 16
      %v2043 = vrot.slane %v2041, 4
      %v2044 = vshll.u32 %v1864, 16
      %v2046 = vrot.slane %v2044, 5
      %v2047 = vor.u32 %v2043, %v2046
      %v2048 = vrot.slane %v2047, 4
      %v2050 = vshll.u32 %v1866, 16
      %v2052 = vrot.slane %v2050, 5
      %v2053 = vsel %vm270, %v2048, %v2052
      %v2055 = vshrl.u32 %v1865, 16
      %v2057 = vrot.slane %v2055, 4
      %v2058 = vshll.u32 %v1865, 16
      %v2060 = vrot.slane %v2058, 5
      %v2061 = vor.u32 %v2057, %v2060
      %v2062 = vrot.slane %v2061, 4
      %v2064 = vshll.u32 %v1867, 16
      %v2066 = vrot.slane %v2064, 5
      %v2067 = vsel %vm270, %v2062, %v2066
      %v2069 = vshrl.u32 %v1868, 16
      %v2071 = vrot.slane %v2069, 4
      %v2072 = vshll.u32 %v1868, 16
      %v2074 = vrot.slane %v2072, 5
      %v2075 = vor.u32 %v2071, %v2074
      %v2076 = vrot.slane %v2075, 4
      %v2078 = vshll.u32 %v1870, 16
      %v2080 = vrot.slane %v2078, 5
      %v2081 = vsel %vm270, %v2076, %v2080
      %v2083 = vshrl.u32 %v1869, 16
      %v2085 = vrot.slane %v2083, 4
      %v2086 = vshll.u32 %v1869, 16
      %v2088 = vrot.slane %v2086, 5
      %v2089 = vor.u32 %v2085, %v2088
      %v2090 = vrot.slane %v2089, 4
      %v2092 = vshll.u32 %v1871, 16
      %v2094 = vrot.slane %v2092, 5
      %v2095 = vsel %vm270, %v2090, %v2094
      %s2096 = scalar_lea.vmem %s1, 768
      %v2097 = vld [vmem:[%s2096] sm:$0xf]
      %v2098 = vld [vmem:[%s2096 + $0x4] sm:$0xf]
      %v2099 = vld [vmem:[%s2096 + $0x8] sm:$0xf]
      %v2100 = vld [vmem:[%s2096 + $0xc] sm:$0xf]
      %v2101 = vld [vmem:[%s2096 + $0x10] sm:$0xf]
      %v2102 = vld [vmem:[%s2096 + $0x14] sm:$0xf]
      %v2103 = vld [vmem:[%s2096 + $0x18] sm:$0xf]
      %v2104 = vld [vmem:[%s2096 + $0x1c] sm:$0xf]
      %v2105 = vld [vmem:[%s2096 + $0x20] sm:$0xf]
      %v2106 = vld [vmem:[%s2096 + $0x24] sm:$0xf]
      %v2107 = vld [vmem:[%s2096 + $0x28] sm:$0xf]
      %v2108 = vld [vmem:[%s2096 + $0x2c] sm:$0xf]
      %v2109 = vld [vmem:[%s2096 + $0x30] sm:$0xf]
      %v2110 = vld [vmem:[%s2096 + $0x34] sm:$0xf]
      %v2111 = vld [vmem:[%s2096 + $0x38] sm:$0xf]
      %v2112 = vld [vmem:[%s2096 + $0x3c] sm:$0xf]
      %v2113 = vld [vmem:[%s2096 + $0x40] sm:$0xf]
      %v2114 = vld [vmem:[%s2096 + $0x44] sm:$0xf]
      %v2115 = vld [vmem:[%s2096 + $0x48] sm:$0xf]
      %v2116 = vld [vmem:[%s2096 + $0x4c] sm:$0xf]
      %v2117 = vld [vmem:[%s2096 + $0x50] sm:$0xf]
      %v2118 = vld [vmem:[%s2096 + $0x54] sm:$0xf]
      %v2119 = vld [vmem:[%s2096 + $0x58] sm:$0xf]
      %v2120 = vld [vmem:[%s2096 + $0x5c] sm:$0xf]
      %v2121 = vld [vmem:[%s2096 + $0x60] sm:$0xf]
      %v2122 = vld [vmem:[%s2096 + $0x64] sm:$0xf]
      %v2123 = vld [vmem:[%s2096 + $0x68] sm:$0xf]
      %v2124 = vld [vmem:[%s2096 + $0x6c] sm:$0xf]
      %v2125 = vld [vmem:[%s2096 + $0x70] sm:$0xf]
      %v2126 = vld [vmem:[%s2096 + $0x74] sm:$0xf]
      %v2127 = vld [vmem:[%s2096 + $0x78] sm:$0xf]
      %v2128 = vld [vmem:[%s2096 + $0x7c] sm:$0xf]
      %v2129 = vld [vmem:[%s2096 + $0x80] sm:$0xf]
      %v2130 = vld [vmem:[%s2096 + $0x84] sm:$0xf]
      %v2131 = vld [vmem:[%s2096 + $0x88] sm:$0xf]
      %v2132 = vld [vmem:[%s2096 + $0x8c] sm:$0xf]
      %v2133 = vld [vmem:[%s2096 + $0x90] sm:$0xf]
      %v2134 = vld [vmem:[%s2096 + $0x94] sm:$0xf]
      %v2135 = vld [vmem:[%s2096 + $0x98] sm:$0xf]
      %v2136 = vld [vmem:[%s2096 + $0x9c] sm:$0xf]
      %v2137 = vld [vmem:[%s2096 + $0xa0] sm:$0xf]
      %v2138 = vld [vmem:[%s2096 + $0xa4] sm:$0xf]
      %v2139 = vld [vmem:[%s2096 + $0xa8] sm:$0xf]
      %v2140 = vld [vmem:[%s2096 + $0xac] sm:$0xf]
      %v2141 = vld [vmem:[%s2096 + $0xb0] sm:$0xf]
      %v2142 = vld [vmem:[%s2096 + $0xb4] sm:$0xf]
      %v2143 = vld [vmem:[%s2096 + $0xb8] sm:$0xf]
      %v2144 = vld [vmem:[%s2096 + $0xbc] sm:$0xf]
      %v2145 = vld [vmem:[%s2096 + $0xc0] sm:$0xf]
      %v2146 = vld [vmem:[%s2096 + $0xc4] sm:$0xf]
      %v2147 = vld [vmem:[%s2096 + $0xc8] sm:$0xf]
      %v2148 = vld [vmem:[%s2096 + $0xcc] sm:$0xf]
      %v2149 = vld [vmem:[%s2096 + $0xd0] sm:$0xf]
      %v2150 = vld [vmem:[%s2096 + $0xd4] sm:$0xf]
      %v2151 = vld [vmem:[%s2096 + $0xd8] sm:$0xf]
      %v2152 = vld [vmem:[%s2096 + $0xdc] sm:$0xf]
      %v2153 = vld [vmem:[%s2096 + $0xe0] sm:$0xf]
      %v2154 = vld [vmem:[%s2096 + $0xe4] sm:$0xf]
      %v2155 = vld [vmem:[%s2096 + $0xe8] sm:$0xf]
      %v2156 = vld [vmem:[%s2096 + $0xec] sm:$0xf]
      %v2157 = vld [vmem:[%s2096 + $0xf0] sm:$0xf]
      %v2158 = vld [vmem:[%s2096 + $0xf4] sm:$0xf]
      %v2159 = vld [vmem:[%s2096 + $0xf8] sm:$0xf]
      %v2160 = vld [vmem:[%s2096 + $0xfc] sm:$0xf]
      %v2161 = vunpack.c.l.b16 %v1885
      %v2162 = vunpack.c.h.b16 %v1885
      %v2163 = vunpack.c.l.b16 %v1899
      %v2164 = vunpack.c.h.b16 %v1899
      %v2165 = vunpack.c.l.b16 %v1913
      %v2166 = vunpack.c.h.b16 %v1913
      %v2167 = vunpack.c.l.b16 %v1927
      %v2168 = vunpack.c.h.b16 %v1927
      %v2169 = vunpack.c.l.b16 %v1941
      %v2170 = vunpack.c.h.b16 %v1941
      %v2171 = vunpack.c.l.b16 %v1955
      %v2172 = vunpack.c.h.b16 %v1955
      %v2173 = vunpack.c.l.b16 %v1969
      %v2174 = vunpack.c.h.b16 %v1969
      %v2175 = vunpack.c.l.b16 %v1983
      %v2176 = vunpack.c.h.b16 %v1983
      %v2177 = vunpack.c.l.b16 %v1997
      %v2178 = vunpack.c.h.b16 %v1997
      %v2179 = vunpack.c.l.b16 %v2011
      %v2180 = vunpack.c.h.b16 %v2011
      %v2181 = vunpack.c.l.b16 %v2025
      %v2182 = vunpack.c.h.b16 %v2025
      %v2183 = vunpack.c.l.b16 %v2039
      %v2184 = vunpack.c.h.b16 %v2039
      %v2185 = vunpack.c.l.b16 %v2053
      %v2186 = vunpack.c.h.b16 %v2053
      %v2187 = vunpack.c.l.b16 %v2067
      %v2188 = vunpack.c.h.b16 %v2067
      %v2189 = vunpack.c.l.b16 %v2081
      %v2190 = vunpack.c.h.b16 %v2081
      %v2191 = vunpack.c.l.b16 %v2095
      %v2192 = vunpack.c.h.b16 %v2095
      %v2193 = vpack.c.b16 %v2165, %v2161
      %v2194 = vpack.c.b16 %v2166, %v2162
      %v2195 = vpack.c.b16 %v2167, %v2163
      %v2196 = vpack.c.b16 %v2168, %v2164
      %v2197 = vpack.c.b16 %v2173, %v2169
      %v2198 = vpack.c.b16 %v2174, %v2170
      %v2199 = vpack.c.b16 %v2175, %v2171
      %v2200 = vpack.c.b16 %v2176, %v2172
      %v2201 = vpack.c.b16 %v2181, %v2177
      %v2202 = vpack.c.b16 %v2182, %v2178
      %v2203 = vpack.c.b16 %v2183, %v2179
      %v2204 = vpack.c.b16 %v2184, %v2180
      %v2205 = vpack.c.b16 %v2189, %v2185
      %v2206 = vpack.c.b16 %v2190, %v2186
      %v2207 = vpack.c.b16 %v2191, %v2187
      %v2208 = vpack.c.b16 %v2192, %v2188
      %v2289 = vunpack.c.l.b16 %v2097
      %v2290 = vunpack.c.l.b16 %v2098
      %v2291 = vunpack.c.l.b16 %v2099
      %v2292 = vunpack.c.l.b16 %v2100
      %v2293 = vunpack.c.l.b16 %v2101
      %v2294 = vunpack.c.l.b16 %v2102
      %v2295 = vunpack.c.l.b16 %v2103
      %v2296 = vunpack.c.l.b16 %v2104
      %v2297 = vunpack.c.l.b16 %v2105
      %v2298 = vunpack.c.l.b16 %v2106
      %v2299 = vunpack.c.l.b16 %v2107
      %v2300 = vunpack.c.l.b16 %v2108
      %v2301 = vunpack.c.l.b16 %v2109
      %v2302 = vunpack.c.l.b16 %v2110
      %v2303 = vunpack.c.l.b16 %v2111
      %v2304 = vunpack.c.l.b16 %v2112
      %v2305 = vunpack.c.l.b16 %v2113
      %v2306 = vunpack.c.l.b16 %v2114
      %v2307 = vunpack.c.l.b16 %v2115
      %v2308 = vunpack.c.l.b16 %v2116
      %v2309 = vunpack.c.l.b16 %v2117
      %v2310 = vunpack.c.l.b16 %v2118
      %v2311 = vunpack.c.l.b16 %v2119
      %v2312 = vunpack.c.l.b16 %v2120
      %v2313 = vunpack.c.l.b16 %v2121
      %v2314 = vunpack.c.l.b16 %v2122
      %v2315 = vunpack.c.l.b16 %v2123
      %v2316 = vunpack.c.l.b16 %v2124
      %v2317 = vunpack.c.l.b16 %v2125
      %v2318 = vunpack.c.l.b16 %v2126
      %v2319 = vunpack.c.l.b16 %v2127
      %v2320 = vunpack.c.l.b16 %v2128
      %v2321 = vunpack.c.l.b16 %v2129
      %v2322 = vunpack.c.l.b16 %v2130
      %v2323 = vunpack.c.l.b16 %v2131
      %v2324 = vunpack.c.l.b16 %v2132
      %v2325 = vunpack.c.l.b16 %v2133
      %v2326 = vunpack.c.l.b16 %v2134
      %v2327 = vunpack.c.l.b16 %v2135
      %v2328 = vunpack.c.l.b16 %v2136
      %v2329 = vunpack.c.l.b16 %v2137
      %v2330 = vunpack.c.l.b16 %v2138
      %v2331 = vunpack.c.l.b16 %v2139
      %v2332 = vunpack.c.l.b16 %v2140
      %v2333 = vunpack.c.l.b16 %v2141
      %v2334 = vunpack.c.l.b16 %v2142
      %v2335 = vunpack.c.l.b16 %v2143
      %v2336 = vunpack.c.l.b16 %v2144
      %v2337 = vunpack.c.l.b16 %v2145
      %v2338 = vunpack.c.l.b16 %v2146
      %v2339 = vunpack.c.l.b16 %v2147
      %v2340 = vunpack.c.l.b16 %v2148
      %v2341 = vunpack.c.l.b16 %v2149
      %v2342 = vunpack.c.l.b16 %v2150
      %v2343 = vunpack.c.l.b16 %v2151
      %v2344 = vunpack.c.l.b16 %v2152
      %v2345 = vunpack.c.l.b16 %v2153
      %v2346 = vunpack.c.l.b16 %v2154
      %v2347 = vunpack.c.l.b16 %v2155
      %v2348 = vunpack.c.l.b16 %v2156
      %v2349 = vunpack.c.l.b16 %v2157
      %v2350 = vunpack.c.l.b16 %v2158
      %v2351 = vunpack.c.l.b16 %v2159
      %v2352 = vunpack.c.l.b16 %v2160
      %v2353 = vpack.c.b16 %v2290, %v2289
      %v2354 = vpack.c.b16 %v2292, %v2291
      %v2355 = vpack.c.b16 %v2294, %v2293
      %v2356 = vpack.c.b16 %v2296, %v2295
      %v2357 = vpack.c.b16 %v2298, %v2297
      %v2358 = vpack.c.b16 %v2300, %v2299
      %v2359 = vpack.c.b16 %v2302, %v2301
      %v2360 = vpack.c.b16 %v2304, %v2303
      %v2361 = vpack.c.b16 %v2306, %v2305
      %v2362 = vpack.c.b16 %v2308, %v2307
      %v2363 = vpack.c.b16 %v2310, %v2309
      %v2364 = vpack.c.b16 %v2312, %v2311
      %v2365 = vpack.c.b16 %v2314, %v2313
      %v2366 = vpack.c.b16 %v2316, %v2315
      %v2367 = vpack.c.b16 %v2318, %v2317
      %v2368 = vpack.c.b16 %v2320, %v2319
      %v2369 = vpack.c.b16 %v2322, %v2321
      %v2370 = vpack.c.b16 %v2324, %v2323
      %v2371 = vpack.c.b16 %v2326, %v2325
      %v2372 = vpack.c.b16 %v2328, %v2327
      %v2373 = vpack.c.b16 %v2330, %v2329
      %v2374 = vpack.c.b16 %v2332, %v2331
      %v2375 = vpack.c.b16 %v2334, %v2333
      %v2376 = vpack.c.b16 %v2336, %v2335
      %v2377 = vpack.c.b16 %v2338, %v2337
      %v2378 = vpack.c.b16 %v2340, %v2339
      %v2379 = vpack.c.b16 %v2342, %v2341
      %v2380 = vpack.c.b16 %v2344, %v2343
      %v2381 = vpack.c.b16 %v2346, %v2345
      %v2382 = vpack.c.b16 %v2348, %v2347
      %v2383 = vpack.c.b16 %v2350, %v2349
      %v2384 = vpack.c.b16 %v2352, %v2351
      %2417 = vmatprep.subr.bf16.mxu0 0
      %2418 = vmatpush1.bf16.msra.mxu0 %v2360
      %2419 = vmatprep.subr.bf16.mxu0 0
      %2420 = vmatpush1.bf16.msra.mxu0 %v2359
      %2421 = vmatprep.subr.bf16.mxu0 0
      %2422 = vmatpush1.bf16.msra.mxu0 %v2358
      %2423 = vmatprep.subr.bf16.mxu0 0
      %2424 = vmatpush1.bf16.msra.mxu0 %v2357
      %2425 = vmatprep.subr.bf16.mxu0 0
      %2426 = vmatpush1.bf16.msra.mxu0 %v2356
      %2427 = vmatprep.subr.bf16.mxu0 0
      %2428 = vmatpush1.bf16.msra.mxu0 %v2355
      %2429 = vmatprep.subr.bf16.mxu0 0
      %2430 = vmatpush1.bf16.msra.mxu0 %v2354
      %2431 = vmatprep.subr.bf16.mxu0 0
      %2432 = vmatpush1.bf16.msra.mxu0 %v2353
      %2433 = vmatprep.subr.bf16.mxu0 0
      %2434 = vmatpush2.bf16.msra.mxu0 %v2368
      %2435 = vmatprep.subr.bf16.mxu0 0
      %2436 = vmatpush2.bf16.msra.mxu0 %v2367
      %2437 = vmatprep.subr.bf16.mxu0 0
      %2438 = vmatpush2.bf16.msra.mxu0 %v2366
      %2439 = vmatprep.subr.bf16.mxu0 0
      %2440 = vmatpush2.bf16.msra.mxu0 %v2365
      %2441 = vmatprep.subr.bf16.mxu0 0
      %2442 = vmatpush2.bf16.msra.mxu0 %v2364
      %2443 = vmatprep.subr.bf16.mxu0 0
      %2444 = vmatpush2.bf16.msra.mxu0 %v2363
      %2445 = vmatprep.subr.bf16.mxu0 0
      %2446 = vmatpush2.bf16.msra.mxu0 %v2362
      %2447 = vmatprep.subr.bf16.mxu0 0
      %2448 = vmatpush2.bf16.msra.mxu0 %v2361
      %2449 = vmatprep.mubr.bf16.mxu0 %v2194
      %2450 = vmatmul.mubr.bf16.gmra.mxu0 %v2193
      %v2451 = vpop.f32.mrf.mxu0
      %v2452 = vadd.f32 0.0, %v2451
      %v2453 = vpop.f32.mrf.mxu0
      %v2454 = vpop.f32.mrf.mxu0
      %v2455 = vadd.f32 0.0, %v2454
      %v2456 = vpop.f32.mrf.mxu0
      %2457 = vmatprep.mubr.bf16.mxu0 %v2198
      %2458 = vmatmul.mubr.bf16.gmra.mxu0 %v2197
      %v2459 = vpop.f32.mrf.mxu0
      %v2460 = vadd.f32 0.0, %v2459
      %v2461 = vpop.f32.mrf.mxu0
      %v2462 = vpop.f32.mrf.mxu0
      %v2463 = vadd.f32 0.0, %v2462
      %v2464 = vpop.f32.mrf.mxu0
      %2465 = vmatprep.mubr.bf16.mxu0 %v2202
      %2466 = vmatmul.mubr.bf16.gmra.mxu0 %v2201
      %v2467 = vpop.f32.mrf.mxu0
      %v2468 = vadd.f32 0.0, %v2467
      %v2469 = vpop.f32.mrf.mxu0
      %v2470 = vpop.f32.mrf.mxu0
      %v2471 = vadd.f32 0.0, %v2470
      %v2472 = vpop.f32.mrf.mxu0
      %2473 = vmatprep.mubr.bf16.mxu0 %v2206
      %2474 = vmatmul.mubr.bf16.gmra.mxu0 %v2205
      %v2475 = vpop.f32.mrf.mxu0
      %v2476 = vadd.f32 0.0, %v2475
      %v2477 = vpop.f32.mrf.mxu0
      %v2478 = vpop.f32.mrf.mxu0
      %v2479 = vadd.f32 0.0, %v2478
      %v2480 = vpop.f32.mrf.mxu0
      %2481 = vdwg.mxu0
      %2482 = vmatprep.subr.bf16.mxu0 0
      %2483 = vmatpush1.bf16.msra.mxu0 %v2376
      %2484 = vmatprep.subr.bf16.mxu0 0
      %2485 = vmatpush1.bf16.msra.mxu0 %v2375
      %2486 = vmatprep.subr.bf16.mxu0 0
      %2487 = vmatpush1.bf16.msra.mxu0 %v2374
      %2488 = vmatprep.subr.bf16.mxu0 0
      %2489 = vmatpush1.bf16.msra.mxu0 %v2373
      %2490 = vmatprep.subr.bf16.mxu0 0
      %2491 = vmatpush1.bf16.msra.mxu0 %v2372
      %2492 = vmatprep.subr.bf16.mxu0 0
      %2493 = vmatpush1.bf16.msra.mxu0 %v2371
      %2494 = vmatprep.subr.bf16.mxu0 0
      %2495 = vmatpush1.bf16.msra.mxu0 %v2370
      %2496 = vmatprep.subr.bf16.mxu0 0
      %2497 = vmatpush1.bf16.msra.mxu0 %v2369
      %2498 = vmatprep.subr.bf16.mxu0 0
      %2499 = vmatpush2.bf16.msra.mxu0 %v2384
      %2500 = vmatprep.subr.bf16.mxu0 0
      %2501 = vmatpush2.bf16.msra.mxu0 %v2383
      %2502 = vmatprep.subr.bf16.mxu0 0
      %2503 = vmatpush2.bf16.msra.mxu0 %v2382
      %2504 = vmatprep.subr.bf16.mxu0 0
      %2505 = vmatpush2.bf16.msra.mxu0 %v2381
      %2506 = vmatprep.subr.bf16.mxu0 0
      %2507 = vmatpush2.bf16.msra.mxu0 %v2380
      %2508 = vmatprep.subr.bf16.mxu0 0
      %2509 = vmatpush2.bf16.msra.mxu0 %v2379
      %2510 = vmatprep.subr.bf16.mxu0 0
      %2511 = vmatpush2.bf16.msra.mxu0 %v2378
      %2512 = vmatprep.subr.bf16.mxu0 0
      %2513 = vmatpush2.bf16.msra.mxu0 %v2377
      %2514 = vmatprep.mubr.bf16.mxu0 %v2196
      %2515 = vmatmul.mubr.bf16.gmra.mxu0 %v2195
      %v2516 = vpop.f32.mrf.mxu0
      %v2517 = vadd.f32 %v2452, %v2516
      %v2518 = vpop.f32.mrf.mxu0
      %v2519 = vpop.f32.mrf.mxu0
      %v2520 = vadd.f32 %v2455, %v2519
      %v2521 = vpop.f32.mrf.mxu0
      %2522 = vmatprep.mubr.bf16.mxu0 %v2200
      %2523 = vmatmul.mubr.bf16.gmra.mxu0 %v2199
      %v2524 = vpop.f32.mrf.mxu0
      %v2525 = vadd.f32 %v2460, %v2524
      %v2526 = vpop.f32.mrf.mxu0
      %v2527 = vpop.f32.mrf.mxu0
      %v2528 = vadd.f32 %v2463, %v2527
      %v2529 = vpop.f32.mrf.mxu0
      %2530 = vmatprep.mubr.bf16.mxu0 %v2204
      %2531 = vmatmul.mubr.bf16.gmra.mxu0 %v2203
      %v2532 = vpop.f32.mrf.mxu0
      %v2533 = vadd.f32 %v2468, %v2532
      %v2534 = vpop.f32.mrf.mxu0
      %v2535 = vpop.f32.mrf.mxu0
      %v2536 = vadd.f32 %v2471, %v2535
      %v2537 = vpop.f32.mrf.mxu0
      %2538 = vmatprep.mubr.bf16.mxu0 %v2208
      %2539 = vmatmul.mubr.bf16.gmra.mxu0 %v2207
      %v2540 = vpop.f32.mrf.mxu0
      %v2541 = vadd.f32 %v2476, %v2540
      %v2542 = vpop.f32.mrf.mxu0
      %v2543 = vpop.f32.mrf.mxu0
      %v2544 = vadd.f32 %v2479, %v2543
      %v2545 = vpop.f32.mrf.mxu0
      %2546 = vdwg.mxu0
      %v2547 = vadd.f32 %v1832, %v2517
      %v2548 = vadd.f32 %v1833, %v2520
      %v2549 = vadd.f32 %v1834, %v2525
      %v2550 = vadd.f32 %v1835, %v2528
      %v2551 = vadd.f32 %v1836, %v2533
      %v2552 = vadd.f32 %v1837, %v2536
      %v2553 = vadd.f32 %v1838, %v2541
      %v2554 = vadd.f32 %v1839, %v2544
      %v2555 = vld [vmem:[%s2] sm:$0x7]
      %v2556 = vlaneseq
      %v2557 = vshrl.u32 %v2556, 7
      %v2558 = vsub.s32 0, %v2557
      %v2559 = vrot.slane %v2555, %v2558
      %v2560 = vadd.f32 %v2547, %v2559
      %v2561 = vadd.f32 %v2548, %v2559
      %v2562 = vadd.f32 %v2549, %v2559
      %v2563 = vadd.f32 %v2550, %v2559
      %v2564 = vadd.f32 %v2551, %v2559
      %v2565 = vadd.f32 %v2552, %v2559
      %v2566 = vadd.f32 %v2553, %v2559
      %v2567 = vadd.f32 %v2554, %v2559
      %vm2568 = vcmp.ge.f32.partialorder %v2560, 0.0
      %vm2569 = vcmp.ge.f32.partialorder %v2561, 0.0
      %vm2570 = vcmp.ge.f32.partialorder %v2562, 0.0
      %vm2571 = vcmp.ge.f32.partialorder %v2563, 0.0
      %vm2572 = vcmp.ge.f32.partialorder %v2564, 0.0
      %vm2573 = vcmp.ge.f32.partialorder %v2565, 0.0
      %vm2574 = vcmp.ge.f32.partialorder %v2566, 0.0
      %vm2575 = vcmp.ge.f32.partialorder %v2567, 0.0
      %v2576 = vmul.f32 %v2560, 0.2
      %v2577 = vmul.f32 %v2561, 0.2
      %v2578 = vmul.f32 %v2562, 0.2
      %v2579 = vmul.f32 %v2563, 0.2
      %v2580 = vmul.f32 %v2564, 0.2
      %v2581 = vmul.f32 %v2565, 0.2
      %v2582 = vmul.f32 %v2566, 0.2
      %v2583 = vmul.f32 %v2567, 0.2
      %v2584 = vsel %vm2568, %v2560, %v2576
      %v2585 = vsel %vm2569, %v2561, %v2577
      %v2586 = vsel %vm2570, %v2562, %v2578
      %v2587 = vsel %vm2571, %v2563, %v2579
      %v2588 = vsel %vm2572, %v2564, %v2580
      %v2589 = vsel %vm2573, %v2565, %v2581
      %v2590 = vsel %vm2574, %v2566, %v2582
      %v2591 = vsel %vm2575, %v2567, %v2583
      %v2592 = vlaneseq
      %v2593 = vshrl.u32 %v2592, 7
      %v2594 = vsub.s32 1, %v2593
      %v2595 = vrot.slane %v2555, %v2594
      %v2596 = vmul.f32 %v2584, %v2595
      %v2597 = vmul.f32 %v2585, %v2595
      %v2598 = vmul.f32 %v2586, %v2595
      %v2599 = vmul.f32 %v2587, %v2595
      %v2600 = vmul.f32 %v2588, %v2595
      %v2601 = vmul.f32 %v2589, %v2595
      %v2602 = vmul.f32 %v2590, %v2595
      %v2603 = vmul.f32 %v2591, %v2595
      %v2604 = vlaneseq
      %v2605 = vshrl.u32 %v2604, 7
      %v2606 = vsub.s32 2, %v2605
      %v2607 = vrot.slane %v2555, %v2606
      %v2608 = vadd.f32 %v2596, %v2607
      %v2609 = vadd.f32 %v2597, %v2607
      %v2610 = vadd.f32 %v2598, %v2607
      %v2611 = vadd.f32 %v2599, %v2607
      %v2612 = vadd.f32 %v2600, %v2607
      %v2613 = vadd.f32 %v2601, %v2607
      %v2614 = vadd.f32 %v2602, %v2607
      %v2615 = vadd.f32 %v2603, %v2607
      %v2616 = vpack.c.bf16 %v2608, %v2608
      %v2617 = vpack.c.bf16 %v2609, %v2609
      %v2618 = vpack.c.bf16 %v2610, %v2610
      %v2619 = vpack.c.bf16 %v2611, %v2611
      %v2620 = vpack.c.bf16 %v2612, %v2612
      %v2621 = vpack.c.bf16 %v2613, %v2613
      %v2622 = vpack.c.bf16 %v2614, %v2614
      %v2623 = vpack.c.bf16 %v2615, %v2615
      %2624 = vst [vmem:[%s170] sm:$0xf] %v2616
      %2625 = vst [vmem:[%s170 + $0x4] sm:$0xf] %v2617
      %2626 = vst [vmem:[%s170 + $0x8] sm:$0xf] %v2618
      %2627 = vst [vmem:[%s170 + $0xc] sm:$0xf] %v2619
      %2628 = vst [vmem:[%s170 + $0x10] sm:$0xf] %v2620
      %2629 = vst [vmem:[%s170 + $0x14] sm:$0xf] %v2621
      %2630 = vst [vmem:[%s170 + $0x18] sm:$0xf] %v2622
      %2631 = vst [vmem:[%s170 + $0x1c] sm:$0xf] %v2623
      %p2632 = scmp.lt.s32.totalorder %s14, 1
      %s2633 = scalar_select %p2632, %s14, 1
      %s2634 = smul.addr %s2633, 8
      %s2635 = smul.addr %s2634, 4
      %s2636 = scalar_lea.vmem %s3, %s2635
      // Predicated region
      $region33: #{discriminator_forward.4} parent=31 // pred_check
        %p2637 = pneg %p100
      $region34: #{discriminator_forward.4} parent=31 // pred_check_branch
        %2639 = sbr.rel (%p2637) target = $region36
      $region35: #{discriminator_forward.4} parent=31 // pred_region
        _
      $region36: #{discriminator_forward.4} parent=31 // pred_fallthru
        _
    $region32: #{discriminator_forward.4} parent=5 // pred_fallthru
      _
    %p2640 = scmp.le.s32.totalorder 2, %s9
    // Predicated region
    $region37: #{discriminator_forward.4} parent=5 // pred_check
      %p2641 = pneg %p2640
    $region38: #{discriminator_forward.4} parent=5 // pred_check_branch
      %2643 = sbr.rel (%p2641) target = $region40
    $region39: #{discriminator_forward.4} parent=5 // pred_region
      %s2644 = ssub.s32 %s9, 2
      // Predicated region
      $region41: #{discriminator_forward.4} parent=39 // pred_check
        %p2645 = pneg %p106
      $region42: #{discriminator_forward.4} parent=39 // pred_check_branch
        %2647 = sbr.rel (%p2645) target = $region44
      $region43: #{discriminator_forward.4} parent=39 // pred_region
        %p2648 = scmp.lt.s32.totalorder %s15, 1
        %s2649 = scalar_select %p2648, %s15, 1
        %s2650 = smul.addr %s2649, 8
        %s2651 = smul.addr %s2650, 4
        %s2652 = scalar_lea.vmem %s3, %s2651
      $region44: #{discriminator_forward.4} parent=39 // pred_fallthru
        _
    $region40: #{discriminator_forward.4} parent=5 // pred_fallthru
      _
  $region6: #{discriminator_forward.4} parent=0 // loop_footer
    %s13 = sadd.s32 1, %s9
  $region7: #{discriminator_forward.4} parent=0 // loop_footer_branch
    %8 = sbr.rel target = $region3
  $region8: #{discriminator_forward.4} parent=0 // loop_exit
    _

// kernel: discriminator_forward.5
$region0: #{discriminator_forward.5}
  #allocation0 [shape = 'u32[]', space=smem, size = 0x4, offset = 0x4, fixed_abs, tag = 'smem constant byte address 0x4 - core index']
  #allocation1 [shape = 'u32[144,128]{1,0:T(1,128)}', space=vmem, size = 0x12000, scoped, tag = 'internal scratch']
  %s0 = inlined_call_operand.vmem [shape: bf16[2,5,5,512], index: 0, kind: input, shape index: {}]
  %s1 = inlined_call_operand.vmem [shape: bf16[4,512,128], index: 1, kind: input, shape index: {}]
  %s2 = inlined_call_operand.vmem [shape: f32[3,128], index: 2, kind: input, shape index: {}]
  %s3 = inlined_call_operand.vmem [shape: bf16[2,4,4,128], index: 3, kind: output, shape index: {}]
  %s4 = sld [smem:[#allocation0]]
  $region45: #{discriminator_forward.5} parent=0
    _
  %s6 = ssub.s32 1, %s4
  %s7 = scalar_select 0, %s6, %s4
  loop: start=0, step=1, limit=4
  $region2: #{discriminator_forward.5} parent=0 // loop_pre_header
    _
  $region3: #{discriminator_forward.5} parent=0 // loop_header
    %s9 = sphi 0, %s13
    %p10 = scmp.ge.s32.totalorder %s9, 4
    %s19 = sphi 0, %s21
    %s22 = sphi 0, %s19
    %s23 = sphi 0, %s22
    %s39 = sphi 0, %s23
    %s43 = sphi 0, %s43
    %s45 = sphi 0, %s43
    %s46 = sphi 0, %s45
    %s60 = sphi 0, %s46
    %s64 = sphi 0, %s64
    %s66 = sphi 0, %s64
    %s67 = sphi 0, %s66
    %s81 = sphi 0, %s67
    %s87 = sphi 0, %s89
    %s90 = sphi 0, %s87
    %s91 = sphi 0, %s90
    %s107 = sphi 0, %s91
  $region4: #{discriminator_forward.5} parent=0 // loop_header_branch
    %12 = sbr.rel (%p10) target = $region8
  $region5: #{discriminator_forward.5} parent=0 // loop_body
    %s14 = ssub.s32 %s9, 1
    %s15 = ssub.s32 %s9, 2
    %s16 = sadd.s32 %s9, 1
    %s17 = ssub.s32 %s9, %s16
    %p18 = scmp.eq.s32.totalorder %s17, 0
    %s20 = sadd.s32 %s19, 1
    %s21 = scalar_select %p18, %s19, %s20
    %p24 = pneg %p18
    %p25 = scmp.eq.s32.totalorder %s9, 1
    %p26 = por %p24, %p25
    %p27 = scmp.ne.s32.totalorder %s19, %s22
    %p28 = scmp.eq.s32.totalorder %s9, 0
    %p29 = por %p27, %p28
    %p30 = scmp.ne.s32.totalorder %s19, %s22
    %p31 = scmp.eq.s32.totalorder %s14, 1
    %p32 = por %p30, %p31
    %p33 = scmp.ne.s32.totalorder %s22, %s23
    %p34 = scmp.eq.s32.totalorder %s14, 0
    %p35 = por %p33, %p34
    %p36 = scmp.ne.s32.totalorder %s22, %s23
    %p37 = scmp.eq.s32.totalorder %s15, 1
    %p38 = por %p36, %p37
    %p40 = scmp.ne.s32.totalorder %s23, %s39
    %p41 = scmp.eq.s32.totalorder %s15, 0
    %p42 = por %p40, %p41
    %s44 = sadd.s32 %s43, 1
    %p47 = scmp.eq.s32.totalorder %s9, 1
    %p48 = scmp.ne.s32.totalorder %s43, %s45
    %p49 = scmp.eq.s32.totalorder %s9, 0
    %p50 = por %p48, %p49
    %p51 = scmp.ne.s32.totalorder %s43, %s45
    %p52 = scmp.eq.s32.totalorder %s14, 1
    %p53 = por %p51, %p52
    %p54 = scmp.ne.s32.totalorder %s45, %s46
    %p55 = scmp.eq.s32.totalorder %s14, 0
    %p56 = por %p54, %p55
    %p57 = scmp.ne.s32.totalorder %s45, %s46
    %p58 = scmp.eq.s32.totalorder %s15, 1
    %p59 = por %p57, %p58
    %p61 = scmp.ne.s32.totalorder %s46, %s60
    %p62 = scmp.eq.s32.totalorder %s15, 0
    %p63 = por %p61, %p62
    %s65 = sadd.s32 %s64, 1
    %p68 = scmp.eq.s32.totalorder %s9, 1
    %p69 = scmp.ne.s32.totalorder %s64, %s66
    %p70 = scmp.eq.s32.totalorder %s9, 0
    %p71 = por %p69, %p70
    %p72 = scmp.ne.s32.totalorder %s64, %s66
    %p73 = scmp.eq.s32.totalorder %s14, 1
    %p74 = por %p72, %p73
    %p75 = scmp.ne.s32.totalorder %s66, %s67
    %p76 = scmp.eq.s32.totalorder %s14, 0
    %p77 = por %p75, %p76
    %p78 = scmp.ne.s32.totalorder %s66, %s67
    %p79 = scmp.eq.s32.totalorder %s15, 1
    %p80 = por %p78, %p79
    %p82 = scmp.ne.s32.totalorder %s67, %s81
    %p83 = scmp.eq.s32.totalorder %s15, 0
    %p84 = por %p82, %p83
    %s85 = ssub.s32 %s9, %s16
    %p86 = scmp.eq.s32.totalorder %s85, 0
    %s88 = sadd.s32 %s87, 1
    %s89 = scalar_select %p86, %s87, %s88
    %p92 = pneg %p86
    %p93 = scmp.eq.s32.totalorder %s9, 1
    %p94 = por %p92, %p93
    %p95 = scmp.ne.s32.totalorder %s87, %s90
    %p96 = scmp.eq.s32.totalorder %s9, 0
    %p97 = por %p95, %p96
    %p98 = scmp.ne.s32.totalorder %s87, %s90
    %p99 = scmp.eq.s32.totalorder %s14, 1
    %p100 = por %p98, %p99
    %p101 = scmp.ne.s32.totalorder %s90, %s91
    %p102 = scmp.eq.s32.totalorder %s14, 0
    %p103 = por %p101, %p102
    %p104 = scmp.ne.s32.totalorder %s90, %s91
    %p105 = scmp.eq.s32.totalorder %s15, 1
    %p106 = por %p104, %p105
    %p108 = scmp.ne.s32.totalorder %s91, %s107
    %p109 = scmp.eq.s32.totalorder %s15, 0
    %p110 = por %p108, %p109
    %p111 = scmp.le.s32.totalorder 1, %s9
    %p112 = scmp.lt.s32.totalorder %s9, 3
    %p113 = pnand %p111, %p112
    %p114 = pneg %p113
    // Predicated region
    $region9: #{discriminator_forward.5} parent=5 // pred_check
      _
    $region10: #{discriminator_forward.5} parent=5 // pred_check_branch
      %116 = sbr.rel (%p113) target = $region12
    $region11: #{discriminator_forward.5} parent=5 // pred_region
      %s117 = ssub.s32 %s9, 1
      // Predicated region
      $region13: #{discriminator_forward.5} parent=11 // pred_check
        %p118 = pneg %p56
      $region14: #{discriminator_forward.5} parent=11 // pred_check_branch
        %120 = sbr.rel (%p118) target = $region16
      $region15: #{discriminator_forward.5} parent=11 // pred_region
        _
      $region16: #{discriminator_forward.5} parent=11 // pred_fallthru
        _
      // Predicated region
      $region17: #{discriminator_forward.5} parent=11 // pred_check
        %p121 = pneg %p77
      $region18: #{discriminator_forward.5} parent=11 // pred_check_branch
        %123 = sbr.rel (%p121) target = $region20
      $region19: #{discriminator_forward.5} parent=11 // pred_region
        _
      $region20: #{discriminator_forward.5} parent=11 // pred_fallthru
        _
    $region12: #{discriminator_forward.5} parent=5 // pred_fallthru
      _
    %p124 = scmp.lt.s32.totalorder %s9, 2
    // Predicated region
    $region21: #{discriminator_forward.5} parent=5 // pred_check
      %p125 = pneg %p124
    $region22: #{discriminator_forward.5} parent=5 // pred_check_branch
      %127 = sbr.rel (%p125) target = $region24
    $region23: #{discriminator_forward.5} parent=5 // pred_region
      // Predicated region
      $region25: #{discriminator_forward.5} parent=23 // pred_check
        %p128 = pneg %p29
      $region26: #{discriminator_forward.5} parent=23 // pred_check_branch
        %130 = sbr.rel (%p128) target = $region28
      $region27: #{discriminator_forward.5} parent=23 // pred_region
        %p131 = scmp.lt.s32.totalorder %s9, 1
        %s132 = scalar_select %p131, %s9, 1
        %s133 = smul.addr %s132, 20
        %s134 = smul.addr %s133, 4
        %s135 = scalar_lea.vmem %s0, %s134
      $region28: #{discriminator_forward.5} parent=23 // pred_fallthru
        _
    $region24: #{discriminator_forward.5} parent=5 // pred_fallthru
      _
    %p136 = scmp.le.s32.totalorder 1, %s9
    %p137 = scmp.lt.s32.totalorder %s9, 3
    %p138 = pnand %p136, %p137
    %p139 = pneg %p138
    // Predicated region
    $region29: #{discriminator_forward.5} parent=5 // pred_check
      _
    $region30: #{discriminator_forward.5} parent=5 // pred_check_branch
      %141 = sbr.rel (%p138) target = $region32
    $region31: #{discriminator_forward.5} parent=5 // pred_region
      %s142 = ssub.s32 %s9, 1
      %p143 = scmp.lt.s32.totalorder %s14, 1
      %s144 = scalar_select %p143, %s14, 1
      %s145 = smul.addr %s144, 20
      %s146 = smul.addr %s145, 4
      %s147 = scalar_lea.vmem %s0, %s146
      %p148 = pneg %p35
      %p149 = pneg %p32
      %p150 = pneg %p56
      %p151 = pneg %p53
      %p152 = pneg %p77
      %p153 = pneg %p74
      %p154 = pneg %p103
      %p155 = pneg %p100
      %p156 = scmp.lt.s32.totalorder %s14, 1
      %s157 = scalar_select %p156, %s14, 1
      %s158 = smul.addr %s157, 4
      %s159 = smul.addr %s158, 2
      %s160 = scalar_lea.vmem %s3, %s159
      %p161 = scmp.lt.s32.totalorder %s14, 1
      %s162 = scalar_select %p161, %s14, 1
      %s163 = smul.addr %s162, 20
      %s164 = smul.addr %s163, 4
      %s165 = scalar_lea.vmem %s0, %s164
      %p166 = scmp.lt.s32.totalorder %s14, 1
      %s167 = scalar_select %p166, %s14, 1
      %s168 = smul.addr %s167, 4
      %s169 = smul.addr %s168, 2
      %s170 = scalar_lea.vmem %s3, %s169
      %v172 = vld [vmem:[%s165] sm:$0x33]
      %v173 = vld [vmem:[%s165 + $0x8] sm:$0x33]
      %v174 = vld [vmem:[%s165 + $0x10] sm:$0x33]
      %v175 = vld [vmem:[%s165 + $0x18] sm:$0x33]
      %v176 = vld [vmem:[%s165 + $0x20] sm:$0x33]
      %v177 = vld [vmem:[%s165 + $0x28] sm:$0x33]
      %v178 = vld [vmem:[%s165 + $0x30] sm:$0x33]
      %v179 = vld [vmem:[%s165 + $0x38] sm:$0x33]
      %v189 = vunpack.c.l.s4 1983009808
      %v190 = vunpack.c.0.s8 %v189
      %v191 = vlaneseq
      %v192 = vshrl.u32 %v191, 7
      %v193 = vsub.s32 %v190, %v192
      %v194 = vrot.slane %v172, %v193
      %v196 = vunpack.c.l.s4 1983009808
      %v197 = vunpack.c.0.s8 %v196
      %v198 = vlaneseq
      %v199 = vshrl.u32 %v198, 7
      %v200 = vsub.s32 %v197, %v199
      %v201 = vrot.slane %v173, %v200
      %v202 = vcombine.low %v194, %v201
      %v204 = vunpack.c.l.s4 1983009808
      %v205 = vunpack.c.0.s8 %v204
      %v206 = vlaneseq
      %v207 = vshrl.u32 %v206, 7
      %v208 = vsub.s32 %v205, %v207
      %v209 = vrot.slane %v174, %v208
      %v211 = vunpack.c.l.s4 1983009808
      %v212 = vunpack.c.0.s8 %v211
      %v213 = vlaneseq
      %v214 = vshrl.u32 %v213, 7
      %v215 = vsub.s32 %v212, %v214
      %v216 = vrot.slane %v175, %v215
      %v217 = vcombine.low %v209, %v216
      %v219 = vunpack.c.l.s4 1983009808
      %v220 = vunpack.c.0.s8 %v219
      %v221 = vlaneseq
      %v222 = vshrl.u32 %v221, 7
      %v223 = vsub.s32 %v220, %v222
      %v224 = vrot.slane %v176, %v223
      %v226 = vunpack.c.l.s4 1983009808
      %v227 = vunpack.c.0.s8 %v226
      %v228 = vlaneseq
      %v229 = vshrl.u32 %v228, 7
      %v230 = vsub.s32 %v227, %v229
      %v231 = vrot.slane %v177, %v230
      %v232 = vcombine.low %v224, %v231
      %v234 = vunpack.c.l.s4 1983009808
      %v235 = vunpack.c.0.s8 %v234
      %v236 = vlaneseq
      %v237 = vshrl.u32 %v236, 7
      %v238 = vsub.s32 %v235, %v237
      %v239 = vrot.slane %v178, %v238
      %v241 = vunpack.c.l.s4 1983009808
      %v242 = vunpack.c.0.s8 %v241
      %v243 = vlaneseq
      %v244 = vshrl.u32 %v243, 7
      %v245 = vsub.s32 %v242, %v244
      %v246 = vrot.slane %v179, %v245
      %v247 = vcombine.low %v239, %v246
      %v248 = vld [vmem:[%s1] sm:$0xf]
      %v249 = vld [vmem:[%s1 + $0x4] sm:$0xf]
      %v250 = vld [vmem:[%s1 + $0x8] sm:$0xf]
      %v251 = vld [vmem:[%s1 + $0xc] sm:$0xf]
      %v252 = vld [vmem:[%s1 + $0x10] sm:$0xf]
      %v253 = vld [vmem:[%s1 + $0x14] sm:$0xf]
      %v254 = vld [vmem:[%s1 + $0x18] sm:$0xf]
      %v255 = vld [vmem:[%s1 + $0x1c] sm:$0xf]
      %v256 = vld [vmem:[%s1 + $0x20] sm:$0xf]
      %v257 = vld [vmem:[%s1 + $0x24] sm:$0xf]
      %v258 = vld [vmem:[%s1 + $0x28] sm:$0xf]
      %v259 = vld [vmem:[%s1 + $0x2c] sm:$0xf]
      %v260 = vld [vmem:[%s1 + $0x30] sm:$0xf]
      %v261 = vld [vmem:[%s1 + $0x34] sm:$0xf]
      %v262 = vld [vmem:[%s1 + $0x38] sm:$0xf]
      %v263 = vld [vmem:[%s1 + $0x3c] sm:$0xf]
      %v264 = vld [vmem:[%s1 + $0x40] sm:$0xf]
      %v265 = vld [vmem:[%s1 + $0x44] sm:$0xf]
      %v266 = vld [vmem:[%s1 + $0x48] sm:$0xf]
      %v267 = vld [vmem:[%s1 + $0x4c] sm:$0xf]
      %v268 = vld [vmem:[%s1 + $0x50] sm:$0xf]
      %v269 = vld [vmem:[%s1 + $0x54] sm:$0xf]
      %v270 = vld [vmem:[%s1 + $0x58] sm:$0xf]
      %v271 = vld [vmem:[%s1 + $0x5c] sm:$0xf]
      %v272 = vld [vmem:[%s1 + $0x60] sm:$0xf]
      %v273 = vld [vmem:[%s1 + $0x64] sm:$0xf]
      %v274 = vld [vmem:[%s1 + $0x68] sm:$0xf]
      %v275 = vld [vmem:[%s1 + $0x6c] sm:$0xf]
      %v276 = vld [vmem:[%s1 + $0x70] sm:$0xf]
      %v277 = vld [vmem:[%s1 + $0x74] sm:$0xf]
      %v278 = vld [vmem:[%s1 + $0x78] sm:$0xf]
      %v279 = vld [vmem:[%s1 + $0x7c] sm:$0xf]
      %v280 = vld [vmem:[%s1 + $0x80] sm:$0xf]
      %v281 = vld [vmem:[%s1 + $0x84] sm:$0xf]
      %v282 = vld [vmem:[%s1 + $0x88] sm:$0xf]
      %v283 = vld [vmem:[%s1 + $0x8c] sm:$0xf]
      %v284 = vld [vmem:[%s1 + $0x90] sm:$0xf]
      %v285 = vld [vmem:[%s1 + $0x94] sm:$0xf]
      %v286 = vld [vmem:[%s1 + $0x98] sm:$0xf]
      %v287 = vld [vmem:[%s1 + $0x9c] sm:$0xf]
      %v288 = vld [vmem:[%s1 + $0xa0] sm:$0xf]
      %v289 = vld [vmem:[%s1 + $0xa4] sm:$0xf]
      %v290 = vld [vmem:[%s1 + $0xa8] sm:$0xf]
      %v291 = vld [vmem:[%s1 + $0xac] sm:$0xf]
      %v292 = vld [vmem:[%s1 + $0xb0] sm:$0xf]
      %v293 = vld [vmem:[%s1 + $0xb4] sm:$0xf]
      %v294 = vld [vmem:[%s1 + $0xb8] sm:$0xf]
      %v295 = vld [vmem:[%s1 + $0xbc] sm:$0xf]
      %v296 = vld [vmem:[%s1 + $0xc0] sm:$0xf]
      %v297 = vld [vmem:[%s1 + $0xc4] sm:$0xf]
      %v298 = vld [vmem:[%s1 + $0xc8] sm:$0xf]
      %v299 = vld [vmem:[%s1 + $0xcc] sm:$0xf]
      %v300 = vld [vmem:[%s1 + $0xd0] sm:$0xf]
      %v301 = vld [vmem:[%s1 + $0xd4] sm:$0xf]
      %v302 = vld [vmem:[%s1 + $0xd8] sm:$0xf]
      %v303 = vld [vmem:[%s1 + $0xdc] sm:$0xf]
      %v304 = vld [vmem:[%s1 + $0xe0] sm:$0xf]
      %v305 = vld [vmem:[%s1 + $0xe4] sm:$0xf]
      %v306 = vld [vmem:[%s1 + $0xe8] sm:$0xf]
      %v307 = vld [vmem:[%s1 + $0xec] sm:$0xf]
      %v308 = vld [vmem:[%s1 + $0xf0] sm:$0xf]
      %v309 = vld [vmem:[%s1 + $0xf4] sm:$0xf]
      %v310 = vld [vmem:[%s1 + $0xf8] sm:$0xf]
      %v311 = vld [vmem:[%s1 + $0xfc] sm:$0xf]
      %v312 = vld [vmem:[%s165] sm:$0x77]
      %v313 = vld [vmem:[%s165 + $0x8] sm:$0x77]
      %v314 = vld [vmem:[%s165 + $0x10] sm:$0x77]
      %v315 = vld [vmem:[%s165 + $0x18] sm:$0x77]
      %v316 = vld [vmem:[%s165 + $0x20] sm:$0x77]
      %v317 = vld [vmem:[%s165 + $0x28] sm:$0x77]
      %v318 = vld [vmem:[%s165 + $0x30] sm:$0x77]
      %v319 = vld [vmem:[%s165 + $0x38] sm:$0x77]
      %v329 = vunpack.c.l.s4 1983009808
      %v330 = vunpack.c.0.s8 %v329
      %v331 = vlaneseq
      %v332 = vshrl.u32 %v331, 7
      %v333 = vsub.s32 %v330, %v332
      %v334 = vrot.slane %v312, %v333
      %v336 = vunpack.c.l.s4 1983009808
      %v337 = vunpack.c.0.s8 %v336
      %v338 = vlaneseq
      %v339 = vshrl.u32 %v338, 7
      %v340 = vsub.s32 %v337, %v339
      %v341 = vrot.slane %v313, %v340
      %v342 = vcombine.low %v334, %v341
      %v343 = vcombine.high %v334, %v341
      %v345 = vunpack.c.l.s4 1983009808
      %v346 = vunpack.c.0.s8 %v345
      %v347 = vlaneseq
      %v348 = vshrl.u32 %v347, 7
      %v349 = vsub.s32 %v346, %v348
      %v350 = vrot.slane %v314, %v349
      %v352 = vunpack.c.l.s4 1983009808
      %v353 = vunpack.c.0.s8 %v352
      %v354 = vlaneseq
      %v355 = vshrl.u32 %v354, 7
      %v356 = vsub.s32 %v353, %v355
      %v357 = vrot.slane %v315, %v356
      %v358 = vcombine.low %v350, %v357
      %v359 = vcombine.high %v350, %v357
      %v361 = vunpack.c.l.s4 1983009808
      %v362 = vunpack.c.0.s8 %v361
      %v363 = vlaneseq
      %v364 = vshrl.u32 %v363, 7
      %v365 = vsub.s32 %v362, %v364
      %v366 = vrot.slane %v316, %v365
      %v368 = vunpack.c.l.s4 1983009808
      %v369 = vunpack.c.0.s8 %v368
      %v370 = vlaneseq
      %v371 = vshrl.u32 %v370, 7
      %v372 = vsub.s32 %v369, %v371
      %v373 = vrot.slane %v317, %v372
      %v374 = vcombine.low %v366, %v373
      %v375 = vcombine.high %v366, %v373
      %v377 = vunpack.c.l.s4 1983009808
      %v378 = vunpack.c.0.s8 %v377
      %v379 = vlaneseq
      %v380 = vshrl.u32 %v379, 7
      %v381 = vsub.s32 %v378, %v380
      %v382 = vrot.slane %v318, %v381
      %v384 = vunpack.c.l.s4 1983009808
      %v385 = vunpack.c.0.s8 %v384
      %v386 = vlaneseq
      %v387 = vshrl.u32 %v386, 7
      %v388 = vsub.s32 %v385, %v387
      %v389 = vrot.slane %v319, %v388
      %v390 = vcombine.low %v382, %v389
      %v391 = vcombine.high %v382, %v389
      %vm392 = vsmask.f32 1280
      %vm393 = vsmask.f32 3336
      %vm394 = vmor %vm392, %vm393
      %vm395 = vsmask.f32 5392
      %vm396 = vmor %vm394, %vm395
      %vm397 = vsmask.f32 7448
      %vm398 = vmor %vm396, %vm397
      %v400 = vshrl.u32 %v342, 16
      %v402 = vrot.slane %v400, 6
      %v403 = vshll.u32 %v342, 16
      %v405 = vrot.slane %v403, 7
      %v406 = vor.u32 %v402, %v405
      %v407 = vrot.slane %v406, 2
      %v409 = vshll.u32 %v343, 16
      %v411 = vrot.slane %v409, 7
      %v412 = vsel %vm398, %v407, %v411
      %v414 = vshrl.u32 %v358, 16
      %v416 = vrot.slane %v414, 6
      %v417 = vshll.u32 %v358, 16
      %v419 = vrot.slane %v417, 7
      %v420 = vor.u32 %v416, %v419
      %v421 = vrot.slane %v420, 2
      %v423 = vshll.u32 %v359, 16
      %v425 = vrot.slane %v423, 7
      %v426 = vsel %vm398, %v421, %v425
      %v428 = vshrl.u32 %v374, 16
      %v430 = vrot.slane %v428, 6
      %v431 = vshll.u32 %v374, 16
      %v433 = vrot.slane %v431, 7
      %v434 = vor.u32 %v430, %v433
      %v435 = vrot.slane %v434, 2
      %v437 = vshll.u32 %v375, 16
      %v439 = vrot.slane %v437, 7
      %v440 = vsel %vm398, %v435, %v439
      %v442 = vshrl.u32 %v390, 16
      %v444 = vrot.slane %v442, 6
      %v445 = vshll.u32 %v390, 16
      %v447 = vrot.slane %v445, 7
      %v448 = vor.u32 %v444, %v447
      %v449 = vrot.slane %v448, 2
      %v451 = vshll.u32 %v391, 16
      %v453 = vrot.slane %v451, 7
      %v454 = vsel %vm398, %v449, %v453
      %s455 = scalar_lea.vmem %s1, 256
      %v456 = vld [vmem:[%s455] sm:$0xf]
      %v457 = vld [vmem:[%s455 + $0x4] sm:$0xf]
      %v458 = vld [vmem:[%s455 + $0x8] sm:$0xf]
      %v459 = vld [vmem:[%s455 + $0xc] sm:$0xf]
      %v460 = vld [vmem:[%s455 + $0x10] sm:$0xf]
      %v461 = vld [vmem:[%s455 + $0x14] sm:$0xf]
      %v462 = vld [vmem:[%s455 + $0x18] sm:$0xf]
      %v463 = vld [vmem:[%s455 + $0x1c] sm:$0xf]
      %v464 = vld [vmem:[%s455 + $0x20] sm:$0xf]
      %v465 = vld [vmem:[%s455 + $0x24] sm:$0xf]
      %v466 = vld [vmem:[%s455 + $0x28] sm:$0xf]
      %v467 = vld [vmem:[%s455 + $0x2c] sm:$0xf]
      %v468 = vld [vmem:[%s455 + $0x30] sm:$0xf]
      %v469 = vld [vmem:[%s455 + $0x34] sm:$0xf]
      %v470 = vld [vmem:[%s455 + $0x38] sm:$0xf]
      %v471 = vld [vmem:[%s455 + $0x3c] sm:$0xf]
      %v472 = vld [vmem:[%s455 + $0x40] sm:$0xf]
      %v473 = vld [vmem:[%s455 + $0x44] sm:$0xf]
      %v474 = vld [vmem:[%s455 + $0x48] sm:$0xf]
      %v475 = vld [vmem:[%s455 + $0x4c] sm:$0xf]
      %v476 = vld [vmem:[%s455 + $0x50] sm:$0xf]
      %v477 = vld [vmem:[%s455 + $0x54] sm:$0xf]
      %v478 = vld [vmem:[%s455 + $0x58] sm:$0xf]
      %v479 = vld [vmem:[%s455 + $0x5c] sm:$0xf]
      %v480 = vld [vmem:[%s455 + $0x60] sm:$0xf]
      %v481 = vld [vmem:[%s455 + $0x64] sm:$0xf]
      %v482 = vld [vmem:[%s455 + $0x68] sm:$0xf]
      %v483 = vld [vmem:[%s455 + $0x6c] sm:$0xf]
      %v484 = vld [vmem:[%s455 + $0x70] sm:$0xf]
      %v485 = vld [vmem:[%s455 + $0x74] sm:$0xf]
      %v486 = vld [vmem:[%s455 + $0x78] sm:$0xf]
      %v487 = vld [vmem:[%s455 + $0x7c] sm:$0xf]
      %v488 = vld [vmem:[%s455 + $0x80] sm:$0xf]
      %v489 = vld [vmem:[%s455 + $0x84] sm:$0xf]
      %v490 = vld [vmem:[%s455 + $0x88] sm:$0xf]
      %v491 = vld [vmem:[%s455 + $0x8c] sm:$0xf]
      %v492 = vld [vmem:[%s455 + $0x90] sm:$0xf]
      %v493 = vld [vmem:[%s455 + $0x94] sm:$0xf]
      %v494 = vld [vmem:[%s455 + $0x98] sm:$0xf]
      %v495 = vld [vmem:[%s455 + $0x9c] sm:$0xf]
      %v496 = vld [vmem:[%s455 + $0xa0] sm:$0xf]
      %v497 = vld [vmem:[%s455 + $0xa4] sm:$0xf]
      %v498 = vld [vmem:[%s455 + $0xa8] sm:$0xf]
      %v499 = vld [vmem:[%s455 + $0xac] sm:$0xf]
      %v500 = vld [vmem:[%s455 + $0xb0] sm:$0xf]
      %v501 = vld [vmem:[%s455 + $0xb4] sm:$0xf]
      %v502 = vld [vmem:[%s455 + $0xb8] sm:$0xf]
      %v503 = vld [vmem:[%s455 + $0xbc] sm:$0xf]
      %v504 = vld [vmem:[%s455 + $0xc0] sm:$0xf]
      %v505 = vld [vmem:[%s455 + $0xc4] sm:$0xf]
      %v506 = vld [vmem:[%s455 + $0xc8] sm:$0xf]
      %v507 = vld [vmem:[%s455 + $0xcc] sm:$0xf]
      %v508 = vld [vmem:[%s455 + $0xd0] sm:$0xf]
      %v509 = vld [vmem:[%s455 + $0xd4] sm:$0xf]
      %v510 = vld [vmem:[%s455 + $0xd8] sm:$0xf]
      %v511 = vld [vmem:[%s455 + $0xdc] sm:$0xf]
      %v512 = vld [vmem:[%s455 + $0xe0] sm:$0xf]
      %v513 = vld [vmem:[%s455 + $0xe4] sm:$0xf]
      %v514 = vld [vmem:[%s455 + $0xe8] sm:$0xf]
      %v515 = vld [vmem:[%s455 + $0xec] sm:$0xf]
      %v516 = vld [vmem:[%s455 + $0xf0] sm:$0xf]
      %v517 = vld [vmem:[%s455 + $0xf4] sm:$0xf]
      %v518 = vld [vmem:[%s455 + $0xf8] sm:$0xf]
      %v519 = vld [vmem:[%s455 + $0xfc] sm:$0xf]
      %v520 = vcombine.low %v412, %v426
      %v521 = vcombine.high %v412, %v426
      %v522 = vcombine.low %v440, %v454
      %v523 = vcombine.high %v440, %v454
      %v525 = vunpack.c.l.s4 1983009808
      %v526 = vunpack.c.0.s8 %v525
      %v527 = vlaneseq
      %v528 = vshrl.u32 %v527, 7
      %v529 = vsub.s32 %v526, %v528
      %v530 = vrot.slane %v520, %v529
      %v532 = vunpack.c.l.s4 1983009808
      %v533 = vunpack.c.0.s8 %v532
      %v534 = vlaneseq
      %v535 = vshrl.u32 %v534, 7
      %v536 = vsub.s32 %v533, %v535
      %v537 = vrot.slane %v521, %v536
      %v539 = vunpack.c.l.s4 1983009808
      %v540 = vunpack.c.0.s8 %v539
      %v541 = vlaneseq
      %v542 = vshrl.u32 %v541, 7
      %v543 = vsub.s32 %v540, %v542
      %v544 = vrot.slane %v522, %v543
      %v546 = vunpack.c.l.s4 1983009808
      %v547 = vunpack.c.0.s8 %v546
      %v548 = vlaneseq
      %v549 = vshrl.u32 %v548, 7
      %v550 = vsub.s32 %v547, %v549
      %v551 = vrot.slane %v523, %v550
      %v552 = vcombine.low %v530, %v544
      %v553 = vcombine.high %v530, %v544
      %v554 = vcombine.low %v537, %v551
      %v555 = vcombine.high %v537, %v551
      %v624 = vunpack.c.l.b16 %v456
      %v625 = vunpack.c.l.b16 %v457
      %v626 = vunpack.c.l.b16 %v458
      %v627 = vunpack.c.l.b16 %v459
      %v628 = vunpack.c.l.b16 %v460
      %v629 = vunpack.c.l.b16 %v461
      %v630 = vunpack.c.l.b16 %v462
      %v631 = vunpack.c.l.b16 %v463
      %v632 = vunpack.c.l.b16 %v464
      %v633 = vunpack.c.l.b16 %v465
      %v634 = vunpack.c.l.b16 %v466
      %v635 = vunpack.c.l.b16 %v467
      %v636 = vunpack.c.l.b16 %v468
      %v637 = vunpack.c.l.b16 %v469
      %v638 = vunpack.c.l.b16 %v470
      %v639 = vunpack.c.l.b16 %v471
      %v640 = vunpack.c.l.b16 %v472
      %v641 = vunpack.c.l.b16 %v473
      %v642 = vunpack.c.l.b16 %v474
      %v643 = vunpack.c.l.b16 %v475
      %v644 = vunpack.c.l.b16 %v476
      %v645 = vunpack.c.l.b16 %v477
      %v646 = vunpack.c.l.b16 %v478
      %v647 = vunpack.c.l.b16 %v479
      %v648 = vunpack.c.l.b16 %v480
      %v649 = vunpack.c.l.b16 %v481
      %v650 = vunpack.c.l.b16 %v482
      %v651 = vunpack.c.l.b16 %v483
      %v652 = vunpack.c.l.b16 %v484
      %v653 = vunpack.c.l.b16 %v485
      %v654 = vunpack.c.l.b16 %v486
      %v655 = vunpack.c.l.b16 %v487
      %v656 = vunpack.c.l.b16 %v488
      %v657 = vunpack.c.l.b16 %v489
      %v658 = vunpack.c.l.b16 %v490
      %v659 = vunpack.c.l.b16 %v491
      %v660 = vunpack.c.l.b16 %v492
      %v661 = vunpack.c.l.b16 %v493
      %v662 = vunpack.c.l.b16 %v494
      %v663 = vunpack.c.l.b16 %v495
      %v664 = vunpack.c.l.b16 %v496
      %v665 = vunpack.c.l.b16 %v497
      %v666 = vunpack.c.l.b16 %v498
      %v667 = vunpack.c.l.b16 %v499
      %v668 = vunpack.c.l.b16 %v500
      %v669 = vunpack.c.l.b16 %v501
      %v670 = vunpack.c.l.b16 %v502
      %v671 = vunpack.c.l.b16 %v503
      %v672 = vunpack.c.l.b16 %v504
      %v673 = vunpack.c.l.b16 %v505
      %v674 = vunpack.c.l.b16 %v506
      %v675 = vunpack.c.l.b16 %v507
      %v676 = vunpack.c.l.b16 %v508
      %v677 = vunpack.c.l.b16 %v509
      %v678 = vunpack.c.l.b16 %v510
      %v679 = vunpack.c.l.b16 %v511
      %v680 = vunpack.c.l.b16 %v512
      %v681 = vunpack.c.l.b16 %v513
      %v682 = vunpack.c.l.b16 %v514
      %v683 = vunpack.c.l.b16 %v515
      %v684 = vunpack.c.l.b16 %v516
      %v685 = vunpack.c.l.b16 %v517
      %v686 = vunpack.c.l.b16 %v518
      %v687 = vunpack.c.l.b16 %v519
      %v688 = vpack.c.b16 %v625, %v624
      %v689 = vpack.c.b16 %v627, %v626
      %v690 = vpack.c.b16 %v629, %v628
      %v691 = vpack.c.b16 %v631, %v630
      %v692 = vpack.c.b16 %v633, %v632
      %v693 = vpack.c.b16 %v635, %v634
      %v694 = vpack.c.b16 %v637, %v636
      %v695 = vpack.c.b16 %v639, %v638
      %v696 = vpack.c.b16 %v641, %v640
      %v697 = vpack.c.b16 %v643, %v642
      %v698 = vpack.c.b16 %v645, %v644
      %v699 = vpack.c.b16 %v647, %v646
      %v700 = vpack.c.b16 %v649, %v648
      %v701 = vpack.c.b16 %v651, %v650
      %v702 = vpack.c.b16 %v653, %v652
      %v703 = vpack.c.b16 %v655, %v654
      %v704 = vpack.c.b16 %v657, %v656
      %v705 = vpack.c.b16 %v659, %v658
      %v706 = vpack.c.b16 %v661, %v660
      %v707 = vpack.c.b16 %v663, %v662
      %v708 = vpack.c.b16 %v665, %v664
      %v709 = vpack.c.b16 %v667, %v666
      %v710 = vpack.c.b16 %v669, %v668
      %v711 = vpack.c.b16 %v671, %v670
      %v712 = vpack.c.b16 %v673, %v672
      %v713 = vpack.c.b16 %v675, %v674
      %v714 = vpack.c.b16 %v677, %v676
      %v715 = vpack.c.b16 %v679, %v678
      %v716 = vpack.c.b16 %v681, %v680
      %v717 = vpack.c.b16 %v683, %v682
      %v718 = vpack.c.b16 %v685, %v684
      %v719 = vpack.c.b16 %v687, %v686
      %752 = vmatprep.subr.bf16.mxu0 0
      %753 = vmatpush1.bf16.msra.mxu0 %v695
      %754 = vmatprep.subr.bf16.mxu0 0
      %755 = vmatpush1.bf16.msra.mxu0 %v694
      %756 = vmatprep.subr.bf16.mxu0 0
      %757 = vmatpush1.bf16.msra.mxu0 %v693
      %758 = vmatprep.subr.bf16.mxu0 0
      %759 = vmatpush1.bf16.msra.mxu0 %v692
      %760 = vmatprep.subr.bf16.mxu0 0
      %761 = vmatpush1.bf16.msra.mxu0 %v691
      %762 = vmatprep.subr.bf16.mxu0 0
      %763 = vmatpush1.bf16.msra.mxu0 %v690
      %764 = vmatprep.subr.bf16.mxu0 0
      %765 = vmatpush1.bf16.msra.mxu0 %v689
      %766 = vmatprep.subr.bf16.mxu0 0
      %767 = vmatpush1.bf16.msra.mxu0 %v688
      %768 = vmatprep.subr.bf16.mxu0 0
      %769 = vmatpush2.bf16.msra.mxu0 %v703
      %770 = vmatprep.subr.bf16.mxu0 0
      %771 = vmatpush2.bf16.msra.mxu0 %v702
      %772 = vmatprep.subr.bf16.mxu0 0
      %773 = vmatpush2.bf16.msra.mxu0 %v701
      %774 = vmatprep.subr.bf16.mxu0 0
      %775 = vmatpush2.bf16.msra.mxu0 %v700
      %776 = vmatprep.subr.bf16.mxu0 0
      %777 = vmatpush2.bf16.msra.mxu0 %v699
      %778 = vmatprep.subr.bf16.mxu0 0
      %779 = vmatpush2.bf16.msra.mxu0 %v698
      %780 = vmatprep.subr.bf16.mxu0 0
      %781 = vmatpush2.bf16.msra.mxu0 %v697
      %782 = vmatprep.subr.bf16.mxu0 0
      %783 = vmatpush2.bf16.msra.mxu0 %v696
      %784 = vmatprep.mubr.bf16.mxu0 %v553
      %785 = vmatmul.mubr.bf16.gmra.mxu0 %v552
      %v786 = vpop.f32.mrf.mxu0
      %v787 = vadd.f32 0.0, %v786
      %v788 = vpop.f32.mrf.mxu0
      %v789 = vpop.f32.mrf.mxu0
      %v790 = vadd.f32 0.0, %v789
      %v791 = vpop.f32.mrf.mxu0
      %792 = vdwg.mxu0
      %793 = vmatprep.subr.bf16.mxu0 0
      %794 = vmatpush1.bf16.msra.mxu0 %v711
      %795 = vmatprep.subr.bf16.mxu0 0
      %796 = vmatpush1.bf16.msra.mxu0 %v710
      %797 = vmatprep.subr.bf16.mxu0 0
      %798 = vmatpush1.bf16.msra.mxu0 %v709
      %799 = vmatprep.subr.bf16.mxu0 0
      %800 = vmatpush1.bf16.msra.mxu0 %v708
      %801 = vmatprep.subr.bf16.mxu0 0
      %802 = vmatpush1.bf16.msra.mxu0 %v707
      %803 = vmatprep.subr.bf16.mxu0 0
      %804 = vmatpush1.bf16.msra.mxu0 %v706
      %805 = vmatprep.subr.bf16.mxu0 0
      %806 = vmatpush1.bf16.msra.mxu0 %v705
      %807 = vmatprep.subr.bf16.mxu0 0
      %808 = vmatpush1.bf16.msra.mxu0 %v704
      %809 = vmatprep.subr.bf16.mxu0 0
      %810 = vmatpush2.bf16.msra.mxu0 %v719
      %811 = vmatprep.subr.bf16.mxu0 0
      %812 = vmatpush2.bf16.msra.mxu0 %v718
      %813 = vmatprep.subr.bf16.mxu0 0
      %814 = vmatpush2.bf16.msra.mxu0 %v717
      %815 = vmatprep.subr.bf16.mxu0 0
      %816 = vmatpush2.bf16.msra.mxu0 %v716
      %817 = vmatprep.subr.bf16.mxu0 0
      %818 = vmatpush2.bf16.msra.mxu0 %v715
      %819 = vmatprep.subr.bf16.mxu0 0
      %820 = vmatpush2.bf16.msra.mxu0 %v714
      %821 = vmatprep.subr.bf16.mxu0 0
      %822 = vmatpush2.bf16.msra.mxu0 %v713
      %823 = vmatprep.subr.bf16.mxu0 0
      %824 = vmatpush2.bf16.msra.mxu0 %v712
      %825 = vmatprep.mubr.bf16.mxu0 %v555
      %826 = vmatmul.mubr.bf16.gmra.mxu0 %v554
      %v827 = vpop.f32.mrf.mxu0
      %v828 = vadd.f32 %v787, %v827
      %v829 = vpop.f32.mrf.mxu0
      %v830 = vpop.f32.mrf.mxu0
      %v831 = vadd.f32 %v790, %v830
      %v832 = vpop.f32.mrf.mxu0
      %833 = vdwg.mxu0
      %v834 = vcombine.low %v202, %v217
      %v835 = vcombine.high %v202, %v217
      %v836 = vcombine.low %v232, %v247
      %v837 = vcombine.high %v232, %v247
      %v839 = vunpack.c.l.s4 1983009808
      %v840 = vunpack.c.0.s8 %v839
      %v841 = vlaneseq
      %v842 = vshrl.u32 %v841, 7
      %v843 = vsub.s32 %v840, %v842
      %v844 = vrot.slane %v834, %v843
      %v846 = vunpack.c.l.s4 1983009808
      %v847 = vunpack.c.0.s8 %v846
      %v848 = vlaneseq
      %v849 = vshrl.u32 %v848, 7
      %v850 = vsub.s32 %v847, %v849
      %v851 = vrot.slane %v835, %v850
      %v853 = vunpack.c.l.s4 1983009808
      %v854 = vunpack.c.0.s8 %v853
      %v855 = vlaneseq
      %v856 = vshrl.u32 %v855, 7
      %v857 = vsub.s32 %v854, %v856
      %v858 = vrot.slane %v836, %v857
      %v860 = vunpack.c.l.s4 1983009808
      %v861 = vunpack.c.0.s8 %v860
      %v862 = vlaneseq
      %v863 = vshrl.u32 %v862, 7
      %v864 = vsub.s32 %v861, %v863
      %v865 = vrot.slane %v837, %v864
      %v866 = vcombine.low %v844, %v858
      %v867 = vcombine.high %v844, %v858
      %v868 = vcombine.low %v851, %v865
      %v869 = vcombine.high %v851, %v865
      %v938 = vunpack.c.l.b16 %v248
      %v939 = vunpack.c.l.b16 %v249
      %v940 = vunpack.c.l.b16 %v250
      %v941 = vunpack.c.l.b16 %v251
      %v942 = vunpack.c.l.b16 %v252
      %v943 = vunpack.c.l.b16 %v253
      %v944 = vunpack.c.l.b16 %v254
      %v945 = vunpack.c.l.b16 %v255
      %v946 = vunpack.c.l.b16 %v256
      %v947 = vunpack.c.l.b16 %v257
      %v948 = vunpack.c.l.b16 %v258
      %v949 = vunpack.c.l.b16 %v259
      %v950 = vunpack.c.l.b16 %v260
      %v951 = vunpack.c.l.b16 %v261
      %v952 = vunpack.c.l.b16 %v262
      %v953 = vunpack.c.l.b16 %v263
      %v954 = vunpack.c.l.b16 %v264
      %v955 = vunpack.c.l.b16 %v265
      %v956 = vunpack.c.l.b16 %v266
      %v957 = vunpack.c.l.b16 %v267
      %v958 = vunpack.c.l.b16 %v268
      %v959 = vunpack.c.l.b16 %v269
      %v960 = vunpack.c.l.b16 %v270
      %v961 = vunpack.c.l.b16 %v271
      %v962 = vunpack.c.l.b16 %v272
      %v963 = vunpack.c.l.b16 %v273
      %v964 = vunpack.c.l.b16 %v274
      %v965 = vunpack.c.l.b16 %v275
      %v966 = vunpack.c.l.b16 %v276
      %v967 = vunpack.c.l.b16 %v277
      %v968 = vunpack.c.l.b16 %v278
      %v969 = vunpack.c.l.b16 %v279
      %v970 = vunpack.c.l.b16 %v280
      %v971 = vunpack.c.l.b16 %v281
      %v972 = vunpack.c.l.b16 %v282
      %v973 = vunpack.c.l.b16 %v283
      %v974 = vunpack.c.l.b16 %v284
      %v975 = vunpack.c.l.b16 %v285
      %v976 = vunpack.c.l.b16 %v286
      %v977 = vunpack.c.l.b16 %v287
      %v978 = vunpack.c.l.b16 %v288
      %v979 = vunpack.c.l.b16 %v289
      %v980 = vunpack.c.l.b16 %v290
      %v981 = vunpack.c.l.b16 %v291
      %v982 = vunpack.c.l.b16 %v292
      %v983 = vunpack.c.l.b16 %v293
      %v984 = vunpack.c.l.b16 %v294
      %v985 = vunpack.c.l.b16 %v295
      %v986 = vunpack.c.l.b16 %v296
      %v987 = vunpack.c.l.b16 %v297
      %v988 = vunpack.c.l.b16 %v298
      %v989 = vunpack.c.l.b16 %v299
      %v990 = vunpack.c.l.b16 %v300
      %v991 = vunpack.c.l.b16 %v301
      %v992 = vunpack.c.l.b16 %v302
      %v993 = vunpack.c.l.b16 %v303
      %v994 = vunpack.c.l.b16 %v304
      %v995 = vunpack.c.l.b16 %v305
      %v996 = vunpack.c.l.b16 %v306
      %v997 = vunpack.c.l.b16 %v307
      %v998 = vunpack.c.l.b16 %v308
      %v999 = vunpack.c.l.b16 %v309
      %v1000 = vunpack.c.l.b16 %v310
      %v1001 = vunpack.c.l.b16 %v311
      %v1002 = vpack.c.b16 %v939, %v938
      %v1003 = vpack.c.b16 %v941, %v940
      %v1004 = vpack.c.b16 %v943, %v942
      %v1005 = vpack.c.b16 %v945, %v944
      %v1006 = vpack.c.b16 %v947, %v946
      %v1007 = vpack.c.b16 %v949, %v948
      %v1008 = vpack.c.b16 %v951, %v950
      %v1009 = vpack.c.b16 %v953, %v952
      %v1010 = vpack.c.b16 %v955, %v954
      %v1011 = vpack.c.b16 %v957, %v956
      %v1012 = vpack.c.b16 %v959, %v958
      %v1013 = vpack.c.b16 %v961, %v960
      %v1014 = vpack.c.b16 %v963, %v962
      %v1015 = vpack.c.b16 %v965, %v964
      %v1016 = vpack.c.b16 %v967, %v966
      %v1017 = vpack.c.b16 %v969, %v968
      %v1018 = vpack.c.b16 %v971, %v970
      %v1019 = vpack.c.b16 %v973, %v972
      %v1020 = vpack.c.b16 %v975, %v974
      %v1021 = vpack.c.b16 %v977, %v976
      %v1022 = vpack.c.b16 %v979, %v978
      %v1023 = vpack.c.b16 %v981, %v980
      %v1024 = vpack.c.b16 %v983, %v982
      %v1025 = vpack.c.b16 %v985, %v984
      %v1026 = vpack.c.b16 %v987, %v986
      %v1027 = vpack.c.b16 %v989, %v988
      %v1028 = vpack.c.b16 %v991, %v990
      %v1029 = vpack.c.b16 %v993, %v992
      %v1030 = vpack.c.b16 %v995, %v994
      %v1031 = vpack.c.b16 %v997, %v996
      %v1032 = vpack.c.b16 %v999, %v998
      %v1033 = vpack.c.b16 %v1001, %v1000
      %1066 = vmatprep.subr.bf16.mxu0 0
      %1067 = vmatpush1.bf16.msra.mxu0 %v1009
      %1068 = vmatprep.subr.bf16.mxu0 0
      %1069 = vmatpush1.bf16.msra.mxu0 %v1008
      %1070 = vmatprep.subr.bf16.mxu0 0
      %1071 = vmatpush1.bf16.msra.mxu0 %v1007
      %1072 = vmatprep.subr.bf16.mxu0 0
      %1073 = vmatpush1.bf16.msra.mxu0 %v1006
      %1074 = vmatprep.subr.bf16.mxu0 0
      %1075 = vmatpush1.bf16.msra.mxu0 %v1005
      %1076 = vmatprep.subr.bf16.mxu0 0
      %1077 = vmatpush1.bf16.msra.mxu0 %v1004
      %1078 = vmatprep.subr.bf16.mxu0 0
      %1079 = vmatpush1.bf16.msra.mxu0 %v1003
      %1080 = vmatprep.subr.bf16.mxu0 0
      %1081 = vmatpush1.bf16.msra.mxu0 %v1002
      %1082 = vmatprep.subr.bf16.mxu0 0
      %1083 = vmatpush2.bf16.msra.mxu0 %v1017
      %1084 = vmatprep.subr.bf16.mxu0 0
      %1085 = vmatpush2.bf16.msra.mxu0 %v1016
      %1086 = vmatprep.subr.bf16.mxu0 0
      %1087 = vmatpush2.bf16.msra.mxu0 %v1015
      %1088 = vmatprep.subr.bf16.mxu0 0
      %1089 = vmatpush2.bf16.msra.mxu0 %v1014
      %1090 = vmatprep.subr.bf16.mxu0 0
      %1091 = vmatpush2.bf16.msra.mxu0 %v1013
      %1092 = vmatprep.subr.bf16.mxu0 0
      %1093 = vmatpush2.bf16.msra.mxu0 %v1012
      %1094 = vmatprep.subr.bf16.mxu0 0
      %1095 = vmatpush2.bf16.msra.mxu0 %v1011
      %1096 = vmatprep.subr.bf16.mxu0 0
      %1097 = vmatpush2.bf16.msra.mxu0 %v1010
      %1098 = vmatprep.mubr.bf16.mxu0 %v867
      %1099 = vmatmul.mubr.bf16.gmra.mxu0 %v866
      %v1100 = vpop.f32.mrf.mxu0
      %v1101 = vadd.f32 %v828, %v1100
      %v1102 = vpop.f32.mrf.mxu0
      %v1103 = vpop.f32.mrf.mxu0
      %v1104 = vadd.f32 %v831, %v1103
      %v1105 = vpop.f32.mrf.mxu0
      %1106 = vdwg.mxu0
      %1107 = vmatprep.subr.bf16.mxu0 0
      %1108 = vmatpush1.bf16.msra.mxu0 %v1025
      %1109 = vmatprep.subr.bf16.mxu0 0
      %1110 = vmatpush1.bf16.msra.mxu0 %v1024
      %1111 = vmatprep.subr.bf16.mxu0 0
      %1112 = vmatpush1.bf16.msra.mxu0 %v1023
      %1113 = vmatprep.subr.bf16.mxu0 0
      %1114 = vmatpush1.bf16.msra.mxu0 %v1022
      %1115 = vmatprep.subr.bf16.mxu0 0
      %1116 = vmatpush1.bf16.msra.mxu0 %v1021
      %1117 = vmatprep.subr.bf16.mxu0 0
      %1118 = vmatpush1.bf16.msra.mxu0 %v1020
      %1119 = vmatprep.subr.bf16.mxu0 0
      %1120 = vmatpush1.bf16.msra.mxu0 %v1019
      %1121 = vmatprep.subr.bf16.mxu0 0
      %1122 = vmatpush1.bf16.msra.mxu0 %v1018
      %1123 = vmatprep.subr.bf16.mxu0 0
      %1124 = vmatpush2.bf16.msra.mxu0 %v1033
      %1125 = vmatprep.subr.bf16.mxu0 0
      %1126 = vmatpush2.bf16.msra.mxu0 %v1032
      %1127 = vmatprep.subr.bf16.mxu0 0
      %1128 = vmatpush2.bf16.msra.mxu0 %v1031
      %1129 = vmatprep.subr.bf16.mxu0 0
      %1130 = vmatpush2.bf16.msra.mxu0 %v1030
      %1131 = vmatprep.subr.bf16.mxu0 0
      %1132 = vmatpush2.bf16.msra.mxu0 %v1029
      %1133 = vmatprep.subr.bf16.mxu0 0
      %1134 = vmatpush2.bf16.msra.mxu0 %v1028
      %1135 = vmatprep.subr.bf16.mxu0 0
      %1136 = vmatpush2.bf16.msra.mxu0 %v1027
      %1137 = vmatprep.subr.bf16.mxu0 0
      %1138 = vmatpush2.bf16.msra.mxu0 %v1026
      %1139 = vmatprep.mubr.bf16.mxu0 %v869
      %1140 = vmatmul.mubr.bf16.gmra.mxu0 %v868
      %v1141 = vpop.f32.mrf.mxu0
      %v1142 = vadd.f32 %v1101, %v1141
      %v1143 = vpop.f32.mrf.mxu0
      %v1144 = vpop.f32.mrf.mxu0
      %v1145 = vadd.f32 %v1104, %v1144
      %v1146 = vpop.f32.mrf.mxu0
      %1147 = vdwg.mxu0
      %s1148 = scalar_lea.vmem %s165, 16
      %v1149 = vld [vmem:[%s1148] sm:$0x33]
      %v1150 = vld [vmem:[%s1148 + $0x8] sm:$0x33]
      %v1151 = vld [vmem:[%s1148 + $0x10] sm:$0x33]
      %v1152 = vld [vmem:[%s1148 + $0x18] sm:$0x33]
      %v1153 = vld [vmem:[%s1148 + $0x20] sm:$0x33]
      %v1154 = vld [vmem:[%s1148 + $0x28] sm:$0x33]
      %v1155 = vld [vmem:[%s1148 + $0x30] sm:$0x33]
      %v1156 = vld [vmem:[%s1148 + $0x38] sm:$0x33]
      %v1166 = vunpack.c.l.s4 1983009808
      %v1167 = vunpack.c.0.s8 %v1166
      %v1168 = vlaneseq
      %v1169 = vshrl.u32 %v1168, 7
      %v1170 = vsub.s32 %v1167, %v1169
      %v1171 = vrot.slane %v1149, %v1170
      %v1173 = vunpack.c.l.s4 1983009808
      %v1174 = vunpack.c.0.s8 %v1173
      %v1175 = vlaneseq
      %v1176 = vshrl.u32 %v1175, 7
      %v1177 = vsub.s32 %v1174, %v1176
      %v1178 = vrot.slane %v1150, %v1177
      %v1179 = vcombine.low %v1171, %v1178
      %v1181 = vunpack.c.l.s4 1983009808
      %v1182 = vunpack.c.0.s8 %v1181
      %v1183 = vlaneseq
      %v1184 = vshrl.u32 %v1183, 7
      %v1185 = vsub.s32 %v1182, %v1184
      %v1186 = vrot.slane %v1151, %v1185
      %v1188 = vunpack.c.l.s4 1983009808
      %v1189 = vunpack.c.0.s8 %v1188
      %v1190 = vlaneseq
      %v1191 = vshrl.u32 %v1190, 7
      %v1192 = vsub.s32 %v1189, %v1191
      %v1193 = vrot.slane %v1152, %v1192
      %v1194 = vcombine.low %v1186, %v1193
      %v1196 = vunpack.c.l.s4 1983009808
      %v1197 = vunpack.c.0.s8 %v1196
      %v1198 = vlaneseq
      %v1199 = vshrl.u32 %v1198, 7
      %v1200 = vsub.s32 %v1197, %v1199
      %v1201 = vrot.slane %v1153, %v1200
      %v1203 = vunpack.c.l.s4 1983009808
      %v1204 = vunpack.c.0.s8 %v1203
      %v1205 = vlaneseq
      %v1206 = vshrl.u32 %v1205, 7
      %v1207 = vsub.s32 %v1204, %v1206
      %v1208 = vrot.slane %v1154, %v1207
      %v1209 = vcombine.low %v1201, %v1208
      %v1211 = vunpack.c.l.s4 1983009808
      %v1212 = vunpack.c.0.s8 %v1211
      %v1213 = vlaneseq
      %v1214 = vshrl.u32 %v1213, 7
      %v1215 = vsub.s32 %v1212, %v1214
      %v1216 = vrot.slane %v1155, %v1215
      %v1218 = vunpack.c.l.s4 1983009808
      %v1219 = vunpack.c.0.s8 %v1218
      %v1220 = vlaneseq
      %v1221 = vshrl.u32 %v1220, 7
      %v1222 = vsub.s32 %v1219, %v1221
      %v1223 = vrot.slane %v1156, %v1222
      %v1224 = vcombine.low %v1216, %v1223
      %s1225 = scalar_lea.vmem %s1, 512
      %v1226 = vld [vmem:[%s1225] sm:$0xf]
      %v1227 = vld [vmem:[%s1225 + $0x4] sm:$0xf]
      %v1228 = vld [vmem:[%s1225 + $0x8] sm:$0xf]
      %v1229 = vld [vmem:[%s1225 + $0xc] sm:$0xf]
      %v1230 = vld [vmem:[%s1225 + $0x10] sm:$0xf]
      %v1231 = vld [vmem:[%s1225 + $0x14] sm:$0xf]
      %v1232 = vld [vmem:[%s1225 + $0x18] sm:$0xf]
      %v1233 = vld [vmem:[%s1225 + $0x1c] sm:$0xf]
      %v1234 = vld [vmem:[%s1225 + $0x20] sm:$0xf]
      %v1235 = vld [vmem:[%s1225 + $0x24] sm:$0xf]
      %v1236 = vld [vmem:[%s1225 + $0x28] sm:$0xf]
      %v1237 = vld [vmem:[%s1225 + $0x2c] sm:$0xf]
      %v1238 = vld [vmem:[%s1225 + $0x30] sm:$0xf]
      %v1239 = vld [vmem:[%s1225 + $0x34] sm:$0xf]
      %v1240 = vld [vmem:[%s1225 + $0x38] sm:$0xf]
      %v1241 = vld [vmem:[%s1225 + $0x3c] sm:$0xf]
      %v1242 = vld [vmem:[%s1225 + $0x40] sm:$0xf]
      %v1243 = vld [vmem:[%s1225 + $0x44] sm:$0xf]
      %v1244 = vld [vmem:[%s1225 + $0x48] sm:$0xf]
      %v1245 = vld [vmem:[%s1225 + $0x4c] sm:$0xf]
      %v1246 = vld [vmem:[%s1225 + $0x50] sm:$0xf]
      %v1247 = vld [vmem:[%s1225 + $0x54] sm:$0xf]
      %v1248 = vld [vmem:[%s1225 + $0x58] sm:$0xf]
      %v1249 = vld [vmem:[%s1225 + $0x5c] sm:$0xf]
      %v1250 = vld [vmem:[%s1225 + $0x60] sm:$0xf]
      %v1251 = vld [vmem:[%s1225 + $0x64] sm:$0xf]
      %v1252 = vld [vmem:[%s1225 + $0x68] sm:$0xf]
      %v1253 = vld [vmem:[%s1225 + $0x6c] sm:$0xf]
      %v1254 = vld [vmem:[%s1225 + $0x70] sm:$0xf]
      %v1255 = vld [vmem:[%s1225 + $0x74] sm:$0xf]
      %v1256 = vld [vmem:[%s1225 + $0x78] sm:$0xf]
      %v1257 = vld [vmem:[%s1225 + $0x7c] sm:$0xf]
      %v1258 = vld [vmem:[%s1225 + $0x80] sm:$0xf]
      %v1259 = vld [vmem:[%s1225 + $0x84] sm:$0xf]
      %v1260 = vld [vmem:[%s1225 + $0x88] sm:$0xf]
      %v1261 = vld [vmem:[%s1225 + $0x8c] sm:$0xf]
      %v1262 = vld [vmem:[%s1225 + $0x90] sm:$0xf]
      %v1263 = vld [vmem:[%s1225 + $0x94] sm:$0xf]
      %v1264 = vld [vmem:[%s1225 + $0x98] sm:$0xf]
      %v1265 = vld [vmem:[%s1225 + $0x9c] sm:$0xf]
      %v1266 = vld [vmem:[%s1225 + $0xa0] sm:$0xf]
      %v1267 = vld [vmem:[%s1225 + $0xa4] sm:$0xf]
      %v1268 = vld [vmem:[%s1225 + $0xa8] sm:$0xf]
      %v1269 = vld [vmem:[%s1225 + $0xac] sm:$0xf]
      %v1270 = vld [vmem:[%s1225 + $0xb0] sm:$0xf]
      %v1271 = vld [vmem:[%s1225 + $0xb4] sm:$0xf]
      %v1272 = vld [vmem:[%s1225 + $0xb8] sm:$0xf]
      %v1273 = vld [vmem:[%s1225 + $0xbc] sm:$0xf]
      %v1274 = vld [vmem:[%s1225 + $0xc0] sm:$0xf]
      %v1275 = vld [vmem:[%s1225 + $0xc4] sm:$0xf]
      %v1276 = vld [vmem:[%s1225 + $0xc8] sm:$0xf]
      %v1277 = vld [vmem:[%s1225 + $0xcc] sm:$0xf]
      %v1278 = vld [vmem:[%s1225 + $0xd0] sm:$0xf]
      %v1279 = vld [vmem:[%s1225 + $0xd4] sm:$0xf]
      %v1280 = vld [vmem:[%s1225 + $0xd8] sm:$0xf]
      %v1281 = vld [vmem:[%s1225 + $0xdc] sm:$0xf]
      %v1282 = vld [vmem:[%s1225 + $0xe0] sm:$0xf]
      %v1283 = vld [vmem:[%s1225 + $0xe4] sm:$0xf]
      %v1284 = vld [vmem:[%s1225 + $0xe8] sm:$0xf]
      %v1285 = vld [vmem:[%s1225 + $0xec] sm:$0xf]
      %v1286 = vld [vmem:[%s1225 + $0xf0] sm:$0xf]
      %v1287 = vld [vmem:[%s1225 + $0xf4] sm:$0xf]
      %v1288 = vld [vmem:[%s1225 + $0xf8] sm:$0xf]
      %v1289 = vld [vmem:[%s1225 + $0xfc] sm:$0xf]
      %v1290 = vcombine.low %v1179, %v1194
      %v1291 = vcombine.high %v1179, %v1194
      %v1292 = vcombine.low %v1209, %v1224
      %v1293 = vcombine.high %v1209, %v1224
      %v1295 = vunpack.c.l.s4 1983009808
      %v1296 = vunpack.c.0.s8 %v1295
      %v1297 = vlaneseq
      %v1298 = vshrl.u32 %v1297, 7
      %v1299 = vsub.s32 %v1296, %v1298
      %v1300 = vrot.slane %v1290, %v1299
      %v1302 = vunpack.c.l.s4 1983009808
      %v1303 = vunpack.c.0.s8 %v1302
      %v1304 = vlaneseq
      %v1305 = vshrl.u32 %v1304, 7
      %v1306 = vsub.s32 %v1303, %v1305
      %v1307 = vrot.slane %v1291, %v1306
      %v1309 = vunpack.c.l.s4 1983009808
      %v1310 = vunpack.c.0.s8 %v1309
      %v1311 = vlaneseq
      %v1312 = vshrl.u32 %v1311, 7
      %v1313 = vsub.s32 %v1310, %v1312
      %v1314 = vrot.slane %v1292, %v1313
      %v1316 = vunpack.c.l.s4 1983009808
      %v1317 = vunpack.c.0.s8 %v1316
      %v1318 = vlaneseq
      %v1319 = vshrl.u32 %v1318, 7
      %v1320 = vsub.s32 %v1317, %v1319
      %v1321 = vrot.slane %v1293, %v1320
      %v1322 = vcombine.low %v1300, %v1314
      %v1323 = vcombine.high %v1300, %v1314
      %v1324 = vcombine.low %v1307, %v1321
      %v1325 = vcombine.high %v1307, %v1321
      %v1394 = vunpack.c.l.b16 %v1226
      %v1395 = vunpack.c.l.b16 %v1227
      %v1396 = vunpack.c.l.b16 %v1228
      %v1397 = vunpack.c.l.b16 %v1229
      %v1398 = vunpack.c.l.b16 %v1230
      %v1399 = vunpack.c.l.b16 %v1231
      %v1400 = vunpack.c.l.b16 %v1232
      %v1401 = vunpack.c.l.b16 %v1233
      %v1402 = vunpack.c.l.b16 %v1234
      %v1403 = vunpack.c.l.b16 %v1235
      %v1404 = vunpack.c.l.b16 %v1236
      %v1405 = vunpack.c.l.b16 %v1237
      %v1406 = vunpack.c.l.b16 %v1238
      %v1407 = vunpack.c.l.b16 %v1239
      %v1408 = vunpack.c.l.b16 %v1240
      %v1409 = vunpack.c.l.b16 %v1241
      %v1410 = vunpack.c.l.b16 %v1242
      %v1411 = vunpack.c.l.b16 %v1243
      %v1412 = vunpack.c.l.b16 %v1244
      %v1413 = vunpack.c.l.b16 %v1245
      %v1414 = vunpack.c.l.b16 %v1246
      %v1415 = vunpack.c.l.b16 %v1247
      %v1416 = vunpack.c.l.b16 %v1248
      %v1417 = vunpack.c.l.b16 %v1249
      %v1418 = vunpack.c.l.b16 %v1250
      %v1419 = vunpack.c.l.b16 %v1251
      %v1420 = vunpack.c.l.b16 %v1252
      %v1421 = vunpack.c.l.b16 %v1253
      %v1422 = vunpack.c.l.b16 %v1254
      %v1423 = vunpack.c.l.b16 %v1255
      %v1424 = vunpack.c.l.b16 %v1256
      %v1425 = vunpack.c.l.b16 %v1257
      %v1426 = vunpack.c.l.b16 %v1258
      %v1427 = vunpack.c.l.b16 %v1259
      %v1428 = vunpack.c.l.b16 %v1260
      %v1429 = vunpack.c.l.b16 %v1261
      %v1430 = vunpack.c.l.b16 %v1262
      %v1431 = vunpack.c.l.b16 %v1263
      %v1432 = vunpack.c.l.b16 %v1264
      %v1433 = vunpack.c.l.b16 %v1265
      %v1434 = vunpack.c.l.b16 %v1266
      %v1435 = vunpack.c.l.b16 %v1267
      %v1436 = vunpack.c.l.b16 %v1268
      %v1437 = vunpack.c.l.b16 %v1269
      %v1438 = vunpack.c.l.b16 %v1270
      %v1439 = vunpack.c.l.b16 %v1271
      %v1440 = vunpack.c.l.b16 %v1272
      %v1441 = vunpack.c.l.b16 %v1273
      %v1442 = vunpack.c.l.b16 %v1274
      %v1443 = vunpack.c.l.b16 %v1275
      %v1444 = vunpack.c.l.b16 %v1276
      %v1445 = vunpack.c.l.b16 %v1277
      %v1446 = vunpack.c.l.b16 %v1278
      %v1447 = vunpack.c.l.b16 %v1279
      %v1448 = vunpack.c.l.b16 %v1280
      %v1449 = vunpack.c.l.b16 %v1281
      %v1450 = vunpack.c.l.b16 %v1282
      %v1451 = vunpack.c.l.b16 %v1283
      %v1452 = vunpack.c.l.b16 %v1284
      %v1453 = vunpack.c.l.b16 %v1285
      %v1454 = vunpack.c.l.b16 %v1286
      %v1455 = vunpack.c.l.b16 %v1287
      %v1456 = vunpack.c.l.b16 %v1288
      %v1457 = vunpack.c.l.b16 %v1289
      %v1458 = vpack.c.b16 %v1395, %v1394
      %v1459 = vpack.c.b16 %v1397, %v1396
      %v1460 = vpack.c.b16 %v1399, %v1398
      %v1461 = vpack.c.b16 %v1401, %v1400
      %v1462 = vpack.c.b16 %v1403, %v1402
      %v1463 = vpack.c.b16 %v1405, %v1404
      %v1464 = vpack.c.b16 %v1407, %v1406
      %v1465 = vpack.c.b16 %v1409, %v1408
      %v1466 = vpack.c.b16 %v1411, %v1410
      %v1467 = vpack.c.b16 %v1413, %v1412
      %v1468 = vpack.c.b16 %v1415, %v1414
      %v1469 = vpack.c.b16 %v1417, %v1416
      %v1470 = vpack.c.b16 %v1419, %v1418
      %v1471 = vpack.c.b16 %v1421, %v1420
      %v1472 = vpack.c.b16 %v1423, %v1422
      %v1473 = vpack.c.b16 %v1425, %v1424
      %v1474 = vpack.c.b16 %v1427, %v1426
      %v1475 = vpack.c.b16 %v1429, %v1428
      %v1476 = vpack.c.b16 %v1431, %v1430
      %v1477 = vpack.c.b16 %v1433, %v1432
      %v1478 = vpack.c.b16 %v1435, %v1434
      %v1479 = vpack.c.b16 %v1437, %v1436
      %v1480 = vpack.c.b16 %v1439, %v1438
      %v1481 = vpack.c.b16 %v1441, %v1440
      %v1482 = vpack.c.b16 %v1443, %v1442
      %v1483 = vpack.c.b16 %v1445, %v1444
      %v1484 = vpack.c.b16 %v1447, %v1446
      %v1485 = vpack.c.b16 %v1449, %v1448
      %v1486 = vpack.c.b16 %v1451, %v1450
      %v1487 = vpack.c.b16 %v1453, %v1452
      %v1488 = vpack.c.b16 %v1455, %v1454
      %v1489 = vpack.c.b16 %v1457, %v1456
      %1522 = vmatprep.subr.bf16.mxu0 0
      %1523 = vmatpush1.bf16.msra.mxu0 %v1465
      %1524 = vmatprep.subr.bf16.mxu0 0
      %1525 = vmatpush1.bf16.msra.mxu0 %v1464
      %1526 = vmatprep.subr.bf16.mxu0 0
      %1527 = vmatpush1.bf16.msra.mxu0 %v1463
      %1528 = vmatprep.subr.bf16.mxu0 0
      %1529 = vmatpush1.bf16.msra.mxu0 %v1462
      %1530 = vmatprep.subr.bf16.mxu0 0
      %1531 = vmatpush1.bf16.msra.mxu0 %v1461
      %1532 = vmatprep.subr.bf16.mxu0 0
      %1533 = vmatpush1.bf16.msra.mxu0 %v1460
      %1534 = vmatprep.subr.bf16.mxu0 0
      %1535 = vmatpush1.bf16.msra.mxu0 %v1459
      %1536 = vmatprep.subr.bf16.mxu0 0
      %1537 = vmatpush1.bf16.msra.mxu0 %v1458
      %1538 = vmatprep.subr.bf16.mxu0 0
      %1539 = vmatpush2.bf16.msra.mxu0 %v1473
      %1540 = vmatprep.subr.bf16.mxu0 0
      %1541 = vmatpush2.bf16.msra.mxu0 %v1472
      %1542 = vmatprep.subr.bf16.mxu0 0
      %1543 = vmatpush2.bf16.msra.mxu0 %v1471
      %1544 = vmatprep.subr.bf16.mxu0 0
      %1545 = vmatpush2.bf16.msra.mxu0 %v1470
      %1546 = vmatprep.subr.bf16.mxu0 0
      %1547 = vmatpush2.bf16.msra.mxu0 %v1469
      %1548 = vmatprep.subr.bf16.mxu0 0
      %1549 = vmatpush2.bf16.msra.mxu0 %v1468
      %1550 = vmatprep.subr.bf16.mxu0 0
      %1551 = vmatpush2.bf16.msra.mxu0 %v1467
      %1552 = vmatprep.subr.bf16.mxu0 0
      %1553 = vmatpush2.bf16.msra.mxu0 %v1466
      %1554 = vmatprep.mubr.bf16.mxu0 %v1323
      %1555 = vmatmul.mubr.bf16.gmra.mxu0 %v1322
      %v1556 = vpop.f32.mrf.mxu0
      %v1557 = vadd.f32 0.0, %v1556
      %v1558 = vpop.f32.mrf.mxu0
      %v1559 = vpop.f32.mrf.mxu0
      %v1560 = vadd.f32 0.0, %v1559
      %v1561 = vpop.f32.mrf.mxu0
      %1562 = vdwg.mxu0
      %1563 = vmatprep.subr.bf16.mxu0 0
      %1564 = vmatpush1.bf16.msra.mxu0 %v1481
      %1565 = vmatprep.subr.bf16.mxu0 0
      %1566 = vmatpush1.bf16.msra.mxu0 %v1480
      %1567 = vmatprep.subr.bf16.mxu0 0
      %1568 = vmatpush1.bf16.msra.mxu0 %v1479
      %1569 = vmatprep.subr.bf16.mxu0 0
      %1570 = vmatpush1.bf16.msra.mxu0 %v1478
      %1571 = vmatprep.subr.bf16.mxu0 0
      %1572 = vmatpush1.bf16.msra.mxu0 %v1477
      %1573 = vmatprep.subr.bf16.mxu0 0
      %1574 = vmatpush1.bf16.msra.mxu0 %v1476
      %1575 = vmatprep.subr.bf16.mxu0 0
      %1576 = vmatpush1.bf16.msra.mxu0 %v1475
      %1577 = vmatprep.subr.bf16.mxu0 0
      %1578 = vmatpush1.bf16.msra.mxu0 %v1474
      %1579 = vmatprep.subr.bf16.mxu0 0
      %1580 = vmatpush2.bf16.msra.mxu0 %v1489
      %1581 = vmatprep.subr.bf16.mxu0 0
      %1582 = vmatpush2.bf16.msra.mxu0 %v1488
      %1583 = vmatprep.subr.bf16.mxu0 0
      %1584 = vmatpush2.bf16.msra.mxu0 %v1487
      %1585 = vmatprep.subr.bf16.mxu0 0
      %1586 = vmatpush2.bf16.msra.mxu0 %v1486
      %1587 = vmatprep.subr.bf16.mxu0 0
      %1588 = vmatpush2.bf16.msra.mxu0 %v1485
      %1589 = vmatprep.subr.bf16.mxu0 0
      %1590 = vmatpush2.bf16.msra.mxu0 %v1484
      %1591 = vmatprep.subr.bf16.mxu0 0
      %1592 = vmatpush2.bf16.msra.mxu0 %v1483
      %1593 = vmatprep.subr.bf16.mxu0 0
      %1594 = vmatpush2.bf16.msra.mxu0 %v1482
      %1595 = vmatprep.mubr.bf16.mxu0 %v1325
      %1596 = vmatmul.mubr.bf16.gmra.mxu0 %v1324
      %v1597 = vpop.f32.mrf.mxu0
      %v1598 = vadd.f32 %v1557, %v1597
      %v1599 = vpop.f32.mrf.mxu0
      %v1600 = vpop.f32.mrf.mxu0
      %v1601 = vadd.f32 %v1560, %v1600
      %v1602 = vpop.f32.mrf.mxu0
      %1603 = vdwg.mxu0
      %v1604 = vadd.f32 %v1142, %v1598
      %v1605 = vadd.f32 %v1145, %v1601
      %v1606 = vld [vmem:[%s1148] sm:$0x77]
      %v1607 = vld [vmem:[%s1148 + $0x8] sm:$0x77]
      %v1608 = vld [vmem:[%s1148 + $0x10] sm:$0x77]
      %v1609 = vld [vmem:[%s1148 + $0x18] sm:$0x77]
      %v1610 = vld [vmem:[%s1148 + $0x20] sm:$0x77]
      %v1611 = vld [vmem:[%s1148 + $0x28] sm:$0x77]
      %v1612 = vld [vmem:[%s1148 + $0x30] sm:$0x77]
      %v1613 = vld [vmem:[%s1148 + $0x38] sm:$0x77]
      %v1623 = vunpack.c.l.s4 1983009808
      %v1624 = vunpack.c.0.s8 %v1623
      %v1625 = vlaneseq
      %v1626 = vshrl.u32 %v1625, 7
      %v1627 = vsub.s32 %v1624, %v1626
      %v1628 = vrot.slane %v1606, %v1627
      %v1630 = vunpack.c.l.s4 1983009808
      %v1631 = vunpack.c.0.s8 %v1630
      %v1632 = vlaneseq
      %v1633 = vshrl.u32 %v1632, 7
      %v1634 = vsub.s32 %v1631, %v1633
      %v1635 = vrot.slane %v1607, %v1634
      %v1636 = vcombine.low %v1628, %v1635
      %v1637 = vcombine.high %v1628, %v1635
      %v1639 = vunpack.c.l.s4 1983009808
      %v1640 = vunpack.c.0.s8 %v1639
      %v1641 = vlaneseq
      %v1642 = vshrl.u32 %v1641, 7
      %v1643 = vsub.s32 %v1640, %v1642
      %v1644 = vrot.slane %v1608, %v1643
      %v1646 = vunpack.c.l.s4 1983009808
      %v1647 = vunpack.c.0.s8 %v1646
      %v1648 = vlaneseq
      %v1649 = vshrl.u32 %v1648, 7
      %v1650 = vsub.s32 %v1647, %v1649
      %v1651 = vrot.slane %v1609, %v1650
      %v1652 = vcombine.low %v1644, %v1651
      %v1653 = vcombine.high %v1644, %v1651
      %v1655 = vunpack.c.l.s4 1983009808
      %v1656 = vunpack.c.0.s8 %v1655
      %v1657 = vlaneseq
      %v1658 = vshrl.u32 %v1657, 7
      %v1659 = vsub.s32 %v1656, %v1658
      %v1660 = vrot.slane %v1610, %v1659
      %v1662 = vunpack.c.l.s4 1983009808
      %v1663 = vunpack.c.0.s8 %v1662
      %v1664 = vlaneseq
      %v1665 = vshrl.u32 %v1664, 7
      %v1666 = vsub.s32 %v1663, %v1665
      %v1667 = vrot.slane %v1611, %v1666
      %v1668 = vcombine.low %v1660, %v1667
      %v1669 = vcombine.high %v1660, %v1667
      %v1671 = vunpack.c.l.s4 1983009808
      %v1672 = vunpack.c.0.s8 %v1671
      %v1673 = vlaneseq
      %v1674 = vshrl.u32 %v1673, 7
      %v1675 = vsub.s32 %v1672, %v1674
      %v1676 = vrot.slane %v1612, %v1675
      %v1678 = vunpack.c.l.s4 1983009808
      %v1679 = vunpack.c.0.s8 %v1678
      %v1680 = vlaneseq
      %v1681 = vshrl.u32 %v1680, 7
      %v1682 = vsub.s32 %v1679, %v1681
      %v1683 = vrot.slane %v1613, %v1682
      %v1684 = vcombine.low %v1676, %v1683
      %v1685 = vcombine.high %v1676, %v1683
      %v1687 = vshrl.u32 %v1636, 16
      %v1689 = vrot.slane %v1687, 6
      %v1690 = vshll.u32 %v1636, 16
      %v1692 = vrot.slane %v1690, 7
      %v1693 = vor.u32 %v1689, %v1692
      %v1694 = vrot.slane %v1693, 2
      %v1696 = vshll.u32 %v1637, 16
      %v1698 = vrot.slane %v1696, 7
      %v1699 = vsel %vm398, %v1694, %v1698
      %v1701 = vshrl.u32 %v1652, 16
      %v1703 = vrot.slane %v1701, 6
      %v1704 = vshll.u32 %v1652, 16
      %v1706 = vrot.slane %v1704, 7
      %v1707 = vor.u32 %v1703, %v1706
      %v1708 = vrot.slane %v1707, 2
      %v1710 = vshll.u32 %v1653, 16
      %v1712 = vrot.slane %v1710, 7
      %v1713 = vsel %vm398, %v1708, %v1712
      %v1715 = vshrl.u32 %v1668, 16
      %v1717 = vrot.slane %v1715, 6
      %v1718 = vshll.u32 %v1668, 16
      %v1720 = vrot.slane %v1718, 7
      %v1721 = vor.u32 %v1717, %v1720
      %v1722 = vrot.slane %v1721, 2
      %v1724 = vshll.u32 %v1669, 16
      %v1726 = vrot.slane %v1724, 7
      %v1727 = vsel %vm398, %v1722, %v1726
      %v1729 = vshrl.u32 %v1684, 16
      %v1731 = vrot.slane %v1729, 6
      %v1732 = vshll.u32 %v1684, 16
      %v1734 = vrot.slane %v1732, 7
      %v1735 = vor.u32 %v1731, %v1734
      %v1736 = vrot.slane %v1735, 2
      %v1738 = vshll.u32 %v1685, 16
      %v1740 = vrot.slane %v1738, 7
      %v1741 = vsel %vm398, %v1736, %v1740
      %s1742 = scalar_lea.vmem %s1, 768
      %v1743 = vld [vmem:[%s1742] sm:$0xf]
      %v1744 = vld [vmem:[%s1742 + $0x4] sm:$0xf]
      %v1745 = vld [vmem:[%s1742 + $0x8] sm:$0xf]
      %v1746 = vld [vmem:[%s1742 + $0xc] sm:$0xf]
      %v1747 = vld [vmem:[%s1742 + $0x10] sm:$0xf]
      %v1748 = vld [vmem:[%s1742 + $0x14] sm:$0xf]
      %v1749 = vld [vmem:[%s1742 + $0x18] sm:$0xf]
      %v1750 = vld [vmem:[%s1742 + $0x1c] sm:$0xf]
      %v1751 = vld [vmem:[%s1742 + $0x20] sm:$0xf]
      %v1752 = vld [vmem:[%s1742 + $0x24] sm:$0xf]
      %v1753 = vld [vmem:[%s1742 + $0x28] sm:$0xf]
      %v1754 = vld [vmem:[%s1742 + $0x2c] sm:$0xf]
      %v1755 = vld [vmem:[%s1742 + $0x30] sm:$0xf]
      %v1756 = vld [vmem:[%s1742 + $0x34] sm:$0xf]
      %v1757 = vld [vmem:[%s1742 + $0x38] sm:$0xf]
      %v1758 = vld [vmem:[%s1742 + $0x3c] sm:$0xf]
      %v1759 = vld [vmem:[%s1742 + $0x40] sm:$0xf]
      %v1760 = vld [vmem:[%s1742 + $0x44] sm:$0xf]
      %v1761 = vld [vmem:[%s1742 + $0x48] sm:$0xf]
      %v1762 = vld [vmem:[%s1742 + $0x4c] sm:$0xf]
      %v1763 = vld [vmem:[%s1742 + $0x50] sm:$0xf]
      %v1764 = vld [vmem:[%s1742 + $0x54] sm:$0xf]
      %v1765 = vld [vmem:[%s1742 + $0x58] sm:$0xf]
      %v1766 = vld [vmem:[%s1742 + $0x5c] sm:$0xf]
      %v1767 = vld [vmem:[%s1742 + $0x60] sm:$0xf]
      %v1768 = vld [vmem:[%s1742 + $0x64] sm:$0xf]
      %v1769 = vld [vmem:[%s1742 + $0x68] sm:$0xf]
      %v1770 = vld [vmem:[%s1742 + $0x6c] sm:$0xf]
      %v1771 = vld [vmem:[%s1742 + $0x70] sm:$0xf]
      %v1772 = vld [vmem:[%s1742 + $0x74] sm:$0xf]
      %v1773 = vld [vmem:[%s1742 + $0x78] sm:$0xf]
      %v1774 = vld [vmem:[%s1742 + $0x7c] sm:$0xf]
      %v1775 = vld [vmem:[%s1742 + $0x80] sm:$0xf]
      %v1776 = vld [vmem:[%s1742 + $0x84] sm:$0xf]
      %v1777 = vld [vmem:[%s1742 + $0x88] sm:$0xf]
      %v1778 = vld [vmem:[%s1742 + $0x8c] sm:$0xf]
      %v1779 = vld [vmem:[%s1742 + $0x90] sm:$0xf]
      %v1780 = vld [vmem:[%s1742 + $0x94] sm:$0xf]
      %v1781 = vld [vmem:[%s1742 + $0x98] sm:$0xf]
      %v1782 = vld [vmem:[%s1742 + $0x9c] sm:$0xf]
      %v1783 = vld [vmem:[%s1742 + $0xa0] sm:$0xf]
      %v1784 = vld [vmem:[%s1742 + $0xa4] sm:$0xf]
      %v1785 = vld [vmem:[%s1742 + $0xa8] sm:$0xf]
      %v1786 = vld [vmem:[%s1742 + $0xac] sm:$0xf]
      %v1787 = vld [vmem:[%s1742 + $0xb0] sm:$0xf]
      %v1788 = vld [vmem:[%s1742 + $0xb4] sm:$0xf]
      %v1789 = vld [vmem:[%s1742 + $0xb8] sm:$0xf]
      %v1790 = vld [vmem:[%s1742 + $0xbc] sm:$0xf]
      %v1791 = vld [vmem:[%s1742 + $0xc0] sm:$0xf]
      %v1792 = vld [vmem:[%s1742 + $0xc4] sm:$0xf]
      %v1793 = vld [vmem:[%s1742 + $0xc8] sm:$0xf]
      %v1794 = vld [vmem:[%s1742 + $0xcc] sm:$0xf]
      %v1795 = vld [vmem:[%s1742 + $0xd0] sm:$0xf]
      %v1796 = vld [vmem:[%s1742 + $0xd4] sm:$0xf]
      %v1797 = vld [vmem:[%s1742 + $0xd8] sm:$0xf]
      %v1798 = vld [vmem:[%s1742 + $0xdc] sm:$0xf]
      %v1799 = vld [vmem:[%s1742 + $0xe0] sm:$0xf]
      %v1800 = vld [vmem:[%s1742 + $0xe4] sm:$0xf]
      %v1801 = vld [vmem:[%s1742 + $0xe8] sm:$0xf]
      %v1802 = vld [vmem:[%s1742 + $0xec] sm:$0xf]
      %v1803 = vld [vmem:[%s1742 + $0xf0] sm:$0xf]
      %v1804 = vld [vmem:[%s1742 + $0xf4] sm:$0xf]
      %v1805 = vld [vmem:[%s1742 + $0xf8] sm:$0xf]
      %v1806 = vld [vmem:[%s1742 + $0xfc] sm:$0xf]
      %v1807 = vcombine.low %v1699, %v1713
      %v1808 = vcombine.high %v1699, %v1713
      %v1809 = vcombine.low %v1727, %v1741
      %v1810 = vcombine.high %v1727, %v1741
      %v1812 = vunpack.c.l.s4 1983009808
      %v1813 = vunpack.c.0.s8 %v1812
      %v1814 = vlaneseq
      %v1815 = vshrl.u32 %v1814, 7
      %v1816 = vsub.s32 %v1813, %v1815
      %v1817 = vrot.slane %v1807, %v1816
      %v1819 = vunpack.c.l.s4 1983009808
      %v1820 = vunpack.c.0.s8 %v1819
      %v1821 = vlaneseq
      %v1822 = vshrl.u32 %v1821, 7
      %v1823 = vsub.s32 %v1820, %v1822
      %v1824 = vrot.slane %v1808, %v1823
      %v1826 = vunpack.c.l.s4 1983009808
      %v1827 = vunpack.c.0.s8 %v1826
      %v1828 = vlaneseq
      %v1829 = vshrl.u32 %v1828, 7
      %v1830 = vsub.s32 %v1827, %v1829
      %v1831 = vrot.slane %v1809, %v1830
      %v1833 = vunpack.c.l.s4 1983009808
      %v1834 = vunpack.c.0.s8 %v1833
      %v1835 = vlaneseq
      %v1836 = vshrl.u32 %v1835, 7
      %v1837 = vsub.s32 %v1834, %v1836
      %v1838 = vrot.slane %v1810, %v1837
      %v1839 = vcombine.low %v1817, %v1831
      %v1840 = vcombine.high %v1817, %v1831
      %v1841 = vcombine.low %v1824, %v1838
      %v1842 = vcombine.high %v1824, %v1838
      %v1911 = vunpack.c.l.b16 %v1743
      %v1912 = vunpack.c.l.b16 %v1744
      %v1913 = vunpack.c.l.b16 %v1745
      %v1914 = vunpack.c.l.b16 %v1746
      %v1915 = vunpack.c.l.b16 %v1747
      %v1916 = vunpack.c.l.b16 %v1748
      %v1917 = vunpack.c.l.b16 %v1749
      %v1918 = vunpack.c.l.b16 %v1750
      %v1919 = vunpack.c.l.b16 %v1751
      %v1920 = vunpack.c.l.b16 %v1752
      %v1921 = vunpack.c.l.b16 %v1753
      %v1922 = vunpack.c.l.b16 %v1754
      %v1923 = vunpack.c.l.b16 %v1755
      %v1924 = vunpack.c.l.b16 %v1756
      %v1925 = vunpack.c.l.b16 %v1757
      %v1926 = vunpack.c.l.b16 %v1758
      %v1927 = vunpack.c.l.b16 %v1759
      %v1928 = vunpack.c.l.b16 %v1760
      %v1929 = vunpack.c.l.b16 %v1761
      %v1930 = vunpack.c.l.b16 %v1762
      %v1931 = vunpack.c.l.b16 %v1763
      %v1932 = vunpack.c.l.b16 %v1764
      %v1933 = vunpack.c.l.b16 %v1765
      %v1934 = vunpack.c.l.b16 %v1766
      %v1935 = vunpack.c.l.b16 %v1767
      %v1936 = vunpack.c.l.b16 %v1768
      %v1937 = vunpack.c.l.b16 %v1769
      %v1938 = vunpack.c.l.b16 %v1770
      %v1939 = vunpack.c.l.b16 %v1771
      %v1940 = vunpack.c.l.b16 %v1772
      %v1941 = vunpack.c.l.b16 %v1773
      %v1942 = vunpack.c.l.b16 %v1774
      %v1943 = vunpack.c.l.b16 %v1775
      %v1944 = vunpack.c.l.b16 %v1776
      %v1945 = vunpack.c.l.b16 %v1777
      %v1946 = vunpack.c.l.b16 %v1778
      %v1947 = vunpack.c.l.b16 %v1779
      %v1948 = vunpack.c.l.b16 %v1780
      %v1949 = vunpack.c.l.b16 %v1781
      %v1950 = vunpack.c.l.b16 %v1782
      %v1951 = vunpack.c.l.b16 %v1783
      %v1952 = vunpack.c.l.b16 %v1784
      %v1953 = vunpack.c.l.b16 %v1785
      %v1954 = vunpack.c.l.b16 %v1786
      %v1955 = vunpack.c.l.b16 %v1787
      %v1956 = vunpack.c.l.b16 %v1788
      %v1957 = vunpack.c.l.b16 %v1789
      %v1958 = vunpack.c.l.b16 %v1790
      %v1959 = vunpack.c.l.b16 %v1791
      %v1960 = vunpack.c.l.b16 %v1792
      %v1961 = vunpack.c.l.b16 %v1793
      %v1962 = vunpack.c.l.b16 %v1794
      %v1963 = vunpack.c.l.b16 %v1795
      %v1964 = vunpack.c.l.b16 %v1796
      %v1965 = vunpack.c.l.b16 %v1797
      %v1966 = vunpack.c.l.b16 %v1798
      %v1967 = vunpack.c.l.b16 %v1799
      %v1968 = vunpack.c.l.b16 %v1800
      %v1969 = vunpack.c.l.b16 %v1801
      %v1970 = vunpack.c.l.b16 %v1802
      %v1971 = vunpack.c.l.b16 %v1803
      %v1972 = vunpack.c.l.b16 %v1804
      %v1973 = vunpack.c.l.b16 %v1805
      %v1974 = vunpack.c.l.b16 %v1806
      %v1975 = vpack.c.b16 %v1912, %v1911
      %v1976 = vpack.c.b16 %v1914, %v1913
      %v1977 = vpack.c.b16 %v1916, %v1915
      %v1978 = vpack.c.b16 %v1918, %v1917
      %v1979 = vpack.c.b16 %v1920, %v1919
      %v1980 = vpack.c.b16 %v1922, %v1921
      %v1981 = vpack.c.b16 %v1924, %v1923
      %v1982 = vpack.c.b16 %v1926, %v1925
      %v1983 = vpack.c.b16 %v1928, %v1927
      %v1984 = vpack.c.b16 %v1930, %v1929
      %v1985 = vpack.c.b16 %v1932, %v1931
      %v1986 = vpack.c.b16 %v1934, %v1933
      %v1987 = vpack.c.b16 %v1936, %v1935
      %v1988 = vpack.c.b16 %v1938, %v1937
      %v1989 = vpack.c.b16 %v1940, %v1939
      %v1990 = vpack.c.b16 %v1942, %v1941
      %v1991 = vpack.c.b16 %v1944, %v1943
      %v1992 = vpack.c.b16 %v1946, %v1945
      %v1993 = vpack.c.b16 %v1948, %v1947
      %v1994 = vpack.c.b16 %v1950, %v1949
      %v1995 = vpack.c.b16 %v1952, %v1951
      %v1996 = vpack.c.b16 %v1954, %v1953
      %v1997 = vpack.c.b16 %v1956, %v1955
      %v1998 = vpack.c.b16 %v1958, %v1957
      %v1999 = vpack.c.b16 %v1960, %v1959
      %v2000 = vpack.c.b16 %v1962, %v1961
      %v2001 = vpack.c.b16 %v1964, %v1963
      %v2002 = vpack.c.b16 %v1966, %v1965
      %v2003 = vpack.c.b16 %v1968, %v1967
      %v2004 = vpack.c.b16 %v1970, %v1969
      %v2005 = vpack.c.b16 %v1972, %v1971
      %v2006 = vpack.c.b16 %v1974, %v1973
      %2039 = vmatprep.subr.bf16.mxu0 0
      %2040 = vmatpush1.bf16.msra.mxu0 %v1982
      %2041 = vmatprep.subr.bf16.mxu0 0
      %2042 = vmatpush1.bf16.msra.mxu0 %v1981
      %2043 = vmatprep.subr.bf16.mxu0 0
      %2044 = vmatpush1.bf16.msra.mxu0 %v1980
      %2045 = vmatprep.subr.bf16.mxu0 0
      %2046 = vmatpush1.bf16.msra.mxu0 %v1979
      %2047 = vmatprep.subr.bf16.mxu0 0
      %2048 = vmatpush1.bf16.msra.mxu0 %v1978
      %2049 = vmatprep.subr.bf16.mxu0 0
      %2050 = vmatpush1.bf16.msra.mxu0 %v1977
      %2051 = vmatprep.subr.bf16.mxu0 0
      %2052 = vmatpush1.bf16.msra.mxu0 %v1976
      %2053 = vmatprep.subr.bf16.mxu0 0
      %2054 = vmatpush1.bf16.msra.mxu0 %v1975
      %2055 = vmatprep.subr.bf16.mxu0 0
      %2056 = vmatpush2.bf16.msra.mxu0 %v1990
      %2057 = vmatprep.subr.bf16.mxu0 0
      %2058 = vmatpush2.bf16.msra.mxu0 %v1989
      %2059 = vmatprep.subr.bf16.mxu0 0
      %2060 = vmatpush2.bf16.msra.mxu0 %v1988
      %2061 = vmatprep.subr.bf16.mxu0 0
      %2062 = vmatpush2.bf16.msra.mxu0 %v1987
      %2063 = vmatprep.subr.bf16.mxu0 0
      %2064 = vmatpush2.bf16.msra.mxu0 %v1986
      %2065 = vmatprep.subr.bf16.mxu0 0
      %2066 = vmatpush2.bf16.msra.mxu0 %v1985
      %2067 = vmatprep.subr.bf16.mxu0 0
      %2068 = vmatpush2.bf16.msra.mxu0 %v1984
      %2069 = vmatprep.subr.bf16.mxu0 0
      %2070 = vmatpush2.bf16.msra.mxu0 %v1983
      %2071 = vmatprep.mubr.bf16.mxu0 %v1840
      %2072 = vmatmul.mubr.bf16.gmra.mxu0 %v1839
      %v2073 = vpop.f32.mrf.mxu0
      %v2074 = vadd.f32 0.0, %v2073
      %v2075 = vpop.f32.mrf.mxu0
      %v2076 = vpop.f32.mrf.mxu0
      %v2077 = vadd.f32 0.0, %v2076
      %v2078 = vpop.f32.mrf.mxu0
      %2079 = vdwg.mxu0
      %2080 = vmatprep.subr.bf16.mxu0 0
      %2081 = vmatpush1.bf16.msra.mxu0 %v1998
      %2082 = vmatprep.subr.bf16.mxu0 0
      %2083 = vmatpush1.bf16.msra.mxu0 %v1997
      %2084 = vmatprep.subr.bf16.mxu0 0
      %2085 = vmatpush1.bf16.msra.mxu0 %v1996
      %2086 = vmatprep.subr.bf16.mxu0 0
      %2087 = vmatpush1.bf16.msra.mxu0 %v1995
      %2088 = vmatprep.subr.bf16.mxu0 0
      %2089 = vmatpush1.bf16.msra.mxu0 %v1994
      %2090 = vmatprep.subr.bf16.mxu0 0
      %2091 = vmatpush1.bf16.msra.mxu0 %v1993
      %2092 = vmatprep.subr.bf16.mxu0 0
      %2093 = vmatpush1.bf16.msra.mxu0 %v1992
      %2094 = vmatprep.subr.bf16.mxu0 0
      %2095 = vmatpush1.bf16.msra.mxu0 %v1991
      %2096 = vmatprep.subr.bf16.mxu0 0
      %2097 = vmatpush2.bf16.msra.mxu0 %v2006
      %2098 = vmatprep.subr.bf16.mxu0 0
      %2099 = vmatpush2.bf16.msra.mxu0 %v2005
      %2100 = vmatprep.subr.bf16.mxu0 0
      %2101 = vmatpush2.bf16.msra.mxu0 %v2004
      %2102 = vmatprep.subr.bf16.mxu0 0
      %2103 = vmatpush2.bf16.msra.mxu0 %v2003
      %2104 = vmatprep.subr.bf16.mxu0 0
      %2105 = vmatpush2.bf16.msra.mxu0 %v2002
      %2106 = vmatprep.subr.bf16.mxu0 0
      %2107 = vmatpush2.bf16.msra.mxu0 %v2001
      %2108 = vmatprep.subr.bf16.mxu0 0
      %2109 = vmatpush2.bf16.msra.mxu0 %v2000
      %2110 = vmatprep.subr.bf16.mxu0 0
      %2111 = vmatpush2.bf16.msra.mxu0 %v1999
      %2112 = vmatprep.mubr.bf16.mxu0 %v1842
      %2113 = vmatmul.mubr.bf16.gmra.mxu0 %v1841
      %v2114 = vpop.f32.mrf.mxu0
      %v2115 = vadd.f32 %v2074, %v2114
      %v2116 = vpop.f32.mrf.mxu0
      %v2117 = vpop.f32.mrf.mxu0
      %v2118 = vadd.f32 %v2077, %v2117
      %v2119 = vpop.f32.mrf.mxu0
      %2120 = vdwg.mxu0
      %v2121 = vadd.f32 %v1604, %v2115
      %v2122 = vadd.f32 %v1605, %v2118
      %v2123 = vld [vmem:[%s2] sm:$0x7]
      %v2124 = vlaneseq
      %v2125 = vshrl.u32 %v2124, 7
      %v2126 = vsub.s32 0, %v2125
      %v2127 = vrot.slane %v2123, %v2126
      %v2128 = vadd.f32 %v2121, %v2127
      %v2129 = vadd.f32 %v2122, %v2127
      %vm2130 = vcmp.ge.f32.partialorder %v2128, 0.0
      %vm2131 = vcmp.ge.f32.partialorder %v2129, 0.0
      %v2132 = vmul.f32 %v2128, 0.2
      %v2133 = vmul.f32 %v2129, 0.2
      %v2134 = vsel %vm2130, %v2128, %v2132
      %v2135 = vsel %vm2131, %v2129, %v2133
      %v2136 = vlaneseq
      %v2137 = vshrl.u32 %v2136, 7
      %v2138 = vsub.s32 1, %v2137
      %v2139 = vrot.slane %v2123, %v2138
      %v2140 = vmul.f32 %v2134, %v2139
      %v2141 = vmul.f32 %v2135, %v2139
      %v2142 = vlaneseq
      %v2143 = vshrl.u32 %v2142, 7
      %v2144 = vsub.s32 2, %v2143
      %v2145 = vrot.slane %v2123, %v2144
      %v2146 = vadd.f32 %v2140, %v2145
      %v2147 = vadd.f32 %v2141, %v2145
      %v2150 = vcombine.high %v2146, %v2146
      %v2151 = vcombine.high %v2147, %v2147
      %v2154 = vpack.c.bf16 %v2146, %v2146
      %v2155 = vpack.c.bf16 %v2150, %v2150
      %v2156 = vpack.c.bf16 %v2147, %v2147
      %v2157 = vpack.c.bf16 %v2151, %v2151
      %2158 = vst [vmem:[%s170] sm:$0x3] %v2154
      %2159 = vst [vmem:[%s170 + $0x2] sm:$0x3] %v2155
      %2160 = vst [vmem:[%s170 + $0x4] sm:$0x3] %v2156
      %2161 = vst [vmem:[%s170 + $0x6] sm:$0x3] %v2157
      %p2162 = scmp.lt.s32.totalorder %s14, 1
      %s2163 = scalar_select %p2162, %s14, 1
      %s2164 = smul.addr %s2163, 4
      %s2165 = smul.addr %s2164, 2
      %s2166 = scalar_lea.vmem %s3, %s2165
      // Predicated region
      $region33: #{discriminator_forward.5} parent=31 // pred_check
        %p2167 = pneg %p100
      $region34: #{discriminator_forward.5} parent=31 // pred_check_branch
        %2169 = sbr.rel (%p2167) target = $region36
      $region35: #{discriminator_forward.5} parent=31 // pred_region
        _
      $region36: #{discriminator_forward.5} parent=31 // pred_fallthru
        _
    $region32: #{discriminator_forward.5} parent=5 // pred_fallthru
      _
    %p2170 = scmp.le.s32.totalorder 2, %s9
    // Predicated region
    $region37: #{discriminator_forward.5} parent=5 // pred_check
      %p2171 = pneg %p2170
    $region38: #{discriminator_forward.5} parent=5 // pred_check_branch
      %2173 = sbr.rel (%p2171) target = $region40
    $region39: #{discriminator_forward.5} parent=5 // pred_region
      %s2174 = ssub.s32 %s9, 2
      // Predicated region
      $region41: #{discriminator_forward.5} parent=39 // pred_check
        %p2175 = pneg %p106
      $region42: #{discriminator_forward.5} parent=39 // pred_check_branch
        %2177 = sbr.rel (%p2175) target = $region44
      $region43: #{discriminator_forward.5} parent=39 // pred_region
        %p2178 = scmp.lt.s32.totalorder %s15, 1
        %s2179 = scalar_select %p2178, %s15, 1
        %s2180 = smul.addr %s2179, 4
        %s2181 = smul.addr %s2180, 2
        %s2182 = scalar_lea.vmem %s3, %s2181
      $region44: #{discriminator_forward.5} parent=39 // pred_fallthru
        _
    $region40: #{discriminator_forward.5} parent=5 // pred_fallthru
      _
  $region6: #{discriminator_forward.5} parent=0 // loop_footer
    %s13 = sadd.s32 1, %s9
  $region7: #{discriminator_forward.5} parent=0 // loop_footer_branch
    %8 = sbr.rel target = $region3
  $region8: #{discriminator_forward.5} parent=0 // loop_exit
    _

// kernel: discriminator_forward.6
$region0: #{discriminator_forward.6}
  #allocation0 [shape = 'u32[]', space=smem, size = 0x4, offset = 0x4, fixed_abs, tag = 'smem constant byte address 0x4 - core index']
  #allocation1 [shape = 'u32[144,128]{1,0:T(1,128)}', space=vmem, size = 0x12000, scoped, tag = 'internal scratch']
  %s0 = inlined_call_operand.vmem [shape: bf16[2,3,3,512], index: 0, kind: input, shape index: {}]
  %s1 = inlined_call_operand.vmem [shape: bf16[4,512,128], index: 1, kind: input, shape index: {}]
  %s2 = inlined_call_operand.vmem [shape: f32[3,128], index: 2, kind: input, shape index: {}]
  %s3 = inlined_call_operand.vmem [shape: bf16[2,2,2,128], index: 3, kind: output, shape index: {}]
  %s4 = sld [smem:[#allocation0]]
  $region45: #{discriminator_forward.6} parent=0
    _
  %s6 = ssub.s32 1, %s4
  %s7 = scalar_select 0, %s6, %s4
  loop: start=0, step=1, limit=4
  $region2: #{discriminator_forward.6} parent=0 // loop_pre_header
    _
  $region3: #{discriminator_forward.6} parent=0 // loop_header
    %s9 = sphi 0, %s13
    %p10 = scmp.ge.s32.totalorder %s9, 4
    %s19 = sphi 0, %s21
    %s22 = sphi 0, %s19
    %s23 = sphi 0, %s22
    %s39 = sphi 0, %s23
    %s43 = sphi 0, %s43
    %s45 = sphi 0, %s43
    %s46 = sphi 0, %s45
    %s60 = sphi 0, %s46
    %s64 = sphi 0, %s64
    %s66 = sphi 0, %s64
    %s67 = sphi 0, %s66
    %s81 = sphi 0, %s67
    %s87 = sphi 0, %s89
    %s90 = sphi 0, %s87
    %s91 = sphi 0, %s90
    %s107 = sphi 0, %s91
  $region4: #{discriminator_forward.6} parent=0 // loop_header_branch
    %12 = sbr.rel (%p10) target = $region8
  $region5: #{discriminator_forward.6} parent=0 // loop_body
    %s14 = ssub.s32 %s9, 1
    %s15 = ssub.s32 %s9, 2
    %s16 = sadd.s32 %s9, 1
    %s17 = ssub.s32 %s9, %s16
    %p18 = scmp.eq.s32.totalorder %s17, 0
    %s20 = sadd.s32 %s19, 1
    %s21 = scalar_select %p18, %s19, %s20
    %p24 = pneg %p18
    %p25 = scmp.eq.s32.totalorder %s9, 1
    %p26 = por %p24, %p25
    %p27 = scmp.ne.s32.totalorder %s19, %s22
    %p28 = scmp.eq.s32.totalorder %s9, 0
    %p29 = por %p27, %p28
    %p30 = scmp.ne.s32.totalorder %s19, %s22
    %p31 = scmp.eq.s32.totalorder %s14, 1
    %p32 = por %p30, %p31
    %p33 = scmp.ne.s32.totalorder %s22, %s23
    %p34 = scmp.eq.s32.totalorder %s14, 0
    %p35 = por %p33, %p34
    %p36 = scmp.ne.s32.totalorder %s22, %s23
    %p37 = scmp.eq.s32.totalorder %s15, 1
    %p38 = por %p36, %p37
    %p40 = scmp.ne.s32.totalorder %s23, %s39
    %p41 = scmp.eq.s32.totalorder %s15, 0
    %p42 = por %p40, %p41
    %s44 = sadd.s32 %s43, 1
    %p47 = scmp.eq.s32.totalorder %s9, 1
    %p48 = scmp.ne.s32.totalorder %s43, %s45
    %p49 = scmp.eq.s32.totalorder %s9, 0
    %p50 = por %p48, %p49
    %p51 = scmp.ne.s32.totalorder %s43, %s45
    %p52 = scmp.eq.s32.totalorder %s14, 1
    %p53 = por %p51, %p52
    %p54 = scmp.ne.s32.totalorder %s45, %s46
    %p55 = scmp.eq.s32.totalorder %s14, 0
    %p56 = por %p54, %p55
    %p57 = scmp.ne.s32.totalorder %s45, %s46
    %p58 = scmp.eq.s32.totalorder %s15, 1
    %p59 = por %p57, %p58
    %p61 = scmp.ne.s32.totalorder %s46, %s60
    %p62 = scmp.eq.s32.totalorder %s15, 0
    %p63 = por %p61, %p62
    %s65 = sadd.s32 %s64, 1
    %p68 = scmp.eq.s32.totalorder %s9, 1
    %p69 = scmp.ne.s32.totalorder %s64, %s66
    %p70 = scmp.eq.s32.totalorder %s9, 0
    %p71 = por %p69, %p70
    %p72 = scmp.ne.s32.totalorder %s64, %s66
    %p73 = scmp.eq.s32.totalorder %s14, 1
    %p74 = por %p72, %p73
    %p75 = scmp.ne.s32.totalorder %s66, %s67
    %p76 = scmp.eq.s32.totalorder %s14, 0
    %p77 = por %p75, %p76
    %p78 = scmp.ne.s32.totalorder %s66, %s67
    %p79 = scmp.eq.s32.totalorder %s15, 1
    %p80 = por %p78, %p79
    %p82 = scmp.ne.s32.totalorder %s67, %s81
    %p83 = scmp.eq.s32.totalorder %s15, 0
    %p84 = por %p82, %p83
    %s85 = ssub.s32 %s9, %s16
    %p86 = scmp.eq.s32.totalorder %s85, 0
    %s88 = sadd.s32 %s87, 1
    %s89 = scalar_select %p86, %s87, %s88
    %p92 = pneg %p86
    %p93 = scmp.eq.s32.totalorder %s9, 1
    %p94 = por %p92, %p93
    %p95 = scmp.ne.s32.totalorder %s87, %s90
    %p96 = scmp.eq.s32.totalorder %s9, 0
    %p97 = por %p95, %p96
    %p98 = scmp.ne.s32.totalorder %s87, %s90
    %p99 = scmp.eq.s32.totalorder %s14, 1
    %p100 = por %p98, %p99
    %p101 = scmp.ne.s32.totalorder %s90, %s91
    %p102 = scmp.eq.s32.totalorder %s14, 0
    %p103 = por %p101, %p102
    %p104 = scmp.ne.s32.totalorder %s90, %s91
    %p105 = scmp.eq.s32.totalorder %s15, 1
    %p106 = por %p104, %p105
    %p108 = scmp.ne.s32.totalorder %s91, %s107
    %p109 = scmp.eq.s32.totalorder %s15, 0
    %p110 = por %p108, %p109
    %p111 = scmp.le.s32.totalorder 1, %s9
    %p112 = scmp.lt.s32.totalorder %s9, 3
    %p113 = pnand %p111, %p112
    %p114 = pneg %p113
    // Predicated region
    $region9: #{discriminator_forward.6} parent=5 // pred_check
      _
    $region10: #{discriminator_forward.6} parent=5 // pred_check_branch
      %116 = sbr.rel (%p113) target = $region12
    $region11: #{discriminator_forward.6} parent=5 // pred_region
      %s117 = ssub.s32 %s9, 1
      // Predicated region
      $region13: #{discriminator_forward.6} parent=11 // pred_check
        %p118 = pneg %p56
      $region14: #{discriminator_forward.6} parent=11 // pred_check_branch
        %120 = sbr.rel (%p118) target = $region16
      $region15: #{discriminator_forward.6} parent=11 // pred_region
        _
      $region16: #{discriminator_forward.6} parent=11 // pred_fallthru
        _
      // Predicated region
      $region17: #{discriminator_forward.6} parent=11 // pred_check
        %p121 = pneg %p77
      $region18: #{discriminator_forward.6} parent=11 // pred_check_branch
        %123 = sbr.rel (%p121) target = $region20
      $region19: #{discriminator_forward.6} parent=11 // pred_region
        _
      $region20: #{discriminator_forward.6} parent=11 // pred_fallthru
        _
    $region12: #{discriminator_forward.6} parent=5 // pred_fallthru
      _
    %p124 = scmp.lt.s32.totalorder %s9, 2
    // Predicated region
    $region21: #{discriminator_forward.6} parent=5 // pred_check
      %p125 = pneg %p124
    $region22: #{discriminator_forward.6} parent=5 // pred_check_branch
      %127 = sbr.rel (%p125) target = $region24
    $region23: #{discriminator_forward.6} parent=5 // pred_region
      // Predicated region
      $region25: #{discriminator_forward.6} parent=23 // pred_check
        %p128 = pneg %p29
      $region26: #{discriminator_forward.6} parent=23 // pred_check_branch
        %130 = sbr.rel (%p128) target = $region28
      $region27: #{discriminator_forward.6} parent=23 // pred_region
        %p131 = scmp.lt.s32.totalorder %s9, 1
        %s132 = scalar_select %p131, %s9, 1
        %s133 = smul.addr %s132, 12
        %s134 = smul.addr %s133, 2
        %s135 = scalar_lea.vmem %s0, %s134
      $region28: #{discriminator_forward.6} parent=23 // pred_fallthru
        _
    $region24: #{discriminator_forward.6} parent=5 // pred_fallthru
      _
    %p136 = scmp.le.s32.totalorder 1, %s9
    %p137 = scmp.lt.s32.totalorder %s9, 3
    %p138 = pnand %p136, %p137
    %p139 = pneg %p138
    // Predicated region
    $region29: #{discriminator_forward.6} parent=5 // pred_check
      _
    $region30: #{discriminator_forward.6} parent=5 // pred_check_branch
      %141 = sbr.rel (%p138) target = $region32
    $region31: #{discriminator_forward.6} parent=5 // pred_region
      %s142 = ssub.s32 %s9, 1
      %p143 = scmp.lt.s32.totalorder %s14, 1
      %s144 = scalar_select %p143, %s14, 1
      %s145 = smul.addr %s144, 12
      %s146 = smul.addr %s145, 2
      %s147 = scalar_lea.vmem %s0, %s146
      %p148 = pneg %p35
      %p149 = pneg %p32
      %p150 = pneg %p56
      %p151 = pneg %p53
      %p152 = pneg %p77
      %p153 = pneg %p74
      %p154 = pneg %p103
      %p155 = pneg %p100
      %p156 = scmp.lt.s32.totalorder %s14, 1
      %s157 = scalar_select %p156, %s14, 1
      %s158 = smul.addr %s157, 2
      %s159 = scalar_lea.vmem %s3, %s158
      %p160 = scmp.lt.s32.totalorder %s14, 1
      %s161 = scalar_select %p160, %s14, 1
      %s162 = smul.addr %s161, 12
      %s163 = smul.addr %s162, 2
      %s164 = scalar_lea.vmem %s0, %s163
      %p165 = scmp.lt.s32.totalorder %s14, 1
      %s166 = scalar_select %p165, %s14, 1
      %s167 = smul.addr %s166, 2
      %s168 = scalar_lea.vmem %s3, %s167
      %v170 = vld [vmem:[%s164] sm:$0x55]
      %v171 = vld [vmem:[%s164 + $0x8] sm:$0x55]
      %v175 = vunpack.c.l.s4 1966171168
      %v176 = vunpack.c.0.s8 %v175
      %v177 = vlaneseq
      %v178 = vshrl.u32 %v177, 7
      %v179 = vsub.s32 %v176, %v178
      %v180 = vrot.slane %v170, %v179
      %v182 = vunpack.c.l.s4 1966171168
      %v183 = vunpack.c.0.s8 %v182
      %v184 = vlaneseq
      %v185 = vshrl.u32 %v184, 7
      %v186 = vsub.s32 %v183, %v185
      %v187 = vrot.slane %v171, %v186
      %v188 = vld [vmem:[%s1] sm:$0xf]
      %v189 = vld [vmem:[%s1 + $0x4] sm:$0xf]
      %v190 = vld [vmem:[%s1 + $0x8] sm:$0xf]
      %v191 = vld [vmem:[%s1 + $0xc] sm:$0xf]
      %v192 = vld [vmem:[%s1 + $0x10] sm:$0xf]
      %v193 = vld [vmem:[%s1 + $0x14] sm:$0xf]
      %v194 = vld [vmem:[%s1 + $0x18] sm:$0xf]
      %v195 = vld [vmem:[%s1 + $0x1c] sm:$0xf]
      %v196 = vld [vmem:[%s1 + $0x20] sm:$0xf]
      %v197 = vld [vmem:[%s1 + $0x24] sm:$0xf]
      %v198 = vld [vmem:[%s1 + $0x28] sm:$0xf]
      %v199 = vld [vmem:[%s1 + $0x2c] sm:$0xf]
      %v200 = vld [vmem:[%s1 + $0x30] sm:$0xf]
      %v201 = vld [vmem:[%s1 + $0x34] sm:$0xf]
      %v202 = vld [vmem:[%s1 + $0x38] sm:$0xf]
      %v203 = vld [vmem:[%s1 + $0x3c] sm:$0xf]
      %v204 = vld [vmem:[%s1 + $0x40] sm:$0xf]
      %v205 = vld [vmem:[%s1 + $0x44] sm:$0xf]
      %v206 = vld [vmem:[%s1 + $0x48] sm:$0xf]
      %v207 = vld [vmem:[%s1 + $0x4c] sm:$0xf]
      %v208 = vld [vmem:[%s1 + $0x50] sm:$0xf]
      %v209 = vld [vmem:[%s1 + $0x54] sm:$0xf]
      %v210 = vld [vmem:[%s1 + $0x58] sm:$0xf]
      %v211 = vld [vmem:[%s1 + $0x5c] sm:$0xf]
      %v212 = vld [vmem:[%s1 + $0x60] sm:$0xf]
      %v213 = vld [vmem:[%s1 + $0x64] sm:$0xf]
      %v214 = vld [vmem:[%s1 + $0x68] sm:$0xf]
      %v215 = vld [vmem:[%s1 + $0x6c] sm:$0xf]
      %v216 = vld [vmem:[%s1 + $0x70] sm:$0xf]
      %v217 = vld [vmem:[%s1 + $0x74] sm:$0xf]
      %v218 = vld [vmem:[%s1 + $0x78] sm:$0xf]
      %v219 = vld [vmem:[%s1 + $0x7c] sm:$0xf]
      %v220 = vld [vmem:[%s1 + $0x80] sm:$0xf]
      %v221 = vld [vmem:[%s1 + $0x84] sm:$0xf]
      %v222 = vld [vmem:[%s1 + $0x88] sm:$0xf]
      %v223 = vld [vmem:[%s1 + $0x8c] sm:$0xf]
      %v224 = vld [vmem:[%s1 + $0x90] sm:$0xf]
      %v225 = vld [vmem:[%s1 + $0x94] sm:$0xf]
      %v226 = vld [vmem:[%s1 + $0x98] sm:$0xf]
      %v227 = vld [vmem:[%s1 + $0x9c] sm:$0xf]
      %v228 = vld [vmem:[%s1 + $0xa0] sm:$0xf]
      %v229 = vld [vmem:[%s1 + $0xa4] sm:$0xf]
      %v230 = vld [vmem:[%s1 + $0xa8] sm:$0xf]
      %v231 = vld [vmem:[%s1 + $0xac] sm:$0xf]
      %v232 = vld [vmem:[%s1 + $0xb0] sm:$0xf]
      %v233 = vld [vmem:[%s1 + $0xb4] sm:$0xf]
      %v234 = vld [vmem:[%s1 + $0xb8] sm:$0xf]
      %v235 = vld [vmem:[%s1 + $0xbc] sm:$0xf]
      %v236 = vld [vmem:[%s1 + $0xc0] sm:$0xf]
      %v237 = vld [vmem:[%s1 + $0xc4] sm:$0xf]
      %v238 = vld [vmem:[%s1 + $0xc8] sm:$0xf]
      %v239 = vld [vmem:[%s1 + $0xcc] sm:$0xf]
      %v240 = vld [vmem:[%s1 + $0xd0] sm:$0xf]
      %v241 = vld [vmem:[%s1 + $0xd4] sm:$0xf]
      %v242 = vld [vmem:[%s1 + $0xd8] sm:$0xf]
      %v243 = vld [vmem:[%s1 + $0xdc] sm:$0xf]
      %v244 = vld [vmem:[%s1 + $0xe0] sm:$0xf]
      %v245 = vld [vmem:[%s1 + $0xe4] sm:$0xf]
      %v246 = vld [vmem:[%s1 + $0xe8] sm:$0xf]
      %v247 = vld [vmem:[%s1 + $0xec] sm:$0xf]
      %v248 = vld [vmem:[%s1 + $0xf0] sm:$0xf]
      %v249 = vld [vmem:[%s1 + $0xf4] sm:$0xf]
      %v250 = vld [vmem:[%s1 + $0xf8] sm:$0xf]
      %v251 = vld [vmem:[%s1 + $0xfc] sm:$0xf]
      %v252 = vld [vmem:[%s164] sm:$0xff]
      %v253 = vld [vmem:[%s164 + $0x8] sm:$0xff]
      %v257 = vunpack.c.l.s4 1966171168
      %v258 = vunpack.c.0.s8 %v257
      %v259 = vlaneseq
      %v260 = vshrl.u32 %v259, 7
      %v261 = vsub.s32 %v258, %v260
      %v262 = vrot.slane %v252, %v261
      %v263 = vcombine.high %v262, %v262
      %v265 = vunpack.c.l.s4 1966171168
      %v266 = vunpack.c.0.s8 %v265
      %v267 = vlaneseq
      %v268 = vshrl.u32 %v267, 7
      %v269 = vsub.s32 %v266, %v268
      %v270 = vrot.slane %v253, %v269
      %v271 = vcombine.high %v270, %v270
      %vm272 = vsmask.f32 256
      %vm273 = vsmask.f32 1284
      %vm274 = vmor %vm272, %vm273
      %vm275 = vsmask.f32 2312
      %vm276 = vmor %vm274, %vm275
      %vm277 = vsmask.f32 3340
      %vm278 = vmor %vm276, %vm277
      %vm279 = vsmask.f32 4368
      %vm280 = vmor %vm278, %vm279
      %vm281 = vsmask.f32 5396
      %vm282 = vmor %vm280, %vm281
      %vm283 = vsmask.f32 6424
      %vm284 = vmor %vm282, %vm283
      %vm285 = vsmask.f32 7452
      %vm286 = vmor %vm284, %vm285
      %v288 = vshrl.u32 %v262, 16
      %v290 = vrot.slane %v288, 7
      %v291 = vrot.slane %v290, 1
      %v293 = vshll.u32 %v263, 16
      %v295 = vsel %vm286, %v291, %v293
      %v297 = vshrl.u32 %v270, 16
      %v299 = vrot.slane %v297, 7
      %v300 = vrot.slane %v299, 1
      %v302 = vshll.u32 %v271, 16
      %v304 = vsel %vm286, %v300, %v302
      %s305 = scalar_lea.vmem %s1, 256
      %v306 = vld [vmem:[%s305] sm:$0xf]
      %v307 = vld [vmem:[%s305 + $0x4] sm:$0xf]
      %v308 = vld [vmem:[%s305 + $0x8] sm:$0xf]
      %v309 = vld [vmem:[%s305 + $0xc] sm:$0xf]
      %v310 = vld [vmem:[%s305 + $0x10] sm:$0xf]
      %v311 = vld [vmem:[%s305 + $0x14] sm:$0xf]
      %v312 = vld [vmem:[%s305 + $0x18] sm:$0xf]
      %v313 = vld [vmem:[%s305 + $0x1c] sm:$0xf]
      %v314 = vld [vmem:[%s305 + $0x20] sm:$0xf]
      %v315 = vld [vmem:[%s305 + $0x24] sm:$0xf]
      %v316 = vld [vmem:[%s305 + $0x28] sm:$0xf]
      %v317 = vld [vmem:[%s305 + $0x2c] sm:$0xf]
      %v318 = vld [vmem:[%s305 + $0x30] sm:$0xf]
      %v319 = vld [vmem:[%s305 + $0x34] sm:$0xf]
      %v320 = vld [vmem:[%s305 + $0x38] sm:$0xf]
      %v321 = vld [vmem:[%s305 + $0x3c] sm:$0xf]
      %v322 = vld [vmem:[%s305 + $0x40] sm:$0xf]
      %v323 = vld [vmem:[%s305 + $0x44] sm:$0xf]
      %v324 = vld [vmem:[%s305 + $0x48] sm:$0xf]
      %v325 = vld [vmem:[%s305 + $0x4c] sm:$0xf]
      %v326 = vld [vmem:[%s305 + $0x50] sm:$0xf]
      %v327 = vld [vmem:[%s305 + $0x54] sm:$0xf]
      %v328 = vld [vmem:[%s305 + $0x58] sm:$0xf]
      %v329 = vld [vmem:[%s305 + $0x5c] sm:$0xf]
      %v330 = vld [vmem:[%s305 + $0x60] sm:$0xf]
      %v331 = vld [vmem:[%s305 + $0x64] sm:$0xf]
      %v332 = vld [vmem:[%s305 + $0x68] sm:$0xf]
      %v333 = vld [vmem:[%s305 + $0x6c] sm:$0xf]
      %v334 = vld [vmem:[%s305 + $0x70] sm:$0xf]
      %v335 = vld [vmem:[%s305 + $0x74] sm:$0xf]
      %v336 = vld [vmem:[%s305 + $0x78] sm:$0xf]
      %v337 = vld [vmem:[%s305 + $0x7c] sm:$0xf]
      %v338 = vld [vmem:[%s305 + $0x80] sm:$0xf]
      %v339 = vld [vmem:[%s305 + $0x84] sm:$0xf]
      %v340 = vld [vmem:[%s305 + $0x88] sm:$0xf]
      %v341 = vld [vmem:[%s305 + $0x8c] sm:$0xf]
      %v342 = vld [vmem:[%s305 + $0x90] sm:$0xf]
      %v343 = vld [vmem:[%s305 + $0x94] sm:$0xf]
      %v344 = vld [vmem:[%s305 + $0x98] sm:$0xf]
      %v345 = vld [vmem:[%s305 + $0x9c] sm:$0xf]
      %v346 = vld [vmem:[%s305 + $0xa0] sm:$0xf]
      %v347 = vld [vmem:[%s305 + $0xa4] sm:$0xf]
      %v348 = vld [vmem:[%s305 + $0xa8] sm:$0xf]
      %v349 = vld [vmem:[%s305 + $0xac] sm:$0xf]
      %v350 = vld [vmem:[%s305 + $0xb0] sm:$0xf]
      %v351 = vld [vmem:[%s305 + $0xb4] sm:$0xf]
      %v352 = vld [vmem:[%s305 + $0xb8] sm:$0xf]
      %v353 = vld [vmem:[%s305 + $0xbc] sm:$0xf]
      %v354 = vld [vmem:[%s305 + $0xc0] sm:$0xf]
      %v355 = vld [vmem:[%s305 + $0xc4] sm:$0xf]
      %v356 = vld [vmem:[%s305 + $0xc8] sm:$0xf]
      %v357 = vld [vmem:[%s305 + $0xcc] sm:$0xf]
      %v358 = vld [vmem:[%s305 + $0xd0] sm:$0xf]
      %v359 = vld [vmem:[%s305 + $0xd4] sm:$0xf]
      %v360 = vld [vmem:[%s305 + $0xd8] sm:$0xf]
      %v361 = vld [vmem:[%s305 + $0xdc] sm:$0xf]
      %v362 = vld [vmem:[%s305 + $0xe0] sm:$0xf]
      %v363 = vld [vmem:[%s305 + $0xe4] sm:$0xf]
      %v364 = vld [vmem:[%s305 + $0xe8] sm:$0xf]
      %v365 = vld [vmem:[%s305 + $0xec] sm:$0xf]
      %v366 = vld [vmem:[%s305 + $0xf0] sm:$0xf]
      %v367 = vld [vmem:[%s305 + $0xf4] sm:$0xf]
      %v368 = vld [vmem:[%s305 + $0xf8] sm:$0xf]
      %v369 = vld [vmem:[%s305 + $0xfc] sm:$0xf]
      %v370 = vcombine.low %v295, %v304
      %v372 = vunpack.c.l.s4 1966171168
      %v373 = vunpack.c.0.s8 %v372
      %v374 = vlaneseq
      %v375 = vshrl.u32 %v374, 7
      %v376 = vsub.s32 %v373, %v375
      %v377 = vrot.slane %v370, %v376
      %v378 = vcombine.high %v377, %v377
      %v380 = vunpack.c.l.s4 1966171168
      %v381 = vunpack.c.0.s8 %v380
      %v382 = vlaneseq
      %v383 = vshrl.u32 %v382, 7
      %v384 = vsub.s32 %v381, %v383
      %v385 = vrot.slane %v377, %v384
      %v387 = vunpack.c.l.s4 1966171168
      %v388 = vunpack.c.0.s8 %v387
      %v389 = vlaneseq
      %v390 = vshrl.u32 %v389, 7
      %v391 = vsub.s32 %v388, %v390
      %v392 = vrot.slane %v378, %v391
      %v393 = vcombine.high %v385, %v385
      %v394 = vcombine.high %v392, %v392
      %v463 = vunpack.c.l.b16 %v306
      %v464 = vunpack.c.l.b16 %v307
      %v465 = vunpack.c.l.b16 %v308
      %v466 = vunpack.c.l.b16 %v309
      %v467 = vunpack.c.l.b16 %v310
      %v468 = vunpack.c.l.b16 %v311
      %v469 = vunpack.c.l.b16 %v312
      %v470 = vunpack.c.l.b16 %v313
      %v471 = vunpack.c.l.b16 %v314
      %v472 = vunpack.c.l.b16 %v315
      %v473 = vunpack.c.l.b16 %v316
      %v474 = vunpack.c.l.b16 %v317
      %v475 = vunpack.c.l.b16 %v318
      %v476 = vunpack.c.l.b16 %v319
      %v477 = vunpack.c.l.b16 %v320
      %v478 = vunpack.c.l.b16 %v321
      %v479 = vunpack.c.l.b16 %v322
      %v480 = vunpack.c.l.b16 %v323
      %v481 = vunpack.c.l.b16 %v324
      %v482 = vunpack.c.l.b16 %v325
      %v483 = vunpack.c.l.b16 %v326
      %v484 = vunpack.c.l.b16 %v327
      %v485 = vunpack.c.l.b16 %v328
      %v486 = vunpack.c.l.b16 %v329
      %v487 = vunpack.c.l.b16 %v330
      %v488 = vunpack.c.l.b16 %v331
      %v489 = vunpack.c.l.b16 %v332
      %v490 = vunpack.c.l.b16 %v333
      %v491 = vunpack.c.l.b16 %v334
      %v492 = vunpack.c.l.b16 %v335
      %v493 = vunpack.c.l.b16 %v336
      %v494 = vunpack.c.l.b16 %v337
      %v495 = vunpack.c.l.b16 %v338
      %v496 = vunpack.c.l.b16 %v339
      %v497 = vunpack.c.l.b16 %v340
      %v498 = vunpack.c.l.b16 %v341
      %v499 = vunpack.c.l.b16 %v342
      %v500 = vunpack.c.l.b16 %v343
      %v501 = vunpack.c.l.b16 %v344
      %v502 = vunpack.c.l.b16 %v345
      %v503 = vunpack.c.l.b16 %v346
      %v504 = vunpack.c.l.b16 %v347
      %v505 = vunpack.c.l.b16 %v348
      %v506 = vunpack.c.l.b16 %v349
      %v507 = vunpack.c.l.b16 %v350
      %v508 = vunpack.c.l.b16 %v351
      %v509 = vunpack.c.l.b16 %v352
      %v510 = vunpack.c.l.b16 %v353
      %v511 = vunpack.c.l.b16 %v354
      %v512 = vunpack.c.l.b16 %v355
      %v513 = vunpack.c.l.b16 %v356
      %v514 = vunpack.c.l.b16 %v357
      %v515 = vunpack.c.l.b16 %v358
      %v516 = vunpack.c.l.b16 %v359
      %v517 = vunpack.c.l.b16 %v360
      %v518 = vunpack.c.l.b16 %v361
      %v519 = vunpack.c.l.b16 %v362
      %v520 = vunpack.c.l.b16 %v363
      %v521 = vunpack.c.l.b16 %v364
      %v522 = vunpack.c.l.b16 %v365
      %v523 = vunpack.c.l.b16 %v366
      %v524 = vunpack.c.l.b16 %v367
      %v525 = vunpack.c.l.b16 %v368
      %v526 = vunpack.c.l.b16 %v369
      %v527 = vpack.c.b16 %v464, %v463
      %v528 = vpack.c.b16 %v466, %v465
      %v529 = vpack.c.b16 %v468, %v467
      %v530 = vpack.c.b16 %v470, %v469
      %v531 = vpack.c.b16 %v472, %v471
      %v532 = vpack.c.b16 %v474, %v473
      %v533 = vpack.c.b16 %v476, %v475
      %v534 = vpack.c.b16 %v478, %v477
      %v535 = vpack.c.b16 %v480, %v479
      %v536 = vpack.c.b16 %v482, %v481
      %v537 = vpack.c.b16 %v484, %v483
      %v538 = vpack.c.b16 %v486, %v485
      %v539 = vpack.c.b16 %v488, %v487
      %v540 = vpack.c.b16 %v490, %v489
      %v541 = vpack.c.b16 %v492, %v491
      %v542 = vpack.c.b16 %v494, %v493
      %v543 = vpack.c.b16 %v496, %v495
      %v544 = vpack.c.b16 %v498, %v497
      %v545 = vpack.c.b16 %v500, %v499
      %v546 = vpack.c.b16 %v502, %v501
      %v547 = vpack.c.b16 %v504, %v503
      %v548 = vpack.c.b16 %v506, %v505
      %v549 = vpack.c.b16 %v508, %v507
      %v550 = vpack.c.b16 %v510, %v509
      %v551 = vpack.c.b16 %v512, %v511
      %v552 = vpack.c.b16 %v514, %v513
      %v553 = vpack.c.b16 %v516, %v515
      %v554 = vpack.c.b16 %v518, %v517
      %v555 = vpack.c.b16 %v520, %v519
      %v556 = vpack.c.b16 %v522, %v521
      %v557 = vpack.c.b16 %v524, %v523
      %v558 = vpack.c.b16 %v526, %v525
      %591 = vmatprep.subr.bf16.mxu0 0
      %592 = vmatpush1.bf16.msra.mxu0 %v534
      %593 = vmatprep.subr.bf16.mxu0 0
      %594 = vmatpush1.bf16.msra.mxu0 %v533
      %595 = vmatprep.subr.bf16.mxu0 0
      %596 = vmatpush1.bf16.msra.mxu0 %v532
      %597 = vmatprep.subr.bf16.mxu0 0
      %598 = vmatpush1.bf16.msra.mxu0 %v531
      %599 = vmatprep.subr.bf16.mxu0 0
      %600 = vmatpush1.bf16.msra.mxu0 %v530
      %601 = vmatprep.subr.bf16.mxu0 0
      %602 = vmatpush1.bf16.msra.mxu0 %v529
      %603 = vmatprep.subr.bf16.mxu0 0
      %604 = vmatpush1.bf16.msra.mxu0 %v528
      %605 = vmatprep.subr.bf16.mxu0 0
      %606 = vmatpush1.bf16.msra.mxu0 %v527
      %607 = vmatprep.subr.bf16.mxu0 0
      %608 = vmatpush2.bf16.msra.mxu0 %v542
      %609 = vmatprep.subr.bf16.mxu0 0
      %610 = vmatpush2.bf16.msra.mxu0 %v541
      %611 = vmatprep.subr.bf16.mxu0 0
      %612 = vmatpush2.bf16.msra.mxu0 %v540
      %613 = vmatprep.subr.bf16.mxu0 0
      %614 = vmatpush2.bf16.msra.mxu0 %v539
      %615 = vmatprep.subr.bf16.mxu0 0
      %616 = vmatpush2.bf16.msra.mxu0 %v538
      %617 = vmatprep.subr.bf16.mxu0 0
      %618 = vmatpush2.bf16.msra.mxu0 %v537
      %619 = vmatprep.subr.bf16.mxu0 0
      %620 = vmatpush2.bf16.msra.mxu0 %v536
      %621 = vmatprep.subr.bf16.mxu0 0
      %622 = vmatpush2.bf16.msra.mxu0 %v535
      %623 = vmatprep.mubr.bf16.mxu0 %v392
      %624 = vmatmul.mubr.bf16.gmra.mxu0 %v385
      %v625 = vpop.f32.mrf.mxu0
      %v626 = vadd.f32 0.0, %v625
      %v627 = vpop.f32.mrf.mxu0
      %v628 = vpop.f32.mrf.mxu0
      %v629 = vpop.f32.mrf.mxu0
      %630 = vdwg.mxu0
      %631 = vmatprep.subr.bf16.mxu0 0
      %632 = vmatpush1.bf16.msra.mxu0 %v550
      %633 = vmatprep.subr.bf16.mxu0 0
      %634 = vmatpush1.bf16.msra.mxu0 %v549
      %635 = vmatprep.subr.bf16.mxu0 0
      %636 = vmatpush1.bf16.msra.mxu0 %v548
      %637 = vmatprep.subr.bf16.mxu0 0
      %638 = vmatpush1.bf16.msra.mxu0 %v547
      %639 = vmatprep.subr.bf16.mxu0 0
      %640 = vmatpush1.bf16.msra.mxu0 %v546
      %641 = vmatprep.subr.bf16.mxu0 0
      %642 = vmatpush1.bf16.msra.mxu0 %v545
      %643 = vmatprep.subr.bf16.mxu0 0
      %644 = vmatpush1.bf16.msra.mxu0 %v544
      %645 = vmatprep.subr.bf16.mxu0 0
      %646 = vmatpush1.bf16.msra.mxu0 %v543
      %647 = vmatprep.subr.bf16.mxu0 0
      %648 = vmatpush2.bf16.msra.mxu0 %v558
      %649 = vmatprep.subr.bf16.mxu0 0
      %650 = vmatpush2.bf16.msra.mxu0 %v557
      %651 = vmatprep.subr.bf16.mxu0 0
      %652 = vmatpush2.bf16.msra.mxu0 %v556
      %653 = vmatprep.subr.bf16.mxu0 0
      %654 = vmatpush2.bf16.msra.mxu0 %v555
      %655 = vmatprep.subr.bf16.mxu0 0
      %656 = vmatpush2.bf16.msra.mxu0 %v554
      %657 = vmatprep.subr.bf16.mxu0 0
      %658 = vmatpush2.bf16.msra.mxu0 %v553
      %659 = vmatprep.subr.bf16.mxu0 0
      %660 = vmatpush2.bf16.msra.mxu0 %v552
      %661 = vmatprep.subr.bf16.mxu0 0
      %662 = vmatpush2.bf16.msra.mxu0 %v551
      %663 = vmatprep.mubr.bf16.mxu0 %v394
      %664 = vmatmul.mubr.bf16.gmra.mxu0 %v393
      %v665 = vpop.f32.mrf.mxu0
      %v666 = vadd.f32 %v626, %v665
      %v667 = vpop.f32.mrf.mxu0
      %v668 = vpop.f32.mrf.mxu0
      %v669 = vpop.f32.mrf.mxu0
      %670 = vdwg.mxu0
      %v671 = vcombine.low %v180, %v187
      %v673 = vunpack.c.l.s4 1966171168
      %v674 = vunpack.c.0.s8 %v673
      %v675 = vlaneseq
      %v676 = vshrl.u32 %v675, 7
      %v677 = vsub.s32 %v674, %v676
      %v678 = vrot.slane %v671, %v677
      %v679 = vcombine.high %v678, %v678
      %v681 = vunpack.c.l.s4 1966171168
      %v682 = vunpack.c.0.s8 %v681
      %v683 = vlaneseq
      %v684 = vshrl.u32 %v683, 7
      %v685 = vsub.s32 %v682, %v684
      %v686 = vrot.slane %v678, %v685
      %v688 = vunpack.c.l.s4 1966171168
      %v689 = vunpack.c.0.s8 %v688
      %v690 = vlaneseq
      %v691 = vshrl.u32 %v690, 7
      %v692 = vsub.s32 %v689, %v691
      %v693 = vrot.slane %v679, %v692
      %v694 = vcombine.high %v686, %v686
      %v695 = vcombine.high %v693, %v693
      %v764 = vunpack.c.l.b16 %v188
      %v765 = vunpack.c.l.b16 %v189
      %v766 = vunpack.c.l.b16 %v190
      %v767 = vunpack.c.l.b16 %v191
      %v768 = vunpack.c.l.b16 %v192
      %v769 = vunpack.c.l.b16 %v193
      %v770 = vunpack.c.l.b16 %v194
      %v771 = vunpack.c.l.b16 %v195
      %v772 = vunpack.c.l.b16 %v196
      %v773 = vunpack.c.l.b16 %v197
      %v774 = vunpack.c.l.b16 %v198
      %v775 = vunpack.c.l.b16 %v199
      %v776 = vunpack.c.l.b16 %v200
      %v777 = vunpack.c.l.b16 %v201
      %v778 = vunpack.c.l.b16 %v202
      %v779 = vunpack.c.l.b16 %v203
      %v780 = vunpack.c.l.b16 %v204
      %v781 = vunpack.c.l.b16 %v205
      %v782 = vunpack.c.l.b16 %v206
      %v783 = vunpack.c.l.b16 %v207
      %v784 = vunpack.c.l.b16 %v208
      %v785 = vunpack.c.l.b16 %v209
      %v786 = vunpack.c.l.b16 %v210
      %v787 = vunpack.c.l.b16 %v211
      %v788 = vunpack.c.l.b16 %v212
      %v789 = vunpack.c.l.b16 %v213
      %v790 = vunpack.c.l.b16 %v214
      %v791 = vunpack.c.l.b16 %v215
      %v792 = vunpack.c.l.b16 %v216
      %v793 = vunpack.c.l.b16 %v217
      %v794 = vunpack.c.l.b16 %v218
      %v795 = vunpack.c.l.b16 %v219
      %v796 = vunpack.c.l.b16 %v220
      %v797 = vunpack.c.l.b16 %v221
      %v798 = vunpack.c.l.b16 %v222
      %v799 = vunpack.c.l.b16 %v223
      %v800 = vunpack.c.l.b16 %v224
      %v801 = vunpack.c.l.b16 %v225
      %v802 = vunpack.c.l.b16 %v226
      %v803 = vunpack.c.l.b16 %v227
      %v804 = vunpack.c.l.b16 %v228
      %v805 = vunpack.c.l.b16 %v229
      %v806 = vunpack.c.l.b16 %v230
      %v807 = vunpack.c.l.b16 %v231
      %v808 = vunpack.c.l.b16 %v232
      %v809 = vunpack.c.l.b16 %v233
      %v810 = vunpack.c.l.b16 %v234
      %v811 = vunpack.c.l.b16 %v235
      %v812 = vunpack.c.l.b16 %v236
      %v813 = vunpack.c.l.b16 %v237
      %v814 = vunpack.c.l.b16 %v238
      %v815 = vunpack.c.l.b16 %v239
      %v816 = vunpack.c.l.b16 %v240
      %v817 = vunpack.c.l.b16 %v241
      %v818 = vunpack.c.l.b16 %v242
      %v819 = vunpack.c.l.b16 %v243
      %v820 = vunpack.c.l.b16 %v244
      %v821 = vunpack.c.l.b16 %v245
      %v822 = vunpack.c.l.b16 %v246
      %v823 = vunpack.c.l.b16 %v247
      %v824 = vunpack.c.l.b16 %v248
      %v825 = vunpack.c.l.b16 %v249
      %v826 = vunpack.c.l.b16 %v250
      %v827 = vunpack.c.l.b16 %v251
      %v828 = vpack.c.b16 %v765, %v764
      %v829 = vpack.c.b16 %v767, %v766
      %v830 = vpack.c.b16 %v769, %v768
      %v831 = vpack.c.b16 %v771, %v770
      %v832 = vpack.c.b16 %v773, %v772
      %v833 = vpack.c.b16 %v775, %v774
      %v834 = vpack.c.b16 %v777, %v776
      %v835 = vpack.c.b16 %v779, %v778
      %v836 = vpack.c.b16 %v781, %v780
      %v837 = vpack.c.b16 %v783, %v782
      %v838 = vpack.c.b16 %v785, %v784
      %v839 = vpack.c.b16 %v787, %v786
      %v840 = vpack.c.b16 %v789, %v788
      %v841 = vpack.c.b16 %v791, %v790
      %v842 = vpack.c.b16 %v793, %v792
      %v843 = vpack.c.b16 %v795, %v794
      %v844 = vpack.c.b16 %v797, %v796
      %v845 = vpack.c.b16 %v799, %v798
      %v846 = vpack.c.b16 %v801, %v800
      %v847 = vpack.c.b16 %v803, %v802
      %v848 = vpack.c.b16 %v805, %v804
      %v849 = vpack.c.b16 %v807, %v806
      %v850 = vpack.c.b16 %v809, %v808
      %v851 = vpack.c.b16 %v811, %v810
      %v852 = vpack.c.b16 %v813, %v812
      %v853 = vpack.c.b16 %v815, %v814
      %v854 = vpack.c.b16 %v817, %v816
      %v855 = vpack.c.b16 %v819, %v818
      %v856 = vpack.c.b16 %v821, %v820
      %v857 = vpack.c.b16 %v823, %v822
      %v858 = vpack.c.b16 %v825, %v824
      %v859 = vpack.c.b16 %v827, %v826
      %892 = vmatprep.subr.bf16.mxu0 0
      %893 = vmatpush1.bf16.msra.mxu0 %v835
      %894 = vmatprep.subr.bf16.mxu0 0
      %895 = vmatpush1.bf16.msra.mxu0 %v834
      %896 = vmatprep.subr.bf16.mxu0 0
      %897 = vmatpush1.bf16.msra.mxu0 %v833
      %898 = vmatprep.subr.bf16.mxu0 0
      %899 = vmatpush1.bf16.msra.mxu0 %v832
      %900 = vmatprep.subr.bf16.mxu0 0
      %901 = vmatpush1.bf16.msra.mxu0 %v831
      %902 = vmatprep.subr.bf16.mxu0 0
      %903 = vmatpush1.bf16.msra.mxu0 %v830
      %904 = vmatprep.subr.bf16.mxu0 0
      %905 = vmatpush1.bf16.msra.mxu0 %v829
      %906 = vmatprep.subr.bf16.mxu0 0
      %907 = vmatpush1.bf16.msra.mxu0 %v828
      %908 = vmatprep.subr.bf16.mxu0 0
      %909 = vmatpush2.bf16.msra.mxu0 %v843
      %910 = vmatprep.subr.bf16.mxu0 0
      %911 = vmatpush2.bf16.msra.mxu0 %v842
      %912 = vmatprep.subr.bf16.mxu0 0
      %913 = vmatpush2.bf16.msra.mxu0 %v841
      %914 = vmatprep.subr.bf16.mxu0 0
      %915 = vmatpush2.bf16.msra.mxu0 %v840
      %916 = vmatprep.subr.bf16.mxu0 0
      %917 = vmatpush2.bf16.msra.mxu0 %v839
      %918 = vmatprep.subr.bf16.mxu0 0
      %919 = vmatpush2.bf16.msra.mxu0 %v838
      %920 = vmatprep.subr.bf16.mxu0 0
      %921 = vmatpush2.bf16.msra.mxu0 %v837
      %922 = vmatprep.subr.bf16.mxu0 0
      %923 = vmatpush2.bf16.msra.mxu0 %v836
      %924 = vmatprep.mubr.bf16.mxu0 %v693
      %925 = vmatmul.mubr.bf16.gmra.mxu0 %v686
      %v926 = vpop.f32.mrf.mxu0
      %v927 = vadd.f32 %v666, %v926
      %v928 = vpop.f32.mrf.mxu0
      %v929 = vpop.f32.mrf.mxu0
      %v930 = vpop.f32.mrf.mxu0
      %931 = vdwg.mxu0
      %932 = vmatprep.subr.bf16.mxu0 0
      %933 = vmatpush1.bf16.msra.mxu0 %v851
      %934 = vmatprep.subr.bf16.mxu0 0
      %935 = vmatpush1.bf16.msra.mxu0 %v850
      %936 = vmatprep.subr.bf16.mxu0 0
      %937 = vmatpush1.bf16.msra.mxu0 %v849
      %938 = vmatprep.subr.bf16.mxu0 0
      %939 = vmatpush1.bf16.msra.mxu0 %v848
      %940 = vmatprep.subr.bf16.mxu0 0
      %941 = vmatpush1.bf16.msra.mxu0 %v847
      %942 = vmatprep.subr.bf16.mxu0 0
      %943 = vmatpush1.bf16.msra.mxu0 %v846
      %944 = vmatprep.subr.bf16.mxu0 0
      %945 = vmatpush1.bf16.msra.mxu0 %v845
      %946 = vmatprep.subr.bf16.mxu0 0
      %947 = vmatpush1.bf16.msra.mxu0 %v844
      %948 = vmatprep.subr.bf16.mxu0 0
      %949 = vmatpush2.bf16.msra.mxu0 %v859
      %950 = vmatprep.subr.bf16.mxu0 0
      %951 = vmatpush2.bf16.msra.mxu0 %v858
      %952 = vmatprep.subr.bf16.mxu0 0
      %953 = vmatpush2.bf16.msra.mxu0 %v857
      %954 = vmatprep.subr.bf16.mxu0 0
      %955 = vmatpush2.bf16.msra.mxu0 %v856
      %956 = vmatprep.subr.bf16.mxu0 0
      %957 = vmatpush2.bf16.msra.mxu0 %v855
      %958 = vmatprep.subr.bf16.mxu0 0
      %959 = vmatpush2.bf16.msra.mxu0 %v854
      %960 = vmatprep.subr.bf16.mxu0 0
      %961 = vmatpush2.bf16.msra.mxu0 %v853
      %962 = vmatprep.subr.bf16.mxu0 0
      %963 = vmatpush2.bf16.msra.mxu0 %v852
      %964 = vmatprep.mubr.bf16.mxu0 %v695
      %965 = vmatmul.mubr.bf16.gmra.mxu0 %v694
      %v966 = vpop.f32.mrf.mxu0
      %v967 = vadd.f32 %v927, %v966
      %v968 = vpop.f32.mrf.mxu0
      %v969 = vpop.f32.mrf.mxu0
      %v970 = vpop.f32.mrf.mxu0
      %971 = vdwg.mxu0
      %s972 = scalar_lea.vmem %s164, 8
      %v973 = vld [vmem:[%s972] sm:$0x55]
      %v974 = vld [vmem:[%s972 + $0x8] sm:$0x55]
      %v978 = vunpack.c.l.s4 1966171168
      %v979 = vunpack.c.0.s8 %v978
      %v980 = vlaneseq
      %v981 = vshrl.u32 %v980, 7
      %v982 = vsub.s32 %v979, %v981
      %v983 = vrot.slane %v973, %v982
      %v985 = vunpack.c.l.s4 1966171168
      %v986 = vunpack.c.0.s8 %v985
      %v987 = vlaneseq
      %v988 = vshrl.u32 %v987, 7
      %v989 = vsub.s32 %v986, %v988
      %v990 = vrot.slane %v974, %v989
      %s991 = scalar_lea.vmem %s1, 512
      %v992 = vld [vmem:[%s991] sm:$0xf]
      %v993 = vld [vmem:[%s991 + $0x4] sm:$0xf]
      %v994 = vld [vmem:[%s991 + $0x8] sm:$0xf]
      %v995 = vld [vmem:[%s991 + $0xc] sm:$0xf]
      %v996 = vld [vmem:[%s991 + $0x10] sm:$0xf]
      %v997 = vld [vmem:[%s991 + $0x14] sm:$0xf]
      %v998 = vld [vmem:[%s991 + $0x18] sm:$0xf]
      %v999 = vld [vmem:[%s991 + $0x1c] sm:$0xf]
      %v1000 = vld [vmem:[%s991 + $0x20] sm:$0xf]
      %v1001 = vld [vmem:[%s991 + $0x24] sm:$0xf]
      %v1002 = vld [vmem:[%s991 + $0x28] sm:$0xf]
      %v1003 = vld [vmem:[%s991 + $0x2c] sm:$0xf]
      %v1004 = vld [vmem:[%s991 + $0x30] sm:$0xf]
      %v1005 = vld [vmem:[%s991 + $0x34] sm:$0xf]
      %v1006 = vld [vmem:[%s991 + $0x38] sm:$0xf]
      %v1007 = vld [vmem:[%s991 + $0x3c] sm:$0xf]
      %v1008 = vld [vmem:[%s991 + $0x40] sm:$0xf]
      %v1009 = vld [vmem:[%s991 + $0x44] sm:$0xf]
      %v1010 = vld [vmem:[%s991 + $0x48] sm:$0xf]
      %v1011 = vld [vmem:[%s991 + $0x4c] sm:$0xf]
      %v1012 = vld [vmem:[%s991 + $0x50] sm:$0xf]
      %v1013 = vld [vmem:[%s991 + $0x54] sm:$0xf]
      %v1014 = vld [vmem:[%s991 + $0x58] sm:$0xf]
      %v1015 = vld [vmem:[%s991 + $0x5c] sm:$0xf]
      %v1016 = vld [vmem:[%s991 + $0x60] sm:$0xf]
      %v1017 = vld [vmem:[%s991 + $0x64] sm:$0xf]
      %v1018 = vld [vmem:[%s991 + $0x68] sm:$0xf]
      %v1019 = vld [vmem:[%s991 + $0x6c] sm:$0xf]
      %v1020 = vld [vmem:[%s991 + $0x70] sm:$0xf]
      %v1021 = vld [vmem:[%s991 + $0x74] sm:$0xf]
      %v1022 = vld [vmem:[%s991 + $0x78] sm:$0xf]
      %v1023 = vld [vmem:[%s991 + $0x7c] sm:$0xf]
      %v1024 = vld [vmem:[%s991 + $0x80] sm:$0xf]
      %v1025 = vld [vmem:[%s991 + $0x84] sm:$0xf]
      %v1026 = vld [vmem:[%s991 + $0x88] sm:$0xf]
      %v1027 = vld [vmem:[%s991 + $0x8c] sm:$0xf]
      %v1028 = vld [vmem:[%s991 + $0x90] sm:$0xf]
      %v1029 = vld [vmem:[%s991 + $0x94] sm:$0xf]
      %v1030 = vld [vmem:[%s991 + $0x98] sm:$0xf]
      %v1031 = vld [vmem:[%s991 + $0x9c] sm:$0xf]
      %v1032 = vld [vmem:[%s991 + $0xa0] sm:$0xf]
      %v1033 = vld [vmem:[%s991 + $0xa4] sm:$0xf]
      %v1034 = vld [vmem:[%s991 + $0xa8] sm:$0xf]
      %v1035 = vld [vmem:[%s991 + $0xac] sm:$0xf]
      %v1036 = vld [vmem:[%s991 + $0xb0] sm:$0xf]
      %v1037 = vld [vmem:[%s991 + $0xb4] sm:$0xf]
      %v1038 = vld [vmem:[%s991 + $0xb8] sm:$0xf]
      %v1039 = vld [vmem:[%s991 + $0xbc] sm:$0xf]
      %v1040 = vld [vmem:[%s991 + $0xc0] sm:$0xf]
      %v1041 = vld [vmem:[%s991 + $0xc4] sm:$0xf]
      %v1042 = vld [vmem:[%s991 + $0xc8] sm:$0xf]
      %v1043 = vld [vmem:[%s991 + $0xcc] sm:$0xf]
      %v1044 = vld [vmem:[%s991 + $0xd0] sm:$0xf]
      %v1045 = vld [vmem:[%s991 + $0xd4] sm:$0xf]
      %v1046 = vld [vmem:[%s991 + $0xd8] sm:$0xf]
      %v1047 = vld [vmem:[%s991 + $0xdc] sm:$0xf]
      %v1048 = vld [vmem:[%s991 + $0xe0] sm:$0xf]
      %v1049 = vld [vmem:[%s991 + $0xe4] sm:$0xf]
      %v1050 = vld [vmem:[%s991 + $0xe8] sm:$0xf]
      %v1051 = vld [vmem:[%s991 + $0xec] sm:$0xf]
      %v1052 = vld [vmem:[%s991 + $0xf0] sm:$0xf]
      %v1053 = vld [vmem:[%s991 + $0xf4] sm:$0xf]
      %v1054 = vld [vmem:[%s991 + $0xf8] sm:$0xf]
      %v1055 = vld [vmem:[%s991 + $0xfc] sm:$0xf]
      %v1056 = vcombine.low %v983, %v990
      %v1058 = vunpack.c.l.s4 1966171168
      %v1059 = vunpack.c.0.s8 %v1058
      %v1060 = vlaneseq
      %v1061 = vshrl.u32 %v1060, 7
      %v1062 = vsub.s32 %v1059, %v1061
      %v1063 = vrot.slane %v1056, %v1062
      %v1064 = vcombine.high %v1063, %v1063
      %v1066 = vunpack.c.l.s4 1966171168
      %v1067 = vunpack.c.0.s8 %v1066
      %v1068 = vlaneseq
      %v1069 = vshrl.u32 %v1068, 7
      %v1070 = vsub.s32 %v1067, %v1069
      %v1071 = vrot.slane %v1063, %v1070
      %v1073 = vunpack.c.l.s4 1966171168
      %v1074 = vunpack.c.0.s8 %v1073
      %v1075 = vlaneseq
      %v1076 = vshrl.u32 %v1075, 7
      %v1077 = vsub.s32 %v1074, %v1076
      %v1078 = vrot.slane %v1064, %v1077
      %v1079 = vcombine.high %v1071, %v1071
      %v1080 = vcombine.high %v1078, %v1078
      %v1149 = vunpack.c.l.b16 %v992
      %v1150 = vunpack.c.l.b16 %v993
      %v1151 = vunpack.c.l.b16 %v994
      %v1152 = vunpack.c.l.b16 %v995
      %v1153 = vunpack.c.l.b16 %v996
      %v1154 = vunpack.c.l.b16 %v997
      %v1155 = vunpack.c.l.b16 %v998
      %v1156 = vunpack.c.l.b16 %v999
      %v1157 = vunpack.c.l.b16 %v1000
      %v1158 = vunpack.c.l.b16 %v1001
      %v1159 = vunpack.c.l.b16 %v1002
      %v1160 = vunpack.c.l.b16 %v1003
      %v1161 = vunpack.c.l.b16 %v1004
      %v1162 = vunpack.c.l.b16 %v1005
      %v1163 = vunpack.c.l.b16 %v1006
      %v1164 = vunpack.c.l.b16 %v1007
      %v1165 = vunpack.c.l.b16 %v1008
      %v1166 = vunpack.c.l.b16 %v1009
      %v1167 = vunpack.c.l.b16 %v1010
      %v1168 = vunpack.c.l.b16 %v1011
      %v1169 = vunpack.c.l.b16 %v1012
      %v1170 = vunpack.c.l.b16 %v1013
      %v1171 = vunpack.c.l.b16 %v1014
      %v1172 = vunpack.c.l.b16 %v1015
      %v1173 = vunpack.c.l.b16 %v1016
      %v1174 = vunpack.c.l.b16 %v1017
      %v1175 = vunpack.c.l.b16 %v1018
      %v1176 = vunpack.c.l.b16 %v1019
      %v1177 = vunpack.c.l.b16 %v1020
      %v1178 = vunpack.c.l.b16 %v1021
      %v1179 = vunpack.c.l.b16 %v1022
      %v1180 = vunpack.c.l.b16 %v1023
      %v1181 = vunpack.c.l.b16 %v1024
      %v1182 = vunpack.c.l.b16 %v1025
      %v1183 = vunpack.c.l.b16 %v1026
      %v1184 = vunpack.c.l.b16 %v1027
      %v1185 = vunpack.c.l.b16 %v1028
      %v1186 = vunpack.c.l.b16 %v1029
      %v1187 = vunpack.c.l.b16 %v1030
      %v1188 = vunpack.c.l.b16 %v1031
      %v1189 = vunpack.c.l.b16 %v1032
      %v1190 = vunpack.c.l.b16 %v1033
      %v1191 = vunpack.c.l.b16 %v1034
      %v1192 = vunpack.c.l.b16 %v1035
      %v1193 = vunpack.c.l.b16 %v1036
      %v1194 = vunpack.c.l.b16 %v1037
      %v1195 = vunpack.c.l.b16 %v1038
      %v1196 = vunpack.c.l.b16 %v1039
      %v1197 = vunpack.c.l.b16 %v1040
      %v1198 = vunpack.c.l.b16 %v1041
      %v1199 = vunpack.c.l.b16 %v1042
      %v1200 = vunpack.c.l.b16 %v1043
      %v1201 = vunpack.c.l.b16 %v1044
      %v1202 = vunpack.c.l.b16 %v1045
      %v1203 = vunpack.c.l.b16 %v1046
      %v1204 = vunpack.c.l.b16 %v1047
      %v1205 = vunpack.c.l.b16 %v1048
      %v1206 = vunpack.c.l.b16 %v1049
      %v1207 = vunpack.c.l.b16 %v1050
      %v1208 = vunpack.c.l.b16 %v1051
      %v1209 = vunpack.c.l.b16 %v1052
      %v1210 = vunpack.c.l.b16 %v1053
      %v1211 = vunpack.c.l.b16 %v1054
      %v1212 = vunpack.c.l.b16 %v1055
      %v1213 = vpack.c.b16 %v1150, %v1149
      %v1214 = vpack.c.b16 %v1152, %v1151
      %v1215 = vpack.c.b16 %v1154, %v1153
      %v1216 = vpack.c.b16 %v1156, %v1155
      %v1217 = vpack.c.b16 %v1158, %v1157
      %v1218 = vpack.c.b16 %v1160, %v1159
      %v1219 = vpack.c.b16 %v1162, %v1161
      %v1220 = vpack.c.b16 %v1164, %v1163
      %v1221 = vpack.c.b16 %v1166, %v1165
      %v1222 = vpack.c.b16 %v1168, %v1167
      %v1223 = vpack.c.b16 %v1170, %v1169
      %v1224 = vpack.c.b16 %v1172, %v1171
      %v1225 = vpack.c.b16 %v1174, %v1173
      %v1226 = vpack.c.b16 %v1176, %v1175
      %v1227 = vpack.c.b16 %v1178, %v1177
      %v1228 = vpack.c.b16 %v1180, %v1179
      %v1229 = vpack.c.b16 %v1182, %v1181
      %v1230 = vpack.c.b16 %v1184, %v1183
      %v1231 = vpack.c.b16 %v1186, %v1185
      %v1232 = vpack.c.b16 %v1188, %v1187
      %v1233 = vpack.c.b16 %v1190, %v1189
      %v1234 = vpack.c.b16 %v1192, %v1191
      %v1235 = vpack.c.b16 %v1194, %v1193
      %v1236 = vpack.c.b16 %v1196, %v1195
      %v1237 = vpack.c.b16 %v1198, %v1197
      %v1238 = vpack.c.b16 %v1200, %v1199
      %v1239 = vpack.c.b16 %v1202, %v1201
      %v1240 = vpack.c.b16 %v1204, %v1203
      %v1241 = vpack.c.b16 %v1206, %v1205
      %v1242 = vpack.c.b16 %v1208, %v1207
      %v1243 = vpack.c.b16 %v1210, %v1209
      %v1244 = vpack.c.b16 %v1212, %v1211
      %1277 = vmatprep.subr.bf16.mxu0 0
      %1278 = vmatpush1.bf16.msra.mxu0 %v1220
      %1279 = vmatprep.subr.bf16.mxu0 0
      %1280 = vmatpush1.bf16.msra.mxu0 %v1219
      %1281 = vmatprep.subr.bf16.mxu0 0
      %1282 = vmatpush1.bf16.msra.mxu0 %v1218
      %1283 = vmatprep.subr.bf16.mxu0 0
      %1284 = vmatpush1.bf16.msra.mxu0 %v1217
      %1285 = vmatprep.subr.bf16.mxu0 0
      %1286 = vmatpush1.bf16.msra.mxu0 %v1216
      %1287 = vmatprep.subr.bf16.mxu0 0
      %1288 = vmatpush1.bf16.msra.mxu0 %v1215
      %1289 = vmatprep.subr.bf16.mxu0 0
      %1290 = vmatpush1.bf16.msra.mxu0 %v1214
      %1291 = vmatprep.subr.bf16.mxu0 0
      %1292 = vmatpush1.bf16.msra.mxu0 %v1213
      %1293 = vmatprep.subr.bf16.mxu0 0
      %1294 = vmatpush2.bf16.msra.mxu0 %v1228
      %1295 = vmatprep.subr.bf16.mxu0 0
      %1296 = vmatpush2.bf16.msra.mxu0 %v1227
      %1297 = vmatprep.subr.bf16.mxu0 0
      %1298 = vmatpush2.bf16.msra.mxu0 %v1226
      %1299 = vmatprep.subr.bf16.mxu0 0
      %1300 = vmatpush2.bf16.msra.mxu0 %v1225
      %1301 = vmatprep.subr.bf16.mxu0 0
      %1302 = vmatpush2.bf16.msra.mxu0 %v1224
      %1303 = vmatprep.subr.bf16.mxu0 0
      %1304 = vmatpush2.bf16.msra.mxu0 %v1223
      %1305 = vmatprep.subr.bf16.mxu0 0
      %1306 = vmatpush2.bf16.msra.mxu0 %v1222
      %1307 = vmatprep.subr.bf16.mxu0 0
      %1308 = vmatpush2.bf16.msra.mxu0 %v1221
      %1309 = vmatprep.mubr.bf16.mxu0 %v1078
      %1310 = vmatmul.mubr.bf16.gmra.mxu0 %v1071
      %v1311 = vpop.f32.mrf.mxu0
      %v1312 = vadd.f32 0.0, %v1311
      %v1313 = vpop.f32.mrf.mxu0
      %v1314 = vpop.f32.mrf.mxu0
      %v1315 = vpop.f32.mrf.mxu0
      %1316 = vdwg.mxu0
      %1317 = vmatprep.subr.bf16.mxu0 0
      %1318 = vmatpush1.bf16.msra.mxu0 %v1236
      %1319 = vmatprep.subr.bf16.mxu0 0
      %1320 = vmatpush1.bf16.msra.mxu0 %v1235
      %1321 = vmatprep.subr.bf16.mxu0 0
      %1322 = vmatpush1.bf16.msra.mxu0 %v1234
      %1323 = vmatprep.subr.bf16.mxu0 0
      %1324 = vmatpush1.bf16.msra.mxu0 %v1233
      %1325 = vmatprep.subr.bf16.mxu0 0
      %1326 = vmatpush1.bf16.msra.mxu0 %v1232
      %1327 = vmatprep.subr.bf16.mxu0 0
      %1328 = vmatpush1.bf16.msra.mxu0 %v1231
      %1329 = vmatprep.subr.bf16.mxu0 0
      %1330 = vmatpush1.bf16.msra.mxu0 %v1230
      %1331 = vmatprep.subr.bf16.mxu0 0
      %1332 = vmatpush1.bf16.msra.mxu0 %v1229
      %1333 = vmatprep.subr.bf16.mxu0 0
      %1334 = vmatpush2.bf16.msra.mxu0 %v1244
      %1335 = vmatprep.subr.bf16.mxu0 0
      %1336 = vmatpush2.bf16.msra.mxu0 %v1243
      %1337 = vmatprep.subr.bf16.mxu0 0
      %1338 = vmatpush2.bf16.msra.mxu0 %v1242
      %1339 = vmatprep.subr.bf16.mxu0 0
      %1340 = vmatpush2.bf16.msra.mxu0 %v1241
      %1341 = vmatprep.subr.bf16.mxu0 0
      %1342 = vmatpush2.bf16.msra.mxu0 %v1240
      %1343 = vmatprep.subr.bf16.mxu0 0
      %1344 = vmatpush2.bf16.msra.mxu0 %v1239
      %1345 = vmatprep.subr.bf16.mxu0 0
      %1346 = vmatpush2.bf16.msra.mxu0 %v1238
      %1347 = vmatprep.subr.bf16.mxu0 0
      %1348 = vmatpush2.bf16.msra.mxu0 %v1237
      %1349 = vmatprep.mubr.bf16.mxu0 %v1080
      %1350 = vmatmul.mubr.bf16.gmra.mxu0 %v1079
      %v1351 = vpop.f32.mrf.mxu0
      %v1352 = vadd.f32 %v1312, %v1351
      %v1353 = vpop.f32.mrf.mxu0
      %v1354 = vpop.f32.mrf.mxu0
      %v1355 = vpop.f32.mrf.mxu0
      %1356 = vdwg.mxu0
      %v1357 = vadd.f32 %v967, %v1352
      %v1358 = vld [vmem:[%s972] sm:$0xff]
      %v1359 = vld [vmem:[%s972 + $0x8] sm:$0xff]
      %v1363 = vunpack.c.l.s4 1966171168
      %v1364 = vunpack.c.0.s8 %v1363
      %v1365 = vlaneseq
      %v1366 = vshrl.u32 %v1365, 7
      %v1367 = vsub.s32 %v1364, %v1366
      %v1368 = vrot.slane %v1358, %v1367
      %v1369 = vcombine.high %v1368, %v1368
      %v1371 = vunpack.c.l.s4 1966171168
      %v1372 = vunpack.c.0.s8 %v1371
      %v1373 = vlaneseq
      %v1374 = vshrl.u32 %v1373, 7
      %v1375 = vsub.s32 %v1372, %v1374
      %v1376 = vrot.slane %v1359, %v1375
      %v1377 = vcombine.high %v1376, %v1376
      %v1379 = vshrl.u32 %v1368, 16
      %v1381 = vrot.slane %v1379, 7
      %v1382 = vrot.slane %v1381, 1
      %v1384 = vshll.u32 %v1369, 16
      %v1386 = vsel %vm286, %v1382, %v1384
      %v1388 = vshrl.u32 %v1376, 16
      %v1390 = vrot.slane %v1388, 7
      %v1391 = vrot.slane %v1390, 1
      %v1393 = vshll.u32 %v1377, 16
      %v1395 = vsel %vm286, %v1391, %v1393
      %s1396 = scalar_lea.vmem %s1, 768
      %v1397 = vld [vmem:[%s1396] sm:$0xf]
      %v1398 = vld [vmem:[%s1396 + $0x4] sm:$0xf]
      %v1399 = vld [vmem:[%s1396 + $0x8] sm:$0xf]
      %v1400 = vld [vmem:[%s1396 + $0xc] sm:$0xf]
      %v1401 = vld [vmem:[%s1396 + $0x10] sm:$0xf]
      %v1402 = vld [vmem:[%s1396 + $0x14] sm:$0xf]
      %v1403 = vld [vmem:[%s1396 + $0x18] sm:$0xf]
      %v1404 = vld [vmem:[%s1396 + $0x1c] sm:$0xf]
      %v1405 = vld [vmem:[%s1396 + $0x20] sm:$0xf]
      %v1406 = vld [vmem:[%s1396 + $0x24] sm:$0xf]
      %v1407 = vld [vmem:[%s1396 + $0x28] sm:$0xf]
      %v1408 = vld [vmem:[%s1396 + $0x2c] sm:$0xf]
      %v1409 = vld [vmem:[%s1396 + $0x30] sm:$0xf]
      %v1410 = vld [vmem:[%s1396 + $0x34] sm:$0xf]
      %v1411 = vld [vmem:[%s1396 + $0x38] sm:$0xf]
      %v1412 = vld [vmem:[%s1396 + $0x3c] sm:$0xf]
      %v1413 = vld [vmem:[%s1396 + $0x40] sm:$0xf]
      %v1414 = vld [vmem:[%s1396 + $0x44] sm:$0xf]
      %v1415 = vld [vmem:[%s1396 + $0x48] sm:$0xf]
      %v1416 = vld [vmem:[%s1396 + $0x4c] sm:$0xf]
      %v1417 = vld [vmem:[%s1396 + $0x50] sm:$0xf]
      %v1418 = vld [vmem:[%s1396 + $0x54] sm:$0xf]
      %v1419 = vld [vmem:[%s1396 + $0x58] sm:$0xf]
      %v1420 = vld [vmem:[%s1396 + $0x5c] sm:$0xf]
      %v1421 = vld [vmem:[%s1396 + $0x60] sm:$0xf]
      %v1422 = vld [vmem:[%s1396 + $0x64] sm:$0xf]
      %v1423 = vld [vmem:[%s1396 + $0x68] sm:$0xf]
      %v1424 = vld [vmem:[%s1396 + $0x6c] sm:$0xf]
      %v1425 = vld [vmem:[%s1396 + $0x70] sm:$0xf]
      %v1426 = vld [vmem:[%s1396 + $0x74] sm:$0xf]
      %v1427 = vld [vmem:[%s1396 + $0x78] sm:$0xf]
      %v1428 = vld [vmem:[%s1396 + $0x7c] sm:$0xf]
      %v1429 = vld [vmem:[%s1396 + $0x80] sm:$0xf]
      %v1430 = vld [vmem:[%s1396 + $0x84] sm:$0xf]
      %v1431 = vld [vmem:[%s1396 + $0x88] sm:$0xf]
      %v1432 = vld [vmem:[%s1396 + $0x8c] sm:$0xf]
      %v1433 = vld [vmem:[%s1396 + $0x90] sm:$0xf]
      %v1434 = vld [vmem:[%s1396 + $0x94] sm:$0xf]
      %v1435 = vld [vmem:[%s1396 + $0x98] sm:$0xf]
      %v1436 = vld [vmem:[%s1396 + $0x9c] sm:$0xf]
      %v1437 = vld [vmem:[%s1396 + $0xa0] sm:$0xf]
      %v1438 = vld [vmem:[%s1396 + $0xa4] sm:$0xf]
      %v1439 = vld [vmem:[%s1396 + $0xa8] sm:$0xf]
      %v1440 = vld [vmem:[%s1396 + $0xac] sm:$0xf]
      %v1441 = vld [vmem:[%s1396 + $0xb0] sm:$0xf]
      %v1442 = vld [vmem:[%s1396 + $0xb4] sm:$0xf]
      %v1443 = vld [vmem:[%s1396 + $0xb8] sm:$0xf]
      %v1444 = vld [vmem:[%s1396 + $0xbc] sm:$0xf]
      %v1445 = vld [vmem:[%s1396 + $0xc0] sm:$0xf]
      %v1446 = vld [vmem:[%s1396 + $0xc4] sm:$0xf]
      %v1447 = vld [vmem:[%s1396 + $0xc8] sm:$0xf]
      %v1448 = vld [vmem:[%s1396 + $0xcc] sm:$0xf]
      %v1449 = vld [vmem:[%s1396 + $0xd0] sm:$0xf]
      %v1450 = vld [vmem:[%s1396 + $0xd4] sm:$0xf]
      %v1451 = vld [vmem:[%s1396 + $0xd8] sm:$0xf]
      %v1452 = vld [vmem:[%s1396 + $0xdc] sm:$0xf]
      %v1453 = vld [vmem:[%s1396 + $0xe0] sm:$0xf]
      %v1454 = vld [vmem:[%s1396 + $0xe4] sm:$0xf]
      %v1455 = vld [vmem:[%s1396 + $0xe8] sm:$0xf]
      %v1456 = vld [vmem:[%s1396 + $0xec] sm:$0xf]
      %v1457 = vld [vmem:[%s1396 + $0xf0] sm:$0xf]
      %v1458 = vld [vmem:[%s1396 + $0xf4] sm:$0xf]
      %v1459 = vld [vmem:[%s1396 + $0xf8] sm:$0xf]
      %v1460 = vld [vmem:[%s1396 + $0xfc] sm:$0xf]
      %v1461 = vcombine.low %v1386, %v1395
      %v1463 = vunpack.c.l.s4 1966171168
      %v1464 = vunpack.c.0.s8 %v1463
      %v1465 = vlaneseq
      %v1466 = vshrl.u32 %v1465, 7
      %v1467 = vsub.s32 %v1464, %v1466
      %v1468 = vrot.slane %v1461, %v1467
      %v1469 = vcombine.high %v1468, %v1468
      %v1471 = vunpack.c.l.s4 1966171168
      %v1472 = vunpack.c.0.s8 %v1471
      %v1473 = vlaneseq
      %v1474 = vshrl.u32 %v1473, 7
      %v1475 = vsub.s32 %v1472, %v1474
      %v1476 = vrot.slane %v1468, %v1475
      %v1478 = vunpack.c.l.s4 1966171168
      %v1479 = vunpack.c.0.s8 %v1478
      %v1480 = vlaneseq
      %v1481 = vshrl.u32 %v1480, 7
      %v1482 = vsub.s32 %v1479, %v1481
      %v1483 = vrot.slane %v1469, %v1482
      %v1484 = vcombine.high %v1476, %v1476
      %v1485 = vcombine.high %v1483, %v1483
      %v1554 = vunpack.c.l.b16 %v1397
      %v1555 = vunpack.c.l.b16 %v1398
      %v1556 = vunpack.c.l.b16 %v1399
      %v1557 = vunpack.c.l.b16 %v1400
      %v1558 = vunpack.c.l.b16 %v1401
      %v1559 = vunpack.c.l.b16 %v1402
      %v1560 = vunpack.c.l.b16 %v1403
      %v1561 = vunpack.c.l.b16 %v1404
      %v1562 = vunpack.c.l.b16 %v1405
      %v1563 = vunpack.c.l.b16 %v1406
      %v1564 = vunpack.c.l.b16 %v1407
      %v1565 = vunpack.c.l.b16 %v1408
      %v1566 = vunpack.c.l.b16 %v1409
      %v1567 = vunpack.c.l.b16 %v1410
      %v1568 = vunpack.c.l.b16 %v1411
      %v1569 = vunpack.c.l.b16 %v1412
      %v1570 = vunpack.c.l.b16 %v1413
      %v1571 = vunpack.c.l.b16 %v1414
      %v1572 = vunpack.c.l.b16 %v1415
      %v1573 = vunpack.c.l.b16 %v1416
      %v1574 = vunpack.c.l.b16 %v1417
      %v1575 = vunpack.c.l.b16 %v1418
      %v1576 = vunpack.c.l.b16 %v1419
      %v1577 = vunpack.c.l.b16 %v1420
      %v1578 = vunpack.c.l.b16 %v1421
      %v1579 = vunpack.c.l.b16 %v1422
      %v1580 = vunpack.c.l.b16 %v1423
      %v1581 = vunpack.c.l.b16 %v1424
      %v1582 = vunpack.c.l.b16 %v1425
      %v1583 = vunpack.c.l.b16 %v1426
      %v1584 = vunpack.c.l.b16 %v1427
      %v1585 = vunpack.c.l.b16 %v1428
      %v1586 = vunpack.c.l.b16 %v1429
      %v1587 = vunpack.c.l.b16 %v1430
      %v1588 = vunpack.c.l.b16 %v1431
      %v1589 = vunpack.c.l.b16 %v1432
      %v1590 = vunpack.c.l.b16 %v1433
      %v1591 = vunpack.c.l.b16 %v1434
      %v1592 = vunpack.c.l.b16 %v1435
      %v1593 = vunpack.c.l.b16 %v1436
      %v1594 = vunpack.c.l.b16 %v1437
      %v1595 = vunpack.c.l.b16 %v1438
      %v1596 = vunpack.c.l.b16 %v1439
      %v1597 = vunpack.c.l.b16 %v1440
      %v1598 = vunpack.c.l.b16 %v1441
      %v1599 = vunpack.c.l.b16 %v1442
      %v1600 = vunpack.c.l.b16 %v1443
      %v1601 = vunpack.c.l.b16 %v1444
      %v1602 = vunpack.c.l.b16 %v1445
      %v1603 = vunpack.c.l.b16 %v1446
      %v1604 = vunpack.c.l.b16 %v1447
      %v1605 = vunpack.c.l.b16 %v1448
      %v1606 = vunpack.c.l.b16 %v1449
      %v1607 = vunpack.c.l.b16 %v1450
      %v1608 = vunpack.c.l.b16 %v1451
      %v1609 = vunpack.c.l.b16 %v1452
      %v1610 = vunpack.c.l.b16 %v1453
      %v1611 = vunpack.c.l.b16 %v1454
      %v1612 = vunpack.c.l.b16 %v1455
      %v1613 = vunpack.c.l.b16 %v1456
      %v1614 = vunpack.c.l.b16 %v1457
      %v1615 = vunpack.c.l.b16 %v1458
      %v1616 = vunpack.c.l.b16 %v1459
      %v1617 = vunpack.c.l.b16 %v1460
      %v1618 = vpack.c.b16 %v1555, %v1554
      %v1619 = vpack.c.b16 %v1557, %v1556
      %v1620 = vpack.c.b16 %v1559, %v1558
      %v1621 = vpack.c.b16 %v1561, %v1560
      %v1622 = vpack.c.b16 %v1563, %v1562
      %v1623 = vpack.c.b16 %v1565, %v1564
      %v1624 = vpack.c.b16 %v1567, %v1566
      %v1625 = vpack.c.b16 %v1569, %v1568
      %v1626 = vpack.c.b16 %v1571, %v1570
      %v1627 = vpack.c.b16 %v1573, %v1572
      %v1628 = vpack.c.b16 %v1575, %v1574
      %v1629 = vpack.c.b16 %v1577, %v1576
      %v1630 = vpack.c.b16 %v1579, %v1578
      %v1631 = vpack.c.b16 %v1581, %v1580
      %v1632 = vpack.c.b16 %v1583, %v1582
      %v1633 = vpack.c.b16 %v1585, %v1584
      %v1634 = vpack.c.b16 %v1587, %v1586
      %v1635 = vpack.c.b16 %v1589, %v1588
      %v1636 = vpack.c.b16 %v1591, %v1590
      %v1637 = vpack.c.b16 %v1593, %v1592
      %v1638 = vpack.c.b16 %v1595, %v1594
      %v1639 = vpack.c.b16 %v1597, %v1596
      %v1640 = vpack.c.b16 %v1599, %v1598
      %v1641 = vpack.c.b16 %v1601, %v1600
      %v1642 = vpack.c.b16 %v1603, %v1602
      %v1643 = vpack.c.b16 %v1605, %v1604
      %v1644 = vpack.c.b16 %v1607, %v1606
      %v1645 = vpack.c.b16 %v1609, %v1608
      %v1646 = vpack.c.b16 %v1611, %v1610
      %v1647 = vpack.c.b16 %v1613, %v1612
      %v1648 = vpack.c.b16 %v1615, %v1614
      %v1649 = vpack.c.b16 %v1617, %v1616
      %1682 = vmatprep.subr.bf16.mxu0 0
      %1683 = vmatpush1.bf16.msra.mxu0 %v1625
      %1684 = vmatprep.subr.bf16.mxu0 0
      %1685 = vmatpush1.bf16.msra.mxu0 %v1624
      %1686 = vmatprep.subr.bf16.mxu0 0
      %1687 = vmatpush1.bf16.msra.mxu0 %v1623
      %1688 = vmatprep.subr.bf16.mxu0 0
      %1689 = vmatpush1.bf16.msra.mxu0 %v1622
      %1690 = vmatprep.subr.bf16.mxu0 0
      %1691 = vmatpush1.bf16.msra.mxu0 %v1621
      %1692 = vmatprep.subr.bf16.mxu0 0
      %1693 = vmatpush1.bf16.msra.mxu0 %v1620
      %1694 = vmatprep.subr.bf16.mxu0 0
      %1695 = vmatpush1.bf16.msra.mxu0 %v1619
      %1696 = vmatprep.subr.bf16.mxu0 0
      %1697 = vmatpush1.bf16.msra.mxu0 %v1618
      %1698 = vmatprep.subr.bf16.mxu0 0
      %1699 = vmatpush2.bf16.msra.mxu0 %v1633
      %1700 = vmatprep.subr.bf16.mxu0 0
      %1701 = vmatpush2.bf16.msra.mxu0 %v1632
      %1702 = vmatprep.subr.bf16.mxu0 0
      %1703 = vmatpush2.bf16.msra.mxu0 %v1631
      %1704 = vmatprep.subr.bf16.mxu0 0
      %1705 = vmatpush2.bf16.msra.mxu0 %v1630
      %1706 = vmatprep.subr.bf16.mxu0 0
      %1707 = vmatpush2.bf16.msra.mxu0 %v1629
      %1708 = vmatprep.subr.bf16.mxu0 0
      %1709 = vmatpush2.bf16.msra.mxu0 %v1628
      %1710 = vmatprep.subr.bf16.mxu0 0
      %1711 = vmatpush2.bf16.msra.mxu0 %v1627
      %1712 = vmatprep.subr.bf16.mxu0 0
      %1713 = vmatpush2.bf16.msra.mxu0 %v1626
      %1714 = vmatprep.mubr.bf16.mxu0 %v1483
      %1715 = vmatmul.mubr.bf16.gmra.mxu0 %v1476
      %v1716 = vpop.f32.mrf.mxu0
      %v1717 = vadd.f32 0.0, %v1716
      %v1718 = vpop.f32.mrf.mxu0
      %v1719 = vpop.f32.mrf.mxu0
      %v1720 = vpop.f32.mrf.mxu0
      %1721 = vdwg.mxu0
      %1722 = vmatprep.subr.bf16.mxu0 0
      %1723 = vmatpush1.bf16.msra.mxu0 %v1641
      %1724 = vmatprep.subr.bf16.mxu0 0
      %1725 = vmatpush1.bf16.msra.mxu0 %v1640
      %1726 = vmatprep.subr.bf16.mxu0 0
      %1727 = vmatpush1.bf16.msra.mxu0 %v1639
      %1728 = vmatprep.subr.bf16.mxu0 0
      %1729 = vmatpush1.bf16.msra.mxu0 %v1638
      %1730 = vmatprep.subr.bf16.mxu0 0
      %1731 = vmatpush1.bf16.msra.mxu0 %v1637
      %1732 = vmatprep.subr.bf16.mxu0 0
      %1733 = vmatpush1.bf16.msra.mxu0 %v1636
      %1734 = vmatprep.subr.bf16.mxu0 0
      %1735 = vmatpush1.bf16.msra.mxu0 %v1635
      %1736 = vmatprep.subr.bf16.mxu0 0
      %1737 = vmatpush1.bf16.msra.mxu0 %v1634
      %1738 = vmatprep.subr.bf16.mxu0 0
      %1739 = vmatpush2.bf16.msra.mxu0 %v1649
      %1740 = vmatprep.subr.bf16.mxu0 0
      %1741 = vmatpush2.bf16.msra.mxu0 %v1648
      %1742 = vmatprep.subr.bf16.mxu0 0
      %1743 = vmatpush2.bf16.msra.mxu0 %v1647
      %1744 = vmatprep.subr.bf16.mxu0 0
      %1745 = vmatpush2.bf16.msra.mxu0 %v1646
      %1746 = vmatprep.subr.bf16.mxu0 0
      %1747 = vmatpush2.bf16.msra.mxu0 %v1645
      %1748 = vmatprep.subr.bf16.mxu0 0
      %1749 = vmatpush2.bf16.msra.mxu0 %v1644
      %1750 = vmatprep.subr.bf16.mxu0 0
      %1751 = vmatpush2.bf16.msra.mxu0 %v1643
      %1752 = vmatprep.subr.bf16.mxu0 0
      %1753 = vmatpush2.bf16.msra.mxu0 %v1642
      %1754 = vmatprep.mubr.bf16.mxu0 %v1485
      %1755 = vmatmul.mubr.bf16.gmra.mxu0 %v1484
      %v1756 = vpop.f32.mrf.mxu0
      %v1757 = vadd.f32 %v1717, %v1756
      %v1758 = vpop.f32.mrf.mxu0
      %v1759 = vpop.f32.mrf.mxu0
      %v1760 = vpop.f32.mrf.mxu0
      %1761 = vdwg.mxu0
      %v1762 = vadd.f32 %v1357, %v1757
      %v1763 = vld [vmem:[%s2] sm:$0x7]
      %v1764 = vlaneseq
      %v1765 = vshrl.u32 %v1764, 7
      %v1766 = vsub.s32 0, %v1765
      %v1767 = vrot.slane %v1763, %v1766
      %v1768 = vadd.f32 %v1762, %v1767
      %vm1769 = vcmp.ge.f32.partialorder %v1768, 0.0
      %v1770 = vmul.f32 %v1768, 0.2
      %v1771 = vsel %vm1769, %v1768, %v1770
      %v1772 = vlaneseq
      %v1773 = vshrl.u32 %v1772, 7
      %v1774 = vsub.s32 1, %v1773
      %v1775 = vrot.slane %v1763, %v1774
      %v1776 = vmul.f32 %v1771, %v1775
      %v1777 = vlaneseq
      %v1778 = vshrl.u32 %v1777, 7
      %v1779 = vsub.s32 2, %v1778
      %v1780 = vrot.slane %v1763, %v1779
      %v1781 = vadd.f32 %v1776, %v1780
      %v1784 = vunpack.c.l.s4 1983009808
      %v1785 = vunpack.c.0.s8 %v1784
      %v1786 = vlaneseq
      %v1787 = vshrl.u32 %v1786, 7
      %v1788 = vsub.s32 %v1785, %v1787
      %v1789 = vrot.slane %v1781, %v1788
      %v1790 = vcombine.high %v1789, %v1789
      %v1793 = vpack.c.bf16 %v1789, %v1789
      %v1794 = vpack.c.bf16 %v1790, %v1790
      %1795 = vst [vmem:[%s168] sm:$0x1] %v1793
      %1796 = vst [vmem:[%s168 + $0x1] sm:$0x1] %v1794
      %p1797 = scmp.lt.s32.totalorder %s14, 1
      %s1798 = scalar_select %p1797, %s14, 1
      %s1799 = smul.addr %s1798, 2
      %s1800 = scalar_lea.vmem %s3, %s1799
      // Predicated region
      $region33: #{discriminator_forward.6} parent=31 // pred_check
        %p1801 = pneg %p100
      $region34: #{discriminator_forward.6} parent=31 // pred_check_branch
        %1803 = sbr.rel (%p1801) target = $region36
      $region35: #{discriminator_forward.6} parent=31 // pred_region
        _
      $region36: #{discriminator_forward.6} parent=31 // pred_fallthru
        _
    $region32: #{discriminator_forward.6} parent=5 // pred_fallthru
      _
    %p1804 = scmp.le.s32.totalorder 2, %s9
    // Predicated region
    $region37: #{discriminator_forward.6} parent=5 // pred_check
      %p1805 = pneg %p1804
    $region38: #{discriminator_forward.6} parent=5 // pred_check_branch
      %1807 = sbr.rel (%p1805) target = $region40
    $region39: #{discriminator_forward.6} parent=5 // pred_region
      %s1808 = ssub.s32 %s9, 2
      // Predicated region
      $region41: #{discriminator_forward.6} parent=39 // pred_check
        %p1809 = pneg %p106
      $region42: #{discriminator_forward.6} parent=39 // pred_check_branch
        %1811 = sbr.rel (%p1809) target = $region44
      $region43: #{discriminator_forward.6} parent=39 // pred_region
        %p1812 = scmp.lt.s32.totalorder %s15, 1
        %s1813 = scalar_select %p1812, %s15, 1
        %s1814 = smul.addr %s1813, 2
        %s1815 = scalar_lea.vmem %s3, %s1814
      $region44: #{discriminator_forward.6} parent=39 // pred_fallthru
        _
    $region40: #{discriminator_forward.6} parent=5 // pred_fallthru
      _
  $region6: #{discriminator_forward.6} parent=0 // loop_footer
    %s13 = sadd.s32 1, %s9
  $region7: #{discriminator_forward.6} parent=0 // loop_footer_branch
    %8 = sbr.rel target = $region3
  $region8: #{discriminator_forward.6} parent=0 // loop_exit
    _

// kernel: discriminator_forward.7
$region0: #{discriminator_forward.7}
  #allocation0 [shape = 'u32[]', space=smem, size = 0x4, offset = 0x4, fixed_abs, tag = 'smem constant byte address 0x4 - core index']
  #allocation1 [shape = 'u32[144,128]{1,0:T(1,128)}', space=vmem, size = 0x12000, scoped, tag = 'internal scratch']
  %s0 = inlined_call_operand.vmem [shape: bf16[2,2,2,512], index: 0, kind: input, shape index: {}]
  %s1 = inlined_call_operand.vmem [shape: bf16[4,512,128], index: 1, kind: input, shape index: {}]
  %s2 = inlined_call_operand.vmem [shape: f32[3,128], index: 2, kind: input, shape index: {}]
  %s3 = inlined_call_operand.vmem [shape: bf16[2,1,1,128], index: 3, kind: output, shape index: {}]
  %s4 = sld [smem:[#allocation0]]
  $region45: #{discriminator_forward.7} parent=0
    _
  %s6 = ssub.s32 1, %s4
  %s7 = scalar_select 0, %s6, %s4
  loop: start=0, step=1, limit=4
  $region2: #{discriminator_forward.7} parent=0 // loop_pre_header
    _
  $region3: #{discriminator_forward.7} parent=0 // loop_header
    %s9 = sphi 0, %s13
    %p10 = scmp.ge.s32.totalorder %s9, 4
    %s19 = sphi 0, %s21
    %s22 = sphi 0, %s19
    %s23 = sphi 0, %s22
    %s39 = sphi 0, %s23
    %s43 = sphi 0, %s43
    %s45 = sphi 0, %s43
    %s46 = sphi 0, %s45
    %s60 = sphi 0, %s46
    %s64 = sphi 0, %s64
    %s66 = sphi 0, %s64
    %s67 = sphi 0, %s66
    %s81 = sphi 0, %s67
    %s87 = sphi 0, %s89
    %s90 = sphi 0, %s87
    %s91 = sphi 0, %s90
    %s107 = sphi 0, %s91
  $region4: #{discriminator_forward.7} parent=0 // loop_header_branch
    %12 = sbr.rel (%p10) target = $region8
  $region5: #{discriminator_forward.7} parent=0 // loop_body
    %s14 = ssub.s32 %s9, 1
    %s15 = ssub.s32 %s9, 2
    %s16 = sadd.s32 %s9, 1
    %s17 = ssub.s32 %s9, %s16
    %p18 = scmp.eq.s32.totalorder %s17, 0
    %s20 = sadd.s32 %s19, 1
    %s21 = scalar_select %p18, %s19, %s20
    %p24 = pneg %p18
    %p25 = scmp.eq.s32.totalorder %s9, 1
    %p26 = por %p24, %p25
    %p27 = scmp.ne.s32.totalorder %s19, %s22
    %p28 = scmp.eq.s32.totalorder %s9, 0
    %p29 = por %p27, %p28
    %p30 = scmp.ne.s32.totalorder %s19, %s22
    %p31 = scmp.eq.s32.totalorder %s14, 1
    %p32 = por %p30, %p31
    %p33 = scmp.ne.s32.totalorder %s22, %s23
    %p34 = scmp.eq.s32.totalorder %s14, 0
    %p35 = por %p33, %p34
    %p36 = scmp.ne.s32.totalorder %s22, %s23
    %p37 = scmp.eq.s32.totalorder %s15, 1
    %p38 = por %p36, %p37
    %p40 = scmp.ne.s32.totalorder %s23, %s39
    %p41 = scmp.eq.s32.totalorder %s15, 0
    %p42 = por %p40, %p41
    %s44 = sadd.s32 %s43, 1
    %p47 = scmp.eq.s32.totalorder %s9, 1
    %p48 = scmp.ne.s32.totalorder %s43, %s45
    %p49 = scmp.eq.s32.totalorder %s9, 0
    %p50 = por %p48, %p49
    %p51 = scmp.ne.s32.totalorder %s43, %s45
    %p52 = scmp.eq.s32.totalorder %s14, 1
    %p53 = por %p51, %p52
    %p54 = scmp.ne.s32.totalorder %s45, %s46
    %p55 = scmp.eq.s32.totalorder %s14, 0
    %p56 = por %p54, %p55
    %p57 = scmp.ne.s32.totalorder %s45, %s46
    %p58 = scmp.eq.s32.totalorder %s15, 1
    %p59 = por %p57, %p58
    %p61 = scmp.ne.s32.totalorder %s46, %s60
    %p62 = scmp.eq.s32.totalorder %s15, 0
    %p63 = por %p61, %p62
    %s65 = sadd.s32 %s64, 1
    %p68 = scmp.eq.s32.totalorder %s9, 1
    %p69 = scmp.ne.s32.totalorder %s64, %s66
    %p70 = scmp.eq.s32.totalorder %s9, 0
    %p71 = por %p69, %p70
    %p72 = scmp.ne.s32.totalorder %s64, %s66
    %p73 = scmp.eq.s32.totalorder %s14, 1
    %p74 = por %p72, %p73
    %p75 = scmp.ne.s32.totalorder %s66, %s67
    %p76 = scmp.eq.s32.totalorder %s14, 0
    %p77 = por %p75, %p76
    %p78 = scmp.ne.s32.totalorder %s66, %s67
    %p79 = scmp.eq.s32.totalorder %s15, 1
    %p80 = por %p78, %p79
    %p82 = scmp.ne.s32.totalorder %s67, %s81
    %p83 = scmp.eq.s32.totalorder %s15, 0
    %p84 = por %p82, %p83
    %s85 = ssub.s32 %s9, %s16
    %p86 = scmp.eq.s32.totalorder %s85, 0
    %s88 = sadd.s32 %s87, 1
    %s89 = scalar_select %p86, %s87, %s88
    %p92 = pneg %p86
    %p93 = scmp.eq.s32.totalorder %s9, 1
    %p94 = por %p92, %p93
    %p95 = scmp.ne.s32.totalorder %s87, %s90
    %p96 = scmp.eq.s32.totalorder %s9, 0
    %p97 = por %p95, %p96
    %p98 = scmp.ne.s32.totalorder %s87, %s90
    %p99 = scmp.eq.s32.totalorder %s14, 1
    %p100 = por %p98, %p99
    %p101 = scmp.ne.s32.totalorder %s90, %s91
    %p102 = scmp.eq.s32.totalorder %s14, 0
    %p103 = por %p101, %p102
    %p104 = scmp.ne.s32.totalorder %s90, %s91
    %p105 = scmp.eq.s32.totalorder %s15, 1
    %p106 = por %p104, %p105
    %p108 = scmp.ne.s32.totalorder %s91, %s107
    %p109 = scmp.eq.s32.totalorder %s15, 0
    %p110 = por %p108, %p109
    %p111 = scmp.le.s32.totalorder 1, %s9
    %p112 = scmp.lt.s32.totalorder %s9, 3
    %p113 = pnand %p111, %p112
    %p114 = pneg %p113
    // Predicated region
    $region9: #{discriminator_forward.7} parent=5 // pred_check
      _
    $region10: #{discriminator_forward.7} parent=5 // pred_check_branch
      %116 = sbr.rel (%p113) target = $region12
    $region11: #{discriminator_forward.7} parent=5 // pred_region
      %s117 = ssub.s32 %s9, 1
      // Predicated region
      $region13: #{discriminator_forward.7} parent=11 // pred_check
        %p118 = pneg %p56
      $region14: #{discriminator_forward.7} parent=11 // pred_check_branch
        %120 = sbr.rel (%p118) target = $region16
      $region15: #{discriminator_forward.7} parent=11 // pred_region
        _
      $region16: #{discriminator_forward.7} parent=11 // pred_fallthru
        _
      // Predicated region
      $region17: #{discriminator_forward.7} parent=11 // pred_check
        %p121 = pneg %p77
      $region18: #{discriminator_forward.7} parent=11 // pred_check_branch
        %123 = sbr.rel (%p121) target = $region20
      $region19: #{discriminator_forward.7} parent=11 // pred_region
        _
      $region20: #{discriminator_forward.7} parent=11 // pred_fallthru
        _
    $region12: #{discriminator_forward.7} parent=5 // pred_fallthru
      _
    %p124 = scmp.lt.s32.totalorder %s9, 2
    // Predicated region
    $region21: #{discriminator_forward.7} parent=5 // pred_check
      %p125 = pneg %p124
    $region22: #{discriminator_forward.7} parent=5 // pred_check_branch
      %127 = sbr.rel (%p125) target = $region24
    $region23: #{discriminator_forward.7} parent=5 // pred_region
      // Predicated region
      $region25: #{discriminator_forward.7} parent=23 // pred_check
        %p128 = pneg %p29
      $region26: #{discriminator_forward.7} parent=23 // pred_check_branch
        %130 = sbr.rel (%p128) target = $region28
      $region27: #{discriminator_forward.7} parent=23 // pred_region
        %p131 = scmp.lt.s32.totalorder %s9, 1
        %s132 = scalar_select %p131, %s9, 1
        %s133 = smul.addr %s132, 8
        %s134 = scalar_lea.vmem %s0, %s133
      $region28: #{discriminator_forward.7} parent=23 // pred_fallthru
        _
    $region24: #{discriminator_forward.7} parent=5 // pred_fallthru
      _
    %p135 = scmp.le.s32.totalorder 1, %s9
    %p136 = scmp.lt.s32.totalorder %s9, 3
    %p137 = pnand %p135, %p136
    %p138 = pneg %p137
    // Predicated region
    $region29: #{discriminator_forward.7} parent=5 // pred_check
      _
    $region30: #{discriminator_forward.7} parent=5 // pred_check_branch
      %140 = sbr.rel (%p137) target = $region32
    $region31: #{discriminator_forward.7} parent=5 // pred_region
      %s141 = ssub.s32 %s9, 1
      %p142 = scmp.lt.s32.totalorder %s14, 1
      %s143 = scalar_select %p142, %s14, 1
      %s144 = smul.addr %s143, 8
      %s145 = scalar_lea.vmem %s0, %s144
      %p146 = pneg %p35
      %p147 = pneg %p32
      %p148 = pneg %p56
      %p149 = pneg %p53
      %p150 = pneg %p77
      %p151 = pneg %p74
      %p152 = pneg %p103
      %p153 = pneg %p100
      %p154 = scmp.lt.s32.totalorder %s14, 1
      %s155 = scalar_select %p154, %s14, 1
      %s156 = scalar_lea.vmem %s3, %s155
      %p157 = scmp.lt.s32.totalorder %s14, 1
      %s158 = scalar_select %p157, %s14, 1
      %s159 = smul.addr %s158, 8
      %s160 = scalar_lea.vmem %s0, %s159
      %p161 = scmp.lt.s32.totalorder %s14, 1
      %s162 = scalar_select %p161, %s14, 1
      %s163 = scalar_lea.vmem %s3, %s162
      %v165 = vld [vmem:[%s160] sm:$0xf]
      %v166 = vld [vmem:[%s1] sm:$0xf]
      %v167 = vld [vmem:[%s1 + $0x4] sm:$0xf]
      %v168 = vld [vmem:[%s1 + $0x8] sm:$0xf]
      %v169 = vld [vmem:[%s1 + $0xc] sm:$0xf]
      %v170 = vld [vmem:[%s1 + $0x10] sm:$0xf]
      %v171 = vld [vmem:[%s1 + $0x14] sm:$0xf]
      %v172 = vld [vmem:[%s1 + $0x18] sm:$0xf]
      %v173 = vld [vmem:[%s1 + $0x1c] sm:$0xf]
      %v174 = vld [vmem:[%s1 + $0x20] sm:$0xf]
      %v175 = vld [vmem:[%s1 + $0x24] sm:$0xf]
      %v176 = vld [vmem:[%s1 + $0x28] sm:$0xf]
      %v177 = vld [vmem:[%s1 + $0x2c] sm:$0xf]
      %v178 = vld [vmem:[%s1 + $0x30] sm:$0xf]
      %v179 = vld [vmem:[%s1 + $0x34] sm:$0xf]
      %v180 = vld [vmem:[%s1 + $0x38] sm:$0xf]
      %v181 = vld [vmem:[%s1 + $0x3c] sm:$0xf]
      %v182 = vld [vmem:[%s1 + $0x40] sm:$0xf]
      %v183 = vld [vmem:[%s1 + $0x44] sm:$0xf]
      %v184 = vld [vmem:[%s1 + $0x48] sm:$0xf]
      %v185 = vld [vmem:[%s1 + $0x4c] sm:$0xf]
      %v186 = vld [vmem:[%s1 + $0x50] sm:$0xf]
      %v187 = vld [vmem:[%s1 + $0x54] sm:$0xf]
      %v188 = vld [vmem:[%s1 + $0x58] sm:$0xf]
      %v189 = vld [vmem:[%s1 + $0x5c] sm:$0xf]
      %v190 = vld [vmem:[%s1 + $0x60] sm:$0xf]
      %v191 = vld [vmem:[%s1 + $0x64] sm:$0xf]
      %v192 = vld [vmem:[%s1 + $0x68] sm:$0xf]
      %v193 = vld [vmem:[%s1 + $0x6c] sm:$0xf]
      %v194 = vld [vmem:[%s1 + $0x70] sm:$0xf]
      %v195 = vld [vmem:[%s1 + $0x74] sm:$0xf]
      %v196 = vld [vmem:[%s1 + $0x78] sm:$0xf]
      %v197 = vld [vmem:[%s1 + $0x7c] sm:$0xf]
      %v198 = vld [vmem:[%s1 + $0x80] sm:$0xf]
      %v199 = vld [vmem:[%s1 + $0x84] sm:$0xf]
      %v200 = vld [vmem:[%s1 + $0x88] sm:$0xf]
      %v201 = vld [vmem:[%s1 + $0x8c] sm:$0xf]
      %v202 = vld [vmem:[%s1 + $0x90] sm:$0xf]
      %v203 = vld [vmem:[%s1 + $0x94] sm:$0xf]
      %v204 = vld [vmem:[%s1 + $0x98] sm:$0xf]
      %v205 = vld [vmem:[%s1 + $0x9c] sm:$0xf]
      %v206 = vld [vmem:[%s1 + $0xa0] sm:$0xf]
      %v207 = vld [vmem:[%s1 + $0xa4] sm:$0xf]
      %v208 = vld [vmem:[%s1 + $0xa8] sm:$0xf]
      %v209 = vld [vmem:[%s1 + $0xac] sm:$0xf]
      %v210 = vld [vmem:[%s1 + $0xb0] sm:$0xf]
      %v211 = vld [vmem:[%s1 + $0xb4] sm:$0xf]
      %v212 = vld [vmem:[%s1 + $0xb8] sm:$0xf]
      %v213 = vld [vmem:[%s1 + $0xbc] sm:$0xf]
      %v214 = vld [vmem:[%s1 + $0xc0] sm:$0xf]
      %v215 = vld [vmem:[%s1 + $0xc4] sm:$0xf]
      %v216 = vld [vmem:[%s1 + $0xc8] sm:$0xf]
      %v217 = vld [vmem:[%s1 + $0xcc] sm:$0xf]
      %v218 = vld [vmem:[%s1 + $0xd0] sm:$0xf]
      %v219 = vld [vmem:[%s1 + $0xd4] sm:$0xf]
      %v220 = vld [vmem:[%s1 + $0xd8] sm:$0xf]
      %v221 = vld [vmem:[%s1 + $0xdc] sm:$0xf]
      %v222 = vld [vmem:[%s1 + $0xe0] sm:$0xf]
      %v223 = vld [vmem:[%s1 + $0xe4] sm:$0xf]
      %v224 = vld [vmem:[%s1 + $0xe8] sm:$0xf]
      %v225 = vld [vmem:[%s1 + $0xec] sm:$0xf]
      %v226 = vld [vmem:[%s1 + $0xf0] sm:$0xf]
      %v227 = vld [vmem:[%s1 + $0xf4] sm:$0xf]
      %v228 = vld [vmem:[%s1 + $0xf8] sm:$0xf]
      %v229 = vld [vmem:[%s1 + $0xfc] sm:$0xf]
      %s230 = scalar_lea.vmem %s1, 256
      %v231 = vld [vmem:[%s230] sm:$0xf]
      %v232 = vld [vmem:[%s230 + $0x4] sm:$0xf]
      %v233 = vld [vmem:[%s230 + $0x8] sm:$0xf]
      %v234 = vld [vmem:[%s230 + $0xc] sm:$0xf]
      %v235 = vld [vmem:[%s230 + $0x10] sm:$0xf]
      %v236 = vld [vmem:[%s230 + $0x14] sm:$0xf]
      %v237 = vld [vmem:[%s230 + $0x18] sm:$0xf]
      %v238 = vld [vmem:[%s230 + $0x1c] sm:$0xf]
      %v239 = vld [vmem:[%s230 + $0x20] sm:$0xf]
      %v240 = vld [vmem:[%s230 + $0x24] sm:$0xf]
      %v241 = vld [vmem:[%s230 + $0x28] sm:$0xf]
      %v242 = vld [vmem:[%s230 + $0x2c] sm:$0xf]
      %v243 = vld [vmem:[%s230 + $0x30] sm:$0xf]
      %v244 = vld [vmem:[%s230 + $0x34] sm:$0xf]
      %v245 = vld [vmem:[%s230 + $0x38] sm:$0xf]
      %v246 = vld [vmem:[%s230 + $0x3c] sm:$0xf]
      %v247 = vld [vmem:[%s230 + $0x40] sm:$0xf]
      %v248 = vld [vmem:[%s230 + $0x44] sm:$0xf]
      %v249 = vld [vmem:[%s230 + $0x48] sm:$0xf]
      %v250 = vld [vmem:[%s230 + $0x4c] sm:$0xf]
      %v251 = vld [vmem:[%s230 + $0x50] sm:$0xf]
      %v252 = vld [vmem:[%s230 + $0x54] sm:$0xf]
      %v253 = vld [vmem:[%s230 + $0x58] sm:$0xf]
      %v254 = vld [vmem:[%s230 + $0x5c] sm:$0xf]
      %v255 = vld [vmem:[%s230 + $0x60] sm:$0xf]
      %v256 = vld [vmem:[%s230 + $0x64] sm:$0xf]
      %v257 = vld [vmem:[%s230 + $0x68] sm:$0xf]
      %v258 = vld [vmem:[%s230 + $0x6c] sm:$0xf]
      %v259 = vld [vmem:[%s230 + $0x70] sm:$0xf]
      %v260 = vld [vmem:[%s230 + $0x74] sm:$0xf]
      %v261 = vld [vmem:[%s230 + $0x78] sm:$0xf]
      %v262 = vld [vmem:[%s230 + $0x7c] sm:$0xf]
      %v263 = vld [vmem:[%s230 + $0x80] sm:$0xf]
      %v264 = vld [vmem:[%s230 + $0x84] sm:$0xf]
      %v265 = vld [vmem:[%s230 + $0x88] sm:$0xf]
      %v266 = vld [vmem:[%s230 + $0x8c] sm:$0xf]
      %v267 = vld [vmem:[%s230 + $0x90] sm:$0xf]
      %v268 = vld [vmem:[%s230 + $0x94] sm:$0xf]
      %v269 = vld [vmem:[%s230 + $0x98] sm:$0xf]
      %v270 = vld [vmem:[%s230 + $0x9c] sm:$0xf]
      %v271 = vld [vmem:[%s230 + $0xa0] sm:$0xf]
      %v272 = vld [vmem:[%s230 + $0xa4] sm:$0xf]
      %v273 = vld [vmem:[%s230 + $0xa8] sm:$0xf]
      %v274 = vld [vmem:[%s230 + $0xac] sm:$0xf]
      %v275 = vld [vmem:[%s230 + $0xb0] sm:$0xf]
      %v276 = vld [vmem:[%s230 + $0xb4] sm:$0xf]
      %v277 = vld [vmem:[%s230 + $0xb8] sm:$0xf]
      %v278 = vld [vmem:[%s230 + $0xbc] sm:$0xf]
      %v279 = vld [vmem:[%s230 + $0xc0] sm:$0xf]
      %v280 = vld [vmem:[%s230 + $0xc4] sm:$0xf]
      %v281 = vld [vmem:[%s230 + $0xc8] sm:$0xf]
      %v282 = vld [vmem:[%s230 + $0xcc] sm:$0xf]
      %v283 = vld [vmem:[%s230 + $0xd0] sm:$0xf]
      %v284 = vld [vmem:[%s230 + $0xd4] sm:$0xf]
      %v285 = vld [vmem:[%s230 + $0xd8] sm:$0xf]
      %v286 = vld [vmem:[%s230 + $0xdc] sm:$0xf]
      %v287 = vld [vmem:[%s230 + $0xe0] sm:$0xf]
      %v288 = vld [vmem:[%s230 + $0xe4] sm:$0xf]
      %v289 = vld [vmem:[%s230 + $0xe8] sm:$0xf]
      %v290 = vld [vmem:[%s230 + $0xec] sm:$0xf]
      %v291 = vld [vmem:[%s230 + $0xf0] sm:$0xf]
      %v292 = vld [vmem:[%s230 + $0xf4] sm:$0xf]
      %v293 = vld [vmem:[%s230 + $0xf8] sm:$0xf]
      %v294 = vld [vmem:[%s230 + $0xfc] sm:$0xf]
      %v297 = vunpack.c.l.s4 1966171168
      %v298 = vunpack.c.0.s8 %v297
      %v299 = vlaneseq
      %v300 = vshrl.u32 %v299, 7
      %v301 = vsub.s32 %v298, %v300
      %v302 = vrot.slane %v165, %v301
      %v303 = vcombine.high %v302, %v302
      %v305 = vunpack.c.l.s4 1966171168
      %v306 = vunpack.c.0.s8 %v305
      %v307 = vlaneseq
      %v308 = vshrl.u32 %v307, 7
      %v309 = vsub.s32 %v306, %v308
      %v310 = vrot.slane %v302, %v309
      %v312 = vunpack.c.l.s4 1966171168
      %v313 = vunpack.c.0.s8 %v312
      %v314 = vlaneseq
      %v315 = vshrl.u32 %v314, 7
      %v316 = vsub.s32 %v313, %v315
      %v317 = vrot.slane %v303, %v316
      %v318 = vcombine.high %v310, %v310
      %v319 = vcombine.high %v317, %v317
      %v321 = vshrl.u32 %v310, 16
      %v324 = vshrl.u32 %v317, 16
      %v327 = vshrl.u32 %v318, 16
      %v330 = vshrl.u32 %v319, 16
      %v400 = vunpack.c.l.b16 %v231
      %v401 = vunpack.c.l.b16 %v232
      %v402 = vunpack.c.l.b16 %v233
      %v403 = vunpack.c.l.b16 %v234
      %v404 = vunpack.c.l.b16 %v235
      %v405 = vunpack.c.l.b16 %v236
      %v406 = vunpack.c.l.b16 %v237
      %v407 = vunpack.c.l.b16 %v238
      %v408 = vunpack.c.l.b16 %v239
      %v409 = vunpack.c.l.b16 %v240
      %v410 = vunpack.c.l.b16 %v241
      %v411 = vunpack.c.l.b16 %v242
      %v412 = vunpack.c.l.b16 %v243
      %v413 = vunpack.c.l.b16 %v244
      %v414 = vunpack.c.l.b16 %v245
      %v415 = vunpack.c.l.b16 %v246
      %v416 = vunpack.c.l.b16 %v247
      %v417 = vunpack.c.l.b16 %v248
      %v418 = vunpack.c.l.b16 %v249
      %v419 = vunpack.c.l.b16 %v250
      %v420 = vunpack.c.l.b16 %v251
      %v421 = vunpack.c.l.b16 %v252
      %v422 = vunpack.c.l.b16 %v253
      %v423 = vunpack.c.l.b16 %v254
      %v424 = vunpack.c.l.b16 %v255
      %v425 = vunpack.c.l.b16 %v256
      %v426 = vunpack.c.l.b16 %v257
      %v427 = vunpack.c.l.b16 %v258
      %v428 = vunpack.c.l.b16 %v259
      %v429 = vunpack.c.l.b16 %v260
      %v430 = vunpack.c.l.b16 %v261
      %v431 = vunpack.c.l.b16 %v262
      %v432 = vunpack.c.l.b16 %v263
      %v433 = vunpack.c.l.b16 %v264
      %v434 = vunpack.c.l.b16 %v265
      %v435 = vunpack.c.l.b16 %v266
      %v436 = vunpack.c.l.b16 %v267
      %v437 = vunpack.c.l.b16 %v268
      %v438 = vunpack.c.l.b16 %v269
      %v439 = vunpack.c.l.b16 %v270
      %v440 = vunpack.c.l.b16 %v271
      %v441 = vunpack.c.l.b16 %v272
      %v442 = vunpack.c.l.b16 %v273
      %v443 = vunpack.c.l.b16 %v274
      %v444 = vunpack.c.l.b16 %v275
      %v445 = vunpack.c.l.b16 %v276
      %v446 = vunpack.c.l.b16 %v277
      %v447 = vunpack.c.l.b16 %v278
      %v448 = vunpack.c.l.b16 %v279
      %v449 = vunpack.c.l.b16 %v280
      %v450 = vunpack.c.l.b16 %v281
      %v451 = vunpack.c.l.b16 %v282
      %v452 = vunpack.c.l.b16 %v283
      %v453 = vunpack.c.l.b16 %v284
      %v454 = vunpack.c.l.b16 %v285
      %v455 = vunpack.c.l.b16 %v286
      %v456 = vunpack.c.l.b16 %v287
      %v457 = vunpack.c.l.b16 %v288
      %v458 = vunpack.c.l.b16 %v289
      %v459 = vunpack.c.l.b16 %v290
      %v460 = vunpack.c.l.b16 %v291
      %v461 = vunpack.c.l.b16 %v292
      %v462 = vunpack.c.l.b16 %v293
      %v463 = vunpack.c.l.b16 %v294
      %v464 = vpack.c.b16 %v401, %v400
      %v465 = vpack.c.b16 %v403, %v402
      %v466 = vpack.c.b16 %v405, %v404
      %v467 = vpack.c.b16 %v407, %v406
      %v468 = vpack.c.b16 %v409, %v408
      %v469 = vpack.c.b16 %v411, %v410
      %v470 = vpack.c.b16 %v413, %v412
      %v471 = vpack.c.b16 %v415, %v414
      %v472 = vpack.c.b16 %v417, %v416
      %v473 = vpack.c.b16 %v419, %v418
      %v474 = vpack.c.b16 %v421, %v420
      %v475 = vpack.c.b16 %v423, %v422
      %v476 = vpack.c.b16 %v425, %v424
      %v477 = vpack.c.b16 %v427, %v426
      %v478 = vpack.c.b16 %v429, %v428
      %v479 = vpack.c.b16 %v431, %v430
      %v480 = vpack.c.b16 %v433, %v432
      %v481 = vpack.c.b16 %v435, %v434
      %v482 = vpack.c.b16 %v437, %v436
      %v483 = vpack.c.b16 %v439, %v438
      %v484 = vpack.c.b16 %v441, %v440
      %v485 = vpack.c.b16 %v443, %v442
      %v486 = vpack.c.b16 %v445, %v444
      %v487 = vpack.c.b16 %v447, %v446
      %v488 = vpack.c.b16 %v449, %v448
      %v489 = vpack.c.b16 %v451, %v450
      %v490 = vpack.c.b16 %v453, %v452
      %v491 = vpack.c.b16 %v455, %v454
      %v492 = vpack.c.b16 %v457, %v456
      %v493 = vpack.c.b16 %v459, %v458
      %v494 = vpack.c.b16 %v461, %v460
      %v495 = vpack.c.b16 %v463, %v462
      %528 = vmatprep.subr.bf16.mxu0 0
      %529 = vmatpush1.bf16.msra.mxu0 %v471
      %530 = vmatprep.subr.bf16.mxu0 0
      %531 = vmatpush1.bf16.msra.mxu0 %v470
      %532 = vmatprep.subr.bf16.mxu0 0
      %533 = vmatpush1.bf16.msra.mxu0 %v469
      %534 = vmatprep.subr.bf16.mxu0 0
      %535 = vmatpush1.bf16.msra.mxu0 %v468
      %536 = vmatprep.subr.bf16.mxu0 0
      %537 = vmatpush1.bf16.msra.mxu0 %v467
      %538 = vmatprep.subr.bf16.mxu0 0
      %539 = vmatpush1.bf16.msra.mxu0 %v466
      %540 = vmatprep.subr.bf16.mxu0 0
      %541 = vmatpush1.bf16.msra.mxu0 %v465
      %542 = vmatprep.subr.bf16.mxu0 0
      %543 = vmatpush1.bf16.msra.mxu0 %v464
      %544 = vmatprep.subr.bf16.mxu0 0
      %545 = vmatpush2.bf16.msra.mxu0 %v479
      %546 = vmatprep.subr.bf16.mxu0 0
      %547 = vmatpush2.bf16.msra.mxu0 %v478
      %548 = vmatprep.subr.bf16.mxu0 0
      %549 = vmatpush2.bf16.msra.mxu0 %v477
      %550 = vmatprep.subr.bf16.mxu0 0
      %551 = vmatpush2.bf16.msra.mxu0 %v476
      %552 = vmatprep.subr.bf16.mxu0 0
      %553 = vmatpush2.bf16.msra.mxu0 %v475
      %554 = vmatprep.subr.bf16.mxu0 0
      %555 = vmatpush2.bf16.msra.mxu0 %v474
      %556 = vmatprep.subr.bf16.mxu0 0
      %557 = vmatpush2.bf16.msra.mxu0 %v473
      %558 = vmatprep.subr.bf16.mxu0 0
      %559 = vmatpush2.bf16.msra.mxu0 %v472
      %560 = vmatprep.mubr.bf16.mxu0 %v324
      %561 = vmatmul.mubr.bf16.gmra.mxu0 %v321
      %v562 = vpop.f32.mrf.mxu0
      %v563 = vadd.f32 0.0, %v562
      %v564 = vpop.f32.mrf.mxu0
      %v565 = vpop.f32.mrf.mxu0
      %v566 = vpop.f32.mrf.mxu0
      %567 = vdwg.mxu0
      %568 = vmatprep.subr.bf16.mxu0 0
      %569 = vmatpush1.bf16.msra.mxu0 %v487
      %570 = vmatprep.subr.bf16.mxu0 0
      %571 = vmatpush1.bf16.msra.mxu0 %v486
      %572 = vmatprep.subr.bf16.mxu0 0
      %573 = vmatpush1.bf16.msra.mxu0 %v485
      %574 = vmatprep.subr.bf16.mxu0 0
      %575 = vmatpush1.bf16.msra.mxu0 %v484
      %576 = vmatprep.subr.bf16.mxu0 0
      %577 = vmatpush1.bf16.msra.mxu0 %v483
      %578 = vmatprep.subr.bf16.mxu0 0
      %579 = vmatpush1.bf16.msra.mxu0 %v482
      %580 = vmatprep.subr.bf16.mxu0 0
      %581 = vmatpush1.bf16.msra.mxu0 %v481
      %582 = vmatprep.subr.bf16.mxu0 0
      %583 = vmatpush1.bf16.msra.mxu0 %v480
      %584 = vmatprep.subr.bf16.mxu0 0
      %585 = vmatpush2.bf16.msra.mxu0 %v495
      %586 = vmatprep.subr.bf16.mxu0 0
      %587 = vmatpush2.bf16.msra.mxu0 %v494
      %588 = vmatprep.subr.bf16.mxu0 0
      %589 = vmatpush2.bf16.msra.mxu0 %v493
      %590 = vmatprep.subr.bf16.mxu0 0
      %591 = vmatpush2.bf16.msra.mxu0 %v492
      %592 = vmatprep.subr.bf16.mxu0 0
      %593 = vmatpush2.bf16.msra.mxu0 %v491
      %594 = vmatprep.subr.bf16.mxu0 0
      %595 = vmatpush2.bf16.msra.mxu0 %v490
      %596 = vmatprep.subr.bf16.mxu0 0
      %597 = vmatpush2.bf16.msra.mxu0 %v489
      %598 = vmatprep.subr.bf16.mxu0 0
      %599 = vmatpush2.bf16.msra.mxu0 %v488
      %600 = vmatprep.mubr.bf16.mxu0 %v330
      %601 = vmatmul.mubr.bf16.gmra.mxu0 %v327
      %v602 = vpop.f32.mrf.mxu0
      %v603 = vadd.f32 %v563, %v602
      %v604 = vpop.f32.mrf.mxu0
      %v605 = vpop.f32.mrf.mxu0
      %v606 = vpop.f32.mrf.mxu0
      %607 = vdwg.mxu0
      %v676 = vunpack.c.l.b16 %v166
      %v677 = vunpack.c.l.b16 %v167
      %v678 = vunpack.c.l.b16 %v168
      %v679 = vunpack.c.l.b16 %v169
      %v680 = vunpack.c.l.b16 %v170
      %v681 = vunpack.c.l.b16 %v171
      %v682 = vunpack.c.l.b16 %v172
      %v683 = vunpack.c.l.b16 %v173
      %v684 = vunpack.c.l.b16 %v174
      %v685 = vunpack.c.l.b16 %v175
      %v686 = vunpack.c.l.b16 %v176
      %v687 = vunpack.c.l.b16 %v177
      %v688 = vunpack.c.l.b16 %v178
      %v689 = vunpack.c.l.b16 %v179
      %v690 = vunpack.c.l.b16 %v180
      %v691 = vunpack.c.l.b16 %v181
      %v692 = vunpack.c.l.b16 %v182
      %v693 = vunpack.c.l.b16 %v183
      %v694 = vunpack.c.l.b16 %v184
      %v695 = vunpack.c.l.b16 %v185
      %v696 = vunpack.c.l.b16 %v186
      %v697 = vunpack.c.l.b16 %v187
      %v698 = vunpack.c.l.b16 %v188
      %v699 = vunpack.c.l.b16 %v189
      %v700 = vunpack.c.l.b16 %v190
      %v701 = vunpack.c.l.b16 %v191
      %v702 = vunpack.c.l.b16 %v192
      %v703 = vunpack.c.l.b16 %v193
      %v704 = vunpack.c.l.b16 %v194
      %v705 = vunpack.c.l.b16 %v195
      %v706 = vunpack.c.l.b16 %v196
      %v707 = vunpack.c.l.b16 %v197
      %v708 = vunpack.c.l.b16 %v198
      %v709 = vunpack.c.l.b16 %v199
      %v710 = vunpack.c.l.b16 %v200
      %v711 = vunpack.c.l.b16 %v201
      %v712 = vunpack.c.l.b16 %v202
      %v713 = vunpack.c.l.b16 %v203
      %v714 = vunpack.c.l.b16 %v204
      %v715 = vunpack.c.l.b16 %v205
      %v716 = vunpack.c.l.b16 %v206
      %v717 = vunpack.c.l.b16 %v207
      %v718 = vunpack.c.l.b16 %v208
      %v719 = vunpack.c.l.b16 %v209
      %v720 = vunpack.c.l.b16 %v210
      %v721 = vunpack.c.l.b16 %v211
      %v722 = vunpack.c.l.b16 %v212
      %v723 = vunpack.c.l.b16 %v213
      %v724 = vunpack.c.l.b16 %v214
      %v725 = vunpack.c.l.b16 %v215
      %v726 = vunpack.c.l.b16 %v216
      %v727 = vunpack.c.l.b16 %v217
      %v728 = vunpack.c.l.b16 %v218
      %v729 = vunpack.c.l.b16 %v219
      %v730 = vunpack.c.l.b16 %v220
      %v731 = vunpack.c.l.b16 %v221
      %v732 = vunpack.c.l.b16 %v222
      %v733 = vunpack.c.l.b16 %v223
      %v734 = vunpack.c.l.b16 %v224
      %v735 = vunpack.c.l.b16 %v225
      %v736 = vunpack.c.l.b16 %v226
      %v737 = vunpack.c.l.b16 %v227
      %v738 = vunpack.c.l.b16 %v228
      %v739 = vunpack.c.l.b16 %v229
      %v740 = vpack.c.b16 %v677, %v676
      %v741 = vpack.c.b16 %v679, %v678
      %v742 = vpack.c.b16 %v681, %v680
      %v743 = vpack.c.b16 %v683, %v682
      %v744 = vpack.c.b16 %v685, %v684
      %v745 = vpack.c.b16 %v687, %v686
      %v746 = vpack.c.b16 %v689, %v688
      %v747 = vpack.c.b16 %v691, %v690
      %v748 = vpack.c.b16 %v693, %v692
      %v749 = vpack.c.b16 %v695, %v694
      %v750 = vpack.c.b16 %v697, %v696
      %v751 = vpack.c.b16 %v699, %v698
      %v752 = vpack.c.b16 %v701, %v700
      %v753 = vpack.c.b16 %v703, %v702
      %v754 = vpack.c.b16 %v705, %v704
      %v755 = vpack.c.b16 %v707, %v706
      %v756 = vpack.c.b16 %v709, %v708
      %v757 = vpack.c.b16 %v711, %v710
      %v758 = vpack.c.b16 %v713, %v712
      %v759 = vpack.c.b16 %v715, %v714
      %v760 = vpack.c.b16 %v717, %v716
      %v761 = vpack.c.b16 %v719, %v718
      %v762 = vpack.c.b16 %v721, %v720
      %v763 = vpack.c.b16 %v723, %v722
      %v764 = vpack.c.b16 %v725, %v724
      %v765 = vpack.c.b16 %v727, %v726
      %v766 = vpack.c.b16 %v729, %v728
      %v767 = vpack.c.b16 %v731, %v730
      %v768 = vpack.c.b16 %v733, %v732
      %v769 = vpack.c.b16 %v735, %v734
      %v770 = vpack.c.b16 %v737, %v736
      %v771 = vpack.c.b16 %v739, %v738
      %804 = vmatprep.subr.bf16.mxu0 0
      %805 = vmatpush1.bf16.msra.mxu0 %v747
      %806 = vmatprep.subr.bf16.mxu0 0
      %807 = vmatpush1.bf16.msra.mxu0 %v746
      %808 = vmatprep.subr.bf16.mxu0 0
      %809 = vmatpush1.bf16.msra.mxu0 %v745
      %810 = vmatprep.subr.bf16.mxu0 0
      %811 = vmatpush1.bf16.msra.mxu0 %v744
      %812 = vmatprep.subr.bf16.mxu0 0
      %813 = vmatpush1.bf16.msra.mxu0 %v743
      %814 = vmatprep.subr.bf16.mxu0 0
      %815 = vmatpush1.bf16.msra.mxu0 %v742
      %816 = vmatprep.subr.bf16.mxu0 0
      %817 = vmatpush1.bf16.msra.mxu0 %v741
      %818 = vmatprep.subr.bf16.mxu0 0
      %819 = vmatpush1.bf16.msra.mxu0 %v740
      %820 = vmatprep.subr.bf16.mxu0 0
      %821 = vmatpush2.bf16.msra.mxu0 %v755
      %822 = vmatprep.subr.bf16.mxu0 0
      %823 = vmatpush2.bf16.msra.mxu0 %v754
      %824 = vmatprep.subr.bf16.mxu0 0
      %825 = vmatpush2.bf16.msra.mxu0 %v753
      %826 = vmatprep.subr.bf16.mxu0 0
      %827 = vmatpush2.bf16.msra.mxu0 %v752
      %828 = vmatprep.subr.bf16.mxu0 0
      %829 = vmatpush2.bf16.msra.mxu0 %v751
      %830 = vmatprep.subr.bf16.mxu0 0
      %831 = vmatpush2.bf16.msra.mxu0 %v750
      %832 = vmatprep.subr.bf16.mxu0 0
      %833 = vmatpush2.bf16.msra.mxu0 %v749
      %834 = vmatprep.subr.bf16.mxu0 0
      %835 = vmatpush2.bf16.msra.mxu0 %v748
      %836 = vmatprep.mubr.bf16.mxu0 %v317
      %837 = vmatmul.mubr.bf16.gmra.mxu0 %v310
      %v838 = vpop.f32.mrf.mxu0
      %v839 = vadd.f32 %v603, %v838
      %v840 = vpop.f32.mrf.mxu0
      %v841 = vpop.f32.mrf.mxu0
      %v842 = vpop.f32.mrf.mxu0
      %843 = vdwg.mxu0
      %844 = vmatprep.subr.bf16.mxu0 0
      %845 = vmatpush1.bf16.msra.mxu0 %v763
      %846 = vmatprep.subr.bf16.mxu0 0
      %847 = vmatpush1.bf16.msra.mxu0 %v762
      %848 = vmatprep.subr.bf16.mxu0 0
      %849 = vmatpush1.bf16.msra.mxu0 %v761
      %850 = vmatprep.subr.bf16.mxu0 0
      %851 = vmatpush1.bf16.msra.mxu0 %v760
      %852 = vmatprep.subr.bf16.mxu0 0
      %853 = vmatpush1.bf16.msra.mxu0 %v759
      %854 = vmatprep.subr.bf16.mxu0 0
      %855 = vmatpush1.bf16.msra.mxu0 %v758
      %856 = vmatprep.subr.bf16.mxu0 0
      %857 = vmatpush1.bf16.msra.mxu0 %v757
      %858 = vmatprep.subr.bf16.mxu0 0
      %859 = vmatpush1.bf16.msra.mxu0 %v756
      %860 = vmatprep.subr.bf16.mxu0 0
      %861 = vmatpush2.bf16.msra.mxu0 %v771
      %862 = vmatprep.subr.bf16.mxu0 0
      %863 = vmatpush2.bf16.msra.mxu0 %v770
      %864 = vmatprep.subr.bf16.mxu0 0
      %865 = vmatpush2.bf16.msra.mxu0 %v769
      %866 = vmatprep.subr.bf16.mxu0 0
      %867 = vmatpush2.bf16.msra.mxu0 %v768
      %868 = vmatprep.subr.bf16.mxu0 0
      %869 = vmatpush2.bf16.msra.mxu0 %v767
      %870 = vmatprep.subr.bf16.mxu0 0
      %871 = vmatpush2.bf16.msra.mxu0 %v766
      %872 = vmatprep.subr.bf16.mxu0 0
      %873 = vmatpush2.bf16.msra.mxu0 %v765
      %874 = vmatprep.subr.bf16.mxu0 0
      %875 = vmatpush2.bf16.msra.mxu0 %v764
      %876 = vmatprep.mubr.bf16.mxu0 %v319
      %877 = vmatmul.mubr.bf16.gmra.mxu0 %v318
      %v878 = vpop.f32.mrf.mxu0
      %v879 = vadd.f32 %v839, %v878
      %v880 = vpop.f32.mrf.mxu0
      %v881 = vpop.f32.mrf.mxu0
      %v882 = vpop.f32.mrf.mxu0
      %883 = vdwg.mxu0
      %s884 = scalar_lea.vmem %s160, 4
      %v885 = vld [vmem:[%s884] sm:$0xf]
      %s886 = scalar_lea.vmem %s1, 512
      %v887 = vld [vmem:[%s886] sm:$0xf]
      %v888 = vld [vmem:[%s886 + $0x4] sm:$0xf]
      %v889 = vld [vmem:[%s886 + $0x8] sm:$0xf]
      %v890 = vld [vmem:[%s886 + $0xc] sm:$0xf]
      %v891 = vld [vmem:[%s886 + $0x10] sm:$0xf]
      %v892 = vld [vmem:[%s886 + $0x14] sm:$0xf]
      %v893 = vld [vmem:[%s886 + $0x18] sm:$0xf]
      %v894 = vld [vmem:[%s886 + $0x1c] sm:$0xf]
      %v895 = vld [vmem:[%s886 + $0x20] sm:$0xf]
      %v896 = vld [vmem:[%s886 + $0x24] sm:$0xf]
      %v897 = vld [vmem:[%s886 + $0x28] sm:$0xf]
      %v898 = vld [vmem:[%s886 + $0x2c] sm:$0xf]
      %v899 = vld [vmem:[%s886 + $0x30] sm:$0xf]
      %v900 = vld [vmem:[%s886 + $0x34] sm:$0xf]
      %v901 = vld [vmem:[%s886 + $0x38] sm:$0xf]
      %v902 = vld [vmem:[%s886 + $0x3c] sm:$0xf]
      %v903 = vld [vmem:[%s886 + $0x40] sm:$0xf]
      %v904 = vld [vmem:[%s886 + $0x44] sm:$0xf]
      %v905 = vld [vmem:[%s886 + $0x48] sm:$0xf]
      %v906 = vld [vmem:[%s886 + $0x4c] sm:$0xf]
      %v907 = vld [vmem:[%s886 + $0x50] sm:$0xf]
      %v908 = vld [vmem:[%s886 + $0x54] sm:$0xf]
      %v909 = vld [vmem:[%s886 + $0x58] sm:$0xf]
      %v910 = vld [vmem:[%s886 + $0x5c] sm:$0xf]
      %v911 = vld [vmem:[%s886 + $0x60] sm:$0xf]
      %v912 = vld [vmem:[%s886 + $0x64] sm:$0xf]
      %v913 = vld [vmem:[%s886 + $0x68] sm:$0xf]
      %v914 = vld [vmem:[%s886 + $0x6c] sm:$0xf]
      %v915 = vld [vmem:[%s886 + $0x70] sm:$0xf]
      %v916 = vld [vmem:[%s886 + $0x74] sm:$0xf]
      %v917 = vld [vmem:[%s886 + $0x78] sm:$0xf]
      %v918 = vld [vmem:[%s886 + $0x7c] sm:$0xf]
      %v919 = vld [vmem:[%s886 + $0x80] sm:$0xf]
      %v920 = vld [vmem:[%s886 + $0x84] sm:$0xf]
      %v921 = vld [vmem:[%s886 + $0x88] sm:$0xf]
      %v922 = vld [vmem:[%s886 + $0x8c] sm:$0xf]
      %v923 = vld [vmem:[%s886 + $0x90] sm:$0xf]
      %v924 = vld [vmem:[%s886 + $0x94] sm:$0xf]
      %v925 = vld [vmem:[%s886 + $0x98] sm:$0xf]
      %v926 = vld [vmem:[%s886 + $0x9c] sm:$0xf]
      %v927 = vld [vmem:[%s886 + $0xa0] sm:$0xf]
      %v928 = vld [vmem:[%s886 + $0xa4] sm:$0xf]
      %v929 = vld [vmem:[%s886 + $0xa8] sm:$0xf]
      %v930 = vld [vmem:[%s886 + $0xac] sm:$0xf]
      %v931 = vld [vmem:[%s886 + $0xb0] sm:$0xf]
      %v932 = vld [vmem:[%s886 + $0xb4] sm:$0xf]
      %v933 = vld [vmem:[%s886 + $0xb8] sm:$0xf]
      %v934 = vld [vmem:[%s886 + $0xbc] sm:$0xf]
      %v935 = vld [vmem:[%s886 + $0xc0] sm:$0xf]
      %v936 = vld [vmem:[%s886 + $0xc4] sm:$0xf]
      %v937 = vld [vmem:[%s886 + $0xc8] sm:$0xf]
      %v938 = vld [vmem:[%s886 + $0xcc] sm:$0xf]
      %v939 = vld [vmem:[%s886 + $0xd0] sm:$0xf]
      %v940 = vld [vmem:[%s886 + $0xd4] sm:$0xf]
      %v941 = vld [vmem:[%s886 + $0xd8] sm:$0xf]
      %v942 = vld [vmem:[%s886 + $0xdc] sm:$0xf]
      %v943 = vld [vmem:[%s886 + $0xe0] sm:$0xf]
      %v944 = vld [vmem:[%s886 + $0xe4] sm:$0xf]
      %v945 = vld [vmem:[%s886 + $0xe8] sm:$0xf]
      %v946 = vld [vmem:[%s886 + $0xec] sm:$0xf]
      %v947 = vld [vmem:[%s886 + $0xf0] sm:$0xf]
      %v948 = vld [vmem:[%s886 + $0xf4] sm:$0xf]
      %v949 = vld [vmem:[%s886 + $0xf8] sm:$0xf]
      %v950 = vld [vmem:[%s886 + $0xfc] sm:$0xf]
      %v953 = vunpack.c.l.s4 1966171168
      %v954 = vunpack.c.0.s8 %v953
      %v955 = vlaneseq
      %v956 = vshrl.u32 %v955, 7
      %v957 = vsub.s32 %v954, %v956
      %v958 = vrot.slane %v885, %v957
      %v959 = vcombine.high %v958, %v958
      %v961 = vunpack.c.l.s4 1966171168
      %v962 = vunpack.c.0.s8 %v961
      %v963 = vlaneseq
      %v964 = vshrl.u32 %v963, 7
      %v965 = vsub.s32 %v962, %v964
      %v966 = vrot.slane %v958, %v965
      %v968 = vunpack.c.l.s4 1966171168
      %v969 = vunpack.c.0.s8 %v968
      %v970 = vlaneseq
      %v971 = vshrl.u32 %v970, 7
      %v972 = vsub.s32 %v969, %v971
      %v973 = vrot.slane %v959, %v972
      %v974 = vcombine.high %v966, %v966
      %v975 = vcombine.high %v973, %v973
      %v1044 = vunpack.c.l.b16 %v887
      %v1045 = vunpack.c.l.b16 %v888
      %v1046 = vunpack.c.l.b16 %v889
      %v1047 = vunpack.c.l.b16 %v890
      %v1048 = vunpack.c.l.b16 %v891
      %v1049 = vunpack.c.l.b16 %v892
      %v1050 = vunpack.c.l.b16 %v893
      %v1051 = vunpack.c.l.b16 %v894
      %v1052 = vunpack.c.l.b16 %v895
      %v1053 = vunpack.c.l.b16 %v896
      %v1054 = vunpack.c.l.b16 %v897
      %v1055 = vunpack.c.l.b16 %v898
      %v1056 = vunpack.c.l.b16 %v899
      %v1057 = vunpack.c.l.b16 %v900
      %v1058 = vunpack.c.l.b16 %v901
      %v1059 = vunpack.c.l.b16 %v902
      %v1060 = vunpack.c.l.b16 %v903
      %v1061 = vunpack.c.l.b16 %v904
      %v1062 = vunpack.c.l.b16 %v905
      %v1063 = vunpack.c.l.b16 %v906
      %v1064 = vunpack.c.l.b16 %v907
      %v1065 = vunpack.c.l.b16 %v908
      %v1066 = vunpack.c.l.b16 %v909
      %v1067 = vunpack.c.l.b16 %v910
      %v1068 = vunpack.c.l.b16 %v911
      %v1069 = vunpack.c.l.b16 %v912
      %v1070 = vunpack.c.l.b16 %v913
      %v1071 = vunpack.c.l.b16 %v914
      %v1072 = vunpack.c.l.b16 %v915
      %v1073 = vunpack.c.l.b16 %v916
      %v1074 = vunpack.c.l.b16 %v917
      %v1075 = vunpack.c.l.b16 %v918
      %v1076 = vunpack.c.l.b16 %v919
      %v1077 = vunpack.c.l.b16 %v920
      %v1078 = vunpack.c.l.b16 %v921
      %v1079 = vunpack.c.l.b16 %v922
      %v1080 = vunpack.c.l.b16 %v923
      %v1081 = vunpack.c.l.b16 %v924
      %v1082 = vunpack.c.l.b16 %v925
      %v1083 = vunpack.c.l.b16 %v926
      %v1084 = vunpack.c.l.b16 %v927
      %v1085 = vunpack.c.l.b16 %v928
      %v1086 = vunpack.c.l.b16 %v929
      %v1087 = vunpack.c.l.b16 %v930
      %v1088 = vunpack.c.l.b16 %v931
      %v1089 = vunpack.c.l.b16 %v932
      %v1090 = vunpack.c.l.b16 %v933
      %v1091 = vunpack.c.l.b16 %v934
      %v1092 = vunpack.c.l.b16 %v935
      %v1093 = vunpack.c.l.b16 %v936
      %v1094 = vunpack.c.l.b16 %v937
      %v1095 = vunpack.c.l.b16 %v938
      %v1096 = vunpack.c.l.b16 %v939
      %v1097 = vunpack.c.l.b16 %v940
      %v1098 = vunpack.c.l.b16 %v941
      %v1099 = vunpack.c.l.b16 %v942
      %v1100 = vunpack.c.l.b16 %v943
      %v1101 = vunpack.c.l.b16 %v944
      %v1102 = vunpack.c.l.b16 %v945
      %v1103 = vunpack.c.l.b16 %v946
      %v1104 = vunpack.c.l.b16 %v947
      %v1105 = vunpack.c.l.b16 %v948
      %v1106 = vunpack.c.l.b16 %v949
      %v1107 = vunpack.c.l.b16 %v950
      %v1108 = vpack.c.b16 %v1045, %v1044
      %v1109 = vpack.c.b16 %v1047, %v1046
      %v1110 = vpack.c.b16 %v1049, %v1048
      %v1111 = vpack.c.b16 %v1051, %v1050
      %v1112 = vpack.c.b16 %v1053, %v1052
      %v1113 = vpack.c.b16 %v1055, %v1054
      %v1114 = vpack.c.b16 %v1057, %v1056
      %v1115 = vpack.c.b16 %v1059, %v1058
      %v1116 = vpack.c.b16 %v1061, %v1060
      %v1117 = vpack.c.b16 %v1063, %v1062
      %v1118 = vpack.c.b16 %v1065, %v1064
      %v1119 = vpack.c.b16 %v1067, %v1066
      %v1120 = vpack.c.b16 %v1069, %v1068
      %v1121 = vpack.c.b16 %v1071, %v1070
      %v1122 = vpack.c.b16 %v1073, %v1072
      %v1123 = vpack.c.b16 %v1075, %v1074
      %v1124 = vpack.c.b16 %v1077, %v1076
      %v1125 = vpack.c.b16 %v1079, %v1078
      %v1126 = vpack.c.b16 %v1081, %v1080
      %v1127 = vpack.c.b16 %v1083, %v1082
      %v1128 = vpack.c.b16 %v1085, %v1084
      %v1129 = vpack.c.b16 %v1087, %v1086
      %v1130 = vpack.c.b16 %v1089, %v1088
      %v1131 = vpack.c.b16 %v1091, %v1090
      %v1132 = vpack.c.b16 %v1093, %v1092
      %v1133 = vpack.c.b16 %v1095, %v1094
      %v1134 = vpack.c.b16 %v1097, %v1096
      %v1135 = vpack.c.b16 %v1099, %v1098
      %v1136 = vpack.c.b16 %v1101, %v1100
      %v1137 = vpack.c.b16 %v1103, %v1102
      %v1138 = vpack.c.b16 %v1105, %v1104
      %v1139 = vpack.c.b16 %v1107, %v1106
      %1172 = vmatprep.subr.bf16.mxu0 0
      %1173 = vmatpush1.bf16.msra.mxu0 %v1115
      %1174 = vmatprep.subr.bf16.mxu0 0
      %1175 = vmatpush1.bf16.msra.mxu0 %v1114
      %1176 = vmatprep.subr.bf16.mxu0 0
      %1177 = vmatpush1.bf16.msra.mxu0 %v1113
      %1178 = vmatprep.subr.bf16.mxu0 0
      %1179 = vmatpush1.bf16.msra.mxu0 %v1112
      %1180 = vmatprep.subr.bf16.mxu0 0
      %1181 = vmatpush1.bf16.msra.mxu0 %v1111
      %1182 = vmatprep.subr.bf16.mxu0 0
      %1183 = vmatpush1.bf16.msra.mxu0 %v1110
      %1184 = vmatprep.subr.bf16.mxu0 0
      %1185 = vmatpush1.bf16.msra.mxu0 %v1109
      %1186 = vmatprep.subr.bf16.mxu0 0
      %1187 = vmatpush1.bf16.msra.mxu0 %v1108
      %1188 = vmatprep.subr.bf16.mxu0 0
      %1189 = vmatpush2.bf16.msra.mxu0 %v1123
      %1190 = vmatprep.subr.bf16.mxu0 0
      %1191 = vmatpush2.bf16.msra.mxu0 %v1122
      %1192 = vmatprep.subr.bf16.mxu0 0
      %1193 = vmatpush2.bf16.msra.mxu0 %v1121
      %1194 = vmatprep.subr.bf16.mxu0 0
      %1195 = vmatpush2.bf16.msra.mxu0 %v1120
      %1196 = vmatprep.subr.bf16.mxu0 0
      %1197 = vmatpush2.bf16.msra.mxu0 %v1119
      %1198 = vmatprep.subr.bf16.mxu0 0
      %1199 = vmatpush2.bf16.msra.mxu0 %v1118
      %1200 = vmatprep.subr.bf16.mxu0 0
      %1201 = vmatpush2.bf16.msra.mxu0 %v1117
      %1202 = vmatprep.subr.bf16.mxu0 0
      %1203 = vmatpush2.bf16.msra.mxu0 %v1116
      %1204 = vmatprep.mubr.bf16.mxu0 %v973
      %1205 = vmatmul.mubr.bf16.gmra.mxu0 %v966
      %v1206 = vpop.f32.mrf.mxu0
      %v1207 = vadd.f32 0.0, %v1206
      %v1208 = vpop.f32.mrf.mxu0
      %v1209 = vpop.f32.mrf.mxu0
      %v1210 = vpop.f32.mrf.mxu0
      %1211 = vdwg.mxu0
      %1212 = vmatprep.subr.bf16.mxu0 0
      %1213 = vmatpush1.bf16.msra.mxu0 %v1131
      %1214 = vmatprep.subr.bf16.mxu0 0
      %1215 = vmatpush1.bf16.msra.mxu0 %v1130
      %1216 = vmatprep.subr.bf16.mxu0 0
      %1217 = vmatpush1.bf16.msra.mxu0 %v1129
      %1218 = vmatprep.subr.bf16.mxu0 0
      %1219 = vmatpush1.bf16.msra.mxu0 %v1128
      %1220 = vmatprep.subr.bf16.mxu0 0
      %1221 = vmatpush1.bf16.msra.mxu0 %v1127
      %1222 = vmatprep.subr.bf16.mxu0 0
      %1223 = vmatpush1.bf16.msra.mxu0 %v1126
      %1224 = vmatprep.subr.bf16.mxu0 0
      %1225 = vmatpush1.bf16.msra.mxu0 %v1125
      %1226 = vmatprep.subr.bf16.mxu0 0
      %1227 = vmatpush1.bf16.msra.mxu0 %v1124
      %1228 = vmatprep.subr.bf16.mxu0 0
      %1229 = vmatpush2.bf16.msra.mxu0 %v1139
      %1230 = vmatprep.subr.bf16.mxu0 0
      %1231 = vmatpush2.bf16.msra.mxu0 %v1138
      %1232 = vmatprep.subr.bf16.mxu0 0
      %1233 = vmatpush2.bf16.msra.mxu0 %v1137
      %1234 = vmatprep.subr.bf16.mxu0 0
      %1235 = vmatpush2.bf16.msra.mxu0 %v1136
      %1236 = vmatprep.subr.bf16.mxu0 0
      %1237 = vmatpush2.bf16.msra.mxu0 %v1135
      %1238 = vmatprep.subr.bf16.mxu0 0
      %1239 = vmatpush2.bf16.msra.mxu0 %v1134
      %1240 = vmatprep.subr.bf16.mxu0 0
      %1241 = vmatpush2.bf16.msra.mxu0 %v1133
      %1242 = vmatprep.subr.bf16.mxu0 0
      %1243 = vmatpush2.bf16.msra.mxu0 %v1132
      %1244 = vmatprep.mubr.bf16.mxu0 %v975
      %1245 = vmatmul.mubr.bf16.gmra.mxu0 %v974
      %v1246 = vpop.f32.mrf.mxu0
      %v1247 = vadd.f32 %v1207, %v1246
      %v1248 = vpop.f32.mrf.mxu0
      %v1249 = vpop.f32.mrf.mxu0
      %v1250 = vpop.f32.mrf.mxu0
      %1251 = vdwg.mxu0
      %v1252 = vadd.f32 %v879, %v1247
      %v1253 = vld [vmem:[%s884] sm:$0xf]
      %s1254 = scalar_lea.vmem %s1, 768
      %v1255 = vld [vmem:[%s1254] sm:$0xf]
      %v1256 = vld [vmem:[%s1254 + $0x4] sm:$0xf]
      %v1257 = vld [vmem:[%s1254 + $0x8] sm:$0xf]
      %v1258 = vld [vmem:[%s1254 + $0xc] sm:$0xf]
      %v1259 = vld [vmem:[%s1254 + $0x10] sm:$0xf]
      %v1260 = vld [vmem:[%s1254 + $0x14] sm:$0xf]
      %v1261 = vld [vmem:[%s1254 + $0x18] sm:$0xf]
      %v1262 = vld [vmem:[%s1254 + $0x1c] sm:$0xf]
      %v1263 = vld [vmem:[%s1254 + $0x20] sm:$0xf]
      %v1264 = vld [vmem:[%s1254 + $0x24] sm:$0xf]
      %v1265 = vld [vmem:[%s1254 + $0x28] sm:$0xf]
      %v1266 = vld [vmem:[%s1254 + $0x2c] sm:$0xf]
      %v1267 = vld [vmem:[%s1254 + $0x30] sm:$0xf]
      %v1268 = vld [vmem:[%s1254 + $0x34] sm:$0xf]
      %v1269 = vld [vmem:[%s1254 + $0x38] sm:$0xf]
      %v1270 = vld [vmem:[%s1254 + $0x3c] sm:$0xf]
      %v1271 = vld [vmem:[%s1254 + $0x40] sm:$0xf]
      %v1272 = vld [vmem:[%s1254 + $0x44] sm:$0xf]
      %v1273 = vld [vmem:[%s1254 + $0x48] sm:$0xf]
      %v1274 = vld [vmem:[%s1254 + $0x4c] sm:$0xf]
      %v1275 = vld [vmem:[%s1254 + $0x50] sm:$0xf]
      %v1276 = vld [vmem:[%s1254 + $0x54] sm:$0xf]
      %v1277 = vld [vmem:[%s1254 + $0x58] sm:$0xf]
      %v1278 = vld [vmem:[%s1254 + $0x5c] sm:$0xf]
      %v1279 = vld [vmem:[%s1254 + $0x60] sm:$0xf]
      %v1280 = vld [vmem:[%s1254 + $0x64] sm:$0xf]
      %v1281 = vld [vmem:[%s1254 + $0x68] sm:$0xf]
      %v1282 = vld [vmem:[%s1254 + $0x6c] sm:$0xf]
      %v1283 = vld [vmem:[%s1254 + $0x70] sm:$0xf]
      %v1284 = vld [vmem:[%s1254 + $0x74] sm:$0xf]
      %v1285 = vld [vmem:[%s1254 + $0x78] sm:$0xf]
      %v1286 = vld [vmem:[%s1254 + $0x7c] sm:$0xf]
      %v1287 = vld [vmem:[%s1254 + $0x80] sm:$0xf]
      %v1288 = vld [vmem:[%s1254 + $0x84] sm:$0xf]
      %v1289 = vld [vmem:[%s1254 + $0x88] sm:$0xf]
      %v1290 = vld [vmem:[%s1254 + $0x8c] sm:$0xf]
      %v1291 = vld [vmem:[%s1254 + $0x90] sm:$0xf]
      %v1292 = vld [vmem:[%s1254 + $0x94] sm:$0xf]
      %v1293 = vld [vmem:[%s1254 + $0x98] sm:$0xf]
      %v1294 = vld [vmem:[%s1254 + $0x9c] sm:$0xf]
      %v1295 = vld [vmem:[%s1254 + $0xa0] sm:$0xf]
      %v1296 = vld [vmem:[%s1254 + $0xa4] sm:$0xf]
      %v1297 = vld [vmem:[%s1254 + $0xa8] sm:$0xf]
      %v1298 = vld [vmem:[%s1254 + $0xac] sm:$0xf]
      %v1299 = vld [vmem:[%s1254 + $0xb0] sm:$0xf]
      %v1300 = vld [vmem:[%s1254 + $0xb4] sm:$0xf]
      %v1301 = vld [vmem:[%s1254 + $0xb8] sm:$0xf]
      %v1302 = vld [vmem:[%s1254 + $0xbc] sm:$0xf]
      %v1303 = vld [vmem:[%s1254 + $0xc0] sm:$0xf]
      %v1304 = vld [vmem:[%s1254 + $0xc4] sm:$0xf]
      %v1305 = vld [vmem:[%s1254 + $0xc8] sm:$0xf]
      %v1306 = vld [vmem:[%s1254 + $0xcc] sm:$0xf]
      %v1307 = vld [vmem:[%s1254 + $0xd0] sm:$0xf]
      %v1308 = vld [vmem:[%s1254 + $0xd4] sm:$0xf]
      %v1309 = vld [vmem:[%s1254 + $0xd8] sm:$0xf]
      %v1310 = vld [vmem:[%s1254 + $0xdc] sm:$0xf]
      %v1311 = vld [vmem:[%s1254 + $0xe0] sm:$0xf]
      %v1312 = vld [vmem:[%s1254 + $0xe4] sm:$0xf]
      %v1313 = vld [vmem:[%s1254 + $0xe8] sm:$0xf]
      %v1314 = vld [vmem:[%s1254 + $0xec] sm:$0xf]
      %v1315 = vld [vmem:[%s1254 + $0xf0] sm:$0xf]
      %v1316 = vld [vmem:[%s1254 + $0xf4] sm:$0xf]
      %v1317 = vld [vmem:[%s1254 + $0xf8] sm:$0xf]
      %v1318 = vld [vmem:[%s1254 + $0xfc] sm:$0xf]
      %v1321 = vunpack.c.l.s4 1966171168
      %v1322 = vunpack.c.0.s8 %v1321
      %v1323 = vlaneseq
      %v1324 = vshrl.u32 %v1323, 7
      %v1325 = vsub.s32 %v1322, %v1324
      %v1326 = vrot.slane %v1253, %v1325
      %v1327 = vcombine.high %v1326, %v1326
      %v1329 = vunpack.c.l.s4 1966171168
      %v1330 = vunpack.c.0.s8 %v1329
      %v1331 = vlaneseq
      %v1332 = vshrl.u32 %v1331, 7
      %v1333 = vsub.s32 %v1330, %v1332
      %v1334 = vrot.slane %v1326, %v1333
      %v1336 = vunpack.c.l.s4 1966171168
      %v1337 = vunpack.c.0.s8 %v1336
      %v1338 = vlaneseq
      %v1339 = vshrl.u32 %v1338, 7
      %v1340 = vsub.s32 %v1337, %v1339
      %v1341 = vrot.slane %v1327, %v1340
      %v1342 = vcombine.high %v1334, %v1334
      %v1343 = vcombine.high %v1341, %v1341
      %v1345 = vshrl.u32 %v1334, 16
      %v1348 = vshrl.u32 %v1341, 16
      %v1351 = vshrl.u32 %v1342, 16
      %v1354 = vshrl.u32 %v1343, 16
      %v1424 = vunpack.c.l.b16 %v1255
      %v1425 = vunpack.c.l.b16 %v1256
      %v1426 = vunpack.c.l.b16 %v1257
      %v1427 = vunpack.c.l.b16 %v1258
      %v1428 = vunpack.c.l.b16 %v1259
      %v1429 = vunpack.c.l.b16 %v1260
      %v1430 = vunpack.c.l.b16 %v1261
      %v1431 = vunpack.c.l.b16 %v1262
      %v1432 = vunpack.c.l.b16 %v1263
      %v1433 = vunpack.c.l.b16 %v1264
      %v1434 = vunpack.c.l.b16 %v1265
      %v1435 = vunpack.c.l.b16 %v1266
      %v1436 = vunpack.c.l.b16 %v1267
      %v1437 = vunpack.c.l.b16 %v1268
      %v1438 = vunpack.c.l.b16 %v1269
      %v1439 = vunpack.c.l.b16 %v1270
      %v1440 = vunpack.c.l.b16 %v1271
      %v1441 = vunpack.c.l.b16 %v1272
      %v1442 = vunpack.c.l.b16 %v1273
      %v1443 = vunpack.c.l.b16 %v1274
      %v1444 = vunpack.c.l.b16 %v1275
      %v1445 = vunpack.c.l.b16 %v1276
      %v1446 = vunpack.c.l.b16 %v1277
      %v1447 = vunpack.c.l.b16 %v1278
      %v1448 = vunpack.c.l.b16 %v1279
      %v1449 = vunpack.c.l.b16 %v1280
      %v1450 = vunpack.c.l.b16 %v1281
      %v1451 = vunpack.c.l.b16 %v1282
      %v1452 = vunpack.c.l.b16 %v1283
      %v1453 = vunpack.c.l.b16 %v1284
      %v1454 = vunpack.c.l.b16 %v1285
      %v1455 = vunpack.c.l.b16 %v1286
      %v1456 = vunpack.c.l.b16 %v1287
      %v1457 = vunpack.c.l.b16 %v1288
      %v1458 = vunpack.c.l.b16 %v1289
      %v1459 = vunpack.c.l.b16 %v1290
      %v1460 = vunpack.c.l.b16 %v1291
      %v1461 = vunpack.c.l.b16 %v1292
      %v1462 = vunpack.c.l.b16 %v1293
      %v1463 = vunpack.c.l.b16 %v1294
      %v1464 = vunpack.c.l.b16 %v1295
      %v1465 = vunpack.c.l.b16 %v1296
      %v1466 = vunpack.c.l.b16 %v1297
      %v1467 = vunpack.c.l.b16 %v1298
      %v1468 = vunpack.c.l.b16 %v1299
      %v1469 = vunpack.c.l.b16 %v1300
      %v1470 = vunpack.c.l.b16 %v1301
      %v1471 = vunpack.c.l.b16 %v1302
      %v1472 = vunpack.c.l.b16 %v1303
      %v1473 = vunpack.c.l.b16 %v1304
      %v1474 = vunpack.c.l.b16 %v1305
      %v1475 = vunpack.c.l.b16 %v1306
      %v1476 = vunpack.c.l.b16 %v1307
      %v1477 = vunpack.c.l.b16 %v1308
      %v1478 = vunpack.c.l.b16 %v1309
      %v1479 = vunpack.c.l.b16 %v1310
      %v1480 = vunpack.c.l.b16 %v1311
      %v1481 = vunpack.c.l.b16 %v1312
      %v1482 = vunpack.c.l.b16 %v1313
      %v1483 = vunpack.c.l.b16 %v1314
      %v1484 = vunpack.c.l.b16 %v1315
      %v1485 = vunpack.c.l.b16 %v1316
      %v1486 = vunpack.c.l.b16 %v1317
      %v1487 = vunpack.c.l.b16 %v1318
      %v1488 = vpack.c.b16 %v1425, %v1424
      %v1489 = vpack.c.b16 %v1427, %v1426
      %v1490 = vpack.c.b16 %v1429, %v1428
      %v1491 = vpack.c.b16 %v1431, %v1430
      %v1492 = vpack.c.b16 %v1433, %v1432
      %v1493 = vpack.c.b16 %v1435, %v1434
      %v1494 = vpack.c.b16 %v1437, %v1436
      %v1495 = vpack.c.b16 %v1439, %v1438
      %v1496 = vpack.c.b16 %v1441, %v1440
      %v1497 = vpack.c.b16 %v1443, %v1442
      %v1498 = vpack.c.b16 %v1445, %v1444
      %v1499 = vpack.c.b16 %v1447, %v1446
      %v1500 = vpack.c.b16 %v1449, %v1448
      %v1501 = vpack.c.b16 %v1451, %v1450
      %v1502 = vpack.c.b16 %v1453, %v1452
      %v1503 = vpack.c.b16 %v1455, %v1454
      %v1504 = vpack.c.b16 %v1457, %v1456
      %v1505 = vpack.c.b16 %v1459, %v1458
      %v1506 = vpack.c.b16 %v1461, %v1460
      %v1507 = vpack.c.b16 %v1463, %v1462
      %v1508 = vpack.c.b16 %v1465, %v1464
      %v1509 = vpack.c.b16 %v1467, %v1466
      %v1510 = vpack.c.b16 %v1469, %v1468
      %v1511 = vpack.c.b16 %v1471, %v1470
      %v1512 = vpack.c.b16 %v1473, %v1472
      %v1513 = vpack.c.b16 %v1475, %v1474
      %v1514 = vpack.c.b16 %v1477, %v1476
      %v1515 = vpack.c.b16 %v1479, %v1478
      %v1516 = vpack.c.b16 %v1481, %v1480
      %v1517 = vpack.c.b16 %v1483, %v1482
      %v1518 = vpack.c.b16 %v1485, %v1484
      %v1519 = vpack.c.b16 %v1487, %v1486
      %1552 = vmatprep.subr.bf16.mxu0 0
      %1553 = vmatpush1.bf16.msra.mxu0 %v1495
      %1554 = vmatprep.subr.bf16.mxu0 0
      %1555 = vmatpush1.bf16.msra.mxu0 %v1494
      %1556 = vmatprep.subr.bf16.mxu0 0
      %1557 = vmatpush1.bf16.msra.mxu0 %v1493
      %1558 = vmatprep.subr.bf16.mxu0 0
      %1559 = vmatpush1.bf16.msra.mxu0 %v1492
      %1560 = vmatprep.subr.bf16.mxu0 0
      %1561 = vmatpush1.bf16.msra.mxu0 %v1491
      %1562 = vmatprep.subr.bf16.mxu0 0
      %1563 = vmatpush1.bf16.msra.mxu0 %v1490
      %1564 = vmatprep.subr.bf16.mxu0 0
      %1565 = vmatpush1.bf16.msra.mxu0 %v1489
      %1566 = vmatprep.subr.bf16.mxu0 0
      %1567 = vmatpush1.bf16.msra.mxu0 %v1488
      %1568 = vmatprep.subr.bf16.mxu0 0
      %1569 = vmatpush2.bf16.msra.mxu0 %v1503
      %1570 = vmatprep.subr.bf16.mxu0 0
      %1571 = vmatpush2.bf16.msra.mxu0 %v1502
      %1572 = vmatprep.subr.bf16.mxu0 0
      %1573 = vmatpush2.bf16.msra.mxu0 %v1501
      %1574 = vmatprep.subr.bf16.mxu0 0
      %1575 = vmatpush2.bf16.msra.mxu0 %v1500
      %1576 = vmatprep.subr.bf16.mxu0 0
      %1577 = vmatpush2.bf16.msra.mxu0 %v1499
      %1578 = vmatprep.subr.bf16.mxu0 0
      %1579 = vmatpush2.bf16.msra.mxu0 %v1498
      %1580 = vmatprep.subr.bf16.mxu0 0
      %1581 = vmatpush2.bf16.msra.mxu0 %v1497
      %1582 = vmatprep.subr.bf16.mxu0 0
      %1583 = vmatpush2.bf16.msra.mxu0 %v1496
      %1584 = vmatprep.mubr.bf16.mxu0 %v1348
      %1585 = vmatmul.mubr.bf16.gmra.mxu0 %v1345
      %v1586 = vpop.f32.mrf.mxu0
      %v1587 = vadd.f32 0.0, %v1586
      %v1588 = vpop.f32.mrf.mxu0
      %v1589 = vpop.f32.mrf.mxu0
      %v1590 = vpop.f32.mrf.mxu0
      %1591 = vdwg.mxu0
      %1592 = vmatprep.subr.bf16.mxu0 0
      %1593 = vmatpush1.bf16.msra.mxu0 %v1511
      %1594 = vmatprep.subr.bf16.mxu0 0
      %1595 = vmatpush1.bf16.msra.mxu0 %v1510
      %1596 = vmatprep.subr.bf16.mxu0 0
      %1597 = vmatpush1.bf16.msra.mxu0 %v1509
      %1598 = vmatprep.subr.bf16.mxu0 0
      %1599 = vmatpush1.bf16.msra.mxu0 %v1508
      %1600 = vmatprep.subr.bf16.mxu0 0
      %1601 = vmatpush1.bf16.msra.mxu0 %v1507
      %1602 = vmatprep.subr.bf16.mxu0 0
      %1603 = vmatpush1.bf16.msra.mxu0 %v1506
      %1604 = vmatprep.subr.bf16.mxu0 0
      %1605 = vmatpush1.bf16.msra.mxu0 %v1505
      %1606 = vmatprep.subr.bf16.mxu0 0
      %1607 = vmatpush1.bf16.msra.mxu0 %v1504
      %1608 = vmatprep.subr.bf16.mxu0 0
      %1609 = vmatpush2.bf16.msra.mxu0 %v1519
      %1610 = vmatprep.subr.bf16.mxu0 0
      %1611 = vmatpush2.bf16.msra.mxu0 %v1518
      %1612 = vmatprep.subr.bf16.mxu0 0
      %1613 = vmatpush2.bf16.msra.mxu0 %v1517
      %1614 = vmatprep.subr.bf16.mxu0 0
      %1615 = vmatpush2.bf16.msra.mxu0 %v1516
      %1616 = vmatprep.subr.bf16.mxu0 0
      %1617 = vmatpush2.bf16.msra.mxu0 %v1515
      %1618 = vmatprep.subr.bf16.mxu0 0
      %1619 = vmatpush2.bf16.msra.mxu0 %v1514
      %1620 = vmatprep.subr.bf16.mxu0 0
      %1621 = vmatpush2.bf16.msra.mxu0 %v1513
      %1622 = vmatprep.subr.bf16.mxu0 0
      %1623 = vmatpush2.bf16.msra.mxu0 %v1512
      %1624 = vmatprep.mubr.bf16.mxu0 %v1354
      %1625 = vmatmul.mubr.bf16.gmra.mxu0 %v1351
      %v1626 = vpop.f32.mrf.mxu0
      %v1627 = vadd.f32 %v1587, %v1626
      %v1628 = vpop.f32.mrf.mxu0
      %v1629 = vpop.f32.mrf.mxu0
      %v1630 = vpop.f32.mrf.mxu0
      %1631 = vdwg.mxu0
      %v1632 = vadd.f32 %v1252, %v1627
      %v1633 = vld [vmem:[%s2] sm:$0x7]
      %v1634 = vadd.f32 %v1632, %v1633
      %vm1635 = vcmp.ge.f32.partialorder %v1634, 0.0
      %v1636 = vmul.f32 %v1634, 0.2
      %v1637 = vsel %vm1635, %v1634, %v1636
      %v1639 = vrot.slane %v1633, 1
      %v1641 = vmul.f32 %v1637, %v1639
      %v1642 = vrot.slane %v1633, 2
      %v1644 = vadd.f32 %v1641, %v1642
      %v1645 = vpack.c.bf16 %v1644, %v1644
      %vm1646 = vcmask 1040384
      %vm1647 = vsmask.f32 256
      %vm1648 = vmand %vm1646, %vm1647
      %v1649 = vld [vmem:[%s163] sm:$0x1]
      %v1650 = vsel %vm1648, %v1645, %v1649
      %1651 = vst [vmem:[%s163] sm:$0x1] %v1650
      %p1652 = scmp.lt.s32.totalorder %s14, 1
      %s1653 = scalar_select %p1652, %s14, 1
      %s1654 = scalar_lea.vmem %s3, %s1653
      // Predicated region
      $region33: #{discriminator_forward.7} parent=31 // pred_check
        %p1655 = pneg %p100
      $region34: #{discriminator_forward.7} parent=31 // pred_check_branch
        %1657 = sbr.rel (%p1655) target = $region36
      $region35: #{discriminator_forward.7} parent=31 // pred_region
        _
      $region36: #{discriminator_forward.7} parent=31 // pred_fallthru
        _
    $region32: #{discriminator_forward.7} parent=5 // pred_fallthru
      _
    %p1658 = scmp.le.s32.totalorder 2, %s9
    // Predicated region
    $region37: #{discriminator_forward.7} parent=5 // pred_check
      %p1659 = pneg %p1658
    $region38: #{discriminator_forward.7} parent=5 // pred_check_branch
      %1661 = sbr.rel (%p1659) target = $region40
    $region39: #{discriminator_forward.7} parent=5 // pred_region
      %s1662 = ssub.s32 %s9, 2
      // Predicated region
      $region41: #{discriminator_forward.7} parent=39 // pred_check
        %p1663 = pneg %p106
      $region42: #{discriminator_forward.7} parent=39 // pred_check_branch
        %1665 = sbr.rel (%p1663) target = $region44
      $region43: #{discriminator_forward.7} parent=39 // pred_region
        %p1666 = scmp.lt.s32.totalorder %s15, 1
        %s1667 = scalar_select %p1666, %s15, 1
        %s1668 = scalar_lea.vmem %s3, %s1667
      $region44: #{discriminator_forward.7} parent=39 // pred_fallthru
        _
    $region40: #{discriminator_forward.7} parent=5 // pred_fallthru
      _
  $region6: #{discriminator_forward.7} parent=0 // loop_footer
    %s13 = sadd.s32 1, %s9
  $region7: #{discriminator_forward.7} parent=0 // loop_footer_branch
    %8 = sbr.rel target = $region3
  $region8: #{discriminator_forward.7} parent=0 // loop_exit
    _

</llo_original>
